<compile_context>
chip_gen: v5e
topology: v5e:2x2
jax: 0.10.0
libtpu: 0.0.40
codegen_flags: <defaults>
</compile_context>

<pallas_src>
import functools

import jax
import jax.numpy as jnp
from jax.experimental import pallas as pl
from jax.experimental.pallas import tpu as pltpu


_LN_EPS = 1e-5  # nn.LayerNorm default

# Per-layer parameter ordering used both by the wrapper (flattening) and the
# kernel (unpacking).
_LAYER_KEYS = ("wq", "wk", "wv", "bq", "bk", "bv",
               "wo", "bo", "w1", "b1", "w2", "b2")
_NPER = len(_LAYER_KEYS)


# --------------------------------------------------------------------------
# In-kernel math helpers
# --------------------------------------------------------------------------

def _erf(x):
    # Abramowitz & Stegun 7.1.26 rational approximation of erf (|err| < 1.5e-7),
    # built only from ops Mosaic lowers directly (exp, mul/add, abs, where).
    a1, a2, a3, a4, a5 = 0.254829592, -0.284496736, 1.421413741, -1.453152027, 1.061405429
    p = 0.3275911
    ax = jnp.abs(x)
    t = pl.reciprocal(1.0 + p * ax, approx=False)   # divide via reciprocal path
    poly = ((((a5 * t + a4) * t + a3) * t + a2) * t + a1) * t
    e = 1.0 - poly * jnp.exp(-ax * ax)
    return jnp.where(x >= 0, e, -e)


def _gelu_exact(x):
    # nn.GELU() default (exact, erf-based) GELU.
    return 0.5 * x * (1.0 + _erf(x * 0.7071067811865476))


def _ln_normalize(x, eps):
    # LayerNorm without affine (affine is folded into the following linear).
    mu = jnp.mean(x, axis=-1, keepdims=True)
    xc = x - mu
    var = jnp.mean(xc * xc, axis=-1, keepdims=True)
    return xc * jax.lax.rsqrt(var + eps)


# --------------------------------------------------------------------------
# One transformer layer, computed fully in registers/VMEM:
#   Residual(PreNorm(Attention)) then Residual(PreNorm(FeedForward))
# Weights arrive pre-split per head (no in-kernel lane slicing or concat).
# --------------------------------------------------------------------------

def _layer_block(x, refs, heads, scale, eps):
    wq, wk, wv, bq, bk, bv, wo, bo, w1, b1, w2, b2 = refs

    # ---- attention sub-block ----
    xhat = _ln_normalize(x, eps)
    acc = jnp.zeros_like(x)                                  # (n, dim)
    for h in range(heads):                                   # static, heads is tiny
        q = jnp.dot(xhat, wq[h], preferred_element_type=jnp.float32) + bq[h]
        k = jnp.dot(xhat, wk[h], preferred_element_type=jnp.float32) + bk[h]
        v = jnp.dot(xhat, wv[h], preferred_element_type=jnp.float32) + bv[h]
        # scores = q @ k^T * scale
        s = jax.lax.dot_general(q, k, (((1,), (1,)), ((), ())),
                                preferred_element_type=jnp.float32) * scale
        s = s - jnp.max(s, axis=-1, keepdims=True)
        p = jnp.exp(s)
        l = jnp.sum(p, axis=-1, keepdims=True)               # (n, 1)
        # reciprocal on EUP + one Newton-Raphson step (~exact f32)
        r = pl.reciprocal(l, approx=True)
        r = r * (2.0 - l * r)
        o_h = jnp.dot(p, v, preferred_element_type=jnp.float32) * r
        # per-head out-projection, accumulated (replaces concat + big matmul)
        acc = acc + jnp.dot(o_h, wo[h], preferred_element_type=jnp.float32)
    x = x + acc + bo[...]                                    # residual + out bias

    # ---- feed-forward sub-block ----
    xhat = _ln_normalize(x, eps)
    h1 = _gelu_exact(jnp.dot(xhat, w1[...], preferred_element_type=jnp.float32)
                     + b1[...])
    y = jnp.dot(h1, w2[...], preferred_element_type=jnp.float32) + b2[...]
    return x + y                                             # residual


# --------------------------------------------------------------------------
# Whole-network kernel (one grid step == one batch element, full forward)
# --------------------------------------------------------------------------

def _whole_net_kernel(*refs, depth, b_depth, heads, dim_head,
                      b_heads, b_dim_head, eps):
    x_ref, c_ref, w_emb_ref, b_emb_ref = refs[0:4]
    layer_refs = refs[4:-1]
    o_ref = refs[-1]
    assert len(layer_refs) == (depth + b_depth) * _NPER

    x = x_ref[0].astype(jnp.float32)                         # (n, dim)

    # ---- spectral stage ----
    off = 0
    for _ in range(depth):
        x = _layer_block(x, layer_refs[off:off + _NPER],
                         heads, dim_head ** -0.5, eps)
        off += _NPER

    # ---- 'b n d -> b d n' + channels_to_embedding + cls prepend ----
    # y = x^T @ w_emb  (contract axis 0 of both operands) -> (dim, b_dim)
    y = jax.lax.dot_general(x, w_emb_ref[...].astype(jnp.float32),
                            (((0,), (0,)), ((), ())),
                            preferred_element_type=jnp.float32)
    y = y + b_emb_ref[...].astype(jnp.float32)
    cls = c_ref[...].astype(jnp.float32)                     # (1, b_dim)
    x2 = jnp.concatenate([cls, y], axis=0)                   # (dim+1, b_dim)

    # ---- spatial (band) stage ----
    for _ in range(b_depth):
        x2 = _layer_block(x2, layer_refs[off:off + _NPER],
                          b_heads, b_dim_head ** -0.5, eps)
        off += _NPER

    o_ref[0] = x2.astype(o_ref.dtype)


# --------------------------------------------------------------------------
# SSFormer_v4 forward: a single pallas_call
# --------------------------------------------------------------------------

def ssformer_v4_forward(fparams, cfg, x, c, mask=None):
    assert mask is None  # TODO(synk): mask != None attention path not implemented
    b, n, dim = x.shape
    b_dim = cfg["b_dim"]
    depth, b_depth = cfg["depth"], cfg["b_depth"]

    layer_arrays = []
    for lyr in fparams["layers"] + fparams["k_layers"]:
        layer_arrays += [lyr[k] for k in _LAYER_KEYS]

    inputs = [x,
              jnp.reshape(c, (1, b_dim)),
              fparams["w_emb"],
              jnp.reshape(fparams["b_emb"], (1, b_dim))] + layer_arrays

    # x varies with the batch grid index; everything else is grid-invariant
    # full-block VMEM residents (index_map always returns block 0...0).
    in_specs = [pl.BlockSpec((1, n, dim), lambda i: (i, 0, 0))]
    for a in inputs[1:]:
        in_specs.append(pl.BlockSpec(a.shape, lambda i, _nd=a.ndim: (0,) * _nd))

    kernel = functools.partial(
        _whole_net_kernel, depth=depth, b_depth=b_depth,
        heads=cfg["heads"], dim_head=cfg["dim_head"],
        b_heads=cfg["b_heads"], b_dim_head=cfg["b_dim_head"], eps=_LN_EPS)

    return pl.pallas_call(
        kernel,
        out_shape=jax.ShapeDtypeStruct((b, dim + 1, b_dim), x.dtype),
        grid=(b,),
        in_specs=in_specs,
        out_specs=pl.BlockSpec((1, dim + 1, b_dim), lambda i: (i, 0, 0)),
        compiler_params=pltpu.CompilerParams(dimension_semantics=("parallel",)),
    )(*inputs)


# --------------------------------------------------------------------------
# Parameter prep:
#   * fold LayerNorm affine into the following linear:
#       (xhat*g + b) @ W + c  ==  xhat @ (diag(g) @ W) + (b @ W + c)
#   * split qkv / out-projection weights per head so the kernel never lane-
#     slices or concatenates along the lane dimension.
# --------------------------------------------------------------------------

def _fold_layer(lyr, heads, dim_head):
    a, f = lyr["attn"], lyr["ff"]
    dim = a["w_qkv"].shape[0]
    inner = heads * dim_head

    w_qkv = a["ln_g"][:, None] * a["w_qkv"]                  # (dim, 3*inner)
    b_qkv = a["ln_b"] @ a["w_qkv"]                           # to_qkv has no own bias

    def split_w(w):   # (dim, inner) -> (heads, dim, dim_head)
        return jnp.transpose(w.reshape(dim, heads, dim_head), (1, 0, 2))

    def split_b(bvec):  # (inner,) -> (heads, 1, dim_head)
        return bvec.reshape(heads, 1, dim_head)

    w1 = f["ln_g"][:, None] * f["w1"]
    b1 = (f["ln_b"] @ f["w1"] + f["b1"]).reshape(1, -1)

    return dict(
        wq=split_w(w_qkv[:, :inner]),
        wk=split_w(w_qkv[:, inner:2 * inner]),
        wv=split_w(w_qkv[:, 2 * inner:]),
        bq=split_b(b_qkv[:inner]),
        bk=split_b(b_qkv[inner:2 * inner]),
        bv=split_b(b_qkv[2 * inner:]),
        wo=a["w_out"].reshape(heads, dim_head, dim),         # rows split per head
        bo=a["b_out"].reshape(1, dim),
        w1=w1, b1=b1,
        w2=f["w2"], b2=f["b2"].reshape(1, -1),
    )


def prepare_params(params, cfg):
    return dict(
        layers=[_fold_layer(l, cfg["heads"], cfg["dim_head"])
                for l in params["layers"]],
        k_layers=[_fold_layer(l, cfg["b_heads"], cfg["b_dim_head"])
                  for l in params["k_layers"]],
        w_emb=params["w_emb"],
        b_emb=params["b_emb"],
    )


# --------------------------------------------------------------------------
# Deterministic parameter initialization (synthetic weights, PyTorch layout)
# --------------------------------------------------------------------------

def init_params(key, cfg):
    keys = iter(jax.random.split(key, 256))

    def w(shape, scale=0.02):
        return scale * jax.random.normal(next(keys), shape, jnp.float32)

    def attn_params(dim, heads, dim_head):
        inner = heads * dim_head
        return dict(
            ln_g=jnp.ones((dim,), jnp.float32),
            ln_b=jnp.zeros((dim,), jnp.float32),
            w_qkv=w((dim, 3 * inner)),            # to_qkv (bias=False)
            w_out=w((inner, dim)),                # to_out[0]
            b_out=jnp.zeros((dim,), jnp.float32),
        )

    def ff_params(dim, hidden):
        return dict(
            ln_g=jnp.ones((dim,), jnp.float32),
            ln_b=jnp.zeros((dim,), jnp.float32),
            w1=w((dim, hidden)),
            b1=jnp.zeros((hidden,), jnp.float32),
            w2=w((hidden, dim)),
            b2=jnp.zeros((dim,), jnp.float32),
        )

    layers = [dict(attn=attn_params(cfg["dim"], cfg["heads"], cfg["dim_head"]),
                   ff=ff_params(cfg["dim"], cfg["mlp_head"]))
              for _ in range(cfg["depth"])]
    k_layers = [dict(attn=attn_params(cfg["b_dim"], cfg["b_heads"], cfg["b_dim_head"]),
                     ff=ff_params(cfg["b_dim"], cfg["b_mlp_head"]))
                for _ in range(cfg["b_depth"])]
    return dict(
        layers=layers,
        k_layers=k_layers,
        w_emb=w((cfg["num_patches"], cfg["b_dim"])),    # channels_to_embedding
        b_emb=jnp.zeros((cfg["b_dim"],), jnp.float32),
        cls_token=w((1, 1, cfg["b_dim"]), scale=1.0),   # present in __init__, unused in forward
    )


# --------------------------------------------------------------------------
# Main
# --------------------------------------------------------------------------

if __name__ == "__main__":
    cfg = dict(dim=16, depth=2, heads=2, dim_head=8, mlp_head=32,
               b_dim=32, b_depth=2, b_heads=2, b_dim_head=16, b_mlp_head=32,
               num_patches=8, dropout=0.0, mode="ViT")

    key = jax.random.PRNGKey(0)
    kx, kc, kp = jax.random.split(key, 3)

    # x: (batch, num_patches, dim), c: (1, 1, b_dim) cls token (forward input)
    x = jax.random.normal(kx, (2, cfg["num_patches"], cfg["dim"]), jnp.float32)
    c = jax.random.normal(kc, (1, 1, cfg["b_dim"]), jnp.float32)

    params = init_params(kp, cfg)
    fparams = prepare_params(params, cfg)   # fold LN affine + per-head split

    fwd = jax.jit(lambda xx, cc: ssformer_v4_forward(fparams, cfg, xx, cc))
    out = jax.block_until_ready(fwd(x, c))

    assert out.shape == (2, cfg["dim"] + 1, cfg["b_dim"]), out.shape
    assert out.dtype == jnp.float32
    print("KERNEL_OK")
</pallas_src>

<mosaic_0001>
module attributes {stable_mosaic.version = 11 : i64} {
  func.func @_whole_net_kernel(%arg0: i32, %arg1: memref<1x8x16xf32, #tpu.memory_space<vmem>>, %arg2: memref<1x32xf32, #tpu.memory_space<vmem>>, %arg3: memref<8x32xf32, #tpu.memory_space<vmem>>, %arg4: memref<1x32xf32, #tpu.memory_space<vmem>>, %arg5: memref<2x16x8xf32, #tpu.memory_space<vmem>>, %arg6: memref<2x16x8xf32, #tpu.memory_space<vmem>>, %arg7: memref<2x16x8xf32, #tpu.memory_space<vmem>>, %arg8: memref<2x1x8xf32, #tpu.memory_space<vmem>>, %arg9: memref<2x1x8xf32, #tpu.memory_space<vmem>>, %arg10: memref<2x1x8xf32, #tpu.memory_space<vmem>>, %arg11: memref<2x8x16xf32, #tpu.memory_space<vmem>>, %arg12: memref<1x16xf32, #tpu.memory_space<vmem>>, %arg13: memref<16x32xf32, #tpu.memory_space<vmem>>, %arg14: memref<1x32xf32, #tpu.memory_space<vmem>>, %arg15: memref<32x16xf32, #tpu.memory_space<vmem>>, %arg16: memref<1x16xf32, #tpu.memory_space<vmem>>, %arg17: memref<2x16x8xf32, #tpu.memory_space<vmem>>, %arg18: memref<2x16x8xf32, #tpu.memory_space<vmem>>, %arg19: memref<2x16x8xf32, #tpu.memory_space<vmem>>, %arg20: memref<2x1x8xf32, #tpu.memory_space<vmem>>, %arg21: memref<2x1x8xf32, #tpu.memory_space<vmem>>, %arg22: memref<2x1x8xf32, #tpu.memory_space<vmem>>, %arg23: memref<2x8x16xf32, #tpu.memory_space<vmem>>, %arg24: memref<1x16xf32, #tpu.memory_space<vmem>>, %arg25: memref<16x32xf32, #tpu.memory_space<vmem>>, %arg26: memref<1x32xf32, #tpu.memory_space<vmem>>, %arg27: memref<32x16xf32, #tpu.memory_space<vmem>>, %arg28: memref<1x16xf32, #tpu.memory_space<vmem>>, %arg29: memref<2x32x16xf32, #tpu.memory_space<vmem>>, %arg30: memref<2x32x16xf32, #tpu.memory_space<vmem>>, %arg31: memref<2x32x16xf32, #tpu.memory_space<vmem>>, %arg32: memref<2x1x16xf32, #tpu.memory_space<vmem>>, %arg33: memref<2x1x16xf32, #tpu.memory_space<vmem>>, %arg34: memref<2x1x16xf32, #tpu.memory_space<vmem>>, %arg35: memref<2x16x32xf32, #tpu.memory_space<vmem>>, %arg36: memref<1x32xf32, #tpu.memory_space<vmem>>, %arg37: memref<32x32xf32, #tpu.memory_space<vmem>>, %arg38: memref<1x32xf32, #tpu.memory_space<vmem>>, %arg39: memref<32x32xf32, #tpu.memory_space<vmem>>, %arg40: memref<1x32xf32, #tpu.memory_space<vmem>>, %arg41: memref<2x32x16xf32, #tpu.memory_space<vmem>>, %arg42: memref<2x32x16xf32, #tpu.memory_space<vmem>>, %arg43: memref<2x32x16xf32, #tpu.memory_space<vmem>>, %arg44: memref<2x1x16xf32, #tpu.memory_space<vmem>>, %arg45: memref<2x1x16xf32, #tpu.memory_space<vmem>>, %arg46: memref<2x1x16xf32, #tpu.memory_space<vmem>>, %arg47: memref<2x16x32xf32, #tpu.memory_space<vmem>>, %arg48: memref<1x32xf32, #tpu.memory_space<vmem>>, %arg49: memref<32x32xf32, #tpu.memory_space<vmem>>, %arg50: memref<1x32xf32, #tpu.memory_space<vmem>>, %arg51: memref<32x32xf32, #tpu.memory_space<vmem>>, %arg52: memref<1x32xf32, #tpu.memory_space<vmem>>, %arg53: memref<1x17x32xf32, #tpu.memory_space<vmem>>) attributes {dimension_semantics = [#tpu.dimension_semantics<parallel>], iteration_bounds = array<i64: 2>, scalar_prefetch = 0 : i64, scratch_operands = 0 : i64, tpu.core_type = #tpu.core_type<tc>, window_params = [{transform_indices = @transform_0, window_bounds = array<i64: 1, 8, 16>}, {pipeline_mode = #tpu.pipeline_mode<synchronous>, transform_indices = @transform_1, window_bounds = array<i64: 1, 32>}, {pipeline_mode = #tpu.pipeline_mode<synchronous>, transform_indices = @transform_2, window_bounds = array<i64: 8, 32>}, {pipeline_mode = #tpu.pipeline_mode<synchronous>, transform_indices = @transform_3, window_bounds = array<i64: 1, 32>}, {pipeline_mode = #tpu.pipeline_mode<synchronous>, transform_indices = @transform_4, window_bounds = array<i64: 2, 16, 8>}, {pipeline_mode = #tpu.pipeline_mode<synchronous>, transform_indices = @transform_5, window_bounds = array<i64: 2, 16, 8>}, {pipeline_mode = #tpu.pipeline_mode<synchronous>, transform_indices = @transform_6, window_bounds = array<i64: 2, 16, 8>}, {pipeline_mode = #tpu.pipeline_mode<synchronous>, transform_indices = @transform_7, window_bounds = array<i64: 2, 1, 8>}, {pipeline_mode = #tpu.pipeline_mode<synchronous>, transform_indices = @transform_8, window_bounds = array<i64: 2, 1, 8>}, {pipeline_mode = #tpu.pipeline_mode<synchronous>, transform_indices = @transform_9, window_bounds = array<i64: 2, 1, 8>}, {pipeline_mode = #tpu.pipeline_mode<synchronous>, transform_indices = @transform_10, window_bounds = array<i64: 2, 8, 16>}, {pipeline_mode = #tpu.pipeline_mode<synchronous>, transform_indices = @transform_11, window_bounds = array<i64: 1, 16>}, {pipeline_mode = #tpu.pipeline_mode<synchronous>, transform_indices = @transform_12, window_bounds = array<i64: 16, 32>}, {pipeline_mode = #tpu.pipeline_mode<synchronous>, transform_indices = @transform_13, window_bounds = array<i64: 1, 32>}, {pipeline_mode = #tpu.pipeline_mode<synchronous>, transform_indices = @transform_14, window_bounds = array<i64: 32, 16>}, {pipeline_mode = #tpu.pipeline_mode<synchronous>, transform_indices = @transform_15, window_bounds = array<i64: 1, 16>}, {pipeline_mode = #tpu.pipeline_mode<synchronous>, transform_indices = @transform_16, window_bounds = array<i64: 2, 16, 8>}, {pipeline_mode = #tpu.pipeline_mode<synchronous>, transform_indices = @transform_17, window_bounds = array<i64: 2, 16, 8>}, {pipeline_mode = #tpu.pipeline_mode<synchronous>, transform_indices = @transform_18, window_bounds = array<i64: 2, 16, 8>}, {pipeline_mode = #tpu.pipeline_mode<synchronous>, transform_indices = @transform_19, window_bounds = array<i64: 2, 1, 8>}, {pipeline_mode = #tpu.pipeline_mode<synchronous>, transform_indices = @transform_20, window_bounds = array<i64: 2, 1, 8>}, {pipeline_mode = #tpu.pipeline_mode<synchronous>, transform_indices = @transform_21, window_bounds = array<i64: 2, 1, 8>}, {pipeline_mode = #tpu.pipeline_mode<synchronous>, transform_indices = @transform_22, window_bounds = array<i64: 2, 8, 16>}, {pipeline_mode = #tpu.pipeline_mode<synchronous>, transform_indices = @transform_23, window_bounds = array<i64: 1, 16>}, {pipeline_mode = #tpu.pipeline_mode<synchronous>, transform_indices = @transform_24, window_bounds = array<i64: 16, 32>}, {pipeline_mode = #tpu.pipeline_mode<synchronous>, transform_indices = @transform_25, window_bounds = array<i64: 1, 32>}, {pipeline_mode = #tpu.pipeline_mode<synchronous>, transform_indices = @transform_26, window_bounds = array<i64: 32, 16>}, {pipeline_mode = #tpu.pipeline_mode<synchronous>, transform_indices = @transform_27, window_bounds = array<i64: 1, 16>}, {pipeline_mode = #tpu.pipeline_mode<synchronous>, transform_indices = @transform_28, window_bounds = array<i64: 2, 32, 16>}, {pipeline_mode = #tpu.pipeline_mode<synchronous>, transform_indices = @transform_29, window_bounds = array<i64: 2, 32, 16>}, {pipeline_mode = #tpu.pipeline_mode<synchronous>, transform_indices = @transform_30, window_bounds = array<i64: 2, 32, 16>}, {pipeline_mode = #tpu.pipeline_mode<synchronous>, transform_indices = @transform_31, window_bounds = array<i64: 2, 1, 16>}, {pipeline_mode = #tpu.pipeline_mode<synchronous>, transform_indices = @transform_32, window_bounds = array<i64: 2, 1, 16>}, {pipeline_mode = #tpu.pipeline_mode<synchronous>, transform_indices = @transform_33, window_bounds = array<i64: 2, 1, 16>}, {pipeline_mode = #tpu.pipeline_mode<synchronous>, transform_indices = @transform_34, window_bounds = array<i64: 2, 16, 32>}, {pipeline_mode = #tpu.pipeline_mode<synchronous>, transform_indices = @transform_35, window_bounds = array<i64: 1, 32>}, {pipeline_mode = #tpu.pipeline_mode<synchronous>, transform_indices = @transform_36, window_bounds = array<i64: 32, 32>}, {pipeline_mode = #tpu.pipeline_mode<synchronous>, transform_indices = @transform_37, window_bounds = array<i64: 1, 32>}, {pipeline_mode = #tpu.pipeline_mode<synchronous>, transform_indices = @transform_38, window_bounds = array<i64: 32, 32>}, {pipeline_mode = #tpu.pipeline_mode<synchronous>, transform_indices = @transform_39, window_bounds = array<i64: 1, 32>}, {pipeline_mode = #tpu.pipeline_mode<synchronous>, transform_indices = @transform_40, window_bounds = array<i64: 2, 32, 16>}, {pipeline_mode = #tpu.pipeline_mode<synchronous>, transform_indices = @transform_41, window_bounds = array<i64: 2, 32, 16>}, {pipeline_mode = #tpu.pipeline_mode<synchronous>, transform_indices = @transform_42, window_bounds = array<i64: 2, 32, 16>}, {pipeline_mode = #tpu.pipeline_mode<synchronous>, transform_indices = @transform_43, window_bounds = array<i64: 2, 1, 16>}, {pipeline_mode = #tpu.pipeline_mode<synchronous>, transform_indices = @transform_44, window_bounds = array<i64: 2, 1, 16>}, {pipeline_mode = #tpu.pipeline_mode<synchronous>, transform_indices = @transform_45, window_bounds = array<i64: 2, 1, 16>}, {pipeline_mode = #tpu.pipeline_mode<synchronous>, transform_indices = @transform_46, window_bounds = array<i64: 2, 16, 32>}, {pipeline_mode = #tpu.pipeline_mode<synchronous>, transform_indices = @transform_47, window_bounds = array<i64: 1, 32>}, {pipeline_mode = #tpu.pipeline_mode<synchronous>, transform_indices = @transform_48, window_bounds = array<i64: 32, 32>}, {pipeline_mode = #tpu.pipeline_mode<synchronous>, transform_indices = @transform_49, window_bounds = array<i64: 1, 32>}, {pipeline_mode = #tpu.pipeline_mode<synchronous>, transform_indices = @transform_50, window_bounds = array<i64: 32, 32>}, {pipeline_mode = #tpu.pipeline_mode<synchronous>, transform_indices = @transform_51, window_bounds = array<i64: 1, 32>}, {transform_indices = @transform_52, window_bounds = array<i64: 1, 17, 32>}]} {
    %c0 = arith.constant 0 : index
    %c0_0 = arith.constant 0 : index
    %c0_1 = arith.constant 0 : index
    %0 = vector.load %arg1[%c0, %c0_0, %c0_1] : memref<1x8x16xf32, #tpu.memory_space<vmem>>, vector<1x8x16xf32>
    %1 = vector.shape_cast %0 : vector<1x8x16xf32> to vector<8x16xf32>
    %cst = arith.constant dense<0.000000e+00> : vector<8xf32>
    %2 = vector.multi_reduction <add>, %1, %cst [1] : vector<8x16xf32> to vector<8xf32>
    %3 = vector.shape_cast %2 : vector<8xf32> to vector<8x1xf32>
    %cst_2 = arith.constant 1.600000e+01 : f32
    %4 = vector.broadcast %cst_2 : f32 to vector<8x1xf32>
    %5 = arith.divf %3, %4 : vector<8x1xf32>
    %6 = vector.broadcast %5 : vector<8x1xf32> to vector<8x16xf32>
    %7 = arith.subf %1, %6 : vector<8x16xf32>
    %8 = arith.mulf %7, %7 : vector<8x16xf32>
    %cst_3 = arith.constant dense<0.000000e+00> : vector<8xf32>
    %9 = vector.multi_reduction <add>, %8, %cst_3 [1] : vector<8x16xf32> to vector<8xf32>
    %10 = vector.shape_cast %9 : vector<8xf32> to vector<8x1xf32>
    %cst_4 = arith.constant 1.600000e+01 : f32
    %11 = vector.broadcast %cst_4 : f32 to vector<8x1xf32>
    %12 = arith.divf %10, %11 : vector<8x1xf32>
    %cst_5 = arith.constant 9.99999974E-6 : f32
    %13 = vector.broadcast %cst_5 : f32 to vector<8x1xf32>
    %14 = arith.addf %12, %13 : vector<8x1xf32>
    %15 = math.rsqrt %14 : vector<8x1xf32>
    %16 = vector.broadcast %15 : vector<8x1xf32> to vector<8x16xf32>
    %17 = arith.mulf %7, %16 : vector<8x16xf32>
    %cst_6 = arith.constant 0.000000e+00 : f32
    %18 = vector.broadcast %cst_6 : f32 to vector<8x16xf32>
    %c0_7 = arith.constant 0 : index
    %c0_8 = arith.constant 0 : index
    %c0_9 = arith.constant 0 : index
    %19 = vector.load %arg5[%c0_7, %c0_8, %c0_9] : memref<2x16x8xf32, #tpu.memory_space<vmem>>, vector<1x16x8xf32>
    %20 = vector.shape_cast %19 : vector<1x16x8xf32> to vector<16x8xf32>
    %cst_10 = arith.constant dense<0.000000e+00> : vector<8x8xf32>
    %21 = tpu.matmul %17, %20, %cst_10 {dimension_numbers = #tpu.dot_dimension_numbers<[1], [0], [0], [1], [0, 0, 1, 1], [], []>} : vector<8x16xf32>, vector<16x8xf32>, vector<8x8xf32> -> vector<8x8xf32>
    %c0_11 = arith.constant 0 : index
    %c0_12 = arith.constant 0 : index
    %c0_13 = arith.constant 0 : index
    %22 = vector.load %arg8[%c0_11, %c0_12, %c0_13] : memref<2x1x8xf32, #tpu.memory_space<vmem>>, vector<1x1x8xf32>
    %23 = vector.shape_cast %22 : vector<1x1x8xf32> to vector<1x8xf32>
    %24 = vector.broadcast %23 : vector<1x8xf32> to vector<8x8xf32>
    %25 = arith.addf %21, %24 : vector<8x8xf32>
    %c0_14 = arith.constant 0 : index
    %c0_15 = arith.constant 0 : index
    %c0_16 = arith.constant 0 : index
    %26 = vector.load %arg6[%c0_14, %c0_15, %c0_16] : memref<2x16x8xf32, #tpu.memory_space<vmem>>, vector<1x16x8xf32>
    %27 = vector.shape_cast %26 : vector<1x16x8xf32> to vector<16x8xf32>
    %cst_17 = arith.constant dense<0.000000e+00> : vector<8x8xf32>
    %28 = tpu.matmul %17, %27, %cst_17 {dimension_numbers = #tpu.dot_dimension_numbers<[1], [0], [0], [1], [0, 0, 1, 1], [], []>} : vector<8x16xf32>, vector<16x8xf32>, vector<8x8xf32> -> vector<8x8xf32>
    %c0_18 = arith.constant 0 : index
    %c0_19 = arith.constant 0 : index
    %c0_20 = arith.constant 0 : index
    %29 = vector.load %arg9[%c0_18, %c0_19, %c0_20] : memref<2x1x8xf32, #tpu.memory_space<vmem>>, vector<1x1x8xf32>
    %30 = vector.shape_cast %29 : vector<1x1x8xf32> to vector<1x8xf32>
    %31 = vector.broadcast %30 : vector<1x8xf32> to vector<8x8xf32>
    %32 = arith.addf %28, %31 : vector<8x8xf32>
    %c0_21 = arith.constant 0 : index
    %c0_22 = arith.constant 0 : index
    %c0_23 = arith.constant 0 : index
    %33 = vector.load %arg7[%c0_21, %c0_22, %c0_23] : memref<2x16x8xf32, #tpu.memory_space<vmem>>, vector<1x16x8xf32>
    %34 = vector.shape_cast %33 : vector<1x16x8xf32> to vector<16x8xf32>
    %cst_24 = arith.constant dense<0.000000e+00> : vector<8x8xf32>
    %35 = tpu.matmul %17, %34, %cst_24 {dimension_numbers = #tpu.dot_dimension_numbers<[1], [0], [0], [1], [0, 0, 1, 1], [], []>} : vector<8x16xf32>, vector<16x8xf32>, vector<8x8xf32> -> vector<8x8xf32>
    %c0_25 = arith.constant 0 : index
    %c0_26 = arith.constant 0 : index
    %c0_27 = arith.constant 0 : index
    %36 = vector.load %arg10[%c0_25, %c0_26, %c0_27] : memref<2x1x8xf32, #tpu.memory_space<vmem>>, vector<1x1x8xf32>
    %37 = vector.shape_cast %36 : vector<1x1x8xf32> to vector<1x8xf32>
    %38 = vector.broadcast %37 : vector<1x8xf32> to vector<8x8xf32>
    %39 = arith.addf %35, %38 : vector<8x8xf32>
    %cst_28 = arith.constant dense<0.000000e+00> : vector<8x8xf32>
    %40 = tpu.matmul %25, %32, %cst_28 {dimension_numbers = #tpu.dot_dimension_numbers<[1], [1], [0], [0], [0, 0, 1, 0], [], []>} : vector<8x8xf32>, vector<8x8xf32>, vector<8x8xf32> -> vector<8x8xf32>
    %cst_29 = arith.constant 0.353553385 : f32
    %41 = vector.broadcast %cst_29 : f32 to vector<8x8xf32>
    %42 = arith.mulf %40, %41 : vector<8x8xf32>
    %cst_30 = arith.constant dense<0xFF800000> : vector<8xf32>
    %43 = vector.multi_reduction <maximumf>, %42, %cst_30 [1] : vector<8x8xf32> to vector<8xf32>
    %44 = vector.shape_cast %43 : vector<8xf32> to vector<8x1xf32>
    %45 = vector.broadcast %44 : vector<8x1xf32> to vector<8x8xf32>
    %46 = arith.subf %42, %45 : vector<8x8xf32>
    %47 = math.exp %46 : vector<8x8xf32>
    %cst_31 = arith.constant dense<0.000000e+00> : vector<8xf32>
    %48 = vector.multi_reduction <add>, %47, %cst_31 [1] : vector<8x8xf32> to vector<8xf32>
    %49 = vector.shape_cast %48 : vector<8xf32> to vector<8x1xf32>
    %50 = tpu.reciprocal %49 {approx = true} : vector<8x1xf32> -> vector<8x1xf32>
    %51 = arith.mulf %49, %50 : vector<8x1xf32>
    %cst_32 = arith.constant 2.000000e+00 : f32
    %52 = vector.broadcast %cst_32 : f32 to vector<8x1xf32>
    %53 = arith.subf %52, %51 : vector<8x1xf32>
    %54 = arith.mulf %50, %53 : vector<8x1xf32>
    %cst_33 = arith.constant dense<0.000000e+00> : vector<8x8xf32>
    %55 = tpu.matmul %47, %39, %cst_33 {dimension_numbers = #tpu.dot_dimension_numbers<[1], [0], [0], [1], [0, 0, 1, 1], [], []>} : vector<8x8xf32>, vector<8x8xf32>, vector<8x8xf32> -> vector<8x8xf32>
    %56 = vector.broadcast %54 : vector<8x1xf32> to vector<8x8xf32>
    %57 = arith.mulf %55, %56 : vector<8x8xf32>
    %c0_34 = arith.constant 0 : index
    %c0_35 = arith.constant 0 : index
    %c0_36 = arith.constant 0 : index
    %58 = vector.load %arg11[%c0_34, %c0_35, %c0_36] : memref<2x8x16xf32, #tpu.memory_space<vmem>>, vector<1x8x16xf32>
    %59 = vector.shape_cast %58 : vector<1x8x16xf32> to vector<8x16xf32>
    %cst_37 = arith.constant dense<0.000000e+00> : vector<8x16xf32>
    %60 = tpu.matmul %57, %59, %cst_37 {dimension_numbers = #tpu.dot_dimension_numbers<[1], [0], [0], [1], [0, 0, 1, 1], [], []>} : vector<8x8xf32>, vector<8x16xf32>, vector<8x16xf32> -> vector<8x16xf32>
    %61 = arith.addf %18, %60 : vector<8x16xf32>
    %c1 = arith.constant 1 : index
    %c0_38 = arith.constant 0 : index
    %c0_39 = arith.constant 0 : index
    %62 = vector.load %arg5[%c1, %c0_38, %c0_39] : memref<2x16x8xf32, #tpu.memory_space<vmem>>, vector<1x16x8xf32>
    %63 = vector.shape_cast %62 : vector<1x16x8xf32> to vector<16x8xf32>
    %cst_40 = arith.constant dense<0.000000e+00> : vector<8x8xf32>
    %64 = tpu.matmul %17, %63, %cst_40 {dimension_numbers = #tpu.dot_dimension_numbers<[1], [0], [0], [1], [0, 0, 1, 1], [], []>} : vector<8x16xf32>, vector<16x8xf32>, vector<8x8xf32> -> vector<8x8xf32>
    %c1_41 = arith.constant 1 : index
    %c0_42 = arith.constant 0 : index
    %c0_43 = arith.constant 0 : index
    %65 = vector.load %arg8[%c1_41, %c0_42, %c0_43] : memref<2x1x8xf32, #tpu.memory_space<vmem>>, vector<1x1x8xf32>
    %66 = vector.shape_cast %65 : vector<1x1x8xf32> to vector<1x8xf32>
    %67 = vector.broadcast %66 : vector<1x8xf32> to vector<8x8xf32>
    %68 = arith.addf %64, %67 : vector<8x8xf32>
    %c1_44 = arith.constant 1 : index
    %c0_45 = arith.constant 0 : index
    %c0_46 = arith.constant 0 : index
    %69 = vector.load %arg6[%c1_44, %c0_45, %c0_46] : memref<2x16x8xf32, #tpu.memory_space<vmem>>, vector<1x16x8xf32>
    %70 = vector.shape_cast %69 : vector<1x16x8xf32> to vector<16x8xf32>
    %cst_47 = arith.constant dense<0.000000e+00> : vector<8x8xf32>
    %71 = tpu.matmul %17, %70, %cst_47 {dimension_numbers = #tpu.dot_dimension_numbers<[1], [0], [0], [1], [0, 0, 1, 1], [], []>} : vector<8x16xf32>, vector<16x8xf32>, vector<8x8xf32> -> vector<8x8xf32>
    %c1_48 = arith.constant 1 : index
    %c0_49 = arith.constant 0 : index
    %c0_50 = arith.constant 0 : index
    %72 = vector.load %arg9[%c1_48, %c0_49, %c0_50] : memref<2x1x8xf32, #tpu.memory_space<vmem>>, vector<1x1x8xf32>
    %73 = vector.shape_cast %72 : vector<1x1x8xf32> to vector<1x8xf32>
    %74 = vector.broadcast %73 : vector<1x8xf32> to vector<8x8xf32>
    %75 = arith.addf %71, %74 : vector<8x8xf32>
    %c1_51 = arith.constant 1 : index
    %c0_52 = arith.constant 0 : index
    %c0_53 = arith.constant 0 : index
    %76 = vector.load %arg7[%c1_51, %c0_52, %c0_53] : memref<2x16x8xf32, #tpu.memory_space<vmem>>, vector<1x16x8xf32>
    %77 = vector.shape_cast %76 : vector<1x16x8xf32> to vector<16x8xf32>
    %cst_54 = arith.constant dense<0.000000e+00> : vector<8x8xf32>
    %78 = tpu.matmul %17, %77, %cst_54 {dimension_numbers = #tpu.dot_dimension_numbers<[1], [0], [0], [1], [0, 0, 1, 1], [], []>} : vector<8x16xf32>, vector<16x8xf32>, vector<8x8xf32> -> vector<8x8xf32>
    %c1_55 = arith.constant 1 : index
    %c0_56 = arith.constant 0 : index
    %c0_57 = arith.constant 0 : index
    %79 = vector.load %arg10[%c1_55, %c0_56, %c0_57] : memref<2x1x8xf32, #tpu.memory_space<vmem>>, vector<1x1x8xf32>
    %80 = vector.shape_cast %79 : vector<1x1x8xf32> to vector<1x8xf32>
    %81 = vector.broadcast %80 : vector<1x8xf32> to vector<8x8xf32>
    %82 = arith.addf %78, %81 : vector<8x8xf32>
    %cst_58 = arith.constant dense<0.000000e+00> : vector<8x8xf32>
    %83 = tpu.matmul %68, %75, %cst_58 {dimension_numbers = #tpu.dot_dimension_numbers<[1], [1], [0], [0], [0, 0, 1, 0], [], []>} : vector<8x8xf32>, vector<8x8xf32>, vector<8x8xf32> -> vector<8x8xf32>
    %cst_59 = arith.constant 0.353553385 : f32
    %84 = vector.broadcast %cst_59 : f32 to vector<8x8xf32>
    %85 = arith.mulf %83, %84 : vector<8x8xf32>
    %cst_60 = arith.constant dense<0xFF800000> : vector<8xf32>
    %86 = vector.multi_reduction <maximumf>, %85, %cst_60 [1] : vector<8x8xf32> to vector<8xf32>
    %87 = vector.shape_cast %86 : vector<8xf32> to vector<8x1xf32>
    %88 = vector.broadcast %87 : vector<8x1xf32> to vector<8x8xf32>
    %89 = arith.subf %85, %88 : vector<8x8xf32>
    %90 = math.exp %89 : vector<8x8xf32>
    %cst_61 = arith.constant dense<0.000000e+00> : vector<8xf32>
    %91 = vector.multi_reduction <add>, %90, %cst_61 [1] : vector<8x8xf32> to vector<8xf32>
    %92 = vector.shape_cast %91 : vector<8xf32> to vector<8x1xf32>
    %93 = tpu.reciprocal %92 {approx = true} : vector<8x1xf32> -> vector<8x1xf32>
    %94 = arith.mulf %92, %93 : vector<8x1xf32>
    %cst_62 = arith.constant 2.000000e+00 : f32
    %95 = vector.broadcast %cst_62 : f32 to vector<8x1xf32>
    %96 = arith.subf %95, %94 : vector<8x1xf32>
    %97 = arith.mulf %93, %96 : vector<8x1xf32>
    %cst_63 = arith.constant dense<0.000000e+00> : vector<8x8xf32>
    %98 = tpu.matmul %90, %82, %cst_63 {dimension_numbers = #tpu.dot_dimension_numbers<[1], [0], [0], [1], [0, 0, 1, 1], [], []>} : vector<8x8xf32>, vector<8x8xf32>, vector<8x8xf32> -> vector<8x8xf32>
    %99 = vector.broadcast %97 : vector<8x1xf32> to vector<8x8xf32>
    %100 = arith.mulf %98, %99 : vector<8x8xf32>
    %c1_64 = arith.constant 1 : index
    %c0_65 = arith.constant 0 : index
    %c0_66 = arith.constant 0 : index
    %101 = vector.load %arg11[%c1_64, %c0_65, %c0_66] : memref<2x8x16xf32, #tpu.memory_space<vmem>>, vector<1x8x16xf32>
    %102 = vector.shape_cast %101 : vector<1x8x16xf32> to vector<8x16xf32>
    %cst_67 = arith.constant dense<0.000000e+00> : vector<8x16xf32>
    %103 = tpu.matmul %100, %102, %cst_67 {dimension_numbers = #tpu.dot_dimension_numbers<[1], [0], [0], [1], [0, 0, 1, 1], [], []>} : vector<8x8xf32>, vector<8x16xf32>, vector<8x16xf32> -> vector<8x16xf32>
    %104 = arith.addf %61, %103 : vector<8x16xf32>
    %105 = arith.addf %1, %104 : vector<8x16xf32>
    %c0_68 = arith.constant 0 : index
    %c0_69 = arith.constant 0 : index
    %106 = vector.load %arg12[%c0_68, %c0_69] : memref<1x16xf32, #tpu.memory_space<vmem>>, vector<1x16xf32>
    %107 = vector.broadcast %106 : vector<1x16xf32> to vector<8x16xf32>
    %108 = arith.addf %105, %107 : vector<8x16xf32>
    %cst_70 = arith.constant dense<0.000000e+00> : vector<8xf32>
    %109 = vector.multi_reduction <add>, %108, %cst_70 [1] : vector<8x16xf32> to vector<8xf32>
    %110 = vector.shape_cast %109 : vector<8xf32> to vector<8x1xf32>
    %cst_71 = arith.constant 1.600000e+01 : f32
    %111 = vector.broadcast %cst_71 : f32 to vector<8x1xf32>
    %112 = arith.divf %110, %111 : vector<8x1xf32>
    %113 = vector.broadcast %112 : vector<8x1xf32> to vector<8x16xf32>
    %114 = arith.subf %108, %113 : vector<8x16xf32>
    %115 = arith.mulf %114, %114 : vector<8x16xf32>
    %cst_72 = arith.constant dense<0.000000e+00> : vector<8xf32>
    %116 = vector.multi_reduction <add>, %115, %cst_72 [1] : vector<8x16xf32> to vector<8xf32>
    %117 = vector.shape_cast %116 : vector<8xf32> to vector<8x1xf32>
    %cst_73 = arith.constant 1.600000e+01 : f32
    %118 = vector.broadcast %cst_73 : f32 to vector<8x1xf32>
    %119 = arith.divf %117, %118 : vector<8x1xf32>
    %cst_74 = arith.constant 9.99999974E-6 : f32
    %120 = vector.broadcast %cst_74 : f32 to vector<8x1xf32>
    %121 = arith.addf %119, %120 : vector<8x1xf32>
    %122 = math.rsqrt %121 : vector<8x1xf32>
    %123 = vector.broadcast %122 : vector<8x1xf32> to vector<8x16xf32>
    %124 = arith.mulf %114, %123 : vector<8x16xf32>
    %c0_75 = arith.constant 0 : index
    %c0_76 = arith.constant 0 : index
    %125 = vector.load %arg13[%c0_75, %c0_76] : memref<16x32xf32, #tpu.memory_space<vmem>>, vector<16x32xf32>
    %cst_77 = arith.constant dense<0.000000e+00> : vector<8x32xf32>
    %126 = tpu.matmul %124, %125, %cst_77 {dimension_numbers = #tpu.dot_dimension_numbers<[1], [0], [0], [1], [0, 0, 1, 1], [], []>} : vector<8x16xf32>, vector<16x32xf32>, vector<8x32xf32> -> vector<8x32xf32>
    %c0_78 = arith.constant 0 : index
    %c0_79 = arith.constant 0 : index
    %127 = vector.load %arg14[%c0_78, %c0_79] : memref<1x32xf32, #tpu.memory_space<vmem>>, vector<1x32xf32>
    %128 = vector.broadcast %127 : vector<1x32xf32> to vector<8x32xf32>
    %129 = arith.addf %126, %128 : vector<8x32xf32>
    %cst_80 = arith.constant 5.000000e-01 : f32
    %130 = vector.broadcast %cst_80 : f32 to vector<8x32xf32>
    %131 = arith.mulf %130, %129 : vector<8x32xf32>
    %cst_81 = arith.constant 0.707106769 : f32
    %132 = vector.broadcast %cst_81 : f32 to vector<8x32xf32>
    %133 = arith.mulf %129, %132 : vector<8x32xf32>
    %134 = math.absf %133 : vector<8x32xf32>
    %cst_82 = arith.constant 0.327591091 : f32
    %135 = vector.broadcast %cst_82 : f32 to vector<8x32xf32>
    %136 = arith.mulf %135, %134 : vector<8x32xf32>
    %cst_83 = arith.constant 1.000000e+00 : f32
    %137 = vector.broadcast %cst_83 : f32 to vector<8x32xf32>
    %138 = arith.addf %137, %136 : vector<8x32xf32>
    %139 = tpu.reciprocal %138 : vector<8x32xf32> -> vector<8x32xf32>
    %cst_84 = arith.constant 1.06140542 : f32
    %140 = vector.broadcast %cst_84 : f32 to vector<8x32xf32>
    %141 = arith.mulf %140, %139 : vector<8x32xf32>
    %cst_85 = arith.constant -1.45315206 : f32
    %142 = vector.broadcast %cst_85 : f32 to vector<8x32xf32>
    %143 = arith.addf %141, %142 : vector<8x32xf32>
    %144 = arith.mulf %143, %139 : vector<8x32xf32>
    %cst_86 = arith.constant 1.42141378 : f32
    %145 = vector.broadcast %cst_86 : f32 to vector<8x32xf32>
    %146 = arith.addf %144, %145 : vector<8x32xf32>
    %147 = arith.mulf %146, %139 : vector<8x32xf32>
    %cst_87 = arith.constant -0.284496725 : f32
    %148 = vector.broadcast %cst_87 : f32 to vector<8x32xf32>
    %149 = arith.addf %147, %148 : vector<8x32xf32>
    %150 = arith.mulf %149, %139 : vector<8x32xf32>
    %cst_88 = arith.constant 0.254829586 : f32
    %151 = vector.broadcast %cst_88 : f32 to vector<8x32xf32>
    %152 = arith.addf %150, %151 : vector<8x32xf32>
    %153 = arith.mulf %152, %139 : vector<8x32xf32>
    %cst_89 = arith.constant 0.000000e+00 : f32
    %154 = vector.broadcast %cst_89 : f32 to vector<8x32xf32>
    %155 = arith.subf %154, %134 : vector<8x32xf32>
    %156 = arith.mulf %155, %134 : vector<8x32xf32>
    %157 = math.exp %156 : vector<8x32xf32>
    %158 = arith.mulf %153, %157 : vector<8x32xf32>
    %cst_90 = arith.constant 1.000000e+00 : f32
    %159 = vector.broadcast %cst_90 : f32 to vector<8x32xf32>
    %160 = arith.subf %159, %158 : vector<8x32xf32>
    %cst_91 = arith.constant 0.000000e+00 : f32
    %161 = vector.broadcast %cst_91 : f32 to vector<8x32xf32>
    %162 = arith.cmpf oge, %133, %161 : vector<8x32xf32>
    %cst_92 = arith.constant 0.000000e+00 : f32
    %163 = vector.broadcast %cst_92 : f32 to vector<8x32xf32>
    %164 = arith.subf %163, %160 : vector<8x32xf32>
    %165 = arith.select %162, %160, %164 : vector<8x32xi1>, vector<8x32xf32>
    %cst_93 = arith.constant 1.000000e+00 : f32
    %166 = vector.broadcast %cst_93 : f32 to vector<8x32xf32>
    %167 = arith.addf %166, %165 : vector<8x32xf32>
    %168 = arith.mulf %131, %167 : vector<8x32xf32>
    %c0_94 = arith.constant 0 : index
    %c0_95 = arith.constant 0 : index
    %169 = vector.load %arg15[%c0_94, %c0_95] : memref<32x16xf32, #tpu.memory_space<vmem>>, vector<32x16xf32>
    %cst_96 = arith.constant dense<0.000000e+00> : vector<8x16xf32>
    %170 = tpu.matmul %168, %169, %cst_96 {dimension_numbers = #tpu.dot_dimension_numbers<[1], [0], [0], [1], [0, 0, 1, 1], [], []>} : vector<8x32xf32>, vector<32x16xf32>, vector<8x16xf32> -> vector<8x16xf32>
    %c0_97 = arith.constant 0 : index
    %c0_98 = arith.constant 0 : index
    %171 = vector.load %arg16[%c0_97, %c0_98] : memref<1x16xf32, #tpu.memory_space<vmem>>, vector<1x16xf32>
    %172 = vector.broadcast %171 : vector<1x16xf32> to vector<8x16xf32>
    %173 = arith.addf %170, %172 : vector<8x16xf32>
    %174 = arith.addf %108, %173 : vector<8x16xf32>
    %cst_99 = arith.constant dense<0.000000e+00> : vector<8xf32>
    %175 = vector.multi_reduction <add>, %174, %cst_99 [1] : vector<8x16xf32> to vector<8xf32>
    %176 = vector.shape_cast %175 : vector<8xf32> to vector<8x1xf32>
    %cst_100 = arith.constant 1.600000e+01 : f32
    %177 = vector.broadcast %cst_100 : f32 to vector<8x1xf32>
    %178 = arith.divf %176, %177 : vector<8x1xf32>
    %179 = vector.broadcast %178 : vector<8x1xf32> to vector<8x16xf32>
    %180 = arith.subf %174, %179 : vector<8x16xf32>
    %181 = arith.mulf %180, %180 : vector<8x16xf32>
    %cst_101 = arith.constant dense<0.000000e+00> : vector<8xf32>
    %182 = vector.multi_reduction <add>, %181, %cst_101 [1] : vector<8x16xf32> to vector<8xf32>
    %183 = vector.shape_cast %182 : vector<8xf32> to vector<8x1xf32>
    %cst_102 = arith.constant 1.600000e+01 : f32
    %184 = vector.broadcast %cst_102 : f32 to vector<8x1xf32>
    %185 = arith.divf %183, %184 : vector<8x1xf32>
    %cst_103 = arith.constant 9.99999974E-6 : f32
    %186 = vector.broadcast %cst_103 : f32 to vector<8x1xf32>
    %187 = arith.addf %185, %186 : vector<8x1xf32>
    %188 = math.rsqrt %187 : vector<8x1xf32>
    %189 = vector.broadcast %188 : vector<8x1xf32> to vector<8x16xf32>
    %190 = arith.mulf %180, %189 : vector<8x16xf32>
    %cst_104 = arith.constant 0.000000e+00 : f32
    %191 = vector.broadcast %cst_104 : f32 to vector<8x16xf32>
    %c0_105 = arith.constant 0 : index
    %c0_106 = arith.constant 0 : index
    %c0_107 = arith.constant 0 : index
    %192 = vector.load %arg17[%c0_105, %c0_106, %c0_107] : memref<2x16x8xf32, #tpu.memory_space<vmem>>, vector<1x16x8xf32>
    %193 = vector.shape_cast %192 : vector<1x16x8xf32> to vector<16x8xf32>
    %cst_108 = arith.constant dense<0.000000e+00> : vector<8x8xf32>
    %194 = tpu.matmul %190, %193, %cst_108 {dimension_numbers = #tpu.dot_dimension_numbers<[1], [0], [0], [1], [0, 0, 1, 1], [], []>} : vector<8x16xf32>, vector<16x8xf32>, vector<8x8xf32> -> vector<8x8xf32>
    %c0_109 = arith.constant 0 : index
    %c0_110 = arith.constant 0 : index
    %c0_111 = arith.constant 0 : index
    %195 = vector.load %arg20[%c0_109, %c0_110, %c0_111] : memref<2x1x8xf32, #tpu.memory_space<vmem>>, vector<1x1x8xf32>
    %196 = vector.shape_cast %195 : vector<1x1x8xf32> to vector<1x8xf32>
    %197 = vector.broadcast %196 : vector<1x8xf32> to vector<8x8xf32>
    %198 = arith.addf %194, %197 : vector<8x8xf32>
    %c0_112 = arith.constant 0 : index
    %c0_113 = arith.constant 0 : index
    %c0_114 = arith.constant 0 : index
    %199 = vector.load %arg18[%c0_112, %c0_113, %c0_114] : memref<2x16x8xf32, #tpu.memory_space<vmem>>, vector<1x16x8xf32>
    %200 = vector.shape_cast %199 : vector<1x16x8xf32> to vector<16x8xf32>
    %cst_115 = arith.constant dense<0.000000e+00> : vector<8x8xf32>
    %201 = tpu.matmul %190, %200, %cst_115 {dimension_numbers = #tpu.dot_dimension_numbers<[1], [0], [0], [1], [0, 0, 1, 1], [], []>} : vector<8x16xf32>, vector<16x8xf32>, vector<8x8xf32> -> vector<8x8xf32>
    %c0_116 = arith.constant 0 : index
    %c0_117 = arith.constant 0 : index
    %c0_118 = arith.constant 0 : index
    %202 = vector.load %arg21[%c0_116, %c0_117, %c0_118] : memref<2x1x8xf32, #tpu.memory_space<vmem>>, vector<1x1x8xf32>
    %203 = vector.shape_cast %202 : vector<1x1x8xf32> to vector<1x8xf32>
    %204 = vector.broadcast %203 : vector<1x8xf32> to vector<8x8xf32>
    %205 = arith.addf %201, %204 : vector<8x8xf32>
    %c0_119 = arith.constant 0 : index
    %c0_120 = arith.constant 0 : index
    %c0_121 = arith.constant 0 : index
    %206 = vector.load %arg19[%c0_119, %c0_120, %c0_121] : memref<2x16x8xf32, #tpu.memory_space<vmem>>, vector<1x16x8xf32>
    %207 = vector.shape_cast %206 : vector<1x16x8xf32> to vector<16x8xf32>
    %cst_122 = arith.constant dense<0.000000e+00> : vector<8x8xf32>
    %208 = tpu.matmul %190, %207, %cst_122 {dimension_numbers = #tpu.dot_dimension_numbers<[1], [0], [0], [1], [0, 0, 1, 1], [], []>} : vector<8x16xf32>, vector<16x8xf32>, vector<8x8xf32> -> vector<8x8xf32>
    %c0_123 = arith.constant 0 : index
    %c0_124 = arith.constant 0 : index
    %c0_125 = arith.constant 0 : index
    %209 = vector.load %arg22[%c0_123, %c0_124, %c0_125] : memref<2x1x8xf32, #tpu.memory_space<vmem>>, vector<1x1x8xf32>
    %210 = vector.shape_cast %209 : vector<1x1x8xf32> to vector<1x8xf32>
    %211 = vector.broadcast %210 : vector<1x8xf32> to vector<8x8xf32>
    %212 = arith.addf %208, %211 : vector<8x8xf32>
    %cst_126 = arith.constant dense<0.000000e+00> : vector<8x8xf32>
    %213 = tpu.matmul %198, %205, %cst_126 {dimension_numbers = #tpu.dot_dimension_numbers<[1], [1], [0], [0], [0, 0, 1, 0], [], []>} : vector<8x8xf32>, vector<8x8xf32>, vector<8x8xf32> -> vector<8x8xf32>
    %cst_127 = arith.constant 0.353553385 : f32
    %214 = vector.broadcast %cst_127 : f32 to vector<8x8xf32>
    %215 = arith.mulf %213, %214 : vector<8x8xf32>
    %cst_128 = arith.constant dense<0xFF800000> : vector<8xf32>
    %216 = vector.multi_reduction <maximumf>, %215, %cst_128 [1] : vector<8x8xf32> to vector<8xf32>
    %217 = vector.shape_cast %216 : vector<8xf32> to vector<8x1xf32>
    %218 = vector.broadcast %217 : vector<8x1xf32> to vector<8x8xf32>
    %219 = arith.subf %215, %218 : vector<8x8xf32>
    %220 = math.exp %219 : vector<8x8xf32>
    %cst_129 = arith.constant dense<0.000000e+00> : vector<8xf32>
    %221 = vector.multi_reduction <add>, %220, %cst_129 [1] : vector<8x8xf32> to vector<8xf32>
    %222 = vector.shape_cast %221 : vector<8xf32> to vector<8x1xf32>
    %223 = tpu.reciprocal %222 {approx = true} : vector<8x1xf32> -> vector<8x1xf32>
    %224 = arith.mulf %222, %223 : vector<8x1xf32>
    %cst_130 = arith.constant 2.000000e+00 : f32
    %225 = vector.broadcast %cst_130 : f32 to vector<8x1xf32>
    %226 = arith.subf %225, %224 : vector<8x1xf32>
    %227 = arith.mulf %223, %226 : vector<8x1xf32>
    %cst_131 = arith.constant dense<0.000000e+00> : vector<8x8xf32>
    %228 = tpu.matmul %220, %212, %cst_131 {dimension_numbers = #tpu.dot_dimension_numbers<[1], [0], [0], [1], [0, 0, 1, 1], [], []>} : vector<8x8xf32>, vector<8x8xf32>, vector<8x8xf32> -> vector<8x8xf32>
    %229 = vector.broadcast %227 : vector<8x1xf32> to vector<8x8xf32>
    %230 = arith.mulf %228, %229 : vector<8x8xf32>
    %c0_132 = arith.constant 0 : index
    %c0_133 = arith.constant 0 : index
    %c0_134 = arith.constant 0 : index
    %231 = vector.load %arg23[%c0_132, %c0_133, %c0_134] : memref<2x8x16xf32, #tpu.memory_space<vmem>>, vector<1x8x16xf32>
    %232 = vector.shape_cast %231 : vector<1x8x16xf32> to vector<8x16xf32>
    %cst_135 = arith.constant dense<0.000000e+00> : vector<8x16xf32>
    %233 = tpu.matmul %230, %232, %cst_135 {dimension_numbers = #tpu.dot_dimension_numbers<[1], [0], [0], [1], [0, 0, 1, 1], [], []>} : vector<8x8xf32>, vector<8x16xf32>, vector<8x16xf32> -> vector<8x16xf32>
    %234 = arith.addf %191, %233 : vector<8x16xf32>
    %c1_136 = arith.constant 1 : index
    %c0_137 = arith.constant 0 : index
    %c0_138 = arith.constant 0 : index
    %235 = vector.load %arg17[%c1_136, %c0_137, %c0_138] : memref<2x16x8xf32, #tpu.memory_space<vmem>>, vector<1x16x8xf32>
    %236 = vector.shape_cast %235 : vector<1x16x8xf32> to vector<16x8xf32>
    %cst_139 = arith.constant dense<0.000000e+00> : vector<8x8xf32>
    %237 = tpu.matmul %190, %236, %cst_139 {dimension_numbers = #tpu.dot_dimension_numbers<[1], [0], [0], [1], [0, 0, 1, 1], [], []>} : vector<8x16xf32>, vector<16x8xf32>, vector<8x8xf32> -> vector<8x8xf32>
    %c1_140 = arith.constant 1 : index
    %c0_141 = arith.constant 0 : index
    %c0_142 = arith.constant 0 : index
    %238 = vector.load %arg20[%c1_140, %c0_141, %c0_142] : memref<2x1x8xf32, #tpu.memory_space<vmem>>, vector<1x1x8xf32>
    %239 = vector.shape_cast %238 : vector<1x1x8xf32> to vector<1x8xf32>
    %240 = vector.broadcast %239 : vector<1x8xf32> to vector<8x8xf32>
    %241 = arith.addf %237, %240 : vector<8x8xf32>
    %c1_143 = arith.constant 1 : index
    %c0_144 = arith.constant 0 : index
    %c0_145 = arith.constant 0 : index
    %242 = vector.load %arg18[%c1_143, %c0_144, %c0_145] : memref<2x16x8xf32, #tpu.memory_space<vmem>>, vector<1x16x8xf32>
    %243 = vector.shape_cast %242 : vector<1x16x8xf32> to vector<16x8xf32>
    %cst_146 = arith.constant dense<0.000000e+00> : vector<8x8xf32>
    %244 = tpu.matmul %190, %243, %cst_146 {dimension_numbers = #tpu.dot_dimension_numbers<[1], [0], [0], [1], [0, 0, 1, 1], [], []>} : vector<8x16xf32>, vector<16x8xf32>, vector<8x8xf32> -> vector<8x8xf32>
    %c1_147 = arith.constant 1 : index
    %c0_148 = arith.constant 0 : index
    %c0_149 = arith.constant 0 : index
    %245 = vector.load %arg21[%c1_147, %c0_148, %c0_149] : memref<2x1x8xf32, #tpu.memory_space<vmem>>, vector<1x1x8xf32>
    %246 = vector.shape_cast %245 : vector<1x1x8xf32> to vector<1x8xf32>
    %247 = vector.broadcast %246 : vector<1x8xf32> to vector<8x8xf32>
    %248 = arith.addf %244, %247 : vector<8x8xf32>
    %c1_150 = arith.constant 1 : index
    %c0_151 = arith.constant 0 : index
    %c0_152 = arith.constant 0 : index
    %249 = vector.load %arg19[%c1_150, %c0_151, %c0_152] : memref<2x16x8xf32, #tpu.memory_space<vmem>>, vector<1x16x8xf32>
    %250 = vector.shape_cast %249 : vector<1x16x8xf32> to vector<16x8xf32>
    %cst_153 = arith.constant dense<0.000000e+00> : vector<8x8xf32>
    %251 = tpu.matmul %190, %250, %cst_153 {dimension_numbers = #tpu.dot_dimension_numbers<[1], [0], [0], [1], [0, 0, 1, 1], [], []>} : vector<8x16xf32>, vector<16x8xf32>, vector<8x8xf32> -> vector<8x8xf32>
    %c1_154 = arith.constant 1 : index
    %c0_155 = arith.constant 0 : index
    %c0_156 = arith.constant 0 : index
    %252 = vector.load %arg22[%c1_154, %c0_155, %c0_156] : memref<2x1x8xf32, #tpu.memory_space<vmem>>, vector<1x1x8xf32>
    %253 = vector.shape_cast %252 : vector<1x1x8xf32> to vector<1x8xf32>
    %254 = vector.broadcast %253 : vector<1x8xf32> to vector<8x8xf32>
    %255 = arith.addf %251, %254 : vector<8x8xf32>
    %cst_157 = arith.constant dense<0.000000e+00> : vector<8x8xf32>
    %256 = tpu.matmul %241, %248, %cst_157 {dimension_numbers = #tpu.dot_dimension_numbers<[1], [1], [0], [0], [0, 0, 1, 0], [], []>} : vector<8x8xf32>, vector<8x8xf32>, vector<8x8xf32> -> vector<8x8xf32>
    %cst_158 = arith.constant 0.353553385 : f32
    %257 = vector.broadcast %cst_158 : f32 to vector<8x8xf32>
    %258 = arith.mulf %256, %257 : vector<8x8xf32>
    %cst_159 = arith.constant dense<0xFF800000> : vector<8xf32>
    %259 = vector.multi_reduction <maximumf>, %258, %cst_159 [1] : vector<8x8xf32> to vector<8xf32>
    %260 = vector.shape_cast %259 : vector<8xf32> to vector<8x1xf32>
    %261 = vector.broadcast %260 : vector<8x1xf32> to vector<8x8xf32>
    %262 = arith.subf %258, %261 : vector<8x8xf32>
    %263 = math.exp %262 : vector<8x8xf32>
    %cst_160 = arith.constant dense<0.000000e+00> : vector<8xf32>
    %264 = vector.multi_reduction <add>, %263, %cst_160 [1] : vector<8x8xf32> to vector<8xf32>
    %265 = vector.shape_cast %264 : vector<8xf32> to vector<8x1xf32>
    %266 = tpu.reciprocal %265 {approx = true} : vector<8x1xf32> -> vector<8x1xf32>
    %267 = arith.mulf %265, %266 : vector<8x1xf32>
    %cst_161 = arith.constant 2.000000e+00 : f32
    %268 = vector.broadcast %cst_161 : f32 to vector<8x1xf32>
    %269 = arith.subf %268, %267 : vector<8x1xf32>
    %270 = arith.mulf %266, %269 : vector<8x1xf32>
    %cst_162 = arith.constant dense<0.000000e+00> : vector<8x8xf32>
    %271 = tpu.matmul %263, %255, %cst_162 {dimension_numbers = #tpu.dot_dimension_numbers<[1], [0], [0], [1], [0, 0, 1, 1], [], []>} : vector<8x8xf32>, vector<8x8xf32>, vector<8x8xf32> -> vector<8x8xf32>
    %272 = vector.broadcast %270 : vector<8x1xf32> to vector<8x8xf32>
    %273 = arith.mulf %271, %272 : vector<8x8xf32>
    %c1_163 = arith.constant 1 : index
    %c0_164 = arith.constant 0 : index
    %c0_165 = arith.constant 0 : index
    %274 = vector.load %arg23[%c1_163, %c0_164, %c0_165] : memref<2x8x16xf32, #tpu.memory_space<vmem>>, vector<1x8x16xf32>
    %275 = vector.shape_cast %274 : vector<1x8x16xf32> to vector<8x16xf32>
    %cst_166 = arith.constant dense<0.000000e+00> : vector<8x16xf32>
    %276 = tpu.matmul %273, %275, %cst_166 {dimension_numbers = #tpu.dot_dimension_numbers<[1], [0], [0], [1], [0, 0, 1, 1], [], []>} : vector<8x8xf32>, vector<8x16xf32>, vector<8x16xf32> -> vector<8x16xf32>
    %277 = arith.addf %234, %276 : vector<8x16xf32>
    %278 = arith.addf %174, %277 : vector<8x16xf32>
    %c0_167 = arith.constant 0 : index
    %c0_168 = arith.constant 0 : index
    %279 = vector.load %arg24[%c0_167, %c0_168] : memref<1x16xf32, #tpu.memory_space<vmem>>, vector<1x16xf32>
    %280 = vector.broadcast %279 : vector<1x16xf32> to vector<8x16xf32>
    %281 = arith.addf %278, %280 : vector<8x16xf32>
    %cst_169 = arith.constant dense<0.000000e+00> : vector<8xf32>
    %282 = vector.multi_reduction <add>, %281, %cst_169 [1] : vector<8x16xf32> to vector<8xf32>
    %283 = vector.shape_cast %282 : vector<8xf32> to vector<8x1xf32>
    %cst_170 = arith.constant 1.600000e+01 : f32
    %284 = vector.broadcast %cst_170 : f32 to vector<8x1xf32>
    %285 = arith.divf %283, %284 : vector<8x1xf32>
    %286 = vector.broadcast %285 : vector<8x1xf32> to vector<8x16xf32>
    %287 = arith.subf %281, %286 : vector<8x16xf32>
    %288 = arith.mulf %287, %287 : vector<8x16xf32>
    %cst_171 = arith.constant dense<0.000000e+00> : vector<8xf32>
    %289 = vector.multi_reduction <add>, %288, %cst_171 [1] : vector<8x16xf32> to vector<8xf32>
    %290 = vector.shape_cast %289 : vector<8xf32> to vector<8x1xf32>
    %cst_172 = arith.constant 1.600000e+01 : f32
    %291 = vector.broadcast %cst_172 : f32 to vector<8x1xf32>
    %292 = arith.divf %290, %291 : vector<8x1xf32>
    %cst_173 = arith.constant 9.99999974E-6 : f32
    %293 = vector.broadcast %cst_173 : f32 to vector<8x1xf32>
    %294 = arith.addf %292, %293 : vector<8x1xf32>
    %295 = math.rsqrt %294 : vector<8x1xf32>
    %296 = vector.broadcast %295 : vector<8x1xf32> to vector<8x16xf32>
    %297 = arith.mulf %287, %296 : vector<8x16xf32>
    %c0_174 = arith.constant 0 : index
    %c0_175 = arith.constant 0 : index
    %298 = vector.load %arg25[%c0_174, %c0_175] : memref<16x32xf32, #tpu.memory_space<vmem>>, vector<16x32xf32>
    %cst_176 = arith.constant dense<0.000000e+00> : vector<8x32xf32>
    %299 = tpu.matmul %297, %298, %cst_176 {dimension_numbers = #tpu.dot_dimension_numbers<[1], [0], [0], [1], [0, 0, 1, 1], [], []>} : vector<8x16xf32>, vector<16x32xf32>, vector<8x32xf32> -> vector<8x32xf32>
    %c0_177 = arith.constant 0 : index
    %c0_178 = arith.constant 0 : index
    %300 = vector.load %arg26[%c0_177, %c0_178] : memref<1x32xf32, #tpu.memory_space<vmem>>, vector<1x32xf32>
    %301 = vector.broadcast %300 : vector<1x32xf32> to vector<8x32xf32>
    %302 = arith.addf %299, %301 : vector<8x32xf32>
    %cst_179 = arith.constant 5.000000e-01 : f32
    %303 = vector.broadcast %cst_179 : f32 to vector<8x32xf32>
    %304 = arith.mulf %303, %302 : vector<8x32xf32>
    %cst_180 = arith.constant 0.707106769 : f32
    %305 = vector.broadcast %cst_180 : f32 to vector<8x32xf32>
    %306 = arith.mulf %302, %305 : vector<8x32xf32>
    %307 = math.absf %306 : vector<8x32xf32>
    %cst_181 = arith.constant 0.327591091 : f32
    %308 = vector.broadcast %cst_181 : f32 to vector<8x32xf32>
    %309 = arith.mulf %308, %307 : vector<8x32xf32>
    %cst_182 = arith.constant 1.000000e+00 : f32
    %310 = vector.broadcast %cst_182 : f32 to vector<8x32xf32>
    %311 = arith.addf %310, %309 : vector<8x32xf32>
    %312 = tpu.reciprocal %311 : vector<8x32xf32> -> vector<8x32xf32>
    %cst_183 = arith.constant 1.06140542 : f32
    %313 = vector.broadcast %cst_183 : f32 to vector<8x32xf32>
    %314 = arith.mulf %313, %312 : vector<8x32xf32>
    %cst_184 = arith.constant -1.45315206 : f32
    %315 = vector.broadcast %cst_184 : f32 to vector<8x32xf32>
    %316 = arith.addf %314, %315 : vector<8x32xf32>
    %317 = arith.mulf %316, %312 : vector<8x32xf32>
    %cst_185 = arith.constant 1.42141378 : f32
    %318 = vector.broadcast %cst_185 : f32 to vector<8x32xf32>
    %319 = arith.addf %317, %318 : vector<8x32xf32>
    %320 = arith.mulf %319, %312 : vector<8x32xf32>
    %cst_186 = arith.constant -0.284496725 : f32
    %321 = vector.broadcast %cst_186 : f32 to vector<8x32xf32>
    %322 = arith.addf %320, %321 : vector<8x32xf32>
    %323 = arith.mulf %322, %312 : vector<8x32xf32>
    %cst_187 = arith.constant 0.254829586 : f32
    %324 = vector.broadcast %cst_187 : f32 to vector<8x32xf32>
    %325 = arith.addf %323, %324 : vector<8x32xf32>
    %326 = arith.mulf %325, %312 : vector<8x32xf32>
    %cst_188 = arith.constant 0.000000e+00 : f32
    %327 = vector.broadcast %cst_188 : f32 to vector<8x32xf32>
    %328 = arith.subf %327, %307 : vector<8x32xf32>
    %329 = arith.mulf %328, %307 : vector<8x32xf32>
    %330 = math.exp %329 : vector<8x32xf32>
    %331 = arith.mulf %326, %330 : vector<8x32xf32>
    %cst_189 = arith.constant 1.000000e+00 : f32
    %332 = vector.broadcast %cst_189 : f32 to vector<8x32xf32>
    %333 = arith.subf %332, %331 : vector<8x32xf32>
    %cst_190 = arith.constant 0.000000e+00 : f32
    %334 = vector.broadcast %cst_190 : f32 to vector<8x32xf32>
    %335 = arith.cmpf oge, %306, %334 : vector<8x32xf32>
    %cst_191 = arith.constant 0.000000e+00 : f32
    %336 = vector.broadcast %cst_191 : f32 to vector<8x32xf32>
    %337 = arith.subf %336, %333 : vector<8x32xf32>
    %338 = arith.select %335, %333, %337 : vector<8x32xi1>, vector<8x32xf32>
    %cst_192 = arith.constant 1.000000e+00 : f32
    %339 = vector.broadcast %cst_192 : f32 to vector<8x32xf32>
    %340 = arith.addf %339, %338 : vector<8x32xf32>
    %341 = arith.mulf %304, %340 : vector<8x32xf32>
    %c0_193 = arith.constant 0 : index
    %c0_194 = arith.constant 0 : index
    %342 = vector.load %arg27[%c0_193, %c0_194] : memref<32x16xf32, #tpu.memory_space<vmem>>, vector<32x16xf32>
    %cst_195 = arith.constant dense<0.000000e+00> : vector<8x16xf32>
    %343 = tpu.matmul %341, %342, %cst_195 {dimension_numbers = #tpu.dot_dimension_numbers<[1], [0], [0], [1], [0, 0, 1, 1], [], []>} : vector<8x32xf32>, vector<32x16xf32>, vector<8x16xf32> -> vector<8x16xf32>
    %c0_196 = arith.constant 0 : index
    %c0_197 = arith.constant 0 : index
    %344 = vector.load %arg28[%c0_196, %c0_197] : memref<1x16xf32, #tpu.memory_space<vmem>>, vector<1x16xf32>
    %345 = vector.broadcast %344 : vector<1x16xf32> to vector<8x16xf32>
    %346 = arith.addf %343, %345 : vector<8x16xf32>
    %347 = arith.addf %281, %346 : vector<8x16xf32>
    %c0_198 = arith.constant 0 : index
    %c0_199 = arith.constant 0 : index
    %348 = vector.load %arg3[%c0_198, %c0_199] : memref<8x32xf32, #tpu.memory_space<vmem>>, vector<8x32xf32>
    %cst_200 = arith.constant dense<0.000000e+00> : vector<16x32xf32>
    %349 = tpu.matmul %347, %348, %cst_200 {dimension_numbers = #tpu.dot_dimension_numbers<[0], [0], [1], [1], [0, 1, 1, 1], [], []>} : vector<8x16xf32>, vector<8x32xf32>, vector<16x32xf32> -> vector<16x32xf32>
    %c0_201 = arith.constant 0 : index
    %c0_202 = arith.constant 0 : index
    %350 = vector.load %arg4[%c0_201, %c0_202] : memref<1x32xf32, #tpu.memory_space<vmem>>, vector<1x32xf32>
    %351 = vector.broadcast %350 : vector<1x32xf32> to vector<16x32xf32>
    %352 = arith.addf %349, %351 : vector<16x32xf32>
    %c0_203 = arith.constant 0 : index
    %c0_204 = arith.constant 0 : index
    %353 = vector.load %arg2[%c0_203, %c0_204] : memref<1x32xf32, #tpu.memory_space<vmem>>, vector<1x32xf32>
    %354 = tpu.concatenate %353, %352 in 0 : vector<1x32xf32>, vector<16x32xf32> -> vector<17x32xf32>
    %cst_205 = arith.constant dense<0.000000e+00> : vector<17xf32>
    %355 = vector.multi_reduction <add>, %354, %cst_205 [1] : vector<17x32xf32> to vector<17xf32>
    %356 = vector.shape_cast %355 : vector<17xf32> to vector<17x1xf32>
    %cst_206 = arith.constant 3.200000e+01 : f32
    %357 = vector.broadcast %cst_206 : f32 to vector<17x1xf32>
    %358 = arith.divf %356, %357 : vector<17x1xf32>
    %359 = vector.broadcast %358 : vector<17x1xf32> to vector<17x32xf32>
    %360 = arith.subf %354, %359 : vector<17x32xf32>
    %361 = arith.mulf %360, %360 : vector<17x32xf32>
    %cst_207 = arith.constant dense<0.000000e+00> : vector<17xf32>
    %362 = vector.multi_reduction <add>, %361, %cst_207 [1] : vector<17x32xf32> to vector<17xf32>
    %363 = vector.shape_cast %362 : vector<17xf32> to vector<17x1xf32>
    %cst_208 = arith.constant 3.200000e+01 : f32
    %364 = vector.broadcast %cst_208 : f32 to vector<17x1xf32>
    %365 = arith.divf %363, %364 : vector<17x1xf32>
    %cst_209 = arith.constant 9.99999974E-6 : f32
    %366 = vector.broadcast %cst_209 : f32 to vector<17x1xf32>
    %367 = arith.addf %365, %366 : vector<17x1xf32>
    %368 = math.rsqrt %367 : vector<17x1xf32>
    %369 = vector.broadcast %368 : vector<17x1xf32> to vector<17x32xf32>
    %370 = arith.mulf %360, %369 : vector<17x32xf32>
    %cst_210 = arith.constant 0.000000e+00 : f32
    %371 = vector.broadcast %cst_210 : f32 to vector<17x32xf32>
    %c0_211 = arith.constant 0 : index
    %c0_212 = arith.constant 0 : index
    %c0_213 = arith.constant 0 : index
    %372 = vector.load %arg29[%c0_211, %c0_212, %c0_213] : memref<2x32x16xf32, #tpu.memory_space<vmem>>, vector<1x32x16xf32>
    %373 = vector.shape_cast %372 : vector<1x32x16xf32> to vector<32x16xf32>
    %cst_214 = arith.constant dense<0.000000e+00> : vector<17x16xf32>
    %374 = tpu.matmul %370, %373, %cst_214 {dimension_numbers = #tpu.dot_dimension_numbers<[1], [0], [0], [1], [0, 0, 1, 1], [], []>} : vector<17x32xf32>, vector<32x16xf32>, vector<17x16xf32> -> vector<17x16xf32>
    %c0_215 = arith.constant 0 : index
    %c0_216 = arith.constant 0 : index
    %c0_217 = arith.constant 0 : index
    %375 = vector.load %arg32[%c0_215, %c0_216, %c0_217] : memref<2x1x16xf32, #tpu.memory_space<vmem>>, vector<1x1x16xf32>
    %376 = vector.shape_cast %375 : vector<1x1x16xf32> to vector<1x16xf32>
    %377 = vector.broadcast %376 : vector<1x16xf32> to vector<17x16xf32>
    %378 = arith.addf %374, %377 : vector<17x16xf32>
    %c0_218 = arith.constant 0 : index
    %c0_219 = arith.constant 0 : index
    %c0_220 = arith.constant 0 : index
    %379 = vector.load %arg30[%c0_218, %c0_219, %c0_220] : memref<2x32x16xf32, #tpu.memory_space<vmem>>, vector<1x32x16xf32>
    %380 = vector.shape_cast %379 : vector<1x32x16xf32> to vector<32x16xf32>
    %cst_221 = arith.constant dense<0.000000e+00> : vector<17x16xf32>
    %381 = tpu.matmul %370, %380, %cst_221 {dimension_numbers = #tpu.dot_dimension_numbers<[1], [0], [0], [1], [0, 0, 1, 1], [], []>} : vector<17x32xf32>, vector<32x16xf32>, vector<17x16xf32> -> vector<17x16xf32>
    %c0_222 = arith.constant 0 : index
    %c0_223 = arith.constant 0 : index
    %c0_224 = arith.constant 0 : index
    %382 = vector.load %arg33[%c0_222, %c0_223, %c0_224] : memref<2x1x16xf32, #tpu.memory_space<vmem>>, vector<1x1x16xf32>
    %383 = vector.shape_cast %382 : vector<1x1x16xf32> to vector<1x16xf32>
    %384 = vector.broadcast %383 : vector<1x16xf32> to vector<17x16xf32>
    %385 = arith.addf %381, %384 : vector<17x16xf32>
    %c0_225 = arith.constant 0 : index
    %c0_226 = arith.constant 0 : index
    %c0_227 = arith.constant 0 : index
    %386 = vector.load %arg31[%c0_225, %c0_226, %c0_227] : memref<2x32x16xf32, #tpu.memory_space<vmem>>, vector<1x32x16xf32>
    %387 = vector.shape_cast %386 : vector<1x32x16xf32> to vector<32x16xf32>
    %cst_228 = arith.constant dense<0.000000e+00> : vector<17x16xf32>
    %388 = tpu.matmul %370, %387, %cst_228 {dimension_numbers = #tpu.dot_dimension_numbers<[1], [0], [0], [1], [0, 0, 1, 1], [], []>} : vector<17x32xf32>, vector<32x16xf32>, vector<17x16xf32> -> vector<17x16xf32>
    %c0_229 = arith.constant 0 : index
    %c0_230 = arith.constant 0 : index
    %c0_231 = arith.constant 0 : index
    %389 = vector.load %arg34[%c0_229, %c0_230, %c0_231] : memref<2x1x16xf32, #tpu.memory_space<vmem>>, vector<1x1x16xf32>
    %390 = vector.shape_cast %389 : vector<1x1x16xf32> to vector<1x16xf32>
    %391 = vector.broadcast %390 : vector<1x16xf32> to vector<17x16xf32>
    %392 = arith.addf %388, %391 : vector<17x16xf32>
    %cst_232 = arith.constant dense<0.000000e+00> : vector<17x17xf32>
    %393 = tpu.matmul %378, %385, %cst_232 {dimension_numbers = #tpu.dot_dimension_numbers<[1], [1], [0], [0], [0, 0, 1, 0], [], []>} : vector<17x16xf32>, vector<17x16xf32>, vector<17x17xf32> -> vector<17x17xf32>
    %cst_233 = arith.constant 2.500000e-01 : f32
    %394 = vector.broadcast %cst_233 : f32 to vector<17x17xf32>
    %395 = arith.mulf %393, %394 : vector<17x17xf32>
    %cst_234 = arith.constant dense<0xFF800000> : vector<17xf32>
    %396 = vector.multi_reduction <maximumf>, %395, %cst_234 [1] : vector<17x17xf32> to vector<17xf32>
    %397 = vector.shape_cast %396 : vector<17xf32> to vector<17x1xf32>
    %398 = vector.broadcast %397 : vector<17x1xf32> to vector<17x17xf32>
    %399 = arith.subf %395, %398 : vector<17x17xf32>
    %400 = math.exp %399 : vector<17x17xf32>
    %cst_235 = arith.constant dense<0.000000e+00> : vector<17xf32>
    %401 = vector.multi_reduction <add>, %400, %cst_235 [1] : vector<17x17xf32> to vector<17xf32>
    %402 = vector.shape_cast %401 : vector<17xf32> to vector<17x1xf32>
    %403 = tpu.reciprocal %402 {approx = true} : vector<17x1xf32> -> vector<17x1xf32>
    %404 = arith.mulf %402, %403 : vector<17x1xf32>
    %cst_236 = arith.constant 2.000000e+00 : f32
    %405 = vector.broadcast %cst_236 : f32 to vector<17x1xf32>
    %406 = arith.subf %405, %404 : vector<17x1xf32>
    %407 = arith.mulf %403, %406 : vector<17x1xf32>
    %cst_237 = arith.constant dense<0.000000e+00> : vector<17x16xf32>
    %408 = tpu.matmul %400, %392, %cst_237 {dimension_numbers = #tpu.dot_dimension_numbers<[1], [0], [0], [1], [0, 0, 1, 1], [], []>} : vector<17x17xf32>, vector<17x16xf32>, vector<17x16xf32> -> vector<17x16xf32>
    %409 = vector.broadcast %407 : vector<17x1xf32> to vector<17x16xf32>
    %410 = arith.mulf %408, %409 : vector<17x16xf32>
    %c0_238 = arith.constant 0 : index
    %c0_239 = arith.constant 0 : index
    %c0_240 = arith.constant 0 : index
    %411 = vector.load %arg35[%c0_238, %c0_239, %c0_240] : memref<2x16x32xf32, #tpu.memory_space<vmem>>, vector<1x16x32xf32>
    %412 = vector.shape_cast %411 : vector<1x16x32xf32> to vector<16x32xf32>
    %cst_241 = arith.constant dense<0.000000e+00> : vector<17x32xf32>
    %413 = tpu.matmul %410, %412, %cst_241 {dimension_numbers = #tpu.dot_dimension_numbers<[1], [0], [0], [1], [0, 0, 1, 1], [], []>} : vector<17x16xf32>, vector<16x32xf32>, vector<17x32xf32> -> vector<17x32xf32>
    %414 = arith.addf %371, %413 : vector<17x32xf32>
    %c1_242 = arith.constant 1 : index
    %c0_243 = arith.constant 0 : index
    %c0_244 = arith.constant 0 : index
    %415 = vector.load %arg29[%c1_242, %c0_243, %c0_244] : memref<2x32x16xf32, #tpu.memory_space<vmem>>, vector<1x32x16xf32>
    %416 = vector.shape_cast %415 : vector<1x32x16xf32> to vector<32x16xf32>
    %cst_245 = arith.constant dense<0.000000e+00> : vector<17x16xf32>
    %417 = tpu.matmul %370, %416, %cst_245 {dimension_numbers = #tpu.dot_dimension_numbers<[1], [0], [0], [1], [0, 0, 1, 1], [], []>} : vector<17x32xf32>, vector<32x16xf32>, vector<17x16xf32> -> vector<17x16xf32>
    %c1_246 = arith.constant 1 : index
    %c0_247 = arith.constant 0 : index
    %c0_248 = arith.constant 0 : index
    %418 = vector.load %arg32[%c1_246, %c0_247, %c0_248] : memref<2x1x16xf32, #tpu.memory_space<vmem>>, vector<1x1x16xf32>
    %419 = vector.shape_cast %418 : vector<1x1x16xf32> to vector<1x16xf32>
    %420 = vector.broadcast %419 : vector<1x16xf32> to vector<17x16xf32>
    %421 = arith.addf %417, %420 : vector<17x16xf32>
    %c1_249 = arith.constant 1 : index
    %c0_250 = arith.constant 0 : index
    %c0_251 = arith.constant 0 : index
    %422 = vector.load %arg30[%c1_249, %c0_250, %c0_251] : memref<2x32x16xf32, #tpu.memory_space<vmem>>, vector<1x32x16xf32>
    %423 = vector.shape_cast %422 : vector<1x32x16xf32> to vector<32x16xf32>
    %cst_252 = arith.constant dense<0.000000e+00> : vector<17x16xf32>
    %424 = tpu.matmul %370, %423, %cst_252 {dimension_numbers = #tpu.dot_dimension_numbers<[1], [0], [0], [1], [0, 0, 1, 1], [], []>} : vector<17x32xf32>, vector<32x16xf32>, vector<17x16xf32> -> vector<17x16xf32>
    %c1_253 = arith.constant 1 : index
    %c0_254 = arith.constant 0 : index
    %c0_255 = arith.constant 0 : index
    %425 = vector.load %arg33[%c1_253, %c0_254, %c0_255] : memref<2x1x16xf32, #tpu.memory_space<vmem>>, vector<1x1x16xf32>
    %426 = vector.shape_cast %425 : vector<1x1x16xf32> to vector<1x16xf32>
    %427 = vector.broadcast %426 : vector<1x16xf32> to vector<17x16xf32>
    %428 = arith.addf %424, %427 : vector<17x16xf32>
    %c1_256 = arith.constant 1 : index
    %c0_257 = arith.constant 0 : index
    %c0_258 = arith.constant 0 : index
    %429 = vector.load %arg31[%c1_256, %c0_257, %c0_258] : memref<2x32x16xf32, #tpu.memory_space<vmem>>, vector<1x32x16xf32>
    %430 = vector.shape_cast %429 : vector<1x32x16xf32> to vector<32x16xf32>
    %cst_259 = arith.constant dense<0.000000e+00> : vector<17x16xf32>
    %431 = tpu.matmul %370, %430, %cst_259 {dimension_numbers = #tpu.dot_dimension_numbers<[1], [0], [0], [1], [0, 0, 1, 1], [], []>} : vector<17x32xf32>, vector<32x16xf32>, vector<17x16xf32> -> vector<17x16xf32>
    %c1_260 = arith.constant 1 : index
    %c0_261 = arith.constant 0 : index
    %c0_262 = arith.constant 0 : index
    %432 = vector.load %arg34[%c1_260, %c0_261, %c0_262] : memref<2x1x16xf32, #tpu.memory_space<vmem>>, vector<1x1x16xf32>
    %433 = vector.shape_cast %432 : vector<1x1x16xf32> to vector<1x16xf32>
    %434 = vector.broadcast %433 : vector<1x16xf32> to vector<17x16xf32>
    %435 = arith.addf %431, %434 : vector<17x16xf32>
    %cst_263 = arith.constant dense<0.000000e+00> : vector<17x17xf32>
    %436 = tpu.matmul %421, %428, %cst_263 {dimension_numbers = #tpu.dot_dimension_numbers<[1], [1], [0], [0], [0, 0, 1, 0], [], []>} : vector<17x16xf32>, vector<17x16xf32>, vector<17x17xf32> -> vector<17x17xf32>
    %cst_264 = arith.constant 2.500000e-01 : f32
    %437 = vector.broadcast %cst_264 : f32 to vector<17x17xf32>
    %438 = arith.mulf %436, %437 : vector<17x17xf32>
    %cst_265 = arith.constant dense<0xFF800000> : vector<17xf32>
    %439 = vector.multi_reduction <maximumf>, %438, %cst_265 [1] : vector<17x17xf32> to vector<17xf32>
    %440 = vector.shape_cast %439 : vector<17xf32> to vector<17x1xf32>
    %441 = vector.broadcast %440 : vector<17x1xf32> to vector<17x17xf32>
    %442 = arith.subf %438, %441 : vector<17x17xf32>
    %443 = math.exp %442 : vector<17x17xf32>
    %cst_266 = arith.constant dense<0.000000e+00> : vector<17xf32>
    %444 = vector.multi_reduction <add>, %443, %cst_266 [1] : vector<17x17xf32> to vector<17xf32>
    %445 = vector.shape_cast %444 : vector<17xf32> to vector<17x1xf32>
    %446 = tpu.reciprocal %445 {approx = true} : vector<17x1xf32> -> vector<17x1xf32>
    %447 = arith.mulf %445, %446 : vector<17x1xf32>
    %cst_267 = arith.constant 2.000000e+00 : f32
    %448 = vector.broadcast %cst_267 : f32 to vector<17x1xf32>
    %449 = arith.subf %448, %447 : vector<17x1xf32>
    %450 = arith.mulf %446, %449 : vector<17x1xf32>
    %cst_268 = arith.constant dense<0.000000e+00> : vector<17x16xf32>
    %451 = tpu.matmul %443, %435, %cst_268 {dimension_numbers = #tpu.dot_dimension_numbers<[1], [0], [0], [1], [0, 0, 1, 1], [], []>} : vector<17x17xf32>, vector<17x16xf32>, vector<17x16xf32> -> vector<17x16xf32>
    %452 = vector.broadcast %450 : vector<17x1xf32> to vector<17x16xf32>
    %453 = arith.mulf %451, %452 : vector<17x16xf32>
    %c1_269 = arith.constant 1 : index
    %c0_270 = arith.constant 0 : index
    %c0_271 = arith.constant 0 : index
    %454 = vector.load %arg35[%c1_269, %c0_270, %c0_271] : memref<2x16x32xf32, #tpu.memory_space<vmem>>, vector<1x16x32xf32>
    %455 = vector.shape_cast %454 : vector<1x16x32xf32> to vector<16x32xf32>
    %cst_272 = arith.constant dense<0.000000e+00> : vector<17x32xf32>
    %456 = tpu.matmul %453, %455, %cst_272 {dimension_numbers = #tpu.dot_dimension_numbers<[1], [0], [0], [1], [0, 0, 1, 1], [], []>} : vector<17x16xf32>, vector<16x32xf32>, vector<17x32xf32> -> vector<17x32xf32>
    %457 = arith.addf %414, %456 : vector<17x32xf32>
    %458 = arith.addf %354, %457 : vector<17x32xf32>
    %c0_273 = arith.constant 0 : index
    %c0_274 = arith.constant 0 : index
    %459 = vector.load %arg36[%c0_273, %c0_274] : memref<1x32xf32, #tpu.memory_space<vmem>>, vector<1x32xf32>
    %460 = vector.broadcast %459 : vector<1x32xf32> to vector<17x32xf32>
    %461 = arith.addf %458, %460 : vector<17x32xf32>
    %cst_275 = arith.constant dense<0.000000e+00> : vector<17xf32>
    %462 = vector.multi_reduction <add>, %461, %cst_275 [1] : vector<17x32xf32> to vector<17xf32>
    %463 = vector.shape_cast %462 : vector<17xf32> to vector<17x1xf32>
    %cst_276 = arith.constant 3.200000e+01 : f32
    %464 = vector.broadcast %cst_276 : f32 to vector<17x1xf32>
    %465 = arith.divf %463, %464 : vector<17x1xf32>
    %466 = vector.broadcast %465 : vector<17x1xf32> to vector<17x32xf32>
    %467 = arith.subf %461, %466 : vector<17x32xf32>
    %468 = arith.mulf %467, %467 : vector<17x32xf32>
    %cst_277 = arith.constant dense<0.000000e+00> : vector<17xf32>
    %469 = vector.multi_reduction <add>, %468, %cst_277 [1] : vector<17x32xf32> to vector<17xf32>
    %470 = vector.shape_cast %469 : vector<17xf32> to vector<17x1xf32>
    %cst_278 = arith.constant 3.200000e+01 : f32
    %471 = vector.broadcast %cst_278 : f32 to vector<17x1xf32>
    %472 = arith.divf %470, %471 : vector<17x1xf32>
    %cst_279 = arith.constant 9.99999974E-6 : f32
    %473 = vector.broadcast %cst_279 : f32 to vector<17x1xf32>
    %474 = arith.addf %472, %473 : vector<17x1xf32>
    %475 = math.rsqrt %474 : vector<17x1xf32>
    %476 = vector.broadcast %475 : vector<17x1xf32> to vector<17x32xf32>
    %477 = arith.mulf %467, %476 : vector<17x32xf32>
    %c0_280 = arith.constant 0 : index
    %c0_281 = arith.constant 0 : index
    %478 = vector.load %arg37[%c0_280, %c0_281] : memref<32x32xf32, #tpu.memory_space<vmem>>, vector<32x32xf32>
    %cst_282 = arith.constant dense<0.000000e+00> : vector<17x32xf32>
    %479 = tpu.matmul %477, %478, %cst_282 {dimension_numbers = #tpu.dot_dimension_numbers<[1], [0], [0], [1], [0, 0, 1, 1], [], []>} : vector<17x32xf32>, vector<32x32xf32>, vector<17x32xf32> -> vector<17x32xf32>
    %c0_283 = arith.constant 0 : index
    %c0_284 = arith.constant 0 : index
    %480 = vector.load %arg38[%c0_283, %c0_284] : memref<1x32xf32, #tpu.memory_space<vmem>>, vector<1x32xf32>
    %481 = vector.broadcast %480 : vector<1x32xf32> to vector<17x32xf32>
    %482 = arith.addf %479, %481 : vector<17x32xf32>
    %cst_285 = arith.constant 5.000000e-01 : f32
    %483 = vector.broadcast %cst_285 : f32 to vector<17x32xf32>
    %484 = arith.mulf %483, %482 : vector<17x32xf32>
    %cst_286 = arith.constant 0.707106769 : f32
    %485 = vector.broadcast %cst_286 : f32 to vector<17x32xf32>
    %486 = arith.mulf %482, %485 : vector<17x32xf32>
    %487 = math.absf %486 : vector<17x32xf32>
    %cst_287 = arith.constant 0.327591091 : f32
    %488 = vector.broadcast %cst_287 : f32 to vector<17x32xf32>
    %489 = arith.mulf %488, %487 : vector<17x32xf32>
    %cst_288 = arith.constant 1.000000e+00 : f32
    %490 = vector.broadcast %cst_288 : f32 to vector<17x32xf32>
    %491 = arith.addf %490, %489 : vector<17x32xf32>
    %492 = tpu.reciprocal %491 : vector<17x32xf32> -> vector<17x32xf32>
    %cst_289 = arith.constant 1.06140542 : f32
    %493 = vector.broadcast %cst_289 : f32 to vector<17x32xf32>
    %494 = arith.mulf %493, %492 : vector<17x32xf32>
    %cst_290 = arith.constant -1.45315206 : f32
    %495 = vector.broadcast %cst_290 : f32 to vector<17x32xf32>
    %496 = arith.addf %494, %495 : vector<17x32xf32>
    %497 = arith.mulf %496, %492 : vector<17x32xf32>
    %cst_291 = arith.constant 1.42141378 : f32
    %498 = vector.broadcast %cst_291 : f32 to vector<17x32xf32>
    %499 = arith.addf %497, %498 : vector<17x32xf32>
    %500 = arith.mulf %499, %492 : vector<17x32xf32>
    %cst_292 = arith.constant -0.284496725 : f32
    %501 = vector.broadcast %cst_292 : f32 to vector<17x32xf32>
    %502 = arith.addf %500, %501 : vector<17x32xf32>
    %503 = arith.mulf %502, %492 : vector<17x32xf32>
    %cst_293 = arith.constant 0.254829586 : f32
    %504 = vector.broadcast %cst_293 : f32 to vector<17x32xf32>
    %505 = arith.addf %503, %504 : vector<17x32xf32>
    %506 = arith.mulf %505, %492 : vector<17x32xf32>
    %cst_294 = arith.constant 0.000000e+00 : f32
    %507 = vector.broadcast %cst_294 : f32 to vector<17x32xf32>
    %508 = arith.subf %507, %487 : vector<17x32xf32>
    %509 = arith.mulf %508, %487 : vector<17x32xf32>
    %510 = math.exp %509 : vector<17x32xf32>
    %511 = arith.mulf %506, %510 : vector<17x32xf32>
    %cst_295 = arith.constant 1.000000e+00 : f32
    %512 = vector.broadcast %cst_295 : f32 to vector<17x32xf32>
    %513 = arith.subf %512, %511 : vector<17x32xf32>
    %cst_296 = arith.constant 0.000000e+00 : f32
    %514 = vector.broadcast %cst_296 : f32 to vector<17x32xf32>
    %515 = arith.cmpf oge, %486, %514 : vector<17x32xf32>
    %cst_297 = arith.constant 0.000000e+00 : f32
    %516 = vector.broadcast %cst_297 : f32 to vector<17x32xf32>
    %517 = arith.subf %516, %513 : vector<17x32xf32>
    %518 = arith.select %515, %513, %517 : vector<17x32xi1>, vector<17x32xf32>
    %cst_298 = arith.constant 1.000000e+00 : f32
    %519 = vector.broadcast %cst_298 : f32 to vector<17x32xf32>
    %520 = arith.addf %519, %518 : vector<17x32xf32>
    %521 = arith.mulf %484, %520 : vector<17x32xf32>
    %c0_299 = arith.constant 0 : index
    %c0_300 = arith.constant 0 : index
    %522 = vector.load %arg39[%c0_299, %c0_300] : memref<32x32xf32, #tpu.memory_space<vmem>>, vector<32x32xf32>
    %cst_301 = arith.constant dense<0.000000e+00> : vector<17x32xf32>
    %523 = tpu.matmul %521, %522, %cst_301 {dimension_numbers = #tpu.dot_dimension_numbers<[1], [0], [0], [1], [0, 0, 1, 1], [], []>} : vector<17x32xf32>, vector<32x32xf32>, vector<17x32xf32> -> vector<17x32xf32>
    %c0_302 = arith.constant 0 : index
    %c0_303 = arith.constant 0 : index
    %524 = vector.load %arg40[%c0_302, %c0_303] : memref<1x32xf32, #tpu.memory_space<vmem>>, vector<1x32xf32>
    %525 = vector.broadcast %524 : vector<1x32xf32> to vector<17x32xf32>
    %526 = arith.addf %523, %525 : vector<17x32xf32>
    %527 = arith.addf %461, %526 : vector<17x32xf32>
    %cst_304 = arith.constant dense<0.000000e+00> : vector<17xf32>
    %528 = vector.multi_reduction <add>, %527, %cst_304 [1] : vector<17x32xf32> to vector<17xf32>
    %529 = vector.shape_cast %528 : vector<17xf32> to vector<17x1xf32>
    %cst_305 = arith.constant 3.200000e+01 : f32
    %530 = vector.broadcast %cst_305 : f32 to vector<17x1xf32>
    %531 = arith.divf %529, %530 : vector<17x1xf32>
    %532 = vector.broadcast %531 : vector<17x1xf32> to vector<17x32xf32>
    %533 = arith.subf %527, %532 : vector<17x32xf32>
    %534 = arith.mulf %533, %533 : vector<17x32xf32>
    %cst_306 = arith.constant dense<0.000000e+00> : vector<17xf32>
    %535 = vector.multi_reduction <add>, %534, %cst_306 [1] : vector<17x32xf32> to vector<17xf32>
    %536 = vector.shape_cast %535 : vector<17xf32> to vector<17x1xf32>
    %cst_307 = arith.constant 3.200000e+01 : f32
    %537 = vector.broadcast %cst_307 : f32 to vector<17x1xf32>
    %538 = arith.divf %536, %537 : vector<17x1xf32>
    %cst_308 = arith.constant 9.99999974E-6 : f32
    %539 = vector.broadcast %cst_308 : f32 to vector<17x1xf32>
    %540 = arith.addf %538, %539 : vector<17x1xf32>
    %541 = math.rsqrt %540 : vector<17x1xf32>
    %542 = vector.broadcast %541 : vector<17x1xf32> to vector<17x32xf32>
    %543 = arith.mulf %533, %542 : vector<17x32xf32>
    %cst_309 = arith.constant 0.000000e+00 : f32
    %544 = vector.broadcast %cst_309 : f32 to vector<17x32xf32>
    %c0_310 = arith.constant 0 : index
    %c0_311 = arith.constant 0 : index
    %c0_312 = arith.constant 0 : index
    %545 = vector.load %arg41[%c0_310, %c0_311, %c0_312] : memref<2x32x16xf32, #tpu.memory_space<vmem>>, vector<1x32x16xf32>
    %546 = vector.shape_cast %545 : vector<1x32x16xf32> to vector<32x16xf32>
    %cst_313 = arith.constant dense<0.000000e+00> : vector<17x16xf32>
    %547 = tpu.matmul %543, %546, %cst_313 {dimension_numbers = #tpu.dot_dimension_numbers<[1], [0], [0], [1], [0, 0, 1, 1], [], []>} : vector<17x32xf32>, vector<32x16xf32>, vector<17x16xf32> -> vector<17x16xf32>
    %c0_314 = arith.constant 0 : index
    %c0_315 = arith.constant 0 : index
    %c0_316 = arith.constant 0 : index
    %548 = vector.load %arg44[%c0_314, %c0_315, %c0_316] : memref<2x1x16xf32, #tpu.memory_space<vmem>>, vector<1x1x16xf32>
    %549 = vector.shape_cast %548 : vector<1x1x16xf32> to vector<1x16xf32>
    %550 = vector.broadcast %549 : vector<1x16xf32> to vector<17x16xf32>
    %551 = arith.addf %547, %550 : vector<17x16xf32>
    %c0_317 = arith.constant 0 : index
    %c0_318 = arith.constant 0 : index
    %c0_319 = arith.constant 0 : index
    %552 = vector.load %arg42[%c0_317, %c0_318, %c0_319] : memref<2x32x16xf32, #tpu.memory_space<vmem>>, vector<1x32x16xf32>
    %553 = vector.shape_cast %552 : vector<1x32x16xf32> to vector<32x16xf32>
    %cst_320 = arith.constant dense<0.000000e+00> : vector<17x16xf32>
    %554 = tpu.matmul %543, %553, %cst_320 {dimension_numbers = #tpu.dot_dimension_numbers<[1], [0], [0], [1], [0, 0, 1, 1], [], []>} : vector<17x32xf32>, vector<32x16xf32>, vector<17x16xf32> -> vector<17x16xf32>
    %c0_321 = arith.constant 0 : index
    %c0_322 = arith.constant 0 : index
    %c0_323 = arith.constant 0 : index
    %555 = vector.load %arg45[%c0_321, %c0_322, %c0_323] : memref<2x1x16xf32, #tpu.memory_space<vmem>>, vector<1x1x16xf32>
    %556 = vector.shape_cast %555 : vector<1x1x16xf32> to vector<1x16xf32>
    %557 = vector.broadcast %556 : vector<1x16xf32> to vector<17x16xf32>
    %558 = arith.addf %554, %557 : vector<17x16xf32>
    %c0_324 = arith.constant 0 : index
    %c0_325 = arith.constant 0 : index
    %c0_326 = arith.constant 0 : index
    %559 = vector.load %arg43[%c0_324, %c0_325, %c0_326] : memref<2x32x16xf32, #tpu.memory_space<vmem>>, vector<1x32x16xf32>
    %560 = vector.shape_cast %559 : vector<1x32x16xf32> to vector<32x16xf32>
    %cst_327 = arith.constant dense<0.000000e+00> : vector<17x16xf32>
    %561 = tpu.matmul %543, %560, %cst_327 {dimension_numbers = #tpu.dot_dimension_numbers<[1], [0], [0], [1], [0, 0, 1, 1], [], []>} : vector<17x32xf32>, vector<32x16xf32>, vector<17x16xf32> -> vector<17x16xf32>
    %c0_328 = arith.constant 0 : index
    %c0_329 = arith.constant 0 : index
    %c0_330 = arith.constant 0 : index
    %562 = vector.load %arg46[%c0_328, %c0_329, %c0_330] : memref<2x1x16xf32, #tpu.memory_space<vmem>>, vector<1x1x16xf32>
    %563 = vector.shape_cast %562 : vector<1x1x16xf32> to vector<1x16xf32>
    %564 = vector.broadcast %563 : vector<1x16xf32> to vector<17x16xf32>
    %565 = arith.addf %561, %564 : vector<17x16xf32>
    %cst_331 = arith.constant dense<0.000000e+00> : vector<17x17xf32>
    %566 = tpu.matmul %551, %558, %cst_331 {dimension_numbers = #tpu.dot_dimension_numbers<[1], [1], [0], [0], [0, 0, 1, 0], [], []>} : vector<17x16xf32>, vector<17x16xf32>, vector<17x17xf32> -> vector<17x17xf32>
    %cst_332 = arith.constant 2.500000e-01 : f32
    %567 = vector.broadcast %cst_332 : f32 to vector<17x17xf32>
    %568 = arith.mulf %566, %567 : vector<17x17xf32>
    %cst_333 = arith.constant dense<0xFF800000> : vector<17xf32>
    %569 = vector.multi_reduction <maximumf>, %568, %cst_333 [1] : vector<17x17xf32> to vector<17xf32>
    %570 = vector.shape_cast %569 : vector<17xf32> to vector<17x1xf32>
    %571 = vector.broadcast %570 : vector<17x1xf32> to vector<17x17xf32>
    %572 = arith.subf %568, %571 : vector<17x17xf32>
    %573 = math.exp %572 : vector<17x17xf32>
    %cst_334 = arith.constant dense<0.000000e+00> : vector<17xf32>
    %574 = vector.multi_reduction <add>, %573, %cst_334 [1] : vector<17x17xf32> to vector<17xf32>
    %575 = vector.shape_cast %574 : vector<17xf32> to vector<17x1xf32>
    %576 = tpu.reciprocal %575 {approx = true} : vector<17x1xf32> -> vector<17x1xf32>
    %577 = arith.mulf %575, %576 : vector<17x1xf32>
    %cst_335 = arith.constant 2.000000e+00 : f32
    %578 = vector.broadcast %cst_335 : f32 to vector<17x1xf32>
    %579 = arith.subf %578, %577 : vector<17x1xf32>
    %580 = arith.mulf %576, %579 : vector<17x1xf32>
    %cst_336 = arith.constant dense<0.000000e+00> : vector<17x16xf32>
    %581 = tpu.matmul %573, %565, %cst_336 {dimension_numbers = #tpu.dot_dimension_numbers<[1], [0], [0], [1], [0, 0, 1, 1], [], []>} : vector<17x17xf32>, vector<17x16xf32>, vector<17x16xf32> -> vector<17x16xf32>
    %582 = vector.broadcast %580 : vector<17x1xf32> to vector<17x16xf32>
    %583 = arith.mulf %581, %582 : vector<17x16xf32>
    %c0_337 = arith.constant 0 : index
    %c0_338 = arith.constant 0 : index
    %c0_339 = arith.constant 0 : index
    %584 = vector.load %arg47[%c0_337, %c0_338, %c0_339] : memref<2x16x32xf32, #tpu.memory_space<vmem>>, vector<1x16x32xf32>
    %585 = vector.shape_cast %584 : vector<1x16x32xf32> to vector<16x32xf32>
    %cst_340 = arith.constant dense<0.000000e+00> : vector<17x32xf32>
    %586 = tpu.matmul %583, %585, %cst_340 {dimension_numbers = #tpu.dot_dimension_numbers<[1], [0], [0], [1], [0, 0, 1, 1], [], []>} : vector<17x16xf32>, vector<16x32xf32>, vector<17x32xf32> -> vector<17x32xf32>
    %587 = arith.addf %544, %586 : vector<17x32xf32>
    %c1_341 = arith.constant 1 : index
    %c0_342 = arith.constant 0 : index
    %c0_343 = arith.constant 0 : index
    %588 = vector.load %arg41[%c1_341, %c0_342, %c0_343] : memref<2x32x16xf32, #tpu.memory_space<vmem>>, vector<1x32x16xf32>
    %589 = vector.shape_cast %588 : vector<1x32x16xf32> to vector<32x16xf32>
    %cst_344 = arith.constant dense<0.000000e+00> : vector<17x16xf32>
    %590 = tpu.matmul %543, %589, %cst_344 {dimension_numbers = #tpu.dot_dimension_numbers<[1], [0], [0], [1], [0, 0, 1, 1], [], []>} : vector<17x32xf32>, vector<32x16xf32>, vector<17x16xf32> -> vector<17x16xf32>
    %c1_345 = arith.constant 1 : index
    %c0_346 = arith.constant 0 : index
    %c0_347 = arith.constant 0 : index
    %591 = vector.load %arg44[%c1_345, %c0_346, %c0_347] : memref<2x1x16xf32, #tpu.memory_space<vmem>>, vector<1x1x16xf32>
    %592 = vector.shape_cast %591 : vector<1x1x16xf32> to vector<1x16xf32>
    %593 = vector.broadcast %592 : vector<1x16xf32> to vector<17x16xf32>
    %594 = arith.addf %590, %593 : vector<17x16xf32>
    %c1_348 = arith.constant 1 : index
    %c0_349 = arith.constant 0 : index
    %c0_350 = arith.constant 0 : index
    %595 = vector.load %arg42[%c1_348, %c0_349, %c0_350] : memref<2x32x16xf32, #tpu.memory_space<vmem>>, vector<1x32x16xf32>
    %596 = vector.shape_cast %595 : vector<1x32x16xf32> to vector<32x16xf32>
    %cst_351 = arith.constant dense<0.000000e+00> : vector<17x16xf32>
    %597 = tpu.matmul %543, %596, %cst_351 {dimension_numbers = #tpu.dot_dimension_numbers<[1], [0], [0], [1], [0, 0, 1, 1], [], []>} : vector<17x32xf32>, vector<32x16xf32>, vector<17x16xf32> -> vector<17x16xf32>
    %c1_352 = arith.constant 1 : index
    %c0_353 = arith.constant 0 : index
    %c0_354 = arith.constant 0 : index
    %598 = vector.load %arg45[%c1_352, %c0_353, %c0_354] : memref<2x1x16xf32, #tpu.memory_space<vmem>>, vector<1x1x16xf32>
    %599 = vector.shape_cast %598 : vector<1x1x16xf32> to vector<1x16xf32>
    %600 = vector.broadcast %599 : vector<1x16xf32> to vector<17x16xf32>
    %601 = arith.addf %597, %600 : vector<17x16xf32>
    %c1_355 = arith.constant 1 : index
    %c0_356 = arith.constant 0 : index
    %c0_357 = arith.constant 0 : index
    %602 = vector.load %arg43[%c1_355, %c0_356, %c0_357] : memref<2x32x16xf32, #tpu.memory_space<vmem>>, vector<1x32x16xf32>
    %603 = vector.shape_cast %602 : vector<1x32x16xf32> to vector<32x16xf32>
    %cst_358 = arith.constant dense<0.000000e+00> : vector<17x16xf32>
    %604 = tpu.matmul %543, %603, %cst_358 {dimension_numbers = #tpu.dot_dimension_numbers<[1], [0], [0], [1], [0, 0, 1, 1], [], []>} : vector<17x32xf32>, vector<32x16xf32>, vector<17x16xf32> -> vector<17x16xf32>
    %c1_359 = arith.constant 1 : index
    %c0_360 = arith.constant 0 : index
    %c0_361 = arith.constant 0 : index
    %605 = vector.load %arg46[%c1_359, %c0_360, %c0_361] : memref<2x1x16xf32, #tpu.memory_space<vmem>>, vector<1x1x16xf32>
    %606 = vector.shape_cast %605 : vector<1x1x16xf32> to vector<1x16xf32>
    %607 = vector.broadcast %606 : vector<1x16xf32> to vector<17x16xf32>
    %608 = arith.addf %604, %607 : vector<17x16xf32>
    %cst_362 = arith.constant dense<0.000000e+00> : vector<17x17xf32>
    %609 = tpu.matmul %594, %601, %cst_362 {dimension_numbers = #tpu.dot_dimension_numbers<[1], [1], [0], [0], [0, 0, 1, 0], [], []>} : vector<17x16xf32>, vector<17x16xf32>, vector<17x17xf32> -> vector<17x17xf32>
    %cst_363 = arith.constant 2.500000e-01 : f32
    %610 = vector.broadcast %cst_363 : f32 to vector<17x17xf32>
    %611 = arith.mulf %609, %610 : vector<17x17xf32>
    %cst_364 = arith.constant dense<0xFF800000> : vector<17xf32>
    %612 = vector.multi_reduction <maximumf>, %611, %cst_364 [1] : vector<17x17xf32> to vector<17xf32>
    %613 = vector.shape_cast %612 : vector<17xf32> to vector<17x1xf32>
    %614 = vector.broadcast %613 : vector<17x1xf32> to vector<17x17xf32>
    %615 = arith.subf %611, %614 : vector<17x17xf32>
    %616 = math.exp %615 : vector<17x17xf32>
    %cst_365 = arith.constant dense<0.000000e+00> : vector<17xf32>
    %617 = vector.multi_reduction <add>, %616, %cst_365 [1] : vector<17x17xf32> to vector<17xf32>
    %618 = vector.shape_cast %617 : vector<17xf32> to vector<17x1xf32>
    %619 = tpu.reciprocal %618 {approx = true} : vector<17x1xf32> -> vector<17x1xf32>
    %620 = arith.mulf %618, %619 : vector<17x1xf32>
    %cst_366 = arith.constant 2.000000e+00 : f32
    %621 = vector.broadcast %cst_366 : f32 to vector<17x1xf32>
    %622 = arith.subf %621, %620 : vector<17x1xf32>
    %623 = arith.mulf %619, %622 : vector<17x1xf32>
    %cst_367 = arith.constant dense<0.000000e+00> : vector<17x16xf32>
    %624 = tpu.matmul %616, %608, %cst_367 {dimension_numbers = #tpu.dot_dimension_numbers<[1], [0], [0], [1], [0, 0, 1, 1], [], []>} : vector<17x17xf32>, vector<17x16xf32>, vector<17x16xf32> -> vector<17x16xf32>
    %625 = vector.broadcast %623 : vector<17x1xf32> to vector<17x16xf32>
    %626 = arith.mulf %624, %625 : vector<17x16xf32>
    %c1_368 = arith.constant 1 : index
    %c0_369 = arith.constant 0 : index
    %c0_370 = arith.constant 0 : index
    %627 = vector.load %arg47[%c1_368, %c0_369, %c0_370] : memref<2x16x32xf32, #tpu.memory_space<vmem>>, vector<1x16x32xf32>
    %628 = vector.shape_cast %627 : vector<1x16x32xf32> to vector<16x32xf32>
    %cst_371 = arith.constant dense<0.000000e+00> : vector<17x32xf32>
    %629 = tpu.matmul %626, %628, %cst_371 {dimension_numbers = #tpu.dot_dimension_numbers<[1], [0], [0], [1], [0, 0, 1, 1], [], []>} : vector<17x16xf32>, vector<16x32xf32>, vector<17x32xf32> -> vector<17x32xf32>
    %630 = arith.addf %587, %629 : vector<17x32xf32>
    %631 = arith.addf %527, %630 : vector<17x32xf32>
    %c0_372 = arith.constant 0 : index
    %c0_373 = arith.constant 0 : index
    %632 = vector.load %arg48[%c0_372, %c0_373] : memref<1x32xf32, #tpu.memory_space<vmem>>, vector<1x32xf32>
    %633 = vector.broadcast %632 : vector<1x32xf32> to vector<17x32xf32>
    %634 = arith.addf %631, %633 : vector<17x32xf32>
    %cst_374 = arith.constant dense<0.000000e+00> : vector<17xf32>
    %635 = vector.multi_reduction <add>, %634, %cst_374 [1] : vector<17x32xf32> to vector<17xf32>
    %636 = vector.shape_cast %635 : vector<17xf32> to vector<17x1xf32>
    %cst_375 = arith.constant 3.200000e+01 : f32
    %637 = vector.broadcast %cst_375 : f32 to vector<17x1xf32>
    %638 = arith.divf %636, %637 : vector<17x1xf32>
    %639 = vector.broadcast %638 : vector<17x1xf32> to vector<17x32xf32>
    %640 = arith.subf %634, %639 : vector<17x32xf32>
    %641 = arith.mulf %640, %640 : vector<17x32xf32>
    %cst_376 = arith.constant dense<0.000000e+00> : vector<17xf32>
    %642 = vector.multi_reduction <add>, %641, %cst_376 [1] : vector<17x32xf32> to vector<17xf32>
    %643 = vector.shape_cast %642 : vector<17xf32> to vector<17x1xf32>
    %cst_377 = arith.constant 3.200000e+01 : f32
    %644 = vector.broadcast %cst_377 : f32 to vector<17x1xf32>
    %645 = arith.divf %643, %644 : vector<17x1xf32>
    %cst_378 = arith.constant 9.99999974E-6 : f32
    %646 = vector.broadcast %cst_378 : f32 to vector<17x1xf32>
    %647 = arith.addf %645, %646 : vector<17x1xf32>
    %648 = math.rsqrt %647 : vector<17x1xf32>
    %649 = vector.broadcast %648 : vector<17x1xf32> to vector<17x32xf32>
    %650 = arith.mulf %640, %649 : vector<17x32xf32>
    %c0_379 = arith.constant 0 : index
    %c0_380 = arith.constant 0 : index
    %651 = vector.load %arg49[%c0_379, %c0_380] : memref<32x32xf32, #tpu.memory_space<vmem>>, vector<32x32xf32>
    %cst_381 = arith.constant dense<0.000000e+00> : vector<17x32xf32>
    %652 = tpu.matmul %650, %651, %cst_381 {dimension_numbers = #tpu.dot_dimension_numbers<[1], [0], [0], [1], [0, 0, 1, 1], [], []>} : vector<17x32xf32>, vector<32x32xf32>, vector<17x32xf32> -> vector<17x32xf32>
    %c0_382 = arith.constant 0 : index
    %c0_383 = arith.constant 0 : index
    %653 = vector.load %arg50[%c0_382, %c0_383] : memref<1x32xf32, #tpu.memory_space<vmem>>, vector<1x32xf32>
    %654 = vector.broadcast %653 : vector<1x32xf32> to vector<17x32xf32>
    %655 = arith.addf %652, %654 : vector<17x32xf32>
    %cst_384 = arith.constant 5.000000e-01 : f32
    %656 = vector.broadcast %cst_384 : f32 to vector<17x32xf32>
    %657 = arith.mulf %656, %655 : vector<17x32xf32>
    %cst_385 = arith.constant 0.707106769 : f32
    %658 = vector.broadcast %cst_385 : f32 to vector<17x32xf32>
    %659 = arith.mulf %655, %658 : vector<17x32xf32>
    %660 = math.absf %659 : vector<17x32xf32>
    %cst_386 = arith.constant 0.327591091 : f32
    %661 = vector.broadcast %cst_386 : f32 to vector<17x32xf32>
    %662 = arith.mulf %661, %660 : vector<17x32xf32>
    %cst_387 = arith.constant 1.000000e+00 : f32
    %663 = vector.broadcast %cst_387 : f32 to vector<17x32xf32>
    %664 = arith.addf %663, %662 : vector<17x32xf32>
    %665 = tpu.reciprocal %664 : vector<17x32xf32> -> vector<17x32xf32>
    %cst_388 = arith.constant 1.06140542 : f32
    %666 = vector.broadcast %cst_388 : f32 to vector<17x32xf32>
    %667 = arith.mulf %666, %665 : vector<17x32xf32>
    %cst_389 = arith.constant -1.45315206 : f32
    %668 = vector.broadcast %cst_389 : f32 to vector<17x32xf32>
    %669 = arith.addf %667, %668 : vector<17x32xf32>
    %670 = arith.mulf %669, %665 : vector<17x32xf32>
    %cst_390 = arith.constant 1.42141378 : f32
    %671 = vector.broadcast %cst_390 : f32 to vector<17x32xf32>
    %672 = arith.addf %670, %671 : vector<17x32xf32>
    %673 = arith.mulf %672, %665 : vector<17x32xf32>
    %cst_391 = arith.constant -0.284496725 : f32
    %674 = vector.broadcast %cst_391 : f32 to vector<17x32xf32>
    %675 = arith.addf %673, %674 : vector<17x32xf32>
    %676 = arith.mulf %675, %665 : vector<17x32xf32>
    %cst_392 = arith.constant 0.254829586 : f32
    %677 = vector.broadcast %cst_392 : f32 to vector<17x32xf32>
    %678 = arith.addf %676, %677 : vector<17x32xf32>
    %679 = arith.mulf %678, %665 : vector<17x32xf32>
    %cst_393 = arith.constant 0.000000e+00 : f32
    %680 = vector.broadcast %cst_393 : f32 to vector<17x32xf32>
    %681 = arith.subf %680, %660 : vector<17x32xf32>
    %682 = arith.mulf %681, %660 : vector<17x32xf32>
    %683 = math.exp %682 : vector<17x32xf32>
    %684 = arith.mulf %679, %683 : vector<17x32xf32>
    %cst_394 = arith.constant 1.000000e+00 : f32
    %685 = vector.broadcast %cst_394 : f32 to vector<17x32xf32>
    %686 = arith.subf %685, %684 : vector<17x32xf32>
    %cst_395 = arith.constant 0.000000e+00 : f32
    %687 = vector.broadcast %cst_395 : f32 to vector<17x32xf32>
    %688 = arith.cmpf oge, %659, %687 : vector<17x32xf32>
    %cst_396 = arith.constant 0.000000e+00 : f32
    %689 = vector.broadcast %cst_396 : f32 to vector<17x32xf32>
    %690 = arith.subf %689, %686 : vector<17x32xf32>
    %691 = arith.select %688, %686, %690 : vector<17x32xi1>, vector<17x32xf32>
    %cst_397 = arith.constant 1.000000e+00 : f32
    %692 = vector.broadcast %cst_397 : f32 to vector<17x32xf32>
    %693 = arith.addf %692, %691 : vector<17x32xf32>
    %694 = arith.mulf %657, %693 : vector<17x32xf32>
    %c0_398 = arith.constant 0 : index
    %c0_399 = arith.constant 0 : index
    %695 = vector.load %arg51[%c0_398, %c0_399] : memref<32x32xf32, #tpu.memory_space<vmem>>, vector<32x32xf32>
    %cst_400 = arith.constant dense<0.000000e+00> : vector<17x32xf32>
    %696 = tpu.matmul %694, %695, %cst_400 {dimension_numbers = #tpu.dot_dimension_numbers<[1], [0], [0], [1], [0, 0, 1, 1], [], []>} : vector<17x32xf32>, vector<32x32xf32>, vector<17x32xf32> -> vector<17x32xf32>
    %c0_401 = arith.constant 0 : index
    %c0_402 = arith.constant 0 : index
    %697 = vector.load %arg52[%c0_401, %c0_402] : memref<1x32xf32, #tpu.memory_space<vmem>>, vector<1x32xf32>
    %698 = vector.broadcast %697 : vector<1x32xf32> to vector<17x32xf32>
    %699 = arith.addf %696, %698 : vector<17x32xf32>
    %700 = arith.addf %634, %699 : vector<17x32xf32>
    %c0_403 = arith.constant 0 : index
    %c0_404 = arith.constant 0 : index
    %c0_405 = arith.constant 0 : index
    %701 = vector.load %arg53[%c0_403, %c0_404, %c0_405] : memref<1x17x32xf32, #tpu.memory_space<vmem>>, vector<1x17x32xf32>
    %702 = vector.shape_cast %701 : vector<1x17x32xf32> to vector<17x32xf32>
    %703 = vector.shape_cast %700 : vector<17x32xf32> to vector<1x17x32xf32>
    tpu.vector_store %arg53[%c0_403, %c0_404, %c0_405], %703 {strides = array<i32>} : memref<1x17x32xf32, #tpu.memory_space<vmem>>, vector<1x17x32xf32>,
    return
  }
  func.func @transform_0(%arg0: i32) -> (i32, i32, i32) {
    %c0_i32 = arith.constant 0 : i32
    %c0_i32_0 = arith.constant 0 : i32
    %c0_i32_1 = arith.constant 0 : i32
    return %arg0, %c0_i32, %c0_i32_0 : i32, i32, i32
  }
  func.func @transform_1(%arg0: i32) -> (i32, i32) {
    %c0_i32 = arith.constant 0 : i32
    %c0_i32_0 = arith.constant 0 : i32
    %c0_i32_1 = arith.constant 0 : i32
    return %c0_i32, %c0_i32_0 : i32, i32
  }
  func.func @transform_2(%arg0: i32) -> (i32, i32) {
    %c0_i32 = arith.constant 0 : i32
    %c0_i32_0 = arith.constant 0 : i32
    %c0_i32_1 = arith.constant 0 : i32
    return %c0_i32, %c0_i32_0 : i32, i32
  }
  func.func @transform_3(%arg0: i32) -> (i32, i32) {
    %c0_i32 = arith.constant 0 : i32
    %c0_i32_0 = arith.constant 0 : i32
    %c0_i32_1 = arith.constant 0 : i32
    return %c0_i32, %c0_i32_0 : i32, i32
  }
  func.func @transform_4(%arg0: i32) -> (i32, i32, i32) {
    %c0_i32 = arith.constant 0 : i32
    %c0_i32_0 = arith.constant 0 : i32
    %c0_i32_1 = arith.constant 0 : i32
    %c0_i32_2 = arith.constant 0 : i32
    return %c0_i32, %c0_i32_0, %c0_i32_1 : i32, i32, i32
  }
  func.func @transform_5(%arg0: i32) -> (i32, i32, i32) {
    %c0_i32 = arith.constant 0 : i32
    %c0_i32_0 = arith.constant 0 : i32
    %c0_i32_1 = arith.constant 0 : i32
    %c0_i32_2 = arith.constant 0 : i32
    return %c0_i32, %c0_i32_0, %c0_i32_1 : i32, i32, i32
  }
  func.func @transform_6(%arg0: i32) -> (i32, i32, i32) {
    %c0_i32 = arith.constant 0 : i32
    %c0_i32_0 = arith.constant 0 : i32
    %c0_i32_1 = arith.constant 0 : i32
    %c0_i32_2 = arith.constant 0 : i32
    return %c0_i32, %c0_i32_0, %c0_i32_1 : i32, i32, i32
  }
  func.func @transform_7(%arg0: i32) -> (i32, i32, i32) {
    %c0_i32 = arith.constant 0 : i32
    %c0_i32_0 = arith.constant 0 : i32
    %c0_i32_1 = arith.constant 0 : i32
    %c0_i32_2 = arith.constant 0 : i32
    return %c0_i32, %c0_i32_0, %c0_i32_1 : i32, i32, i32
  }
  func.func @transform_8(%arg0: i32) -> (i32, i32, i32) {
    %c0_i32 = arith.constant 0 : i32
    %c0_i32_0 = arith.constant 0 : i32
    %c0_i32_1 = arith.constant 0 : i32
    %c0_i32_2 = arith.constant 0 : i32
    return %c0_i32, %c0_i32_0, %c0_i32_1 : i32, i32, i32
  }
  func.func @transform_9(%arg0: i32) -> (i32, i32, i32) {
    %c0_i32 = arith.constant 0 : i32
    %c0_i32_0 = arith.constant 0 : i32
    %c0_i32_1 = arith.constant 0 : i32
    %c0_i32_2 = arith.constant 0 : i32
    return %c0_i32, %c0_i32_0, %c0_i32_1 : i32, i32, i32
  }
  func.func @transform_10(%arg0: i32) -> (i32, i32, i32) {
    %c0_i32 = arith.constant 0 : i32
    %c0_i32_0 = arith.constant 0 : i32
    %c0_i32_1 = arith.constant 0 : i32
    %c0_i32_2 = arith.constant 0 : i32
    return %c0_i32, %c0_i32_0, %c0_i32_1 : i32, i32, i32
  }
  func.func @transform_11(%arg0: i32) -> (i32, i32) {
    %c0_i32 = arith.constant 0 : i32
    %c0_i32_0 = arith.constant 0 : i32
    %c0_i32_1 = arith.constant 0 : i32
    return %c0_i32, %c0_i32_0 : i32, i32
  }
  func.func @transform_12(%arg0: i32) -> (i32, i32) {
    %c0_i32 = arith.constant 0 : i32
    %c0_i32_0 = arith.constant 0 : i32
    %c0_i32_1 = arith.constant 0 : i32
    return %c0_i32, %c0_i32_0 : i32, i32
  }
  func.func @transform_13(%arg0: i32) -> (i32, i32) {
    %c0_i32 = arith.constant 0 : i32
    %c0_i32_0 = arith.constant 0 : i32
    %c0_i32_1 = arith.constant 0 : i32
    return %c0_i32, %c0_i32_0 : i32, i32
  }
  func.func @transform_14(%arg0: i32) -> (i32, i32) {
    %c0_i32 = arith.constant 0 : i32
    %c0_i32_0 = arith.constant 0 : i32
    %c0_i32_1 = arith.constant 0 : i32
    return %c0_i32, %c0_i32_0 : i32, i32
  }
  func.func @transform_15(%arg0: i32) -> (i32, i32) {
    %c0_i32 = arith.constant 0 : i32
    %c0_i32_0 = arith.constant 0 : i32
    %c0_i32_1 = arith.constant 0 : i32
    return %c0_i32, %c0_i32_0 : i32, i32
  }
  func.func @transform_16(%arg0: i32) -> (i32, i32, i32) {
    %c0_i32 = arith.constant 0 : i32
    %c0_i32_0 = arith.constant 0 : i32
    %c0_i32_1 = arith.constant 0 : i32
    %c0_i32_2 = arith.constant 0 : i32
    return %c0_i32, %c0_i32_0, %c0_i32_1 : i32, i32, i32
  }
  func.func @transform_17(%arg0: i32) -> (i32, i32, i32) {
    %c0_i32 = arith.constant 0 : i32
    %c0_i32_0 = arith.constant 0 : i32
    %c0_i32_1 = arith.constant 0 : i32
    %c0_i32_2 = arith.constant 0 : i32
    return %c0_i32, %c0_i32_0, %c0_i32_1 : i32, i32, i32
  }
  func.func @transform_18(%arg0: i32) -> (i32, i32, i32) {
    %c0_i32 = arith.constant 0 : i32
    %c0_i32_0 = arith.constant 0 : i32
    %c0_i32_1 = arith.constant 0 : i32
    %c0_i32_2 = arith.constant 0 : i32
    return %c0_i32, %c0_i32_0, %c0_i32_1 : i32, i32, i32
  }
  func.func @transform_19(%arg0: i32) -> (i32, i32, i32) {
    %c0_i32 = arith.constant 0 : i32
    %c0_i32_0 = arith.constant 0 : i32
    %c0_i32_1 = arith.constant 0 : i32
    %c0_i32_2 = arith.constant 0 : i32
    return %c0_i32, %c0_i32_0, %c0_i32_1 : i32, i32, i32
  }
  func.func @transform_20(%arg0: i32) -> (i32, i32, i32) {
    %c0_i32 = arith.constant 0 : i32
    %c0_i32_0 = arith.constant 0 : i32
    %c0_i32_1 = arith.constant 0 : i32
    %c0_i32_2 = arith.constant 0 : i32
    return %c0_i32, %c0_i32_0, %c0_i32_1 : i32, i32, i32
  }
  func.func @transform_21(%arg0: i32) -> (i32, i32, i32) {
    %c0_i32 = arith.constant 0 : i32
    %c0_i32_0 = arith.constant 0 : i32
    %c0_i32_1 = arith.constant 0 : i32
    %c0_i32_2 = arith.constant 0 : i32
    return %c0_i32, %c0_i32_0, %c0_i32_1 : i32, i32, i32
  }
  func.func @transform_22(%arg0: i32) -> (i32, i32, i32) {
    %c0_i32 = arith.constant 0 : i32
    %c0_i32_0 = arith.constant 0 : i32
    %c0_i32_1 = arith.constant 0 : i32
    %c0_i32_2 = arith.constant 0 : i32
    return %c0_i32, %c0_i32_0, %c0_i32_1 : i32, i32, i32
  }
  func.func @transform_23(%arg0: i32) -> (i32, i32) {
    %c0_i32 = arith.constant 0 : i32
    %c0_i32_0 = arith.constant 0 : i32
    %c0_i32_1 = arith.constant 0 : i32
    return %c0_i32, %c0_i32_0 : i32, i32
  }
  func.func @transform_24(%arg0: i32) -> (i32, i32) {
    %c0_i32 = arith.constant 0 : i32
    %c0_i32_0 = arith.constant 0 : i32
    %c0_i32_1 = arith.constant 0 : i32
    return %c0_i32, %c0_i32_0 : i32, i32
  }
  func.func @transform_25(%arg0: i32) -> (i32, i32) {
    %c0_i32 = arith.constant 0 : i32
    %c0_i32_0 = arith.constant 0 : i32
    %c0_i32_1 = arith.constant 0 : i32
    return %c0_i32, %c0_i32_0 : i32, i32
  }
  func.func @transform_26(%arg0: i32) -> (i32, i32) {
    %c0_i32 = arith.constant 0 : i32
    %c0_i32_0 = arith.constant 0 : i32
    %c0_i32_1 = arith.constant 0 : i32
    return %c0_i32, %c0_i32_0 : i32, i32
  }
  func.func @transform_27(%arg0: i32) -> (i32, i32) {
    %c0_i32 = arith.constant 0 : i32
    %c0_i32_0 = arith.constant 0 : i32
    %c0_i32_1 = arith.constant 0 : i32
    return %c0_i32, %c0_i32_0 : i32, i32
  }
  func.func @transform_28(%arg0: i32) -> (i32, i32, i32) {
    %c0_i32 = arith.constant 0 : i32
    %c0_i32_0 = arith.constant 0 : i32
    %c0_i32_1 = arith.constant 0 : i32
    %c0_i32_2 = arith.constant 0 : i32
    return %c0_i32, %c0_i32_0, %c0_i32_1 : i32, i32, i32
  }
  func.func @transform_29(%arg0: i32) -> (i32, i32, i32) {
    %c0_i32 = arith.constant 0 : i32
    %c0_i32_0 = arith.constant 0 : i32
    %c0_i32_1 = arith.constant 0 : i32
    %c0_i32_2 = arith.constant 0 : i32
    return %c0_i32, %c0_i32_0, %c0_i32_1 : i32, i32, i32
  }
  func.func @transform_30(%arg0: i32) -> (i32, i32, i32) {
    %c0_i32 = arith.constant 0 : i32
    %c0_i32_0 = arith.constant 0 : i32
    %c0_i32_1 = arith.constant 0 : i32
    %c0_i32_2 = arith.constant 0 : i32
    return %c0_i32, %c0_i32_0, %c0_i32_1 : i32, i32, i32
  }
  func.func @transform_31(%arg0: i32) -> (i32, i32, i32) {
    %c0_i32 = arith.constant 0 : i32
    %c0_i32_0 = arith.constant 0 : i32
    %c0_i32_1 = arith.constant 0 : i32
    %c0_i32_2 = arith.constant 0 : i32
    return %c0_i32, %c0_i32_0, %c0_i32_1 : i32, i32, i32
  }
  func.func @transform_32(%arg0: i32) -> (i32, i32, i32) {
    %c0_i32 = arith.constant 0 : i32
    %c0_i32_0 = arith.constant 0 : i32
    %c0_i32_1 = arith.constant 0 : i32
    %c0_i32_2 = arith.constant 0 : i32
    return %c0_i32, %c0_i32_0, %c0_i32_1 : i32, i32, i32
  }
  func.func @transform_33(%arg0: i32) -> (i32, i32, i32) {
    %c0_i32 = arith.constant 0 : i32
    %c0_i32_0 = arith.constant 0 : i32
    %c0_i32_1 = arith.constant 0 : i32
    %c0_i32_2 = arith.constant 0 : i32
    return %c0_i32, %c0_i32_0, %c0_i32_1 : i32, i32, i32
  }
  func.func @transform_34(%arg0: i32) -> (i32, i32, i32) {
    %c0_i32 = arith.constant 0 : i32
    %c0_i32_0 = arith.constant 0 : i32
    %c0_i32_1 = arith.constant 0 : i32
    %c0_i32_2 = arith.constant 0 : i32
    return %c0_i32, %c0_i32_0, %c0_i32_1 : i32, i32, i32
  }
  func.func @transform_35(%arg0: i32) -> (i32, i32) {
    %c0_i32 = arith.constant 0 : i32
    %c0_i32_0 = arith.constant 0 : i32
    %c0_i32_1 = arith.constant 0 : i32
    return %c0_i32, %c0_i32_0 : i32, i32
  }
  func.func @transform_36(%arg0: i32) -> (i32, i32) {
    %c0_i32 = arith.constant 0 : i32
    %c0_i32_0 = arith.constant 0 : i32
    %c0_i32_1 = arith.constant 0 : i32
    return %c0_i32, %c0_i32_0 : i32, i32
  }
  func.func @transform_37(%arg0: i32) -> (i32, i32) {
    %c0_i32 = arith.constant 0 : i32
    %c0_i32_0 = arith.constant 0 : i32
    %c0_i32_1 = arith.constant 0 : i32
    return %c0_i32, %c0_i32_0 : i32, i32
  }
  func.func @transform_38(%arg0: i32) -> (i32, i32) {
    %c0_i32 = arith.constant 0 : i32
    %c0_i32_0 = arith.constant 0 : i32
    %c0_i32_1 = arith.constant 0 : i32
    return %c0_i32, %c0_i32_0 : i32, i32
  }
  func.func @transform_39(%arg0: i32) -> (i32, i32) {
    %c0_i32 = arith.constant 0 : i32
    %c0_i32_0 = arith.constant 0 : i32
    %c0_i32_1 = arith.constant 0 : i32
    return %c0_i32, %c0_i32_0 : i32, i32
  }
  func.func @transform_40(%arg0: i32) -> (i32, i32, i32) {
    %c0_i32 = arith.constant 0 : i32
    %c0_i32_0 = arith.constant 0 : i32
    %c0_i32_1 = arith.constant 0 : i32
    %c0_i32_2 = arith.constant 0 : i32
    return %c0_i32, %c0_i32_0, %c0_i32_1 : i32, i32, i32
  }
  func.func @transform_41(%arg0: i32) -> (i32, i32, i32) {
    %c0_i32 = arith.constant 0 : i32
    %c0_i32_0 = arith.constant 0 : i32
    %c0_i32_1 = arith.constant 0 : i32
    %c0_i32_2 = arith.constant 0 : i32
    return %c0_i32, %c0_i32_0, %c0_i32_1 : i32, i32, i32
  }
  func.func @transform_42(%arg0: i32) -> (i32, i32, i32) {
    %c0_i32 = arith.constant 0 : i32
    %c0_i32_0 = arith.constant 0 : i32
    %c0_i32_1 = arith.constant 0 : i32
    %c0_i32_2 = arith.constant 0 : i32
    return %c0_i32, %c0_i32_0, %c0_i32_1 : i32, i32, i32
  }
  func.func @transform_43(%arg0: i32) -> (i32, i32, i32) {
    %c0_i32 = arith.constant 0 : i32
    %c0_i32_0 = arith.constant 0 : i32
    %c0_i32_1 = arith.constant 0 : i32
    %c0_i32_2 = arith.constant 0 : i32
    return %c0_i32, %c0_i32_0, %c0_i32_1 : i32, i32, i32
  }
  func.func @transform_44(%arg0: i32) -> (i32, i32, i32) {
    %c0_i32 = arith.constant 0 : i32
    %c0_i32_0 = arith.constant 0 : i32
    %c0_i32_1 = arith.constant 0 : i32
    %c0_i32_2 = arith.constant 0 : i32
    return %c0_i32, %c0_i32_0, %c0_i32_1 : i32, i32, i32
  }
  func.func @transform_45(%arg0: i32) -> (i32, i32, i32) {
    %c0_i32 = arith.constant 0 : i32
    %c0_i32_0 = arith.constant 0 : i32
    %c0_i32_1 = arith.constant 0 : i32
    %c0_i32_2 = arith.constant 0 : i32
    return %c0_i32, %c0_i32_0, %c0_i32_1 : i32, i32, i32
  }
  func.func @transform_46(%arg0: i32) -> (i32, i32, i32) {
    %c0_i32 = arith.constant 0 : i32
    %c0_i32_0 = arith.constant 0 : i32
    %c0_i32_1 = arith.constant 0 : i32
    %c0_i32_2 = arith.constant 0 : i32
    return %c0_i32, %c0_i32_0, %c0_i32_1 : i32, i32, i32
  }
  func.func @transform_47(%arg0: i32) -> (i32, i32) {
    %c0_i32 = arith.constant 0 : i32
    %c0_i32_0 = arith.constant 0 : i32
    %c0_i32_1 = arith.constant 0 : i32
    return %c0_i32, %c0_i32_0 : i32, i32
  }
  func.func @transform_48(%arg0: i32) -> (i32, i32) {
    %c0_i32 = arith.constant 0 : i32
    %c0_i32_0 = arith.constant 0 : i32
    %c0_i32_1 = arith.constant 0 : i32
    return %c0_i32, %c0_i32_0 : i32, i32
  }
  func.func @transform_49(%arg0: i32) -> (i32, i32) {
    %c0_i32 = arith.constant 0 : i32
    %c0_i32_0 = arith.constant 0 : i32
    %c0_i32_1 = arith.constant 0 : i32
    return %c0_i32, %c0_i32_0 : i32, i32
  }
  func.func @transform_50(%arg0: i32) -> (i32, i32) {
    %c0_i32 = arith.constant 0 : i32
    %c0_i32_0 = arith.constant 0 : i32
    %c0_i32_1 = arith.constant 0 : i32
    return %c0_i32, %c0_i32_0 : i32, i32
  }
  func.func @transform_51(%arg0: i32) -> (i32, i32) {
    %c0_i32 = arith.constant 0 : i32
    %c0_i32_0 = arith.constant 0 : i32
    %c0_i32_1 = arith.constant 0 : i32
    return %c0_i32, %c0_i32_0 : i32, i32
  }
  func.func @transform_52(%arg0: i32) -> (i32, i32, i32) {
    %c0_i32 = arith.constant 0 : i32
    %c0_i32_0 = arith.constant 0 : i32
    %c0_i32_1 = arith.constant 0 : i32
    return %arg0, %c0_i32, %c0_i32_0 : i32, i32, i32
  }
}

</mosaic_0001>

<llo_original>
// kernel: _lambda_.1
$region0: #{_lambda_.1}
  #allocation0 [shape = 'u32[]', space=smem, size = 0x4, offset = 0x4, fixed_abs, tag = 'smem constant byte address 0x4 - core index']
  #allocation1 [shape = 'u32[72,128]{1,0:T(1,128)}', space=vmem, size = 0x9000, scoped, tag = 'internal scratch']
  %s0 = inlined_call_operand.smem [shape: u32[53], index: -1, kind: input, shape index: {}]
  %s1 = sld [smem:[%s0]]
  %s2 = scalar_lea.smem %s0, 1
  %s3 = sld [smem:[%s2]]
  %s4 = scalar_lea.smem %s0, 2
  %s5 = sld [smem:[%s4]]
  %s6 = scalar_lea.smem %s0, 3
  %s7 = sld [smem:[%s6]]
  %s8 = scalar_lea.smem %s0, 4
  %s9 = sld [smem:[%s8]]
  %s10 = scalar_lea.smem %s0, 5
  %s11 = sld [smem:[%s10]]
  %s12 = scalar_lea.smem %s0, 6
  %s13 = sld [smem:[%s12]]
  %s14 = scalar_lea.smem %s0, 7
  %s15 = sld [smem:[%s14]]
  %s16 = scalar_lea.smem %s0, 8
  %s17 = sld [smem:[%s16]]
  %s18 = scalar_lea.smem %s0, 9
  %s19 = sld [smem:[%s18]]
  %s20 = scalar_lea.smem %s0, 10
  %s21 = sld [smem:[%s20]]
  %s22 = scalar_lea.smem %s0, 11
  %s23 = sld [smem:[%s22]]
  %s24 = scalar_lea.smem %s0, 12
  %s25 = sld [smem:[%s24]]
  %s26 = scalar_lea.smem %s0, 13
  %s27 = sld [smem:[%s26]]
  %s28 = scalar_lea.smem %s0, 14
  %s29 = sld [smem:[%s28]]
  %s30 = scalar_lea.smem %s0, 15
  %s31 = sld [smem:[%s30]]
  %s32 = scalar_lea.smem %s0, 16
  %s33 = sld [smem:[%s32]]
  %s34 = scalar_lea.smem %s0, 17
  %s35 = sld [smem:[%s34]]
  %s36 = scalar_lea.smem %s0, 18
  %s37 = sld [smem:[%s36]]
  %s38 = scalar_lea.smem %s0, 19
  %s39 = sld [smem:[%s38]]
  %s40 = scalar_lea.smem %s0, 20
  %s41 = sld [smem:[%s40]]
  %s42 = scalar_lea.smem %s0, 21
  %s43 = sld [smem:[%s42]]
  %s44 = scalar_lea.smem %s0, 22
  %s45 = sld [smem:[%s44]]
  %s46 = scalar_lea.smem %s0, 23
  %s47 = sld [smem:[%s46]]
  %s48 = scalar_lea.smem %s0, 24
  %s49 = sld [smem:[%s48]]
  %s50 = scalar_lea.smem %s0, 25
  %s51 = sld [smem:[%s50]]
  %s52 = scalar_lea.smem %s0, 26
  %s53 = sld [smem:[%s52]]
  %s54 = scalar_lea.smem %s0, 27
  %s55 = sld [smem:[%s54]]
  %s56 = scalar_lea.smem %s0, 28
  %s57 = sld [smem:[%s56]]
  %s58 = scalar_lea.smem %s0, 29
  %s59 = sld [smem:[%s58]]
  %s60 = scalar_lea.smem %s0, 30
  %s61 = sld [smem:[%s60]]
  %s62 = scalar_lea.smem %s0, 31
  %s63 = sld [smem:[%s62]]
  %s64 = scalar_lea.smem %s0, 32
  %s65 = sld [smem:[%s64]]
  %s66 = scalar_lea.smem %s0, 33
  %s67 = sld [smem:[%s66]]
  %s68 = scalar_lea.smem %s0, 34
  %s69 = sld [smem:[%s68]]
  %s70 = scalar_lea.smem %s0, 35
  %s71 = sld [smem:[%s70]]
  %s72 = scalar_lea.smem %s0, 36
  %s73 = sld [smem:[%s72]]
  %s74 = scalar_lea.smem %s0, 37
  %s75 = sld [smem:[%s74]]
  %s76 = scalar_lea.smem %s0, 38
  %s77 = sld [smem:[%s76]]
  %s78 = scalar_lea.smem %s0, 39
  %s79 = sld [smem:[%s78]]
  %s80 = scalar_lea.smem %s0, 40
  %s81 = sld [smem:[%s80]]
  %s82 = scalar_lea.smem %s0, 41
  %s83 = sld [smem:[%s82]]
  %s84 = scalar_lea.smem %s0, 42
  %s85 = sld [smem:[%s84]]
  %s86 = scalar_lea.smem %s0, 43
  %s87 = sld [smem:[%s86]]
  %s88 = scalar_lea.smem %s0, 44
  %s89 = sld [smem:[%s88]]
  %s90 = scalar_lea.smem %s0, 45
  %s91 = sld [smem:[%s90]]
  %s92 = scalar_lea.smem %s0, 46
  %s93 = sld [smem:[%s92]]
  %s94 = scalar_lea.smem %s0, 47
  %s95 = sld [smem:[%s94]]
  %s96 = scalar_lea.smem %s0, 48
  %s97 = sld [smem:[%s96]]
  %s98 = scalar_lea.smem %s0, 49
  %s99 = sld [smem:[%s98]]
  %s100 = scalar_lea.smem %s0, 50
  %s101 = sld [smem:[%s100]]
  %s102 = scalar_lea.smem %s0, 51
  %s103 = sld [smem:[%s102]]
  %s104 = scalar_lea.smem %s0, 52
  %s105 = sld [smem:[%s104]]
  %s106 = sld [smem:[#allocation0]]
  $region341: #{_lambda_.1} parent=0
    _
  %s108 = ssub.s32 1, %s106
  %s109 = scalar_select 0, %s108, %s106
  $region1: #{_lambda_.1} parent=0
    #allocation2 [shape = 'u8[8192]{0}', space=vmem, size = 0x2000, scoped, tag = 'input window, operand 0']
    #allocation3 [shape = 's32[2]{0}', space=sflag, size = 0x8, scoped, tag = 'scoped memory for _lambda_.1']
    #allocation4 [shape = 'u8[4096]{0}', space=vmem, size = 0x1000, scoped, tag = 'input window, operand 2, single buffered']
    #allocation5 [shape = 's32[1]{0}', space=sflag, size = 0x4, scoped, tag = 'scoped memory for _lambda_.1']
    #allocation6 [shape = 'u8[16384]{0}', space=vmem, size = 0x4000, scoped, tag = 'input window, operand 4, single buffered']
    #allocation7 [shape = 'u8[16384]{0}', space=vmem, size = 0x4000, scoped, tag = 'input window, operand 5, single buffered']
    #allocation8 [shape = 's32[1]{0}', space=sflag, size = 0x4, scoped, tag = 'scoped memory for _lambda_.1']
    #allocation9 [shape = 'u8[16384]{0}', space=vmem, size = 0x4000, scoped, tag = 'input window, operand 6, single buffered']
    #allocation10 [shape = 'u8[8192]{0}', space=vmem, size = 0x2000, scoped, tag = 'input window, operand 10, single buffered']
    #allocation11 [shape = 's32[1]{0}', space=sflag, size = 0x4, scoped, tag = 'scoped memory for _lambda_.1']
    #allocation12 [shape = 'u8[8192]{0}', space=vmem, size = 0x2000, scoped, tag = 'input window, operand 12, single buffered']
    #allocation13 [shape = 'u8[16384]{0}', space=vmem, size = 0x4000, scoped, tag = 'input window, operand 14, single buffered']
    #allocation14 [shape = 's32[1]{0}', space=sflag, size = 0x4, scoped, tag = 'scoped memory for _lambda_.1']
    #allocation15 [shape = 'u8[16384]{0}', space=vmem, size = 0x4000, scoped, tag = 'input window, operand 16, single buffered']
    #allocation16 [shape = 'u8[16384]{0}', space=vmem, size = 0x4000, scoped, tag = 'input window, operand 17, single buffered']
    #allocation17 [shape = 's32[1]{0}', space=sflag, size = 0x4, scoped, tag = 'scoped memory for _lambda_.1']
    #allocation18 [shape = 'u8[16384]{0}', space=vmem, size = 0x4000, scoped, tag = 'input window, operand 18, single buffered']
    #allocation19 [shape = 'u8[8192]{0}', space=vmem, size = 0x2000, scoped, tag = 'input window, operand 22, single buffered']
    #allocation20 [shape = 's32[1]{0}', space=sflag, size = 0x4, scoped, tag = 'scoped memory for _lambda_.1']
    #allocation21 [shape = 'u8[8192]{0}', space=vmem, size = 0x2000, scoped, tag = 'input window, operand 24, single buffered']
    #allocation22 [shape = 'u8[16384]{0}', space=vmem, size = 0x4000, scoped, tag = 'input window, operand 26, single buffered']
    #allocation23 [shape = 's32[1]{0}', space=sflag, size = 0x4, scoped, tag = 'scoped memory for _lambda_.1']
    #allocation24 [shape = 'u8[32768]{0}', space=vmem, size = 0x8000, scoped, tag = 'input window, operand 28, single buffered']
    #allocation25 [shape = 'u8[32768]{0}', space=vmem, size = 0x8000, scoped, tag = 'input window, operand 29, single buffered']
    #allocation26 [shape = 's32[1]{0}', space=sflag, size = 0x4, scoped, tag = 'scoped memory for _lambda_.1']
    #allocation27 [shape = 'u8[32768]{0}', space=vmem, size = 0x8000, scoped, tag = 'input window, operand 30, single buffered']
    #allocation28 [shape = 'u8[16384]{0}', space=vmem, size = 0x4000, scoped, tag = 'input window, operand 34, single buffered']
    #allocation29 [shape = 's32[1]{0}', space=sflag, size = 0x4, scoped, tag = 'scoped memory for _lambda_.1']
    #allocation30 [shape = 'u8[16384]{0}', space=vmem, size = 0x4000, scoped, tag = 'input window, operand 36, single buffered']
    #allocation31 [shape = 'u8[16384]{0}', space=vmem, size = 0x4000, scoped, tag = 'input window, operand 38, single buffered']
    #allocation32 [shape = 's32[1]{0}', space=sflag, size = 0x4, scoped, tag = 'scoped memory for _lambda_.1']
    #allocation33 [shape = 'u8[32768]{0}', space=vmem, size = 0x8000, scoped, tag = 'input window, operand 40, single buffered']
    #allocation34 [shape = 'u8[32768]{0}', space=vmem, size = 0x8000, scoped, tag = 'input window, operand 41, single buffered']
    #allocation35 [shape = 's32[1]{0}', space=sflag, size = 0x4, scoped, tag = 'scoped memory for _lambda_.1']
    #allocation36 [shape = 'u8[32768]{0}', space=vmem, size = 0x8000, scoped, tag = 'input window, operand 42, single buffered']
    #allocation37 [shape = 'u8[16384]{0}', space=vmem, size = 0x4000, scoped, tag = 'input window, operand 46, single buffered']
    #allocation38 [shape = 's32[1]{0}', space=sflag, size = 0x4, scoped, tag = 'scoped memory for _lambda_.1']
    #allocation39 [shape = 'u8[16384]{0}', space=vmem, size = 0x4000, scoped, tag = 'input window, operand 48, single buffered']
    %110 = vsyncpa [#allocation3], 0
    %s111 = scalar_lea.sflag [#allocation3], 1
    %112 = vsyncpa %s111, 0
    %113 = vsyncpa [#allocation5], 0
    %114 = vsyncpa [#allocation8], 0
    %115 = vsyncpa [#allocation11], 0
    %116 = vsyncpa [#allocation14], 0
    %117 = vsyncpa [#allocation17], 0
    %118 = vsyncpa [#allocation20], 0
    %119 = vsyncpa [#allocation23], 0
    %120 = vsyncpa [#allocation26], 0
    %121 = vsyncpa [#allocation29], 0
    %122 = vsyncpa [#allocation32], 0
    %123 = vsyncpa [#allocation35], 0
    %124 = vsyncpa [#allocation38], 0
    loop: start=0, step=1, limit=4
    $region2: #{_lambda_.1} parent=1 // loop_pre_header
      _
    $region3: #{_lambda_.1} parent=1 // loop_header
      %s126 = sphi 0, %s130
      %p127 = scmp.ge.s32.totalorder %s126, 4
      %s136 = sphi 0, %s138
      %s139 = sphi 0, %s136
      %s140 = sphi 0, %s139
      %s156 = sphi 0, %s140
      %s160 = sphi 0, %s160
      %s162 = sphi 0, %s160
      %s163 = sphi 0, %s162
      %s177 = sphi 0, %s163
      %s181 = sphi 0, %s181
      %s183 = sphi 0, %s181
      %s184 = sphi 0, %s183
      %s198 = sphi 0, %s184
      %s202 = sphi 0, %s202
      %s204 = sphi 0, %s202
      %s205 = sphi 0, %s204
      %s219 = sphi 0, %s205
      %s223 = sphi 0, %s223
      %s225 = sphi 0, %s223
      %s226 = sphi 0, %s225
      %s240 = sphi 0, %s226
      %s244 = sphi 0, %s244
      %s246 = sphi 0, %s244
      %s247 = sphi 0, %s246
      %s261 = sphi 0, %s247
      %s265 = sphi 0, %s265
      %s267 = sphi 0, %s265
      %s268 = sphi 0, %s267
      %s282 = sphi 0, %s268
      %s286 = sphi 0, %s286
      %s288 = sphi 0, %s286
      %s289 = sphi 0, %s288
      %s303 = sphi 0, %s289
      %s307 = sphi 0, %s307
      %s309 = sphi 0, %s307
      %s310 = sphi 0, %s309
      %s324 = sphi 0, %s310
      %s328 = sphi 0, %s328
      %s330 = sphi 0, %s328
      %s331 = sphi 0, %s330
      %s345 = sphi 0, %s331
      %s349 = sphi 0, %s349
      %s351 = sphi 0, %s349
      %s352 = sphi 0, %s351
      %s366 = sphi 0, %s352
      %s370 = sphi 0, %s370
      %s372 = sphi 0, %s370
      %s373 = sphi 0, %s372
      %s387 = sphi 0, %s373
      %s391 = sphi 0, %s391
      %s393 = sphi 0, %s391
      %s394 = sphi 0, %s393
      %s408 = sphi 0, %s394
      %s412 = sphi 0, %s412
      %s414 = sphi 0, %s412
      %s415 = sphi 0, %s414
      %s429 = sphi 0, %s415
      %s433 = sphi 0, %s433
      %s435 = sphi 0, %s433
      %s436 = sphi 0, %s435
      %s450 = sphi 0, %s436
      %s454 = sphi 0, %s454
      %s456 = sphi 0, %s454
      %s457 = sphi 0, %s456
      %s471 = sphi 0, %s457
      %s475 = sphi 0, %s475
      %s477 = sphi 0, %s475
      %s478 = sphi 0, %s477
      %s492 = sphi 0, %s478
      %s496 = sphi 0, %s496
      %s498 = sphi 0, %s496
      %s499 = sphi 0, %s498
      %s513 = sphi 0, %s499
      %s517 = sphi 0, %s517
      %s519 = sphi 0, %s517
      %s520 = sphi 0, %s519
      %s534 = sphi 0, %s520
      %s538 = sphi 0, %s538
      %s540 = sphi 0, %s538
      %s541 = sphi 0, %s540
      %s555 = sphi 0, %s541
      %s559 = sphi 0, %s559
      %s561 = sphi 0, %s559
      %s562 = sphi 0, %s561
      %s576 = sphi 0, %s562
      %s580 = sphi 0, %s580
      %s582 = sphi 0, %s580
      %s583 = sphi 0, %s582
      %s597 = sphi 0, %s583
      %s601 = sphi 0, %s601
      %s603 = sphi 0, %s601
      %s604 = sphi 0, %s603
      %s618 = sphi 0, %s604
      %s622 = sphi 0, %s622
      %s624 = sphi 0, %s622
      %s625 = sphi 0, %s624
      %s639 = sphi 0, %s625
      %s643 = sphi 0, %s643
      %s645 = sphi 0, %s643
      %s646 = sphi 0, %s645
      %s660 = sphi 0, %s646
      %s664 = sphi 0, %s664
      %s666 = sphi 0, %s664
      %s667 = sphi 0, %s666
      %s681 = sphi 0, %s667
      %s685 = sphi 0, %s685
      %s687 = sphi 0, %s685
      %s688 = sphi 0, %s687
      %s702 = sphi 0, %s688
      %s706 = sphi 0, %s706
      %s708 = sphi 0, %s706
      %s709 = sphi 0, %s708
      %s723 = sphi 0, %s709
      %s727 = sphi 0, %s727
      %s729 = sphi 0, %s727
      %s730 = sphi 0, %s729
      %s744 = sphi 0, %s730
      %s748 = sphi 0, %s748
      %s750 = sphi 0, %s748
      %s751 = sphi 0, %s750
      %s765 = sphi 0, %s751
      %s769 = sphi 0, %s769
      %s771 = sphi 0, %s769
      %s772 = sphi 0, %s771
      %s786 = sphi 0, %s772
      %s790 = sphi 0, %s790
      %s792 = sphi 0, %s790
      %s793 = sphi 0, %s792
      %s807 = sphi 0, %s793
      %s811 = sphi 0, %s811
      %s813 = sphi 0, %s811
      %s814 = sphi 0, %s813
      %s828 = sphi 0, %s814
      %s832 = sphi 0, %s832
      %s834 = sphi 0, %s832
      %s835 = sphi 0, %s834
      %s849 = sphi 0, %s835
      %s853 = sphi 0, %s853
      %s855 = sphi 0, %s853
      %s856 = sphi 0, %s855
      %s870 = sphi 0, %s856
      %s874 = sphi 0, %s874
      %s876 = sphi 0, %s874
      %s877 = sphi 0, %s876
      %s891 = sphi 0, %s877
      %s895 = sphi 0, %s895
      %s897 = sphi 0, %s895
      %s898 = sphi 0, %s897
      %s912 = sphi 0, %s898
      %s916 = sphi 0, %s916
      %s918 = sphi 0, %s916
      %s919 = sphi 0, %s918
      %s933 = sphi 0, %s919
      %s937 = sphi 0, %s937
      %s939 = sphi 0, %s937
      %s940 = sphi 0, %s939
      %s954 = sphi 0, %s940
      %s958 = sphi 0, %s958
      %s960 = sphi 0, %s958
      %s961 = sphi 0, %s960
      %s975 = sphi 0, %s961
      %s979 = sphi 0, %s979
      %s981 = sphi 0, %s979
      %s982 = sphi 0, %s981
      %s996 = sphi 0, %s982
      %s1000 = sphi 0, %s1000
      %s1002 = sphi 0, %s1000
      %s1003 = sphi 0, %s1002
      %s1017 = sphi 0, %s1003
      %s1021 = sphi 0, %s1021
      %s1023 = sphi 0, %s1021
      %s1024 = sphi 0, %s1023
      %s1038 = sphi 0, %s1024
      %s1042 = sphi 0, %s1042
      %s1044 = sphi 0, %s1042
      %s1045 = sphi 0, %s1044
      %s1059 = sphi 0, %s1045
      %s1063 = sphi 0, %s1063
      %s1065 = sphi 0, %s1063
      %s1066 = sphi 0, %s1065
      %s1080 = sphi 0, %s1066
      %s1084 = sphi 0, %s1084
      %s1086 = sphi 0, %s1084
      %s1087 = sphi 0, %s1086
      %s1101 = sphi 0, %s1087
      %s1105 = sphi 0, %s1105
      %s1107 = sphi 0, %s1105
      %s1108 = sphi 0, %s1107
      %s1122 = sphi 0, %s1108
      %s1126 = sphi 0, %s1126
      %s1128 = sphi 0, %s1126
      %s1129 = sphi 0, %s1128
      %s1143 = sphi 0, %s1129
      %s1147 = sphi 0, %s1147
      %s1149 = sphi 0, %s1147
      %s1150 = sphi 0, %s1149
      %s1164 = sphi 0, %s1150
      %s1168 = sphi 0, %s1168
      %s1170 = sphi 0, %s1168
      %s1171 = sphi 0, %s1170
      %s1185 = sphi 0, %s1171
      %s1189 = sphi 0, %s1189
      %s1191 = sphi 0, %s1189
      %s1192 = sphi 0, %s1191
      %s1206 = sphi 0, %s1192
      %s1210 = sphi 0, %s1210
      %s1212 = sphi 0, %s1210
      %s1213 = sphi 0, %s1212
      %s1227 = sphi 0, %s1213
      %s1233 = sphi 0, %s1235
      %s1236 = sphi 0, %s1233
      %s1237 = sphi 0, %s1236
      %s1253 = sphi 0, %s1237
    $region4: #{_lambda_.1} parent=1 // loop_header_branch
      %129 = sbr.rel (%p127) target = $region8
    $region5: #{_lambda_.1} parent=1 // loop_body
      %s131 = ssub.s32 %s126, 1
      %s132 = ssub.s32 %s126, 2
      %s133 = sadd.s32 %s126, 1
      %s134 = ssub.s32 %s126, %s133
      %p135 = scmp.eq.s32.totalorder %s134, 0
      %s137 = sadd.s32 %s136, 1
      %s138 = scalar_select %p135, %s136, %s137
      %p141 = pneg %p135
      %p142 = scmp.eq.s32.totalorder %s126, 1
      %p143 = por %p141, %p142
      %p144 = scmp.ne.s32.totalorder %s136, %s139
      %p145 = scmp.eq.s32.totalorder %s126, 0
      %p146 = por %p144, %p145
      %p147 = scmp.ne.s32.totalorder %s136, %s139
      %p148 = scmp.eq.s32.totalorder %s131, 1
      %p149 = por %p147, %p148
      %p150 = scmp.ne.s32.totalorder %s139, %s140
      %p151 = scmp.eq.s32.totalorder %s131, 0
      %p152 = por %p150, %p151
      %p153 = scmp.ne.s32.totalorder %s139, %s140
      %p154 = scmp.eq.s32.totalorder %s132, 1
      %p155 = por %p153, %p154
      %p157 = scmp.ne.s32.totalorder %s140, %s156
      %p158 = scmp.eq.s32.totalorder %s132, 0
      %p159 = por %p157, %p158
      %s161 = sadd.s32 %s160, 1
      %p164 = scmp.eq.s32.totalorder %s126, 1
      %p165 = scmp.ne.s32.totalorder %s160, %s162
      %p166 = scmp.eq.s32.totalorder %s126, 0
      %p167 = por %p165, %p166
      %p168 = scmp.ne.s32.totalorder %s160, %s162
      %p169 = scmp.eq.s32.totalorder %s131, 1
      %p170 = por %p168, %p169
      %p171 = scmp.ne.s32.totalorder %s162, %s163
      %p172 = scmp.eq.s32.totalorder %s131, 0
      %p173 = por %p171, %p172
      %p174 = scmp.ne.s32.totalorder %s162, %s163
      %p175 = scmp.eq.s32.totalorder %s132, 1
      %p176 = por %p174, %p175
      %p178 = scmp.ne.s32.totalorder %s163, %s177
      %p179 = scmp.eq.s32.totalorder %s132, 0
      %p180 = por %p178, %p179
      %s182 = sadd.s32 %s181, 1
      %p185 = scmp.eq.s32.totalorder %s126, 1
      %p186 = scmp.ne.s32.totalorder %s181, %s183
      %p187 = scmp.eq.s32.totalorder %s126, 0
      %p188 = por %p186, %p187
      %p189 = scmp.ne.s32.totalorder %s181, %s183
      %p190 = scmp.eq.s32.totalorder %s131, 1
      %p191 = por %p189, %p190
      %p192 = scmp.ne.s32.totalorder %s183, %s184
      %p193 = scmp.eq.s32.totalorder %s131, 0
      %p194 = por %p192, %p193
      %p195 = scmp.ne.s32.totalorder %s183, %s184
      %p196 = scmp.eq.s32.totalorder %s132, 1
      %p197 = por %p195, %p196
      %p199 = scmp.ne.s32.totalorder %s184, %s198
      %p200 = scmp.eq.s32.totalorder %s132, 0
      %p201 = por %p199, %p200
      %s203 = sadd.s32 %s202, 1
      %p206 = scmp.eq.s32.totalorder %s126, 1
      %p207 = scmp.ne.s32.totalorder %s202, %s204
      %p208 = scmp.eq.s32.totalorder %s126, 0
      %p209 = por %p207, %p208
      %p210 = scmp.ne.s32.totalorder %s202, %s204
      %p211 = scmp.eq.s32.totalorder %s131, 1
      %p212 = por %p210, %p211
      %p213 = scmp.ne.s32.totalorder %s204, %s205
      %p214 = scmp.eq.s32.totalorder %s131, 0
      %p215 = por %p213, %p214
      %p216 = scmp.ne.s32.totalorder %s204, %s205
      %p217 = scmp.eq.s32.totalorder %s132, 1
      %p218 = por %p216, %p217
      %p220 = scmp.ne.s32.totalorder %s205, %s219
      %p221 = scmp.eq.s32.totalorder %s132, 0
      %p222 = por %p220, %p221
      %s224 = sadd.s32 %s223, 1
      %p227 = scmp.eq.s32.totalorder %s126, 1
      %p228 = scmp.ne.s32.totalorder %s223, %s225
      %p229 = scmp.eq.s32.totalorder %s126, 0
      %p230 = por %p228, %p229
      %p231 = scmp.ne.s32.totalorder %s223, %s225
      %p232 = scmp.eq.s32.totalorder %s131, 1
      %p233 = por %p231, %p232
      %p234 = scmp.ne.s32.totalorder %s225, %s226
      %p235 = scmp.eq.s32.totalorder %s131, 0
      %p236 = por %p234, %p235
      %p237 = scmp.ne.s32.totalorder %s225, %s226
      %p238 = scmp.eq.s32.totalorder %s132, 1
      %p239 = por %p237, %p238
      %p241 = scmp.ne.s32.totalorder %s226, %s240
      %p242 = scmp.eq.s32.totalorder %s132, 0
      %p243 = por %p241, %p242
      %s245 = sadd.s32 %s244, 1
      %p248 = scmp.eq.s32.totalorder %s126, 1
      %p249 = scmp.ne.s32.totalorder %s244, %s246
      %p250 = scmp.eq.s32.totalorder %s126, 0
      %p251 = por %p249, %p250
      %p252 = scmp.ne.s32.totalorder %s244, %s246
      %p253 = scmp.eq.s32.totalorder %s131, 1
      %p254 = por %p252, %p253
      %p255 = scmp.ne.s32.totalorder %s246, %s247
      %p256 = scmp.eq.s32.totalorder %s131, 0
      %p257 = por %p255, %p256
      %p258 = scmp.ne.s32.totalorder %s246, %s247
      %p259 = scmp.eq.s32.totalorder %s132, 1
      %p260 = por %p258, %p259
      %p262 = scmp.ne.s32.totalorder %s247, %s261
      %p263 = scmp.eq.s32.totalorder %s132, 0
      %p264 = por %p262, %p263
      %s266 = sadd.s32 %s265, 1
      %p269 = scmp.eq.s32.totalorder %s126, 1
      %p270 = scmp.ne.s32.totalorder %s265, %s267
      %p271 = scmp.eq.s32.totalorder %s126, 0
      %p272 = por %p270, %p271
      %p273 = scmp.ne.s32.totalorder %s265, %s267
      %p274 = scmp.eq.s32.totalorder %s131, 1
      %p275 = por %p273, %p274
      %p276 = scmp.ne.s32.totalorder %s267, %s268
      %p277 = scmp.eq.s32.totalorder %s131, 0
      %p278 = por %p276, %p277
      %p279 = scmp.ne.s32.totalorder %s267, %s268
      %p280 = scmp.eq.s32.totalorder %s132, 1
      %p281 = por %p279, %p280
      %p283 = scmp.ne.s32.totalorder %s268, %s282
      %p284 = scmp.eq.s32.totalorder %s132, 0
      %p285 = por %p283, %p284
      %s287 = sadd.s32 %s286, 1
      %p290 = scmp.eq.s32.totalorder %s126, 1
      %p291 = scmp.ne.s32.totalorder %s286, %s288
      %p292 = scmp.eq.s32.totalorder %s126, 0
      %p293 = por %p291, %p292
      %p294 = scmp.ne.s32.totalorder %s286, %s288
      %p295 = scmp.eq.s32.totalorder %s131, 1
      %p296 = por %p294, %p295
      %p297 = scmp.ne.s32.totalorder %s288, %s289
      %p298 = scmp.eq.s32.totalorder %s131, 0
      %p299 = por %p297, %p298
      %p300 = scmp.ne.s32.totalorder %s288, %s289
      %p301 = scmp.eq.s32.totalorder %s132, 1
      %p302 = por %p300, %p301
      %p304 = scmp.ne.s32.totalorder %s289, %s303
      %p305 = scmp.eq.s32.totalorder %s132, 0
      %p306 = por %p304, %p305
      %s308 = sadd.s32 %s307, 1
      %p311 = scmp.eq.s32.totalorder %s126, 1
      %p312 = scmp.ne.s32.totalorder %s307, %s309
      %p313 = scmp.eq.s32.totalorder %s126, 0
      %p314 = por %p312, %p313
      %p315 = scmp.ne.s32.totalorder %s307, %s309
      %p316 = scmp.eq.s32.totalorder %s131, 1
      %p317 = por %p315, %p316
      %p318 = scmp.ne.s32.totalorder %s309, %s310
      %p319 = scmp.eq.s32.totalorder %s131, 0
      %p320 = por %p318, %p319
      %p321 = scmp.ne.s32.totalorder %s309, %s310
      %p322 = scmp.eq.s32.totalorder %s132, 1
      %p323 = por %p321, %p322
      %p325 = scmp.ne.s32.totalorder %s310, %s324
      %p326 = scmp.eq.s32.totalorder %s132, 0
      %p327 = por %p325, %p326
      %s329 = sadd.s32 %s328, 1
      %p332 = scmp.eq.s32.totalorder %s126, 1
      %p333 = scmp.ne.s32.totalorder %s328, %s330
      %p334 = scmp.eq.s32.totalorder %s126, 0
      %p335 = por %p333, %p334
      %p336 = scmp.ne.s32.totalorder %s328, %s330
      %p337 = scmp.eq.s32.totalorder %s131, 1
      %p338 = por %p336, %p337
      %p339 = scmp.ne.s32.totalorder %s330, %s331
      %p340 = scmp.eq.s32.totalorder %s131, 0
      %p341 = por %p339, %p340
      %p342 = scmp.ne.s32.totalorder %s330, %s331
      %p343 = scmp.eq.s32.totalorder %s132, 1
      %p344 = por %p342, %p343
      %p346 = scmp.ne.s32.totalorder %s331, %s345
      %p347 = scmp.eq.s32.totalorder %s132, 0
      %p348 = por %p346, %p347
      %s350 = sadd.s32 %s349, 1
      %p353 = scmp.eq.s32.totalorder %s126, 1
      %p354 = scmp.ne.s32.totalorder %s349, %s351
      %p355 = scmp.eq.s32.totalorder %s126, 0
      %p356 = por %p354, %p355
      %p357 = scmp.ne.s32.totalorder %s349, %s351
      %p358 = scmp.eq.s32.totalorder %s131, 1
      %p359 = por %p357, %p358
      %p360 = scmp.ne.s32.totalorder %s351, %s352
      %p361 = scmp.eq.s32.totalorder %s131, 0
      %p362 = por %p360, %p361
      %p363 = scmp.ne.s32.totalorder %s351, %s352
      %p364 = scmp.eq.s32.totalorder %s132, 1
      %p365 = por %p363, %p364
      %p367 = scmp.ne.s32.totalorder %s352, %s366
      %p368 = scmp.eq.s32.totalorder %s132, 0
      %p369 = por %p367, %p368
      %s371 = sadd.s32 %s370, 1
      %p374 = scmp.eq.s32.totalorder %s126, 1
      %p375 = scmp.ne.s32.totalorder %s370, %s372
      %p376 = scmp.eq.s32.totalorder %s126, 0
      %p377 = por %p375, %p376
      %p378 = scmp.ne.s32.totalorder %s370, %s372
      %p379 = scmp.eq.s32.totalorder %s131, 1
      %p380 = por %p378, %p379
      %p381 = scmp.ne.s32.totalorder %s372, %s373
      %p382 = scmp.eq.s32.totalorder %s131, 0
      %p383 = por %p381, %p382
      %p384 = scmp.ne.s32.totalorder %s372, %s373
      %p385 = scmp.eq.s32.totalorder %s132, 1
      %p386 = por %p384, %p385
      %p388 = scmp.ne.s32.totalorder %s373, %s387
      %p389 = scmp.eq.s32.totalorder %s132, 0
      %p390 = por %p388, %p389
      %s392 = sadd.s32 %s391, 1
      %p395 = scmp.eq.s32.totalorder %s126, 1
      %p396 = scmp.ne.s32.totalorder %s391, %s393
      %p397 = scmp.eq.s32.totalorder %s126, 0
      %p398 = por %p396, %p397
      %p399 = scmp.ne.s32.totalorder %s391, %s393
      %p400 = scmp.eq.s32.totalorder %s131, 1
      %p401 = por %p399, %p400
      %p402 = scmp.ne.s32.totalorder %s393, %s394
      %p403 = scmp.eq.s32.totalorder %s131, 0
      %p404 = por %p402, %p403
      %p405 = scmp.ne.s32.totalorder %s393, %s394
      %p406 = scmp.eq.s32.totalorder %s132, 1
      %p407 = por %p405, %p406
      %p409 = scmp.ne.s32.totalorder %s394, %s408
      %p410 = scmp.eq.s32.totalorder %s132, 0
      %p411 = por %p409, %p410
      %s413 = sadd.s32 %s412, 1
      %p416 = scmp.eq.s32.totalorder %s126, 1
      %p417 = scmp.ne.s32.totalorder %s412, %s414
      %p418 = scmp.eq.s32.totalorder %s126, 0
      %p419 = por %p417, %p418
      %p420 = scmp.ne.s32.totalorder %s412, %s414
      %p421 = scmp.eq.s32.totalorder %s131, 1
      %p422 = por %p420, %p421
      %p423 = scmp.ne.s32.totalorder %s414, %s415
      %p424 = scmp.eq.s32.totalorder %s131, 0
      %p425 = por %p423, %p424
      %p426 = scmp.ne.s32.totalorder %s414, %s415
      %p427 = scmp.eq.s32.totalorder %s132, 1
      %p428 = por %p426, %p427
      %p430 = scmp.ne.s32.totalorder %s415, %s429
      %p431 = scmp.eq.s32.totalorder %s132, 0
      %p432 = por %p430, %p431
      %s434 = sadd.s32 %s433, 1
      %p437 = scmp.eq.s32.totalorder %s126, 1
      %p438 = scmp.ne.s32.totalorder %s433, %s435
      %p439 = scmp.eq.s32.totalorder %s126, 0
      %p440 = por %p438, %p439
      %p441 = scmp.ne.s32.totalorder %s433, %s435
      %p442 = scmp.eq.s32.totalorder %s131, 1
      %p443 = por %p441, %p442
      %p444 = scmp.ne.s32.totalorder %s435, %s436
      %p445 = scmp.eq.s32.totalorder %s131, 0
      %p446 = por %p444, %p445
      %p447 = scmp.ne.s32.totalorder %s435, %s436
      %p448 = scmp.eq.s32.totalorder %s132, 1
      %p449 = por %p447, %p448
      %p451 = scmp.ne.s32.totalorder %s436, %s450
      %p452 = scmp.eq.s32.totalorder %s132, 0
      %p453 = por %p451, %p452
      %s455 = sadd.s32 %s454, 1
      %p458 = scmp.eq.s32.totalorder %s126, 1
      %p459 = scmp.ne.s32.totalorder %s454, %s456
      %p460 = scmp.eq.s32.totalorder %s126, 0
      %p461 = por %p459, %p460
      %p462 = scmp.ne.s32.totalorder %s454, %s456
      %p463 = scmp.eq.s32.totalorder %s131, 1
      %p464 = por %p462, %p463
      %p465 = scmp.ne.s32.totalorder %s456, %s457
      %p466 = scmp.eq.s32.totalorder %s131, 0
      %p467 = por %p465, %p466
      %p468 = scmp.ne.s32.totalorder %s456, %s457
      %p469 = scmp.eq.s32.totalorder %s132, 1
      %p470 = por %p468, %p469
      %p472 = scmp.ne.s32.totalorder %s457, %s471
      %p473 = scmp.eq.s32.totalorder %s132, 0
      %p474 = por %p472, %p473
      %s476 = sadd.s32 %s475, 1
      %p479 = scmp.eq.s32.totalorder %s126, 1
      %p480 = scmp.ne.s32.totalorder %s475, %s477
      %p481 = scmp.eq.s32.totalorder %s126, 0
      %p482 = por %p480, %p481
      %p483 = scmp.ne.s32.totalorder %s475, %s477
      %p484 = scmp.eq.s32.totalorder %s131, 1
      %p485 = por %p483, %p484
      %p486 = scmp.ne.s32.totalorder %s477, %s478
      %p487 = scmp.eq.s32.totalorder %s131, 0
      %p488 = por %p486, %p487
      %p489 = scmp.ne.s32.totalorder %s477, %s478
      %p490 = scmp.eq.s32.totalorder %s132, 1
      %p491 = por %p489, %p490
      %p493 = scmp.ne.s32.totalorder %s478, %s492
      %p494 = scmp.eq.s32.totalorder %s132, 0
      %p495 = por %p493, %p494
      %s497 = sadd.s32 %s496, 1
      %p500 = scmp.eq.s32.totalorder %s126, 1
      %p501 = scmp.ne.s32.totalorder %s496, %s498
      %p502 = scmp.eq.s32.totalorder %s126, 0
      %p503 = por %p501, %p502
      %p504 = scmp.ne.s32.totalorder %s496, %s498
      %p505 = scmp.eq.s32.totalorder %s131, 1
      %p506 = por %p504, %p505
      %p507 = scmp.ne.s32.totalorder %s498, %s499
      %p508 = scmp.eq.s32.totalorder %s131, 0
      %p509 = por %p507, %p508
      %p510 = scmp.ne.s32.totalorder %s498, %s499
      %p511 = scmp.eq.s32.totalorder %s132, 1
      %p512 = por %p510, %p511
      %p514 = scmp.ne.s32.totalorder %s499, %s513
      %p515 = scmp.eq.s32.totalorder %s132, 0
      %p516 = por %p514, %p515
      %s518 = sadd.s32 %s517, 1
      %p521 = scmp.eq.s32.totalorder %s126, 1
      %p522 = scmp.ne.s32.totalorder %s517, %s519
      %p523 = scmp.eq.s32.totalorder %s126, 0
      %p524 = por %p522, %p523
      %p525 = scmp.ne.s32.totalorder %s517, %s519
      %p526 = scmp.eq.s32.totalorder %s131, 1
      %p527 = por %p525, %p526
      %p528 = scmp.ne.s32.totalorder %s519, %s520
      %p529 = scmp.eq.s32.totalorder %s131, 0
      %p530 = por %p528, %p529
      %p531 = scmp.ne.s32.totalorder %s519, %s520
      %p532 = scmp.eq.s32.totalorder %s132, 1
      %p533 = por %p531, %p532
      %p535 = scmp.ne.s32.totalorder %s520, %s534
      %p536 = scmp.eq.s32.totalorder %s132, 0
      %p537 = por %p535, %p536
      %s539 = sadd.s32 %s538, 1
      %p542 = scmp.eq.s32.totalorder %s126, 1
      %p543 = scmp.ne.s32.totalorder %s538, %s540
      %p544 = scmp.eq.s32.totalorder %s126, 0
      %p545 = por %p543, %p544
      %p546 = scmp.ne.s32.totalorder %s538, %s540
      %p547 = scmp.eq.s32.totalorder %s131, 1
      %p548 = por %p546, %p547
      %p549 = scmp.ne.s32.totalorder %s540, %s541
      %p550 = scmp.eq.s32.totalorder %s131, 0
      %p551 = por %p549, %p550
      %p552 = scmp.ne.s32.totalorder %s540, %s541
      %p553 = scmp.eq.s32.totalorder %s132, 1
      %p554 = por %p552, %p553
      %p556 = scmp.ne.s32.totalorder %s541, %s555
      %p557 = scmp.eq.s32.totalorder %s132, 0
      %p558 = por %p556, %p557
      %s560 = sadd.s32 %s559, 1
      %p563 = scmp.eq.s32.totalorder %s126, 1
      %p564 = scmp.ne.s32.totalorder %s559, %s561
      %p565 = scmp.eq.s32.totalorder %s126, 0
      %p566 = por %p564, %p565
      %p567 = scmp.ne.s32.totalorder %s559, %s561
      %p568 = scmp.eq.s32.totalorder %s131, 1
      %p569 = por %p567, %p568
      %p570 = scmp.ne.s32.totalorder %s561, %s562
      %p571 = scmp.eq.s32.totalorder %s131, 0
      %p572 = por %p570, %p571
      %p573 = scmp.ne.s32.totalorder %s561, %s562
      %p574 = scmp.eq.s32.totalorder %s132, 1
      %p575 = por %p573, %p574
      %p577 = scmp.ne.s32.totalorder %s562, %s576
      %p578 = scmp.eq.s32.totalorder %s132, 0
      %p579 = por %p577, %p578
      %s581 = sadd.s32 %s580, 1
      %p584 = scmp.eq.s32.totalorder %s126, 1
      %p585 = scmp.ne.s32.totalorder %s580, %s582
      %p586 = scmp.eq.s32.totalorder %s126, 0
      %p587 = por %p585, %p586
      %p588 = scmp.ne.s32.totalorder %s580, %s582
      %p589 = scmp.eq.s32.totalorder %s131, 1
      %p590 = por %p588, %p589
      %p591 = scmp.ne.s32.totalorder %s582, %s583
      %p592 = scmp.eq.s32.totalorder %s131, 0
      %p593 = por %p591, %p592
      %p594 = scmp.ne.s32.totalorder %s582, %s583
      %p595 = scmp.eq.s32.totalorder %s132, 1
      %p596 = por %p594, %p595
      %p598 = scmp.ne.s32.totalorder %s583, %s597
      %p599 = scmp.eq.s32.totalorder %s132, 0
      %p600 = por %p598, %p599
      %s602 = sadd.s32 %s601, 1
      %p605 = scmp.eq.s32.totalorder %s126, 1
      %p606 = scmp.ne.s32.totalorder %s601, %s603
      %p607 = scmp.eq.s32.totalorder %s126, 0
      %p608 = por %p606, %p607
      %p609 = scmp.ne.s32.totalorder %s601, %s603
      %p610 = scmp.eq.s32.totalorder %s131, 1
      %p611 = por %p609, %p610
      %p612 = scmp.ne.s32.totalorder %s603, %s604
      %p613 = scmp.eq.s32.totalorder %s131, 0
      %p614 = por %p612, %p613
      %p615 = scmp.ne.s32.totalorder %s603, %s604
      %p616 = scmp.eq.s32.totalorder %s132, 1
      %p617 = por %p615, %p616
      %p619 = scmp.ne.s32.totalorder %s604, %s618
      %p620 = scmp.eq.s32.totalorder %s132, 0
      %p621 = por %p619, %p620
      %s623 = sadd.s32 %s622, 1
      %p626 = scmp.eq.s32.totalorder %s126, 1
      %p627 = scmp.ne.s32.totalorder %s622, %s624
      %p628 = scmp.eq.s32.totalorder %s126, 0
      %p629 = por %p627, %p628
      %p630 = scmp.ne.s32.totalorder %s622, %s624
      %p631 = scmp.eq.s32.totalorder %s131, 1
      %p632 = por %p630, %p631
      %p633 = scmp.ne.s32.totalorder %s624, %s625
      %p634 = scmp.eq.s32.totalorder %s131, 0
      %p635 = por %p633, %p634
      %p636 = scmp.ne.s32.totalorder %s624, %s625
      %p637 = scmp.eq.s32.totalorder %s132, 1
      %p638 = por %p636, %p637
      %p640 = scmp.ne.s32.totalorder %s625, %s639
      %p641 = scmp.eq.s32.totalorder %s132, 0
      %p642 = por %p640, %p641
      %s644 = sadd.s32 %s643, 1
      %p647 = scmp.eq.s32.totalorder %s126, 1
      %p648 = scmp.ne.s32.totalorder %s643, %s645
      %p649 = scmp.eq.s32.totalorder %s126, 0
      %p650 = por %p648, %p649
      %p651 = scmp.ne.s32.totalorder %s643, %s645
      %p652 = scmp.eq.s32.totalorder %s131, 1
      %p653 = por %p651, %p652
      %p654 = scmp.ne.s32.totalorder %s645, %s646
      %p655 = scmp.eq.s32.totalorder %s131, 0
      %p656 = por %p654, %p655
      %p657 = scmp.ne.s32.totalorder %s645, %s646
      %p658 = scmp.eq.s32.totalorder %s132, 1
      %p659 = por %p657, %p658
      %p661 = scmp.ne.s32.totalorder %s646, %s660
      %p662 = scmp.eq.s32.totalorder %s132, 0
      %p663 = por %p661, %p662
      %s665 = sadd.s32 %s664, 1
      %p668 = scmp.eq.s32.totalorder %s126, 1
      %p669 = scmp.ne.s32.totalorder %s664, %s666
      %p670 = scmp.eq.s32.totalorder %s126, 0
      %p671 = por %p669, %p670
      %p672 = scmp.ne.s32.totalorder %s664, %s666
      %p673 = scmp.eq.s32.totalorder %s131, 1
      %p674 = por %p672, %p673
      %p675 = scmp.ne.s32.totalorder %s666, %s667
      %p676 = scmp.eq.s32.totalorder %s131, 0
      %p677 = por %p675, %p676
      %p678 = scmp.ne.s32.totalorder %s666, %s667
      %p679 = scmp.eq.s32.totalorder %s132, 1
      %p680 = por %p678, %p679
      %p682 = scmp.ne.s32.totalorder %s667, %s681
      %p683 = scmp.eq.s32.totalorder %s132, 0
      %p684 = por %p682, %p683
      %s686 = sadd.s32 %s685, 1
      %p689 = scmp.eq.s32.totalorder %s126, 1
      %p690 = scmp.ne.s32.totalorder %s685, %s687
      %p691 = scmp.eq.s32.totalorder %s126, 0
      %p692 = por %p690, %p691
      %p693 = scmp.ne.s32.totalorder %s685, %s687
      %p694 = scmp.eq.s32.totalorder %s131, 1
      %p695 = por %p693, %p694
      %p696 = scmp.ne.s32.totalorder %s687, %s688
      %p697 = scmp.eq.s32.totalorder %s131, 0
      %p698 = por %p696, %p697
      %p699 = scmp.ne.s32.totalorder %s687, %s688
      %p700 = scmp.eq.s32.totalorder %s132, 1
      %p701 = por %p699, %p700
      %p703 = scmp.ne.s32.totalorder %s688, %s702
      %p704 = scmp.eq.s32.totalorder %s132, 0
      %p705 = por %p703, %p704
      %s707 = sadd.s32 %s706, 1
      %p710 = scmp.eq.s32.totalorder %s126, 1
      %p711 = scmp.ne.s32.totalorder %s706, %s708
      %p712 = scmp.eq.s32.totalorder %s126, 0
      %p713 = por %p711, %p712
      %p714 = scmp.ne.s32.totalorder %s706, %s708
      %p715 = scmp.eq.s32.totalorder %s131, 1
      %p716 = por %p714, %p715
      %p717 = scmp.ne.s32.totalorder %s708, %s709
      %p718 = scmp.eq.s32.totalorder %s131, 0
      %p719 = por %p717, %p718
      %p720 = scmp.ne.s32.totalorder %s708, %s709
      %p721 = scmp.eq.s32.totalorder %s132, 1
      %p722 = por %p720, %p721
      %p724 = scmp.ne.s32.totalorder %s709, %s723
      %p725 = scmp.eq.s32.totalorder %s132, 0
      %p726 = por %p724, %p725
      %s728 = sadd.s32 %s727, 1
      %p731 = scmp.eq.s32.totalorder %s126, 1
      %p732 = scmp.ne.s32.totalorder %s727, %s729
      %p733 = scmp.eq.s32.totalorder %s126, 0
      %p734 = por %p732, %p733
      %p735 = scmp.ne.s32.totalorder %s727, %s729
      %p736 = scmp.eq.s32.totalorder %s131, 1
      %p737 = por %p735, %p736
      %p738 = scmp.ne.s32.totalorder %s729, %s730
      %p739 = scmp.eq.s32.totalorder %s131, 0
      %p740 = por %p738, %p739
      %p741 = scmp.ne.s32.totalorder %s729, %s730
      %p742 = scmp.eq.s32.totalorder %s132, 1
      %p743 = por %p741, %p742
      %p745 = scmp.ne.s32.totalorder %s730, %s744
      %p746 = scmp.eq.s32.totalorder %s132, 0
      %p747 = por %p745, %p746
      %s749 = sadd.s32 %s748, 1
      %p752 = scmp.eq.s32.totalorder %s126, 1
      %p753 = scmp.ne.s32.totalorder %s748, %s750
      %p754 = scmp.eq.s32.totalorder %s126, 0
      %p755 = por %p753, %p754
      %p756 = scmp.ne.s32.totalorder %s748, %s750
      %p757 = scmp.eq.s32.totalorder %s131, 1
      %p758 = por %p756, %p757
      %p759 = scmp.ne.s32.totalorder %s750, %s751
      %p760 = scmp.eq.s32.totalorder %s131, 0
      %p761 = por %p759, %p760
      %p762 = scmp.ne.s32.totalorder %s750, %s751
      %p763 = scmp.eq.s32.totalorder %s132, 1
      %p764 = por %p762, %p763
      %p766 = scmp.ne.s32.totalorder %s751, %s765
      %p767 = scmp.eq.s32.totalorder %s132, 0
      %p768 = por %p766, %p767
      %s770 = sadd.s32 %s769, 1
      %p773 = scmp.eq.s32.totalorder %s126, 1
      %p774 = scmp.ne.s32.totalorder %s769, %s771
      %p775 = scmp.eq.s32.totalorder %s126, 0
      %p776 = por %p774, %p775
      %p777 = scmp.ne.s32.totalorder %s769, %s771
      %p778 = scmp.eq.s32.totalorder %s131, 1
      %p779 = por %p777, %p778
      %p780 = scmp.ne.s32.totalorder %s771, %s772
      %p781 = scmp.eq.s32.totalorder %s131, 0
      %p782 = por %p780, %p781
      %p783 = scmp.ne.s32.totalorder %s771, %s772
      %p784 = scmp.eq.s32.totalorder %s132, 1
      %p785 = por %p783, %p784
      %p787 = scmp.ne.s32.totalorder %s772, %s786
      %p788 = scmp.eq.s32.totalorder %s132, 0
      %p789 = por %p787, %p788
      %s791 = sadd.s32 %s790, 1
      %p794 = scmp.eq.s32.totalorder %s126, 1
      %p795 = scmp.ne.s32.totalorder %s790, %s792
      %p796 = scmp.eq.s32.totalorder %s126, 0
      %p797 = por %p795, %p796
      %p798 = scmp.ne.s32.totalorder %s790, %s792
      %p799 = scmp.eq.s32.totalorder %s131, 1
      %p800 = por %p798, %p799
      %p801 = scmp.ne.s32.totalorder %s792, %s793
      %p802 = scmp.eq.s32.totalorder %s131, 0
      %p803 = por %p801, %p802
      %p804 = scmp.ne.s32.totalorder %s792, %s793
      %p805 = scmp.eq.s32.totalorder %s132, 1
      %p806 = por %p804, %p805
      %p808 = scmp.ne.s32.totalorder %s793, %s807
      %p809 = scmp.eq.s32.totalorder %s132, 0
      %p810 = por %p808, %p809
      %s812 = sadd.s32 %s811, 1
      %p815 = scmp.eq.s32.totalorder %s126, 1
      %p816 = scmp.ne.s32.totalorder %s811, %s813
      %p817 = scmp.eq.s32.totalorder %s126, 0
      %p818 = por %p816, %p817
      %p819 = scmp.ne.s32.totalorder %s811, %s813
      %p820 = scmp.eq.s32.totalorder %s131, 1
      %p821 = por %p819, %p820
      %p822 = scmp.ne.s32.totalorder %s813, %s814
      %p823 = scmp.eq.s32.totalorder %s131, 0
      %p824 = por %p822, %p823
      %p825 = scmp.ne.s32.totalorder %s813, %s814
      %p826 = scmp.eq.s32.totalorder %s132, 1
      %p827 = por %p825, %p826
      %p829 = scmp.ne.s32.totalorder %s814, %s828
      %p830 = scmp.eq.s32.totalorder %s132, 0
      %p831 = por %p829, %p830
      %s833 = sadd.s32 %s832, 1
      %p836 = scmp.eq.s32.totalorder %s126, 1
      %p837 = scmp.ne.s32.totalorder %s832, %s834
      %p838 = scmp.eq.s32.totalorder %s126, 0
      %p839 = por %p837, %p838
      %p840 = scmp.ne.s32.totalorder %s832, %s834
      %p841 = scmp.eq.s32.totalorder %s131, 1
      %p842 = por %p840, %p841
      %p843 = scmp.ne.s32.totalorder %s834, %s835
      %p844 = scmp.eq.s32.totalorder %s131, 0
      %p845 = por %p843, %p844
      %p846 = scmp.ne.s32.totalorder %s834, %s835
      %p847 = scmp.eq.s32.totalorder %s132, 1
      %p848 = por %p846, %p847
      %p850 = scmp.ne.s32.totalorder %s835, %s849
      %p851 = scmp.eq.s32.totalorder %s132, 0
      %p852 = por %p850, %p851
      %s854 = sadd.s32 %s853, 1
      %p857 = scmp.eq.s32.totalorder %s126, 1
      %p858 = scmp.ne.s32.totalorder %s853, %s855
      %p859 = scmp.eq.s32.totalorder %s126, 0
      %p860 = por %p858, %p859
      %p861 = scmp.ne.s32.totalorder %s853, %s855
      %p862 = scmp.eq.s32.totalorder %s131, 1
      %p863 = por %p861, %p862
      %p864 = scmp.ne.s32.totalorder %s855, %s856
      %p865 = scmp.eq.s32.totalorder %s131, 0
      %p866 = por %p864, %p865
      %p867 = scmp.ne.s32.totalorder %s855, %s856
      %p868 = scmp.eq.s32.totalorder %s132, 1
      %p869 = por %p867, %p868
      %p871 = scmp.ne.s32.totalorder %s856, %s870
      %p872 = scmp.eq.s32.totalorder %s132, 0
      %p873 = por %p871, %p872
      %s875 = sadd.s32 %s874, 1
      %p878 = scmp.eq.s32.totalorder %s126, 1
      %p879 = scmp.ne.s32.totalorder %s874, %s876
      %p880 = scmp.eq.s32.totalorder %s126, 0
      %p881 = por %p879, %p880
      %p882 = scmp.ne.s32.totalorder %s874, %s876
      %p883 = scmp.eq.s32.totalorder %s131, 1
      %p884 = por %p882, %p883
      %p885 = scmp.ne.s32.totalorder %s876, %s877
      %p886 = scmp.eq.s32.totalorder %s131, 0
      %p887 = por %p885, %p886
      %p888 = scmp.ne.s32.totalorder %s876, %s877
      %p889 = scmp.eq.s32.totalorder %s132, 1
      %p890 = por %p888, %p889
      %p892 = scmp.ne.s32.totalorder %s877, %s891
      %p893 = scmp.eq.s32.totalorder %s132, 0
      %p894 = por %p892, %p893
      %s896 = sadd.s32 %s895, 1
      %p899 = scmp.eq.s32.totalorder %s126, 1
      %p900 = scmp.ne.s32.totalorder %s895, %s897
      %p901 = scmp.eq.s32.totalorder %s126, 0
      %p902 = por %p900, %p901
      %p903 = scmp.ne.s32.totalorder %s895, %s897
      %p904 = scmp.eq.s32.totalorder %s131, 1
      %p905 = por %p903, %p904
      %p906 = scmp.ne.s32.totalorder %s897, %s898
      %p907 = scmp.eq.s32.totalorder %s131, 0
      %p908 = por %p906, %p907
      %p909 = scmp.ne.s32.totalorder %s897, %s898
      %p910 = scmp.eq.s32.totalorder %s132, 1
      %p911 = por %p909, %p910
      %p913 = scmp.ne.s32.totalorder %s898, %s912
      %p914 = scmp.eq.s32.totalorder %s132, 0
      %p915 = por %p913, %p914
      %s917 = sadd.s32 %s916, 1
      %p920 = scmp.eq.s32.totalorder %s126, 1
      %p921 = scmp.ne.s32.totalorder %s916, %s918
      %p922 = scmp.eq.s32.totalorder %s126, 0
      %p923 = por %p921, %p922
      %p924 = scmp.ne.s32.totalorder %s916, %s918
      %p925 = scmp.eq.s32.totalorder %s131, 1
      %p926 = por %p924, %p925
      %p927 = scmp.ne.s32.totalorder %s918, %s919
      %p928 = scmp.eq.s32.totalorder %s131, 0
      %p929 = por %p927, %p928
      %p930 = scmp.ne.s32.totalorder %s918, %s919
      %p931 = scmp.eq.s32.totalorder %s132, 1
      %p932 = por %p930, %p931
      %p934 = scmp.ne.s32.totalorder %s919, %s933
      %p935 = scmp.eq.s32.totalorder %s132, 0
      %p936 = por %p934, %p935
      %s938 = sadd.s32 %s937, 1
      %p941 = scmp.eq.s32.totalorder %s126, 1
      %p942 = scmp.ne.s32.totalorder %s937, %s939
      %p943 = scmp.eq.s32.totalorder %s126, 0
      %p944 = por %p942, %p943
      %p945 = scmp.ne.s32.totalorder %s937, %s939
      %p946 = scmp.eq.s32.totalorder %s131, 1
      %p947 = por %p945, %p946
      %p948 = scmp.ne.s32.totalorder %s939, %s940
      %p949 = scmp.eq.s32.totalorder %s131, 0
      %p950 = por %p948, %p949
      %p951 = scmp.ne.s32.totalorder %s939, %s940
      %p952 = scmp.eq.s32.totalorder %s132, 1
      %p953 = por %p951, %p952
      %p955 = scmp.ne.s32.totalorder %s940, %s954
      %p956 = scmp.eq.s32.totalorder %s132, 0
      %p957 = por %p955, %p956
      %s959 = sadd.s32 %s958, 1
      %p962 = scmp.eq.s32.totalorder %s126, 1
      %p963 = scmp.ne.s32.totalorder %s958, %s960
      %p964 = scmp.eq.s32.totalorder %s126, 0
      %p965 = por %p963, %p964
      %p966 = scmp.ne.s32.totalorder %s958, %s960
      %p967 = scmp.eq.s32.totalorder %s131, 1
      %p968 = por %p966, %p967
      %p969 = scmp.ne.s32.totalorder %s960, %s961
      %p970 = scmp.eq.s32.totalorder %s131, 0
      %p971 = por %p969, %p970
      %p972 = scmp.ne.s32.totalorder %s960, %s961
      %p973 = scmp.eq.s32.totalorder %s132, 1
      %p974 = por %p972, %p973
      %p976 = scmp.ne.s32.totalorder %s961, %s975
      %p977 = scmp.eq.s32.totalorder %s132, 0
      %p978 = por %p976, %p977
      %s980 = sadd.s32 %s979, 1
      %p983 = scmp.eq.s32.totalorder %s126, 1
      %p984 = scmp.ne.s32.totalorder %s979, %s981
      %p985 = scmp.eq.s32.totalorder %s126, 0
      %p986 = por %p984, %p985
      %p987 = scmp.ne.s32.totalorder %s979, %s981
      %p988 = scmp.eq.s32.totalorder %s131, 1
      %p989 = por %p987, %p988
      %p990 = scmp.ne.s32.totalorder %s981, %s982
      %p991 = scmp.eq.s32.totalorder %s131, 0
      %p992 = por %p990, %p991
      %p993 = scmp.ne.s32.totalorder %s981, %s982
      %p994 = scmp.eq.s32.totalorder %s132, 1
      %p995 = por %p993, %p994
      %p997 = scmp.ne.s32.totalorder %s982, %s996
      %p998 = scmp.eq.s32.totalorder %s132, 0
      %p999 = por %p997, %p998
      %s1001 = sadd.s32 %s1000, 1
      %p1004 = scmp.eq.s32.totalorder %s126, 1
      %p1005 = scmp.ne.s32.totalorder %s1000, %s1002
      %p1006 = scmp.eq.s32.totalorder %s126, 0
      %p1007 = por %p1005, %p1006
      %p1008 = scmp.ne.s32.totalorder %s1000, %s1002
      %p1009 = scmp.eq.s32.totalorder %s131, 1
      %p1010 = por %p1008, %p1009
      %p1011 = scmp.ne.s32.totalorder %s1002, %s1003
      %p1012 = scmp.eq.s32.totalorder %s131, 0
      %p1013 = por %p1011, %p1012
      %p1014 = scmp.ne.s32.totalorder %s1002, %s1003
      %p1015 = scmp.eq.s32.totalorder %s132, 1
      %p1016 = por %p1014, %p1015
      %p1018 = scmp.ne.s32.totalorder %s1003, %s1017
      %p1019 = scmp.eq.s32.totalorder %s132, 0
      %p1020 = por %p1018, %p1019
      %s1022 = sadd.s32 %s1021, 1
      %p1025 = scmp.eq.s32.totalorder %s126, 1
      %p1026 = scmp.ne.s32.totalorder %s1021, %s1023
      %p1027 = scmp.eq.s32.totalorder %s126, 0
      %p1028 = por %p1026, %p1027
      %p1029 = scmp.ne.s32.totalorder %s1021, %s1023
      %p1030 = scmp.eq.s32.totalorder %s131, 1
      %p1031 = por %p1029, %p1030
      %p1032 = scmp.ne.s32.totalorder %s1023, %s1024
      %p1033 = scmp.eq.s32.totalorder %s131, 0
      %p1034 = por %p1032, %p1033
      %p1035 = scmp.ne.s32.totalorder %s1023, %s1024
      %p1036 = scmp.eq.s32.totalorder %s132, 1
      %p1037 = por %p1035, %p1036
      %p1039 = scmp.ne.s32.totalorder %s1024, %s1038
      %p1040 = scmp.eq.s32.totalorder %s132, 0
      %p1041 = por %p1039, %p1040
      %s1043 = sadd.s32 %s1042, 1
      %p1046 = scmp.eq.s32.totalorder %s126, 1
      %p1047 = scmp.ne.s32.totalorder %s1042, %s1044
      %p1048 = scmp.eq.s32.totalorder %s126, 0
      %p1049 = por %p1047, %p1048
      %p1050 = scmp.ne.s32.totalorder %s1042, %s1044
      %p1051 = scmp.eq.s32.totalorder %s131, 1
      %p1052 = por %p1050, %p1051
      %p1053 = scmp.ne.s32.totalorder %s1044, %s1045
      %p1054 = scmp.eq.s32.totalorder %s131, 0
      %p1055 = por %p1053, %p1054
      %p1056 = scmp.ne.s32.totalorder %s1044, %s1045
      %p1057 = scmp.eq.s32.totalorder %s132, 1
      %p1058 = por %p1056, %p1057
      %p1060 = scmp.ne.s32.totalorder %s1045, %s1059
      %p1061 = scmp.eq.s32.totalorder %s132, 0
      %p1062 = por %p1060, %p1061
      %s1064 = sadd.s32 %s1063, 1
      %p1067 = scmp.eq.s32.totalorder %s126, 1
      %p1068 = scmp.ne.s32.totalorder %s1063, %s1065
      %p1069 = scmp.eq.s32.totalorder %s126, 0
      %p1070 = por %p1068, %p1069
      %p1071 = scmp.ne.s32.totalorder %s1063, %s1065
      %p1072 = scmp.eq.s32.totalorder %s131, 1
      %p1073 = por %p1071, %p1072
      %p1074 = scmp.ne.s32.totalorder %s1065, %s1066
      %p1075 = scmp.eq.s32.totalorder %s131, 0
      %p1076 = por %p1074, %p1075
      %p1077 = scmp.ne.s32.totalorder %s1065, %s1066
      %p1078 = scmp.eq.s32.totalorder %s132, 1
      %p1079 = por %p1077, %p1078
      %p1081 = scmp.ne.s32.totalorder %s1066, %s1080
      %p1082 = scmp.eq.s32.totalorder %s132, 0
      %p1083 = por %p1081, %p1082
      %s1085 = sadd.s32 %s1084, 1
      %p1088 = scmp.eq.s32.totalorder %s126, 1
      %p1089 = scmp.ne.s32.totalorder %s1084, %s1086
      %p1090 = scmp.eq.s32.totalorder %s126, 0
      %p1091 = por %p1089, %p1090
      %p1092 = scmp.ne.s32.totalorder %s1084, %s1086
      %p1093 = scmp.eq.s32.totalorder %s131, 1
      %p1094 = por %p1092, %p1093
      %p1095 = scmp.ne.s32.totalorder %s1086, %s1087
      %p1096 = scmp.eq.s32.totalorder %s131, 0
      %p1097 = por %p1095, %p1096
      %p1098 = scmp.ne.s32.totalorder %s1086, %s1087
      %p1099 = scmp.eq.s32.totalorder %s132, 1
      %p1100 = por %p1098, %p1099
      %p1102 = scmp.ne.s32.totalorder %s1087, %s1101
      %p1103 = scmp.eq.s32.totalorder %s132, 0
      %p1104 = por %p1102, %p1103
      %s1106 = sadd.s32 %s1105, 1
      %p1109 = scmp.eq.s32.totalorder %s126, 1
      %p1110 = scmp.ne.s32.totalorder %s1105, %s1107
      %p1111 = scmp.eq.s32.totalorder %s126, 0
      %p1112 = por %p1110, %p1111
      %p1113 = scmp.ne.s32.totalorder %s1105, %s1107
      %p1114 = scmp.eq.s32.totalorder %s131, 1
      %p1115 = por %p1113, %p1114
      %p1116 = scmp.ne.s32.totalorder %s1107, %s1108
      %p1117 = scmp.eq.s32.totalorder %s131, 0
      %p1118 = por %p1116, %p1117
      %p1119 = scmp.ne.s32.totalorder %s1107, %s1108
      %p1120 = scmp.eq.s32.totalorder %s132, 1
      %p1121 = por %p1119, %p1120
      %p1123 = scmp.ne.s32.totalorder %s1108, %s1122
      %p1124 = scmp.eq.s32.totalorder %s132, 0
      %p1125 = por %p1123, %p1124
      %s1127 = sadd.s32 %s1126, 1
      %p1130 = scmp.eq.s32.totalorder %s126, 1
      %p1131 = scmp.ne.s32.totalorder %s1126, %s1128
      %p1132 = scmp.eq.s32.totalorder %s126, 0
      %p1133 = por %p1131, %p1132
      %p1134 = scmp.ne.s32.totalorder %s1126, %s1128
      %p1135 = scmp.eq.s32.totalorder %s131, 1
      %p1136 = por %p1134, %p1135
      %p1137 = scmp.ne.s32.totalorder %s1128, %s1129
      %p1138 = scmp.eq.s32.totalorder %s131, 0
      %p1139 = por %p1137, %p1138
      %p1140 = scmp.ne.s32.totalorder %s1128, %s1129
      %p1141 = scmp.eq.s32.totalorder %s132, 1
      %p1142 = por %p1140, %p1141
      %p1144 = scmp.ne.s32.totalorder %s1129, %s1143
      %p1145 = scmp.eq.s32.totalorder %s132, 0
      %p1146 = por %p1144, %p1145
      %s1148 = sadd.s32 %s1147, 1
      %p1151 = scmp.eq.s32.totalorder %s126, 1
      %p1152 = scmp.ne.s32.totalorder %s1147, %s1149
      %p1153 = scmp.eq.s32.totalorder %s126, 0
      %p1154 = por %p1152, %p1153
      %p1155 = scmp.ne.s32.totalorder %s1147, %s1149
      %p1156 = scmp.eq.s32.totalorder %s131, 1
      %p1157 = por %p1155, %p1156
      %p1158 = scmp.ne.s32.totalorder %s1149, %s1150
      %p1159 = scmp.eq.s32.totalorder %s131, 0
      %p1160 = por %p1158, %p1159
      %p1161 = scmp.ne.s32.totalorder %s1149, %s1150
      %p1162 = scmp.eq.s32.totalorder %s132, 1
      %p1163 = por %p1161, %p1162
      %p1165 = scmp.ne.s32.totalorder %s1150, %s1164
      %p1166 = scmp.eq.s32.totalorder %s132, 0
      %p1167 = por %p1165, %p1166
      %s1169 = sadd.s32 %s1168, 1
      %p1172 = scmp.eq.s32.totalorder %s126, 1
      %p1173 = scmp.ne.s32.totalorder %s1168, %s1170
      %p1174 = scmp.eq.s32.totalorder %s126, 0
      %p1175 = por %p1173, %p1174
      %p1176 = scmp.ne.s32.totalorder %s1168, %s1170
      %p1177 = scmp.eq.s32.totalorder %s131, 1
      %p1178 = por %p1176, %p1177
      %p1179 = scmp.ne.s32.totalorder %s1170, %s1171
      %p1180 = scmp.eq.s32.totalorder %s131, 0
      %p1181 = por %p1179, %p1180
      %p1182 = scmp.ne.s32.totalorder %s1170, %s1171
      %p1183 = scmp.eq.s32.totalorder %s132, 1
      %p1184 = por %p1182, %p1183
      %p1186 = scmp.ne.s32.totalorder %s1171, %s1185
      %p1187 = scmp.eq.s32.totalorder %s132, 0
      %p1188 = por %p1186, %p1187
      %s1190 = sadd.s32 %s1189, 1
      %p1193 = scmp.eq.s32.totalorder %s126, 1
      %p1194 = scmp.ne.s32.totalorder %s1189, %s1191
      %p1195 = scmp.eq.s32.totalorder %s126, 0
      %p1196 = por %p1194, %p1195
      %p1197 = scmp.ne.s32.totalorder %s1189, %s1191
      %p1198 = scmp.eq.s32.totalorder %s131, 1
      %p1199 = por %p1197, %p1198
      %p1200 = scmp.ne.s32.totalorder %s1191, %s1192
      %p1201 = scmp.eq.s32.totalorder %s131, 0
      %p1202 = por %p1200, %p1201
      %p1203 = scmp.ne.s32.totalorder %s1191, %s1192
      %p1204 = scmp.eq.s32.totalorder %s132, 1
      %p1205 = por %p1203, %p1204
      %p1207 = scmp.ne.s32.totalorder %s1192, %s1206
      %p1208 = scmp.eq.s32.totalorder %s132, 0
      %p1209 = por %p1207, %p1208
      %s1211 = sadd.s32 %s1210, 1
      %p1214 = scmp.eq.s32.totalorder %s126, 1
      %p1215 = scmp.ne.s32.totalorder %s1210, %s1212
      %p1216 = scmp.eq.s32.totalorder %s126, 0
      %p1217 = por %p1215, %p1216
      %p1218 = scmp.ne.s32.totalorder %s1210, %s1212
      %p1219 = scmp.eq.s32.totalorder %s131, 1
      %p1220 = por %p1218, %p1219
      %p1221 = scmp.ne.s32.totalorder %s1212, %s1213
      %p1222 = scmp.eq.s32.totalorder %s131, 0
      %p1223 = por %p1221, %p1222
      %p1224 = scmp.ne.s32.totalorder %s1212, %s1213
      %p1225 = scmp.eq.s32.totalorder %s132, 1
      %p1226 = por %p1224, %p1225
      %p1228 = scmp.ne.s32.totalorder %s1213, %s1227
      %p1229 = scmp.eq.s32.totalorder %s132, 0
      %p1230 = por %p1228, %p1229
      %s1231 = ssub.s32 %s126, %s133
      %p1232 = scmp.eq.s32.totalorder %s1231, 0
      %s1234 = sadd.s32 %s1233, 1
      %s1235 = scalar_select %p1232, %s1233, %s1234
      %p1238 = pneg %p1232
      %p1239 = scmp.eq.s32.totalorder %s126, 1
      %p1240 = por %p1238, %p1239
      %p1241 = scmp.ne.s32.totalorder %s1233, %s1236
      %p1242 = scmp.eq.s32.totalorder %s126, 0
      %p1243 = por %p1241, %p1242
      %p1244 = scmp.ne.s32.totalorder %s1233, %s1236
      %p1245 = scmp.eq.s32.totalorder %s131, 1
      %p1246 = por %p1244, %p1245
      %p1247 = scmp.ne.s32.totalorder %s1236, %s1237
      %p1248 = scmp.eq.s32.totalorder %s131, 0
      %p1249 = por %p1247, %p1248
      %p1250 = scmp.ne.s32.totalorder %s1236, %s1237
      %p1251 = scmp.eq.s32.totalorder %s132, 1
      %p1252 = por %p1250, %p1251
      %p1254 = scmp.ne.s32.totalorder %s1237, %s1253
      %p1255 = scmp.eq.s32.totalorder %s132, 0
      %p1256 = por %p1254, %p1255
      %p1257 = scmp.le.s32.totalorder 1, %s126
      %p1258 = scmp.lt.s32.totalorder %s126, 3
      %p1259 = pnand %p1257, %p1258
      %p1260 = pneg %p1259
      // Predicated region
      $region9: #{_lambda_.1} parent=5 // pred_check
        _
      $region10: #{_lambda_.1} parent=5 // pred_check_branch
        %1262 = sbr.rel (%p1259) target = $region12
      $region11: #{_lambda_.1} parent=5 // pred_region
        %s1263 = ssub.s32 %s126, 1
        // Predicated region
        $region13: #{_lambda_.1} parent=11 // pred_check
          %p1264 = pneg %p173
        $region14: #{_lambda_.1} parent=11 // pred_check_branch
          %1266 = sbr.rel (%p1264) target = $region16
        $region15: #{_lambda_.1} parent=11 // pred_region
          _
        $region16: #{_lambda_.1} parent=11 // pred_fallthru
          _
        // Predicated region
        $region17: #{_lambda_.1} parent=11 // pred_check
          %p1267 = pneg %p194
        $region18: #{_lambda_.1} parent=11 // pred_check_branch
          %1269 = sbr.rel (%p1267) target = $region20
        $region19: #{_lambda_.1} parent=11 // pred_region
          %1271 = vsyncadd [#allocation5], 0
          %s1273 = sshll.u32 %s5, 4
          %s1274 = int_to_ptr.hbm [resolvable:$true] %s1273
          %s1275 = sshll.u32 [#allocation4], 4
          %s1276 = int_to_ptr.vmem [resolvable:$true] %s1275
          %1278 = dma.hbm_to_vmem [thread:$0]  %s1274, 128, %s1276, [#allocation5]
        $region20: #{_lambda_.1} parent=11 // pred_fallthru
          _
        // Predicated region
        $region21: #{_lambda_.1} parent=11 // pred_check
          %p1279 = pneg %p215
        $region22: #{_lambda_.1} parent=11 // pred_check_branch
          %1281 = sbr.rel (%p1279) target = $region24
        $region23: #{_lambda_.1} parent=11 // pred_region
          _
        $region24: #{_lambda_.1} parent=11 // pred_fallthru
          _
        // Predicated region
        $region25: #{_lambda_.1} parent=11 // pred_check
          %p1282 = pneg %p236
        $region26: #{_lambda_.1} parent=11 // pred_check_branch
          %1284 = sbr.rel (%p1282) target = $region28
        $region27: #{_lambda_.1} parent=11 // pred_region
          %1286 = vsyncadd [#allocation5], 0
          %s1287 = sshll.u32 %s9, 4
          %s1288 = int_to_ptr.hbm [resolvable:$true] %s1287
          %s1289 = sshll.u32 [#allocation6], 4
          %s1290 = int_to_ptr.vmem [resolvable:$true] %s1289
          %1295 = dma.hbm_to_vmem [thread:$0]  %s1288, 512, %s1290, [#allocation5], 128, 128, 8
        $region28: #{_lambda_.1} parent=11 // pred_fallthru
          _
        // Predicated region
        $region29: #{_lambda_.1} parent=11 // pred_check
          %p1296 = pneg %p257
        $region30: #{_lambda_.1} parent=11 // pred_check_branch
          %1298 = sbr.rel (%p1296) target = $region32
        $region31: #{_lambda_.1} parent=11 // pred_region
          %1300 = vsyncadd [#allocation8], 0
          %s1301 = sshll.u32 %s11, 4
          %s1302 = int_to_ptr.hbm [resolvable:$true] %s1301
          %s1303 = sshll.u32 [#allocation7], 4
          %s1304 = int_to_ptr.vmem [resolvable:$true] %s1303
          %1309 = dma.hbm_to_vmem [thread:$0]  %s1302, 512, %s1304, [#allocation8], 128, 128, 8
        $region32: #{_lambda_.1} parent=11 // pred_fallthru
          _
        // Predicated region
        $region33: #{_lambda_.1} parent=11 // pred_check
          %p1310 = pneg %p278
        $region34: #{_lambda_.1} parent=11 // pred_check_branch
          %1312 = sbr.rel (%p1310) target = $region36
        $region35: #{_lambda_.1} parent=11 // pred_region
          %1314 = vsyncadd [#allocation8], 0
          %s1315 = sshll.u32 %s13, 4
          %s1316 = int_to_ptr.hbm [resolvable:$true] %s1315
          %s1317 = sshll.u32 [#allocation9], 4
          %s1318 = int_to_ptr.vmem [resolvable:$true] %s1317
          %1323 = dma.hbm_to_vmem [thread:$0]  %s1316, 512, %s1318, [#allocation8], 128, 128, 8
        $region36: #{_lambda_.1} parent=11 // pred_fallthru
          _
        // Predicated region
        $region37: #{_lambda_.1} parent=11 // pred_check
          %p1324 = pneg %p299
        $region38: #{_lambda_.1} parent=11 // pred_check_branch
          %1326 = sbr.rel (%p1324) target = $region40
        $region39: #{_lambda_.1} parent=11 // pred_region
          _
        $region40: #{_lambda_.1} parent=11 // pred_fallthru
          _
        // Predicated region
        $region41: #{_lambda_.1} parent=11 // pred_check
          %p1327 = pneg %p320
        $region42: #{_lambda_.1} parent=11 // pred_check_branch
          %1329 = sbr.rel (%p1327) target = $region44
        $region43: #{_lambda_.1} parent=11 // pred_region
          _
        $region44: #{_lambda_.1} parent=11 // pred_fallthru
          _
        // Predicated region
        $region45: #{_lambda_.1} parent=11 // pred_check
          %p1330 = pneg %p341
        $region46: #{_lambda_.1} parent=11 // pred_check_branch
          %1332 = sbr.rel (%p1330) target = $region48
        $region47: #{_lambda_.1} parent=11 // pred_region
          _
        $region48: #{_lambda_.1} parent=11 // pred_fallthru
          _
        // Predicated region
        $region49: #{_lambda_.1} parent=11 // pred_check
          %p1333 = pneg %p362
        $region50: #{_lambda_.1} parent=11 // pred_check_branch
          %1335 = sbr.rel (%p1333) target = $region52
        $region51: #{_lambda_.1} parent=11 // pred_region
          %1337 = vsyncadd [#allocation11], 0
          %s1338 = sshll.u32 %s21, 4
          %s1339 = int_to_ptr.hbm [resolvable:$true] %s1338
          %s1340 = sshll.u32 [#allocation10], 4
          %s1341 = int_to_ptr.vmem [resolvable:$true] %s1340
          %1346 = dma.hbm_to_vmem [thread:$0]  %s1339, 256, %s1341, [#allocation11], 128, 128, 8
        $region52: #{_lambda_.1} parent=11 // pred_fallthru
          _
        // Predicated region
        $region53: #{_lambda_.1} parent=11 // pred_check
          %p1347 = pneg %p383
        $region54: #{_lambda_.1} parent=11 // pred_check_branch
          %1349 = sbr.rel (%p1347) target = $region56
        $region55: #{_lambda_.1} parent=11 // pred_region
          _
        $region56: #{_lambda_.1} parent=11 // pred_fallthru
          _
        // Predicated region
        $region57: #{_lambda_.1} parent=11 // pred_check
          %p1350 = pneg %p404
        $region58: #{_lambda_.1} parent=11 // pred_check_branch
          %1352 = sbr.rel (%p1350) target = $region60
        $region59: #{_lambda_.1} parent=11 // pred_region
          %1354 = vsyncadd [#allocation11], 0
          %s1355 = sshll.u32 %s25, 4
          %s1356 = int_to_ptr.hbm [resolvable:$true] %s1355
          %s1357 = sshll.u32 [#allocation12], 4
          %s1358 = int_to_ptr.vmem [resolvable:$true] %s1357
          %1363 = dma.hbm_to_vmem [thread:$0]  %s1356, 256, %s1358, [#allocation11], 128, 128, 8
        $region60: #{_lambda_.1} parent=11 // pred_fallthru
          _
        // Predicated region
        $region61: #{_lambda_.1} parent=11 // pred_check
          %p1364 = pneg %p425
        $region62: #{_lambda_.1} parent=11 // pred_check_branch
          %1366 = sbr.rel (%p1364) target = $region64
        $region63: #{_lambda_.1} parent=11 // pred_region
          _
        $region64: #{_lambda_.1} parent=11 // pred_fallthru
          _
        // Predicated region
        $region65: #{_lambda_.1} parent=11 // pred_check
          %p1367 = pneg %p446
        $region66: #{_lambda_.1} parent=11 // pred_check_branch
          %1369 = sbr.rel (%p1367) target = $region68
        $region67: #{_lambda_.1} parent=11 // pred_region
          %1371 = vsyncadd [#allocation14], 0
          %s1372 = sshll.u32 %s29, 4
          %s1373 = int_to_ptr.hbm [resolvable:$true] %s1372
          %s1374 = sshll.u32 [#allocation13], 4
          %s1375 = int_to_ptr.vmem [resolvable:$true] %s1374
          %1380 = dma.hbm_to_vmem [thread:$0]  %s1373, 512, %s1375, [#allocation14], 128, 128, 8
        $region68: #{_lambda_.1} parent=11 // pred_fallthru
          _
        // Predicated region
        $region69: #{_lambda_.1} parent=11 // pred_check
          %p1381 = pneg %p467
        $region70: #{_lambda_.1} parent=11 // pred_check_branch
          %1383 = sbr.rel (%p1381) target = $region72
        $region71: #{_lambda_.1} parent=11 // pred_region
          _
        $region72: #{_lambda_.1} parent=11 // pred_fallthru
          _
        // Predicated region
        $region73: #{_lambda_.1} parent=11 // pred_check
          %p1384 = pneg %p488
        $region74: #{_lambda_.1} parent=11 // pred_check_branch
          %1386 = sbr.rel (%p1384) target = $region76
        $region75: #{_lambda_.1} parent=11 // pred_region
          %1388 = vsyncadd [#allocation14], 0
          %s1389 = sshll.u32 %s33, 4
          %s1390 = int_to_ptr.hbm [resolvable:$true] %s1389
          %s1391 = sshll.u32 [#allocation15], 4
          %s1392 = int_to_ptr.vmem [resolvable:$true] %s1391
          %1397 = dma.hbm_to_vmem [thread:$0]  %s1390, 512, %s1392, [#allocation14], 128, 128, 8
        $region76: #{_lambda_.1} parent=11 // pred_fallthru
          _
        // Predicated region
        $region77: #{_lambda_.1} parent=11 // pred_check
          %p1398 = pneg %p509
        $region78: #{_lambda_.1} parent=11 // pred_check_branch
          %1400 = sbr.rel (%p1398) target = $region80
        $region79: #{_lambda_.1} parent=11 // pred_region
          %1402 = vsyncadd [#allocation17], 0
          %s1403 = sshll.u32 %s35, 4
          %s1404 = int_to_ptr.hbm [resolvable:$true] %s1403
          %s1405 = sshll.u32 [#allocation16], 4
          %s1406 = int_to_ptr.vmem [resolvable:$true] %s1405
          %1411 = dma.hbm_to_vmem [thread:$0]  %s1404, 512, %s1406, [#allocation17], 128, 128, 8
        $region80: #{_lambda_.1} parent=11 // pred_fallthru
          _
        // Predicated region
        $region81: #{_lambda_.1} parent=11 // pred_check
          %p1412 = pneg %p530
        $region82: #{_lambda_.1} parent=11 // pred_check_branch
          %1414 = sbr.rel (%p1412) target = $region84
        $region83: #{_lambda_.1} parent=11 // pred_region
          %1416 = vsyncadd [#allocation17], 0
          %s1417 = sshll.u32 %s37, 4
          %s1418 = int_to_ptr.hbm [resolvable:$true] %s1417
          %s1419 = sshll.u32 [#allocation18], 4
          %s1420 = int_to_ptr.vmem [resolvable:$true] %s1419
          %1425 = dma.hbm_to_vmem [thread:$0]  %s1418, 512, %s1420, [#allocation17], 128, 128, 8
        $region84: #{_lambda_.1} parent=11 // pred_fallthru
          _
        // Predicated region
        $region85: #{_lambda_.1} parent=11 // pred_check
          %p1426 = pneg %p551
        $region86: #{_lambda_.1} parent=11 // pred_check_branch
          %1428 = sbr.rel (%p1426) target = $region88
        $region87: #{_lambda_.1} parent=11 // pred_region
          _
        $region88: #{_lambda_.1} parent=11 // pred_fallthru
          _
        // Predicated region
        $region89: #{_lambda_.1} parent=11 // pred_check
          %p1429 = pneg %p572
        $region90: #{_lambda_.1} parent=11 // pred_check_branch
          %1431 = sbr.rel (%p1429) target = $region92
        $region91: #{_lambda_.1} parent=11 // pred_region
          _
        $region92: #{_lambda_.1} parent=11 // pred_fallthru
          _
        // Predicated region
        $region93: #{_lambda_.1} parent=11 // pred_check
          %p1432 = pneg %p593
        $region94: #{_lambda_.1} parent=11 // pred_check_branch
          %1434 = sbr.rel (%p1432) target = $region96
        $region95: #{_lambda_.1} parent=11 // pred_region
          _
        $region96: #{_lambda_.1} parent=11 // pred_fallthru
          _
        // Predicated region
        $region97: #{_lambda_.1} parent=11 // pred_check
          %p1435 = pneg %p614
        $region98: #{_lambda_.1} parent=11 // pred_check_branch
          %1437 = sbr.rel (%p1435) target = $region100
        $region99: #{_lambda_.1} parent=11 // pred_region
          %1439 = vsyncadd [#allocation20], 0
          %s1440 = sshll.u32 %s45, 4
          %s1441 = int_to_ptr.hbm [resolvable:$true] %s1440
          %s1442 = sshll.u32 [#allocation19], 4
          %s1443 = int_to_ptr.vmem [resolvable:$true] %s1442
          %1448 = dma.hbm_to_vmem [thread:$0]  %s1441, 256, %s1443, [#allocation20], 128, 128, 8
        $region100: #{_lambda_.1} parent=11 // pred_fallthru
          _
        // Predicated region
        $region101: #{_lambda_.1} parent=11 // pred_check
          %p1449 = pneg %p635
        $region102: #{_lambda_.1} parent=11 // pred_check_branch
          %1451 = sbr.rel (%p1449) target = $region104
        $region103: #{_lambda_.1} parent=11 // pred_region
          _
        $region104: #{_lambda_.1} parent=11 // pred_fallthru
          _
        // Predicated region
        $region105: #{_lambda_.1} parent=11 // pred_check
          %p1452 = pneg %p656
        $region106: #{_lambda_.1} parent=11 // pred_check_branch
          %1454 = sbr.rel (%p1452) target = $region108
        $region107: #{_lambda_.1} parent=11 // pred_region
          %1456 = vsyncadd [#allocation20], 0
          %s1457 = sshll.u32 %s49, 4
          %s1458 = int_to_ptr.hbm [resolvable:$true] %s1457
          %s1459 = sshll.u32 [#allocation21], 4
          %s1460 = int_to_ptr.vmem [resolvable:$true] %s1459
          %1465 = dma.hbm_to_vmem [thread:$0]  %s1458, 256, %s1460, [#allocation20], 128, 128, 8
        $region108: #{_lambda_.1} parent=11 // pred_fallthru
          _
        // Predicated region
        $region109: #{_lambda_.1} parent=11 // pred_check
          %p1466 = pneg %p677
        $region110: #{_lambda_.1} parent=11 // pred_check_branch
          %1468 = sbr.rel (%p1466) target = $region112
        $region111: #{_lambda_.1} parent=11 // pred_region
          _
        $region112: #{_lambda_.1} parent=11 // pred_fallthru
          _
        // Predicated region
        $region113: #{_lambda_.1} parent=11 // pred_check
          %p1469 = pneg %p698
        $region114: #{_lambda_.1} parent=11 // pred_check_branch
          %1471 = sbr.rel (%p1469) target = $region116
        $region115: #{_lambda_.1} parent=11 // pred_region
          %1473 = vsyncadd [#allocation23], 0
          %s1474 = sshll.u32 %s53, 4
          %s1475 = int_to_ptr.hbm [resolvable:$true] %s1474
          %s1476 = sshll.u32 [#allocation22], 4
          %s1477 = int_to_ptr.vmem [resolvable:$true] %s1476
          %1482 = dma.hbm_to_vmem [thread:$0]  %s1475, 512, %s1477, [#allocation23], 128, 128, 8
        $region116: #{_lambda_.1} parent=11 // pred_fallthru
          _
        // Predicated region
        $region117: #{_lambda_.1} parent=11 // pred_check
          %p1483 = pneg %p719
        $region118: #{_lambda_.1} parent=11 // pred_check_branch
          %1485 = sbr.rel (%p1483) target = $region120
        $region119: #{_lambda_.1} parent=11 // pred_region
          _
        $region120: #{_lambda_.1} parent=11 // pred_fallthru
          _
        // Predicated region
        $region121: #{_lambda_.1} parent=11 // pred_check
          %p1486 = pneg %p740
        $region122: #{_lambda_.1} parent=11 // pred_check_branch
          %1488 = sbr.rel (%p1486) target = $region124
        $region123: #{_lambda_.1} parent=11 // pred_region
          %1490 = vsyncadd [#allocation23], 0
          %s1491 = sshll.u32 %s57, 4
          %s1492 = int_to_ptr.hbm [resolvable:$true] %s1491
          %s1493 = sshll.u32 [#allocation24], 4
          %s1494 = int_to_ptr.vmem [resolvable:$true] %s1493
          %1499 = dma.hbm_to_vmem [thread:$0]  %s1492, 1024, %s1494, [#allocation23], 128, 128, 8
        $region124: #{_lambda_.1} parent=11 // pred_fallthru
          _
        // Predicated region
        $region125: #{_lambda_.1} parent=11 // pred_check
          %p1500 = pneg %p761
        $region126: #{_lambda_.1} parent=11 // pred_check_branch
          %1502 = sbr.rel (%p1500) target = $region128
        $region127: #{_lambda_.1} parent=11 // pred_region
          %1504 = vsyncadd [#allocation26], 0
          %s1505 = sshll.u32 %s59, 4
          %s1506 = int_to_ptr.hbm [resolvable:$true] %s1505
          %s1507 = sshll.u32 [#allocation25], 4
          %s1508 = int_to_ptr.vmem [resolvable:$true] %s1507
          %1513 = dma.hbm_to_vmem [thread:$0]  %s1506, 1024, %s1508, [#allocation26], 128, 128, 8
        $region128: #{_lambda_.1} parent=11 // pred_fallthru
          _
        // Predicated region
        $region129: #{_lambda_.1} parent=11 // pred_check
          %p1514 = pneg %p782
        $region130: #{_lambda_.1} parent=11 // pred_check_branch
          %1516 = sbr.rel (%p1514) target = $region132
        $region131: #{_lambda_.1} parent=11 // pred_region
          %1518 = vsyncadd [#allocation26], 0
          %s1519 = sshll.u32 %s61, 4
          %s1520 = int_to_ptr.hbm [resolvable:$true] %s1519
          %s1521 = sshll.u32 [#allocation27], 4
          %s1522 = int_to_ptr.vmem [resolvable:$true] %s1521
          %1527 = dma.hbm_to_vmem [thread:$0]  %s1520, 1024, %s1522, [#allocation26], 128, 128, 8
        $region132: #{_lambda_.1} parent=11 // pred_fallthru
          _
        // Predicated region
        $region133: #{_lambda_.1} parent=11 // pred_check
          %p1528 = pneg %p803
        $region134: #{_lambda_.1} parent=11 // pred_check_branch
          %1530 = sbr.rel (%p1528) target = $region136
        $region135: #{_lambda_.1} parent=11 // pred_region
          _
        $region136: #{_lambda_.1} parent=11 // pred_fallthru
          _
        // Predicated region
        $region137: #{_lambda_.1} parent=11 // pred_check
          %p1531 = pneg %p824
        $region138: #{_lambda_.1} parent=11 // pred_check_branch
          %1533 = sbr.rel (%p1531) target = $region140
        $region139: #{_lambda_.1} parent=11 // pred_region
          _
        $region140: #{_lambda_.1} parent=11 // pred_fallthru
          _
        // Predicated region
        $region141: #{_lambda_.1} parent=11 // pred_check
          %p1534 = pneg %p845
        $region142: #{_lambda_.1} parent=11 // pred_check_branch
          %1536 = sbr.rel (%p1534) target = $region144
        $region143: #{_lambda_.1} parent=11 // pred_region
          _
        $region144: #{_lambda_.1} parent=11 // pred_fallthru
          _
        // Predicated region
        $region145: #{_lambda_.1} parent=11 // pred_check
          %p1537 = pneg %p866
        $region146: #{_lambda_.1} parent=11 // pred_check_branch
          %1539 = sbr.rel (%p1537) target = $region148
        $region147: #{_lambda_.1} parent=11 // pred_region
          %1541 = vsyncadd [#allocation29], 0
          %s1542 = sshll.u32 %s69, 4
          %s1543 = int_to_ptr.hbm [resolvable:$true] %s1542
          %s1544 = sshll.u32 [#allocation28], 4
          %s1545 = int_to_ptr.vmem [resolvable:$true] %s1544
          %1550 = dma.hbm_to_vmem [thread:$0]  %s1543, 512, %s1545, [#allocation29], 128, 128, 8
        $region148: #{_lambda_.1} parent=11 // pred_fallthru
          _
        // Predicated region
        $region149: #{_lambda_.1} parent=11 // pred_check
          %p1551 = pneg %p887
        $region150: #{_lambda_.1} parent=11 // pred_check_branch
          %1553 = sbr.rel (%p1551) target = $region152
        $region151: #{_lambda_.1} parent=11 // pred_region
          _
        $region152: #{_lambda_.1} parent=11 // pred_fallthru
          _
        // Predicated region
        $region153: #{_lambda_.1} parent=11 // pred_check
          %p1554 = pneg %p908
        $region154: #{_lambda_.1} parent=11 // pred_check_branch
          %1556 = sbr.rel (%p1554) target = $region156
        $region155: #{_lambda_.1} parent=11 // pred_region
          %1558 = vsyncadd [#allocation29], 0
          %s1559 = sshll.u32 %s73, 4
          %s1560 = int_to_ptr.hbm [resolvable:$true] %s1559
          %s1561 = sshll.u32 [#allocation30], 4
          %s1562 = int_to_ptr.vmem [resolvable:$true] %s1561
          %1567 = dma.hbm_to_vmem [thread:$0]  %s1560, 512, %s1562, [#allocation29], 128, 128, 8
        $region156: #{_lambda_.1} parent=11 // pred_fallthru
          _
        // Predicated region
        $region157: #{_lambda_.1} parent=11 // pred_check
          %p1568 = pneg %p929
        $region158: #{_lambda_.1} parent=11 // pred_check_branch
          %1570 = sbr.rel (%p1568) target = $region160
        $region159: #{_lambda_.1} parent=11 // pred_region
          _
        $region160: #{_lambda_.1} parent=11 // pred_fallthru
          _
        // Predicated region
        $region161: #{_lambda_.1} parent=11 // pred_check
          %p1571 = pneg %p950
        $region162: #{_lambda_.1} parent=11 // pred_check_branch
          %1573 = sbr.rel (%p1571) target = $region164
        $region163: #{_lambda_.1} parent=11 // pred_region
          %1575 = vsyncadd [#allocation32], 0
          %s1576 = sshll.u32 %s77, 4
          %s1577 = int_to_ptr.hbm [resolvable:$true] %s1576
          %s1578 = sshll.u32 [#allocation31], 4
          %s1579 = int_to_ptr.vmem [resolvable:$true] %s1578
          %1584 = dma.hbm_to_vmem [thread:$0]  %s1577, 512, %s1579, [#allocation32], 128, 128, 8
        $region164: #{_lambda_.1} parent=11 // pred_fallthru
          _
        // Predicated region
        $region165: #{_lambda_.1} parent=11 // pred_check
          %p1585 = pneg %p971
        $region166: #{_lambda_.1} parent=11 // pred_check_branch
          %1587 = sbr.rel (%p1585) target = $region168
        $region167: #{_lambda_.1} parent=11 // pred_region
          _
        $region168: #{_lambda_.1} parent=11 // pred_fallthru
          _
        // Predicated region
        $region169: #{_lambda_.1} parent=11 // pred_check
          %p1588 = pneg %p992
        $region170: #{_lambda_.1} parent=11 // pred_check_branch
          %1590 = sbr.rel (%p1588) target = $region172
        $region171: #{_lambda_.1} parent=11 // pred_region
          %1592 = vsyncadd [#allocation32], 0
          %s1593 = sshll.u32 %s81, 4
          %s1594 = int_to_ptr.hbm [resolvable:$true] %s1593
          %s1595 = sshll.u32 [#allocation33], 4
          %s1596 = int_to_ptr.vmem [resolvable:$true] %s1595
          %1601 = dma.hbm_to_vmem [thread:$0]  %s1594, 1024, %s1596, [#allocation32], 128, 128, 8
        $region172: #{_lambda_.1} parent=11 // pred_fallthru
          _
        // Predicated region
        $region173: #{_lambda_.1} parent=11 // pred_check
          %p1602 = pneg %p1013
        $region174: #{_lambda_.1} parent=11 // pred_check_branch
          %1604 = sbr.rel (%p1602) target = $region176
        $region175: #{_lambda_.1} parent=11 // pred_region
          %1606 = vsyncadd [#allocation35], 0
          %s1607 = sshll.u32 %s83, 4
          %s1608 = int_to_ptr.hbm [resolvable:$true] %s1607
          %s1609 = sshll.u32 [#allocation34], 4
          %s1610 = int_to_ptr.vmem [resolvable:$true] %s1609
          %1615 = dma.hbm_to_vmem [thread:$0]  %s1608, 1024, %s1610, [#allocation35], 128, 128, 8
        $region176: #{_lambda_.1} parent=11 // pred_fallthru
          _
        // Predicated region
        $region177: #{_lambda_.1} parent=11 // pred_check
          %p1616 = pneg %p1034
        $region178: #{_lambda_.1} parent=11 // pred_check_branch
          %1618 = sbr.rel (%p1616) target = $region180
        $region179: #{_lambda_.1} parent=11 // pred_region
          %1620 = vsyncadd [#allocation35], 0
          %s1621 = sshll.u32 %s85, 4
          %s1622 = int_to_ptr.hbm [resolvable:$true] %s1621
          %s1623 = sshll.u32 [#allocation36], 4
          %s1624 = int_to_ptr.vmem [resolvable:$true] %s1623
          %1629 = dma.hbm_to_vmem [thread:$0]  %s1622, 1024, %s1624, [#allocation35], 128, 128, 8
        $region180: #{_lambda_.1} parent=11 // pred_fallthru
          _
        // Predicated region
        $region181: #{_lambda_.1} parent=11 // pred_check
          %p1630 = pneg %p1055
        $region182: #{_lambda_.1} parent=11 // pred_check_branch
          %1632 = sbr.rel (%p1630) target = $region184
        $region183: #{_lambda_.1} parent=11 // pred_region
          _
        $region184: #{_lambda_.1} parent=11 // pred_fallthru
          _
        // Predicated region
        $region185: #{_lambda_.1} parent=11 // pred_check
          %p1633 = pneg %p1076
        $region186: #{_lambda_.1} parent=11 // pred_check_branch
          %1635 = sbr.rel (%p1633) target = $region188
        $region187: #{_lambda_.1} parent=11 // pred_region
          _
        $region188: #{_lambda_.1} parent=11 // pred_fallthru
          _
        // Predicated region
        $region189: #{_lambda_.1} parent=11 // pred_check
          %p1636 = pneg %p1097
        $region190: #{_lambda_.1} parent=11 // pred_check_branch
          %1638 = sbr.rel (%p1636) target = $region192
        $region191: #{_lambda_.1} parent=11 // pred_region
          _
        $region192: #{_lambda_.1} parent=11 // pred_fallthru
          _
        // Predicated region
        $region193: #{_lambda_.1} parent=11 // pred_check
          %p1639 = pneg %p1118
        $region194: #{_lambda_.1} parent=11 // pred_check_branch
          %1641 = sbr.rel (%p1639) target = $region196
        $region195: #{_lambda_.1} parent=11 // pred_region
          %1643 = vsyncadd [#allocation38], 0
          %s1644 = sshll.u32 %s93, 4
          %s1645 = int_to_ptr.hbm [resolvable:$true] %s1644
          %s1646 = sshll.u32 [#allocation37], 4
          %s1647 = int_to_ptr.vmem [resolvable:$true] %s1646
          %1652 = dma.hbm_to_vmem [thread:$0]  %s1645, 512, %s1647, [#allocation38], 128, 128, 8
        $region196: #{_lambda_.1} parent=11 // pred_fallthru
          _
        // Predicated region
        $region197: #{_lambda_.1} parent=11 // pred_check
          %p1653 = pneg %p1139
        $region198: #{_lambda_.1} parent=11 // pred_check_branch
          %1655 = sbr.rel (%p1653) target = $region200
        $region199: #{_lambda_.1} parent=11 // pred_region
          _
        $region200: #{_lambda_.1} parent=11 // pred_fallthru
          _
        // Predicated region
        $region201: #{_lambda_.1} parent=11 // pred_check
          %p1656 = pneg %p1160
        $region202: #{_lambda_.1} parent=11 // pred_check_branch
          %1658 = sbr.rel (%p1656) target = $region204
        $region203: #{_lambda_.1} parent=11 // pred_region
          %1660 = vsyncadd [#allocation38], 0
          %s1661 = sshll.u32 %s97, 4
          %s1662 = int_to_ptr.hbm [resolvable:$true] %s1661
          %s1663 = sshll.u32 [#allocation39], 4
          %s1664 = int_to_ptr.vmem [resolvable:$true] %s1663
          %1669 = dma.hbm_to_vmem [thread:$0]  %s1662, 512, %s1664, [#allocation38], 128, 128, 8
        $region204: #{_lambda_.1} parent=11 // pred_fallthru
          _
        // Predicated region
        $region205: #{_lambda_.1} parent=11 // pred_check
          %p1670 = pneg %p1181
        $region206: #{_lambda_.1} parent=11 // pred_check_branch
          %1672 = sbr.rel (%p1670) target = $region208
        $region207: #{_lambda_.1} parent=11 // pred_region
          _
        $region208: #{_lambda_.1} parent=11 // pred_fallthru
          _
        // Predicated region
        $region209: #{_lambda_.1} parent=11 // pred_check
          %p1673 = pneg %p1202
        $region210: #{_lambda_.1} parent=11 // pred_check_branch
          %1675 = sbr.rel (%p1673) target = $region212
        $region211: #{_lambda_.1} parent=11 // pred_region
          _
        $region212: #{_lambda_.1} parent=11 // pred_fallthru
          _
        // Predicated region
        $region213: #{_lambda_.1} parent=11 // pred_check
          %p1676 = pneg %p1223
        $region214: #{_lambda_.1} parent=11 // pred_check_branch
          %1678 = sbr.rel (%p1676) target = $region216
        $region215: #{_lambda_.1} parent=11 // pred_region
          _
        $region216: #{_lambda_.1} parent=11 // pred_fallthru
          _
      $region12: #{_lambda_.1} parent=5 // pred_fallthru
        _
      %p1679 = scmp.lt.s32.totalorder %s126, 2
      // Predicated region
      $region217: #{_lambda_.1} parent=5 // pred_check
        %p1680 = pneg %p1679
      $region218: #{_lambda_.1} parent=5 // pred_check_branch
        %1682 = sbr.rel (%p1680) target = $region220
      $region219: #{_lambda_.1} parent=5 // pred_region
        // Predicated region
        $region221: #{_lambda_.1} parent=219 // pred_check
          %p1683 = pneg %p146
        $region222: #{_lambda_.1} parent=219 // pred_check_branch
          %1685 = sbr.rel (%p1683) target = $region224
        $region223: #{_lambda_.1} parent=219 // pred_region
          %s1686 = sand.u32 %s136, 1
          %s1687 = scalar_lea.sflag [#allocation3], %s1686
          %s1688 = sand.u32 %s136, 1
          %s1689 = smul.addr %s1688, 8
          %s1690 = scalar_lea.vmem [#allocation2], %s1689
          %1692 = vsyncadd %s1687, 0
          %s1693 = smul.addr %s126, 8
          %s1694 = scalar_lea.hbm %s1, %s1693
          %s1696 = sshll.u32 %s1694, 4
          %s1697 = int_to_ptr.hbm [resolvable:$true] %s1696
          %s1698 = sshll.u32 %s1690, 4
          %s1699 = int_to_ptr.vmem [resolvable:$true] %s1698
          %1701 = dma.hbm_to_vmem [thread:$0]  %s1697, 128, %s1699, %s1687
        $region224: #{_lambda_.1} parent=219 // pred_fallthru
          _
      $region220: #{_lambda_.1} parent=5 // pred_fallthru
        _
      %p1702 = scmp.le.s32.totalorder 1, %s126
      %p1703 = scmp.lt.s32.totalorder %s126, 3
      %p1704 = pnand %p1702, %p1703
      %p1705 = pneg %p1704
      // Predicated region
      $region225: #{_lambda_.1} parent=5 // pred_check
        _
      $region226: #{_lambda_.1} parent=5 // pred_check_branch
        %1707 = sbr.rel (%p1704) target = $region228
      $region227: #{_lambda_.1} parent=5 // pred_region
        %s1708 = ssub.s32 %s126, 1
        %s1709 = sand.u32 %s139, 1
        %s1710 = scalar_lea.sflag [#allocation3], %s1709
        %s1711 = sand.u32 %s139, 1
        %s1712 = smul.addr %s1711, 8
        %s1713 = scalar_lea.vmem [#allocation2], %s1712
        // Predicated region
        $region229: #{_lambda_.1} parent=227 // pred_check
          %p1714 = pneg %p152
        $region230: #{_lambda_.1} parent=227 // pred_check_branch
          %1716 = sbr.rel (%p1714) target = $region232
        $region231: #{_lambda_.1} parent=227 // pred_region
          %1718 = dma.done %s1710, 128
        $region232: #{_lambda_.1} parent=227 // pred_fallthru
          _
        // Predicated region
        $region233: #{_lambda_.1} parent=227 // pred_check
          %p1719 = pneg %p194
        $region234: #{_lambda_.1} parent=227 // pred_check_branch
          %1721 = sbr.rel (%p1719) target = $region236
        $region235: #{_lambda_.1} parent=227 // pred_region
          %1723 = dma.done [#allocation5], 128
        $region236: #{_lambda_.1} parent=227 // pred_fallthru
          _
        // Predicated region
        $region237: #{_lambda_.1} parent=227 // pred_check
          %p1724 = pneg %p236
        $region238: #{_lambda_.1} parent=227 // pred_check_branch
          %1726 = sbr.rel (%p1724) target = $region240
        $region239: #{_lambda_.1} parent=227 // pred_region
          %1728 = dma.done [#allocation5], 512
        $region240: #{_lambda_.1} parent=227 // pred_fallthru
          _
        // Predicated region
        $region241: #{_lambda_.1} parent=227 // pred_check
          %p1729 = pneg %p257
        $region242: #{_lambda_.1} parent=227 // pred_check_branch
          %1731 = sbr.rel (%p1729) target = $region244
        $region243: #{_lambda_.1} parent=227 // pred_region
          %1733 = dma.done [#allocation8], 512
        $region244: #{_lambda_.1} parent=227 // pred_fallthru
          _
        // Predicated region
        $region245: #{_lambda_.1} parent=227 // pred_check
          %p1734 = pneg %p278
        $region246: #{_lambda_.1} parent=227 // pred_check_branch
          %1736 = sbr.rel (%p1734) target = $region248
        $region247: #{_lambda_.1} parent=227 // pred_region
          %1738 = dma.done [#allocation8], 512
        $region248: #{_lambda_.1} parent=227 // pred_fallthru
          _
        // Predicated region
        $region249: #{_lambda_.1} parent=227 // pred_check
          %p1739 = pneg %p362
        $region250: #{_lambda_.1} parent=227 // pred_check_branch
          %1741 = sbr.rel (%p1739) target = $region252
        $region251: #{_lambda_.1} parent=227 // pred_region
          %1743 = dma.done [#allocation11], 256
        $region252: #{_lambda_.1} parent=227 // pred_fallthru
          _
        // Predicated region
        $region253: #{_lambda_.1} parent=227 // pred_check
          %p1744 = pneg %p404
        $region254: #{_lambda_.1} parent=227 // pred_check_branch
          %1746 = sbr.rel (%p1744) target = $region256
        $region255: #{_lambda_.1} parent=227 // pred_region
          %1748 = dma.done [#allocation11], 256
        $region256: #{_lambda_.1} parent=227 // pred_fallthru
          _
        // Predicated region
        $region257: #{_lambda_.1} parent=227 // pred_check
          %p1749 = pneg %p446
        $region258: #{_lambda_.1} parent=227 // pred_check_branch
          %1751 = sbr.rel (%p1749) target = $region260
        $region259: #{_lambda_.1} parent=227 // pred_region
          %1753 = dma.done [#allocation14], 512
        $region260: #{_lambda_.1} parent=227 // pred_fallthru
          _
        // Predicated region
        $region261: #{_lambda_.1} parent=227 // pred_check
          %p1754 = pneg %p488
        $region262: #{_lambda_.1} parent=227 // pred_check_branch
          %1756 = sbr.rel (%p1754) target = $region264
        $region263: #{_lambda_.1} parent=227 // pred_region
          %1758 = dma.done [#allocation14], 512
        $region264: #{_lambda_.1} parent=227 // pred_fallthru
          _
        // Predicated region
        $region265: #{_lambda_.1} parent=227 // pred_check
          %p1759 = pneg %p509
        $region266: #{_lambda_.1} parent=227 // pred_check_branch
          %1761 = sbr.rel (%p1759) target = $region268
        $region267: #{_lambda_.1} parent=227 // pred_region
          %1763 = dma.done [#allocation17], 512
        $region268: #{_lambda_.1} parent=227 // pred_fallthru
          _
        // Predicated region
        $region269: #{_lambda_.1} parent=227 // pred_check
          %p1764 = pneg %p530
        $region270: #{_lambda_.1} parent=227 // pred_check_branch
          %1766 = sbr.rel (%p1764) target = $region272
        $region271: #{_lambda_.1} parent=227 // pred_region
          %1768 = dma.done [#allocation17], 512
        $region272: #{_lambda_.1} parent=227 // pred_fallthru
          _
        // Predicated region
        $region273: #{_lambda_.1} parent=227 // pred_check
          %p1769 = pneg %p614
        $region274: #{_lambda_.1} parent=227 // pred_check_branch
          %1771 = sbr.rel (%p1769) target = $region276
        $region275: #{_lambda_.1} parent=227 // pred_region
          %1773 = dma.done [#allocation20], 256
        $region276: #{_lambda_.1} parent=227 // pred_fallthru
          _
        // Predicated region
        $region277: #{_lambda_.1} parent=227 // pred_check
          %p1774 = pneg %p656
        $region278: #{_lambda_.1} parent=227 // pred_check_branch
          %1776 = sbr.rel (%p1774) target = $region280
        $region279: #{_lambda_.1} parent=227 // pred_region
          %1778 = dma.done [#allocation20], 256
        $region280: #{_lambda_.1} parent=227 // pred_fallthru
          _
        // Predicated region
        $region281: #{_lambda_.1} parent=227 // pred_check
          %p1779 = pneg %p698
        $region282: #{_lambda_.1} parent=227 // pred_check_branch
          %1781 = sbr.rel (%p1779) target = $region284
        $region283: #{_lambda_.1} parent=227 // pred_region
          %1783 = dma.done [#allocation23], 512
        $region284: #{_lambda_.1} parent=227 // pred_fallthru
          _
        // Predicated region
        $region285: #{_lambda_.1} parent=227 // pred_check
          %p1784 = pneg %p740
        $region286: #{_lambda_.1} parent=227 // pred_check_branch
          %1786 = sbr.rel (%p1784) target = $region288
        $region287: #{_lambda_.1} parent=227 // pred_region
          %1788 = dma.done [#allocation23], 1024
        $region288: #{_lambda_.1} parent=227 // pred_fallthru
          _
        // Predicated region
        $region289: #{_lambda_.1} parent=227 // pred_check
          %p1789 = pneg %p761
        $region290: #{_lambda_.1} parent=227 // pred_check_branch
          %1791 = sbr.rel (%p1789) target = $region292
        $region291: #{_lambda_.1} parent=227 // pred_region
          %1793 = dma.done [#allocation26], 1024
        $region292: #{_lambda_.1} parent=227 // pred_fallthru
          _
        // Predicated region
        $region293: #{_lambda_.1} parent=227 // pred_check
          %p1794 = pneg %p782
        $region294: #{_lambda_.1} parent=227 // pred_check_branch
          %1796 = sbr.rel (%p1794) target = $region296
        $region295: #{_lambda_.1} parent=227 // pred_region
          %1798 = dma.done [#allocation26], 1024
        $region296: #{_lambda_.1} parent=227 // pred_fallthru
          _
        // Predicated region
        $region297: #{_lambda_.1} parent=227 // pred_check
          %p1799 = pneg %p866
        $region298: #{_lambda_.1} parent=227 // pred_check_branch
          %1801 = sbr.rel (%p1799) target = $region300
        $region299: #{_lambda_.1} parent=227 // pred_region
          %1803 = dma.done [#allocation29], 512
        $region300: #{_lambda_.1} parent=227 // pred_fallthru
          _
        // Predicated region
        $region301: #{_lambda_.1} parent=227 // pred_check
          %p1804 = pneg %p908
        $region302: #{_lambda_.1} parent=227 // pred_check_branch
          %1806 = sbr.rel (%p1804) target = $region304
        $region303: #{_lambda_.1} parent=227 // pred_region
          %1808 = dma.done [#allocation29], 512
        $region304: #{_lambda_.1} parent=227 // pred_fallthru
          _
        // Predicated region
        $region305: #{_lambda_.1} parent=227 // pred_check
          %p1809 = pneg %p950
        $region306: #{_lambda_.1} parent=227 // pred_check_branch
          %1811 = sbr.rel (%p1809) target = $region308
        $region307: #{_lambda_.1} parent=227 // pred_region
          %1813 = dma.done [#allocation32], 512
        $region308: #{_lambda_.1} parent=227 // pred_fallthru
          _
        // Predicated region
        $region309: #{_lambda_.1} parent=227 // pred_check
          %p1814 = pneg %p992
        $region310: #{_lambda_.1} parent=227 // pred_check_branch
          %1816 = sbr.rel (%p1814) target = $region312
        $region311: #{_lambda_.1} parent=227 // pred_region
          %1818 = dma.done [#allocation32], 1024
        $region312: #{_lambda_.1} parent=227 // pred_fallthru
          _
        // Predicated region
        $region313: #{_lambda_.1} parent=227 // pred_check
          %p1819 = pneg %p1013
        $region314: #{_lambda_.1} parent=227 // pred_check_branch
          %1821 = sbr.rel (%p1819) target = $region316
        $region315: #{_lambda_.1} parent=227 // pred_region
          %1823 = dma.done [#allocation35], 1024
        $region316: #{_lambda_.1} parent=227 // pred_fallthru
          _
        // Predicated region
        $region317: #{_lambda_.1} parent=227 // pred_check
          %p1824 = pneg %p1034
        $region318: #{_lambda_.1} parent=227 // pred_check_branch
          %1826 = sbr.rel (%p1824) target = $region320
        $region319: #{_lambda_.1} parent=227 // pred_region
          %1828 = dma.done [#allocation35], 1024
        $region320: #{_lambda_.1} parent=227 // pred_fallthru
          _
        // Predicated region
        $region321: #{_lambda_.1} parent=227 // pred_check
          %p1829 = pneg %p1118
        $region322: #{_lambda_.1} parent=227 // pred_check_branch
          %1831 = sbr.rel (%p1829) target = $region324
        $region323: #{_lambda_.1} parent=227 // pred_region
          %1833 = dma.done [#allocation38], 512
        $region324: #{_lambda_.1} parent=227 // pred_fallthru
          _
        // Predicated region
        $region325: #{_lambda_.1} parent=227 // pred_check
          %p1834 = pneg %p1160
        $region326: #{_lambda_.1} parent=227 // pred_check_branch
          %1836 = sbr.rel (%p1834) target = $region328
        $region327: #{_lambda_.1} parent=227 // pred_region
          %1838 = dma.done [#allocation38], 512
        $region328: #{_lambda_.1} parent=227 // pred_fallthru
          _
        %s1839 = sand.u32 %s139, 1
        %s1840 = scalar_lea.sflag [#allocation3], %s1839
        %s1841 = sand.u32 %s139, 1
        %s1842 = smul.addr %s1841, 8
        %s1843 = scalar_lea.vmem [#allocation2], %s1842
        %p1844 = pneg %p152
        %p1845 = pneg %p149
        %p1846 = pneg %p173
        %p1847 = pneg %p170
        %p1848 = pneg %p194
        %p1849 = pneg %p191
        %p1850 = pneg %p215
        %p1851 = pneg %p212
        %p1852 = pneg %p236
        %p1853 = pneg %p233
        %p1854 = pneg %p257
        %p1855 = pneg %p254
        %p1856 = pneg %p278
        %p1857 = pneg %p275
        %p1858 = pneg %p299
        %p1859 = pneg %p296
        %p1860 = pneg %p320
        %p1861 = pneg %p317
        %p1862 = pneg %p341
        %p1863 = pneg %p338
        %p1864 = pneg %p362
        %p1865 = pneg %p359
        %p1866 = pneg %p383
        %p1867 = pneg %p380
        %p1868 = pneg %p404
        %p1869 = pneg %p401
        %p1870 = pneg %p425
        %p1871 = pneg %p422
        %p1872 = pneg %p446
        %p1873 = pneg %p443
        %p1874 = pneg %p467
        %p1875 = pneg %p464
        %p1876 = pneg %p488
        %p1877 = pneg %p485
        %p1878 = pneg %p509
        %p1879 = pneg %p506
        %p1880 = pneg %p530
        %p1881 = pneg %p527
        %p1882 = pneg %p551
        %p1883 = pneg %p548
        %p1884 = pneg %p572
        %p1885 = pneg %p569
        %p1886 = pneg %p593
        %p1887 = pneg %p590
        %p1888 = pneg %p614
        %p1889 = pneg %p611
        %p1890 = pneg %p635
        %p1891 = pneg %p632
        %p1892 = pneg %p656
        %p1893 = pneg %p653
        %p1894 = pneg %p677
        %p1895 = pneg %p674
        %p1896 = pneg %p698
        %p1897 = pneg %p695
        %p1898 = pneg %p719
        %p1899 = pneg %p716
        %p1900 = pneg %p740
        %p1901 = pneg %p737
        %p1902 = pneg %p761
        %p1903 = pneg %p758
        %p1904 = pneg %p782
        %p1905 = pneg %p779
        %p1906 = pneg %p803
        %p1907 = pneg %p800
        %p1908 = pneg %p824
        %p1909 = pneg %p821
        %p1910 = pneg %p845
        %p1911 = pneg %p842
        %p1912 = pneg %p866
        %p1913 = pneg %p863
        %p1914 = pneg %p887
        %p1915 = pneg %p884
        %p1916 = pneg %p908
        %p1917 = pneg %p905
        %p1918 = pneg %p929
        %p1919 = pneg %p926
        %p1920 = pneg %p950
        %p1921 = pneg %p947
        %p1922 = pneg %p971
        %p1923 = pneg %p968
        %p1924 = pneg %p992
        %p1925 = pneg %p989
        %p1926 = pneg %p1013
        %p1927 = pneg %p1010
        %p1928 = pneg %p1034
        %p1929 = pneg %p1031
        %p1930 = pneg %p1055
        %p1931 = pneg %p1052
        %p1932 = pneg %p1076
        %p1933 = pneg %p1073
        %p1934 = pneg %p1097
        %p1935 = pneg %p1094
        %p1936 = pneg %p1118
        %p1937 = pneg %p1115
        %p1938 = pneg %p1139
        %p1939 = pneg %p1136
        %p1940 = pneg %p1160
        %p1941 = pneg %p1157
        %p1942 = pneg %p1181
        %p1943 = pneg %p1178
        %p1944 = pneg %p1202
        %p1945 = pneg %p1199
        %p1946 = pneg %p1223
        %p1947 = pneg %p1220
        %p1948 = pneg %p1249
        %p1949 = pneg %p1246
        %p1950 = scmp.lt.s32.totalorder %s131, 1
        %s1951 = scalar_select %p1950, %s131, 1
        %s1952 = smul.addr %s1951, 3
        %s1953 = smul.addr %s1952, 8
        %s1954 = scalar_lea.vmem %s105, %s1953
        %p1955 = scmp.lt.s32.totalorder %s131, 1
        %s1956 = scalar_select %p1955, %s131, 1
        %s1957 = smul.addr %s1956, 3
        %s1958 = smul.addr %s1957, 8
        %s1959 = scalar_lea.vmem %s105, %s1958
        %v1960 = vld [vmem:[%s1713] sm:$0xff]
        %vm1961 = vcmask 130048
        %v1962 = vsel %vm1961, %v1960, 0.0
        %1963 = vadd.xlane.f32.xlu0 %v1962
        %v1964 = vpop.xlane.xlu0 %1963
        %v1965 = vrcp.pop 16.0
        %v1966 = vmul.f32 16.0, %v1965
        %v1967 = vsub.f32 1.0, %v1966
        %v1968 = vmul.f32 %v1965, %v1967
        %v1969 = vadd.f32 %v1965, %v1968
        %vm1970 = vweird.f32 %v1965
        %v1971 = vsel %vm1970, %v1965, %v1969
        %v1972 = vmul.f32 %v1964, %v1971
        %v1973 = vsub.f32 %v1960, %v1972
        %v1974 = vmul.f32 %v1973, %v1973
        %v1975 = vsel %vm1961, %v1974, 0.0
        %1976 = vadd.xlane.f32.xlu0 %v1975
        %v1977 = vpop.xlane.xlu0 %1976
        %v1978 = vmul.f32 %v1977, %v1971
        %v1979 = vadd.f32 %v1978, 1e-05
        %v1980 = vrsqrt.pop %v1979
        %v1981 = vmul.f32 %v1980, %v1979
        %v1982 = vmul.f32 %v1981, %v1980
        %v1983 = vmul.f32 0.5, %v1982
        %v1984 = vsub.f32 1.5, %v1983
        %v1985 = vmul.f32 %v1980, %v1984
        %vm1986 = vweird.f32 %v1979
        %vm1987 = vweird.f32 %v1980
        %vm1988 = vmor %vm1986, %vm1987
        %v1989 = vsel %vm1988, %v1980, %v1985
        %v1990 = vmul.f32 %v1973, %v1989
        %v1991 = vld [vmem:[#allocation6] sm:$0xff]
        %v1992 = vld [vmem:[#allocation6 + $0x8] sm:$0xff]
        %v1993 = vld [vmem:[%s15] sm:$0x1]
        %v1995 = vperm.slane %v1993, 0
        %v1998 = vsel %vm1961, %v1990, 0
        %2000 = vmatpush.msra.mxu0 0.0
        %2001 = vmatpush.msra.mxu0 0.0
        %2002 = vmatpush.msra.mxu0 0.0
        %2003 = vmatpush.msra.mxu0 0.0
        %2004 = vmatpush.msra.mxu0 0.0
        %2005 = vmatpush.msra.mxu0 0.0
        %2006 = vmatpush.msra.mxu0 0.0
        %2007 = vmatpush.msra.mxu0 0.0
        %2008 = vmatpush.msra.mxu0 0.0
        %2009 = vmatpush.msra.mxu0 0.0
        %2010 = vmatpush.msra.mxu0 0.0
        %2011 = vmatpush.msra.mxu0 0.0
        %2012 = vmatpush.msra.mxu0 0.0
        %2013 = vmatpush.msra.mxu0 0.0
        %2014 = vmatpush.msra.mxu0 %v1992
        %2015 = vmatpush.msra.mxu0 %v1991
        %2016 = vmatmul.f32.gmra.mxu0 %v1998
        %v2017 = vpop.f32.mrf.mxu0
        %v2018 = vadd.f32 %v1995, %v2017
        %2019 = vdwg.mxu0
        %v2020 = vld [vmem:[#allocation7] sm:$0xff]
        %v2021 = vld [vmem:[#allocation7 + $0x8] sm:$0xff]
        %v2022 = vld [vmem:[%s17] sm:$0x1]
        %v2024 = vperm.slane %v2022, 0
        %2026 = vmatpush.msra.mxu0 0.0
        %2027 = vmatpush.msra.mxu0 0.0
        %2028 = vmatpush.msra.mxu0 0.0
        %2029 = vmatpush.msra.mxu0 0.0
        %2030 = vmatpush.msra.mxu0 0.0
        %2031 = vmatpush.msra.mxu0 0.0
        %2032 = vmatpush.msra.mxu0 0.0
        %2033 = vmatpush.msra.mxu0 0.0
        %2034 = vmatpush.msra.mxu0 0.0
        %2035 = vmatpush.msra.mxu0 0.0
        %2036 = vmatpush.msra.mxu0 0.0
        %2037 = vmatpush.msra.mxu0 0.0
        %2038 = vmatpush.msra.mxu0 0.0
        %2039 = vmatpush.msra.mxu0 0.0
        %2040 = vmatpush.msra.mxu0 %v2021
        %2041 = vmatpush.msra.mxu0 %v2020
        %2042 = vmatmul.f32.gmra.mxu0 %v1998
        %v2043 = vpop.f32.mrf.mxu0
        %v2044 = vadd.f32 %v2024, %v2043
        %2045 = vdwg.mxu0
        %v2046 = vld [vmem:[#allocation9] sm:$0xff]
        %v2047 = vld [vmem:[#allocation9 + $0x8] sm:$0xff]
        %v2048 = vld [vmem:[%s19] sm:$0x1]
        %v2050 = vperm.slane %v2048, 0
        %2052 = vmatpush.msra.mxu0 0.0
        %2053 = vmatpush.msra.mxu0 0.0
        %2054 = vmatpush.msra.mxu0 0.0
        %2055 = vmatpush.msra.mxu0 0.0
        %2056 = vmatpush.msra.mxu0 0.0
        %2057 = vmatpush.msra.mxu0 0.0
        %2058 = vmatpush.msra.mxu0 0.0
        %2059 = vmatpush.msra.mxu0 0.0
        %2060 = vmatpush.msra.mxu0 0.0
        %2061 = vmatpush.msra.mxu0 0.0
        %2062 = vmatpush.msra.mxu0 0.0
        %2063 = vmatpush.msra.mxu0 0.0
        %2064 = vmatpush.msra.mxu0 0.0
        %2065 = vmatpush.msra.mxu0 0.0
        %2066 = vmatpush.msra.mxu0 %v2047
        %2067 = vmatpush.msra.mxu0 %v2046
        %2068 = vmatmul.f32.gmra.mxu0 %v1998
        %v2069 = vpop.f32.mrf.mxu0
        %v2070 = vadd.f32 %v2050, %v2069
        %2071 = vdwg.mxu0
        %vm2072 = vcmask 64512
        %v2074 = vsel %vm2072, %v2018, 0
        %v2077 = vsel %vm2072, %v2044, 0
        %2079 = vmatpush.xpose.msra.mxu0 0.0
        %2080 = vmatpush.xpose.msra.mxu0 0.0
        %2081 = vmatpush.xpose.msra.mxu0 0.0
        %2082 = vmatpush.xpose.msra.mxu0 0.0
        %2083 = vmatpush.xpose.msra.mxu0 0.0
        %2084 = vmatpush.xpose.msra.mxu0 0.0
        %2085 = vmatpush.xpose.msra.mxu0 0.0
        %2086 = vmatpush.xpose.msra.mxu0 0.0
        %2087 = vmatpush.xpose.msra.mxu0 0.0
        %2088 = vmatpush.xpose.msra.mxu0 0.0
        %2089 = vmatpush.xpose.msra.mxu0 0.0
        %2090 = vmatpush.xpose.msra.mxu0 0.0
        %2091 = vmatpush.xpose.msra.mxu0 0.0
        %2092 = vmatpush.xpose.msra.mxu0 0.0
        %2093 = vmatpush.xpose.msra.mxu0 0.0
        %2094 = vmatpush.xpose.msra.mxu0 %v2077
        %2095 = vmatmul.f32.gmra.mxu0 %v2074
        %v2096 = vpop.f32.mrf.mxu0
        %v2097 = vadd.f32 0.0, %v2096
        %2098 = vdwg.mxu0
        %v2099 = vmul.f32 %v2097, 0.35355338
        %v2100 = vsel %vm2072, %v2099, -inf
        %2101 = vmax.xlane.f32.xlu0 %v2100
        %v2102 = vpop.xlane.xlu0 %2101
        %v2103 = vsub.f32 %v2099, %v2102
        %v2104 = vmul.f32 %v2103, 1.442695
        %v2105 = vpow.pop %v2104
        %v2106 = vsel %vm2072, %v2105, 0.0
        %2107 = vadd.xlane.f32.xlu0 %v2106
        %v2108 = vpop.xlane.xlu0 %2107
        %v2109 = vrcp.pop %v2108
        %v2110 = vmul.f32 %v2108, %v2109
        %v2111 = vsub.f32 2.0, %v2110
        %v2112 = vmul.f32 %v2109, %v2111
        %v2114 = vsel %vm2072, %v2105, 0
        %2116 = vmatpush.msra.mxu0 0.0
        %2117 = vmatpush.msra.mxu0 0.0
        %2118 = vmatpush.msra.mxu0 0.0
        %2119 = vmatpush.msra.mxu0 0.0
        %2120 = vmatpush.msra.mxu0 0.0
        %2121 = vmatpush.msra.mxu0 0.0
        %2122 = vmatpush.msra.mxu0 0.0
        %2123 = vmatpush.msra.mxu0 0.0
        %2124 = vmatpush.msra.mxu0 0.0
        %2125 = vmatpush.msra.mxu0 0.0
        %2126 = vmatpush.msra.mxu0 0.0
        %2127 = vmatpush.msra.mxu0 0.0
        %2128 = vmatpush.msra.mxu0 0.0
        %2129 = vmatpush.msra.mxu0 0.0
        %2130 = vmatpush.msra.mxu0 0.0
        %2131 = vmatpush.msra.mxu0 %v2070
        %2132 = vmatmul.f32.gmra.mxu0 %v2114
        %v2133 = vpop.f32.mrf.mxu0
        %v2134 = vadd.f32 0.0, %v2133
        %2135 = vdwg.mxu0
        %v2136 = vmul.f32 %v2134, %v2112
        %v2137 = vld [vmem:[#allocation10] sm:$0xff]
        %s2138 = scalar_lea.vmem [#allocation6], 16
        %v2139 = vld [vmem:[%s2138] sm:$0xff]
        %v2140 = vld [vmem:[%s2138 + $0x8] sm:$0xff]
        %s2141 = scalar_lea.vmem %s15, 1
        %v2142 = vld [vmem:[%s2141] sm:$0x1]
        %v2144 = vperm.slane %v2142, 0
        %2146 = vmatpush.msra.mxu0 0.0
        %2147 = vmatpush.msra.mxu0 0.0
        %2148 = vmatpush.msra.mxu0 0.0
        %2149 = vmatpush.msra.mxu0 0.0
        %2150 = vmatpush.msra.mxu0 0.0
        %2151 = vmatpush.msra.mxu0 0.0
        %2152 = vmatpush.msra.mxu0 0.0
        %2153 = vmatpush.msra.mxu0 0.0
        %2154 = vmatpush.msra.mxu0 0.0
        %2155 = vmatpush.msra.mxu0 0.0
        %2156 = vmatpush.msra.mxu0 0.0
        %2157 = vmatpush.msra.mxu0 0.0
        %2158 = vmatpush.msra.mxu0 0.0
        %2159 = vmatpush.msra.mxu0 0.0
        %2160 = vmatpush.msra.mxu0 %v2140
        %2161 = vmatpush.msra.mxu0 %v2139
        %2162 = vmatmul.f32.gmra.mxu0 %v1998
        %v2163 = vpop.f32.mrf.mxu0
        %v2164 = vadd.f32 %v2144, %v2163
        %2165 = vdwg.mxu0
        %s2166 = scalar_lea.vmem [#allocation7], 16
        %v2167 = vld [vmem:[%s2166] sm:$0xff]
        %v2168 = vld [vmem:[%s2166 + $0x8] sm:$0xff]
        %s2169 = scalar_lea.vmem %s17, 1
        %v2170 = vld [vmem:[%s2169] sm:$0x1]
        %v2172 = vperm.slane %v2170, 0
        %2174 = vmatpush.msra.mxu0 0.0
        %2175 = vmatpush.msra.mxu0 0.0
        %2176 = vmatpush.msra.mxu0 0.0
        %2177 = vmatpush.msra.mxu0 0.0
        %2178 = vmatpush.msra.mxu0 0.0
        %2179 = vmatpush.msra.mxu0 0.0
        %2180 = vmatpush.msra.mxu0 0.0
        %2181 = vmatpush.msra.mxu0 0.0
        %2182 = vmatpush.msra.mxu0 0.0
        %2183 = vmatpush.msra.mxu0 0.0
        %2184 = vmatpush.msra.mxu0 0.0
        %2185 = vmatpush.msra.mxu0 0.0
        %2186 = vmatpush.msra.mxu0 0.0
        %2187 = vmatpush.msra.mxu0 0.0
        %2188 = vmatpush.msra.mxu0 %v2168
        %2189 = vmatpush.msra.mxu0 %v2167
        %2190 = vmatmul.f32.gmra.mxu0 %v1998
        %v2191 = vpop.f32.mrf.mxu0
        %v2192 = vadd.f32 %v2172, %v2191
        %2193 = vdwg.mxu0
        %s2194 = scalar_lea.vmem [#allocation9], 16
        %v2195 = vld [vmem:[%s2194] sm:$0xff]
        %v2196 = vld [vmem:[%s2194 + $0x8] sm:$0xff]
        %s2197 = scalar_lea.vmem %s19, 1
        %v2198 = vld [vmem:[%s2197] sm:$0x1]
        %v2200 = vperm.slane %v2198, 0
        %2202 = vmatpush.msra.mxu0 0.0
        %2203 = vmatpush.msra.mxu0 0.0
        %2204 = vmatpush.msra.mxu0 0.0
        %2205 = vmatpush.msra.mxu0 0.0
        %2206 = vmatpush.msra.mxu0 0.0
        %2207 = vmatpush.msra.mxu0 0.0
        %2208 = vmatpush.msra.mxu0 0.0
        %2209 = vmatpush.msra.mxu0 0.0
        %2210 = vmatpush.msra.mxu0 0.0
        %2211 = vmatpush.msra.mxu0 0.0
        %2212 = vmatpush.msra.mxu0 0.0
        %2213 = vmatpush.msra.mxu0 0.0
        %2214 = vmatpush.msra.mxu0 0.0
        %2215 = vmatpush.msra.mxu0 0.0
        %2216 = vmatpush.msra.mxu0 %v2196
        %2217 = vmatpush.msra.mxu0 %v2195
        %2218 = vmatmul.f32.gmra.mxu0 %v1998
        %v2219 = vpop.f32.mrf.mxu0
        %v2220 = vadd.f32 %v2200, %v2219
        %2221 = vdwg.mxu0
        %v2223 = vsel %vm2072, %v2164, 0
        %v2226 = vsel %vm2072, %v2192, 0
        %2228 = vmatpush.xpose.msra.mxu0 0.0
        %2229 = vmatpush.xpose.msra.mxu0 0.0
        %2230 = vmatpush.xpose.msra.mxu0 0.0
        %2231 = vmatpush.xpose.msra.mxu0 0.0
        %2232 = vmatpush.xpose.msra.mxu0 0.0
        %2233 = vmatpush.xpose.msra.mxu0 0.0
        %2234 = vmatpush.xpose.msra.mxu0 0.0
        %2235 = vmatpush.xpose.msra.mxu0 0.0
        %2236 = vmatpush.xpose.msra.mxu0 0.0
        %2237 = vmatpush.xpose.msra.mxu0 0.0
        %2238 = vmatpush.xpose.msra.mxu0 0.0
        %2239 = vmatpush.xpose.msra.mxu0 0.0
        %2240 = vmatpush.xpose.msra.mxu0 0.0
        %2241 = vmatpush.xpose.msra.mxu0 0.0
        %2242 = vmatpush.xpose.msra.mxu0 0.0
        %2243 = vmatpush.xpose.msra.mxu0 %v2226
        %2244 = vmatmul.f32.gmra.mxu0 %v2223
        %v2245 = vpop.f32.mrf.mxu0
        %v2246 = vadd.f32 0.0, %v2245
        %2247 = vdwg.mxu0
        %v2248 = vmul.f32 %v2246, 0.35355338
        %v2249 = vsel %vm2072, %v2248, -inf
        %2250 = vmax.xlane.f32.xlu0 %v2249
        %v2251 = vpop.xlane.xlu0 %2250
        %v2252 = vsub.f32 %v2248, %v2251
        %v2253 = vmul.f32 %v2252, 1.442695
        %v2254 = vpow.pop %v2253
        %v2255 = vsel %vm2072, %v2254, 0.0
        %2256 = vadd.xlane.f32.xlu0 %v2255
        %v2257 = vpop.xlane.xlu0 %2256
        %v2258 = vrcp.pop %v2257
        %v2259 = vmul.f32 %v2257, %v2258
        %v2260 = vsub.f32 2.0, %v2259
        %v2261 = vmul.f32 %v2258, %v2260
        %v2263 = vsel %vm2072, %v2254, 0
        %2265 = vmatpush.msra.mxu0 0.0
        %2266 = vmatpush.msra.mxu0 0.0
        %2267 = vmatpush.msra.mxu0 0.0
        %2268 = vmatpush.msra.mxu0 0.0
        %2269 = vmatpush.msra.mxu0 0.0
        %2270 = vmatpush.msra.mxu0 0.0
        %2271 = vmatpush.msra.mxu0 0.0
        %2272 = vmatpush.msra.mxu0 0.0
        %2273 = vmatpush.msra.mxu0 0.0
        %2274 = vmatpush.msra.mxu0 0.0
        %2275 = vmatpush.msra.mxu0 0.0
        %2276 = vmatpush.msra.mxu0 0.0
        %2277 = vmatpush.msra.mxu0 0.0
        %2278 = vmatpush.msra.mxu0 0.0
        %2279 = vmatpush.msra.mxu0 0.0
        %2280 = vmatpush.msra.mxu0 %v2220
        %2281 = vmatmul.f32.gmra.mxu0 %v2263
        %v2282 = vpop.f32.mrf.mxu0
        %v2283 = vadd.f32 0.0, %v2282
        %2284 = vdwg.mxu0
        %v2285 = vmul.f32 %v2283, %v2261
        %s2286 = scalar_lea.vmem [#allocation10], 8
        %v2287 = vld [vmem:[%s2286] sm:$0xff]
        %v2289 = vsel %vm2072, %v2285, 0
        %2291 = vmatpush.msra.mxu0 0.0
        %2292 = vmatpush.msra.mxu0 0.0
        %2293 = vmatpush.msra.mxu0 0.0
        %2294 = vmatpush.msra.mxu0 0.0
        %2295 = vmatpush.msra.mxu0 0.0
        %2296 = vmatpush.msra.mxu0 0.0
        %2297 = vmatpush.msra.mxu0 0.0
        %2298 = vmatpush.msra.mxu0 0.0
        %2299 = vmatpush.msra.mxu0 0.0
        %2300 = vmatpush.msra.mxu0 0.0
        %2301 = vmatpush.msra.mxu0 0.0
        %2302 = vmatpush.msra.mxu0 0.0
        %2303 = vmatpush.msra.mxu0 0.0
        %2304 = vmatpush.msra.mxu0 0.0
        %2305 = vmatpush.msra.mxu0 0.0
        %2306 = vmatpush.msra.mxu0 %v2287
        %2307 = vmatmul.f32.gmra.mxu0 %v2289
        %v2308 = vpop.f32.mrf.mxu0
        %v2309 = vadd.f32 0.0, %v2308
        %2310 = vdwg.mxu0
        %v2312 = vsel %vm2072, %v2136, 0
        %2314 = vmatpush.msra.mxu0 0.0
        %2315 = vmatpush.msra.mxu0 0.0
        %2316 = vmatpush.msra.mxu0 0.0
        %2317 = vmatpush.msra.mxu0 0.0
        %2318 = vmatpush.msra.mxu0 0.0
        %2319 = vmatpush.msra.mxu0 0.0
        %2320 = vmatpush.msra.mxu0 0.0
        %2321 = vmatpush.msra.mxu0 0.0
        %2322 = vmatpush.msra.mxu0 0.0
        %2323 = vmatpush.msra.mxu0 0.0
        %2324 = vmatpush.msra.mxu0 0.0
        %2325 = vmatpush.msra.mxu0 0.0
        %2326 = vmatpush.msra.mxu0 0.0
        %2327 = vmatpush.msra.mxu0 0.0
        %2328 = vmatpush.msra.mxu0 0.0
        %2329 = vmatpush.msra.mxu0 %v2137
        %2330 = vmatmul.f32.gmra.mxu0 %v2312
        %v2331 = vpop.f32.mrf.mxu0
        %v2332 = vadd.f32 %v2309, %v2331
        %2333 = vdwg.mxu0
        %v2334 = vadd.f32 %v1960, %v2332
        %v2335 = vld [vmem:[%s23] sm:$0x1]
        %v2337 = vperm.slane %v2335, 0
        %v2339 = vadd.f32 %v2334, %v2337
        %v2340 = vsel %vm1961, %v2339, 0.0
        %2341 = vadd.xlane.f32.xlu0 %v2340
        %v2342 = vpop.xlane.xlu0 %2341
        %v2343 = vmul.f32 %v2342, %v1971
        %v2344 = vsub.f32 %v2339, %v2343
        %v2345 = vmul.f32 %v2344, %v2344
        %v2346 = vsel %vm1961, %v2345, 0.0
        %2347 = vadd.xlane.f32.xlu0 %v2346
        %v2348 = vpop.xlane.xlu0 %2347
        %v2349 = vmul.f32 %v2348, %v1971
        %v2350 = vadd.f32 %v2349, 1e-05
        %v2351 = vrsqrt.pop %v2350
        %v2352 = vmul.f32 %v2351, %v2350
        %v2353 = vmul.f32 %v2352, %v2351
        %v2354 = vmul.f32 0.5, %v2353
        %v2355 = vsub.f32 1.5, %v2354
        %v2356 = vmul.f32 %v2351, %v2355
        %vm2357 = vweird.f32 %v2350
        %vm2358 = vweird.f32 %v2351
        %vm2359 = vmor %vm2357, %vm2358
        %v2360 = vsel %vm2359, %v2351, %v2356
        %v2361 = vmul.f32 %v2344, %v2360
        %v2362 = vld [vmem:[#allocation12] sm:$0xff]
        %v2363 = vld [vmem:[#allocation12 + $0x8] sm:$0xff]
        %v2364 = vld [vmem:[%s27] sm:$0x1]
        %v2366 = vperm.slane %v2364, 0
        %v2369 = vsel %vm1961, %v2361, 0
        %2371 = vmatpush.msra.mxu0 0.0
        %2372 = vmatpush.msra.mxu0 0.0
        %2373 = vmatpush.msra.mxu0 0.0
        %2374 = vmatpush.msra.mxu0 0.0
        %2375 = vmatpush.msra.mxu0 0.0
        %2376 = vmatpush.msra.mxu0 0.0
        %2377 = vmatpush.msra.mxu0 0.0
        %2378 = vmatpush.msra.mxu0 0.0
        %2379 = vmatpush.msra.mxu0 0.0
        %2380 = vmatpush.msra.mxu0 0.0
        %2381 = vmatpush.msra.mxu0 0.0
        %2382 = vmatpush.msra.mxu0 0.0
        %2383 = vmatpush.msra.mxu0 0.0
        %2384 = vmatpush.msra.mxu0 0.0
        %2385 = vmatpush.msra.mxu0 %v2363
        %2386 = vmatpush.msra.mxu0 %v2362
        %2387 = vmatmul.f32.gmra.mxu0 %v2369
        %v2388 = vpop.f32.mrf.mxu0
        %v2389 = vadd.f32 %v2366, %v2388
        %2390 = vdwg.mxu0
        %v2391 = vmul.f32 %v2389, 0.5
        %v2392 = vmul.f32 %v2389, 0.70710677
        %v2393 = vand.u32 2147483647, %v2392
        %v2394 = vmul.f32 %v2393, 0.3275911
        %v2395 = vadd.f32 %v2394, 1.0
        %v2396 = vrcp.pop %v2395
        %v2397 = vmul.f32 %v2395, %v2396
        %v2398 = vsub.f32 1.0, %v2397
        %v2399 = vmul.f32 %v2396, %v2398
        %v2400 = vadd.f32 %v2396, %v2399
        %vm2401 = vweird.f32 %v2395
        %vm2402 = vweird.f32 %v2396
        %vm2403 = vmor %vm2401, %vm2402
        %v2404 = vsel %vm2403, %v2396, %v2400
        %v2405 = vand.u32 2147483647, %v2395
        %vm2406 = vcmp.eq.f32.partialorder %v2405, 8.507059e+37
        %v2407 = vand.u32 %v2395, 2147483648
        %v2408 = vor.u32 1.1754944e-38, %v2407
        %v2409 = vsel %vm2406, %v2408, %v2404
        %v2410 = vmul.f32 %v2409, 1.0614054
        %v2411 = vadd.f32 %v2410, -1.4531521
        %v2412 = vmul.f32 %v2411, %v2409
        %v2413 = vadd.f32 %v2412, 1.4214138
        %v2414 = vmul.f32 %v2413, %v2409
        %v2415 = vadd.f32 %v2414, -0.28449672
        %v2416 = vmul.f32 %v2415, %v2409
        %v2417 = vadd.f32 %v2416, 0.2548296
        %v2418 = vmul.f32 %v2417, %v2409
        %v2419 = vsub.f32 0.0, %v2393
        %v2420 = vmul.f32 %v2419, %v2393
        %v2421 = vmul.f32 %v2420, 1.442695
        %v2422 = vpow.pop %v2421
        %v2423 = vmul.f32 %v2418, %v2422
        %v2424 = vsub.f32 1.0, %v2423
        %vm2425 = vcmp.ge.f32.partialorder %v2392, 0.0
        %v2426 = vsub.f32 0.0, %v2424
        %v2427 = vsel %vm2425, %v2424, %v2426
        %v2428 = vadd.f32 %v2427, 1.0
        %v2429 = vmul.f32 %v2391, %v2428
        %v2430 = vld [vmem:[#allocation13] sm:$0xff]
        %v2431 = vld [vmem:[#allocation13 + $0x8] sm:$0xff]
        %v2432 = vld [vmem:[#allocation13 + $0x10] sm:$0xff]
        %v2433 = vld [vmem:[#allocation13 + $0x18] sm:$0xff]
        %v2434 = vld [vmem:[%s31] sm:$0x1]
        %v2436 = vperm.slane %v2434, 0
        %vm2438 = vcmask 261120
        %v2440 = vsel %vm2438, %v2429, 0
        %2442 = vmatpush.msra.mxu0 0.0
        %2443 = vmatpush.msra.mxu0 0.0
        %2444 = vmatpush.msra.mxu0 0.0
        %2445 = vmatpush.msra.mxu0 0.0
        %2446 = vmatpush.msra.mxu0 0.0
        %2447 = vmatpush.msra.mxu0 0.0
        %2448 = vmatpush.msra.mxu0 0.0
        %2449 = vmatpush.msra.mxu0 0.0
        %2450 = vmatpush.msra.mxu0 0.0
        %2451 = vmatpush.msra.mxu0 0.0
        %2452 = vmatpush.msra.mxu0 0.0
        %2453 = vmatpush.msra.mxu0 0.0
        %2454 = vmatpush.msra.mxu0 %v2433
        %2455 = vmatpush.msra.mxu0 %v2432
        %2456 = vmatpush.msra.mxu0 %v2431
        %2457 = vmatpush.msra.mxu0 %v2430
        %2458 = vmatmul.f32.gmra.mxu0 %v2440
        %v2459 = vpop.f32.mrf.mxu0
        %v2460 = vadd.f32 %v2436, %v2459
        %2461 = vdwg.mxu0
        %v2462 = vadd.f32 %v2339, %v2460
        %v2463 = vsel %vm1961, %v2462, 0.0
        %2464 = vadd.xlane.f32.xlu0 %v2463
        %v2465 = vpop.xlane.xlu0 %2464
        %v2466 = vmul.f32 %v2465, %v1971
        %v2467 = vsub.f32 %v2462, %v2466
        %v2468 = vmul.f32 %v2467, %v2467
        %v2469 = vsel %vm1961, %v2468, 0.0
        %2470 = vadd.xlane.f32.xlu0 %v2469
        %v2471 = vpop.xlane.xlu0 %2470
        %v2472 = vmul.f32 %v2471, %v1971
        %v2473 = vadd.f32 %v2472, 1e-05
        %v2474 = vrsqrt.pop %v2473
        %v2475 = vmul.f32 %v2474, %v2473
        %v2476 = vmul.f32 %v2475, %v2474
        %v2477 = vmul.f32 0.5, %v2476
        %v2478 = vsub.f32 1.5, %v2477
        %v2479 = vmul.f32 %v2474, %v2478
        %vm2480 = vweird.f32 %v2473
        %vm2481 = vweird.f32 %v2474
        %vm2482 = vmor %vm2480, %vm2481
        %v2483 = vsel %vm2482, %v2474, %v2479
        %v2484 = vmul.f32 %v2467, %v2483
        %v2485 = vld [vmem:[#allocation15] sm:$0xff]
        %v2486 = vld [vmem:[#allocation15 + $0x8] sm:$0xff]
        %v2487 = vld [vmem:[%s39] sm:$0x1]
        %v2489 = vperm.slane %v2487, 0
        %v2492 = vsel %vm1961, %v2484, 0
        %2494 = vmatpush.msra.mxu0 0.0
        %2495 = vmatpush.msra.mxu0 0.0
        %2496 = vmatpush.msra.mxu0 0.0
        %2497 = vmatpush.msra.mxu0 0.0
        %2498 = vmatpush.msra.mxu0 0.0
        %2499 = vmatpush.msra.mxu0 0.0
        %2500 = vmatpush.msra.mxu0 0.0
        %2501 = vmatpush.msra.mxu0 0.0
        %2502 = vmatpush.msra.mxu0 0.0
        %2503 = vmatpush.msra.mxu0 0.0
        %2504 = vmatpush.msra.mxu0 0.0
        %2505 = vmatpush.msra.mxu0 0.0
        %2506 = vmatpush.msra.mxu0 0.0
        %2507 = vmatpush.msra.mxu0 0.0
        %2508 = vmatpush.msra.mxu0 %v2486
        %2509 = vmatpush.msra.mxu0 %v2485
        %2510 = vmatmul.f32.gmra.mxu0 %v2492
        %v2511 = vpop.f32.mrf.mxu0
        %v2512 = vadd.f32 %v2489, %v2511
        %2513 = vdwg.mxu0
        %v2514 = vld [vmem:[#allocation16] sm:$0xff]
        %v2515 = vld [vmem:[#allocation16 + $0x8] sm:$0xff]
        %v2516 = vld [vmem:[%s41] sm:$0x1]
        %v2518 = vperm.slane %v2516, 0
        %2520 = vmatpush.msra.mxu0 0.0
        %2521 = vmatpush.msra.mxu0 0.0
        %2522 = vmatpush.msra.mxu0 0.0
        %2523 = vmatpush.msra.mxu0 0.0
        %2524 = vmatpush.msra.mxu0 0.0
        %2525 = vmatpush.msra.mxu0 0.0
        %2526 = vmatpush.msra.mxu0 0.0
        %2527 = vmatpush.msra.mxu0 0.0
        %2528 = vmatpush.msra.mxu0 0.0
        %2529 = vmatpush.msra.mxu0 0.0
        %2530 = vmatpush.msra.mxu0 0.0
        %2531 = vmatpush.msra.mxu0 0.0
        %2532 = vmatpush.msra.mxu0 0.0
        %2533 = vmatpush.msra.mxu0 0.0
        %2534 = vmatpush.msra.mxu0 %v2515
        %2535 = vmatpush.msra.mxu0 %v2514
        %2536 = vmatmul.f32.gmra.mxu0 %v2492
        %v2537 = vpop.f32.mrf.mxu0
        %v2538 = vadd.f32 %v2518, %v2537
        %2539 = vdwg.mxu0
        %v2540 = vld [vmem:[#allocation18] sm:$0xff]
        %v2541 = vld [vmem:[#allocation18 + $0x8] sm:$0xff]
        %v2542 = vld [vmem:[%s43] sm:$0x1]
        %v2544 = vperm.slane %v2542, 0
        %2546 = vmatpush.msra.mxu0 0.0
        %2547 = vmatpush.msra.mxu0 0.0
        %2548 = vmatpush.msra.mxu0 0.0
        %2549 = vmatpush.msra.mxu0 0.0
        %2550 = vmatpush.msra.mxu0 0.0
        %2551 = vmatpush.msra.mxu0 0.0
        %2552 = vmatpush.msra.mxu0 0.0
        %2553 = vmatpush.msra.mxu0 0.0
        %2554 = vmatpush.msra.mxu0 0.0
        %2555 = vmatpush.msra.mxu0 0.0
        %2556 = vmatpush.msra.mxu0 0.0
        %2557 = vmatpush.msra.mxu0 0.0
        %2558 = vmatpush.msra.mxu0 0.0
        %2559 = vmatpush.msra.mxu0 0.0
        %2560 = vmatpush.msra.mxu0 %v2541
        %2561 = vmatpush.msra.mxu0 %v2540
        %2562 = vmatmul.f32.gmra.mxu0 %v2492
        %v2563 = vpop.f32.mrf.mxu0
        %v2564 = vadd.f32 %v2544, %v2563
        %2565 = vdwg.mxu0
        %v2567 = vsel %vm2072, %v2512, 0
        %v2570 = vsel %vm2072, %v2538, 0
        %2572 = vmatpush.xpose.msra.mxu0 0.0
        %2573 = vmatpush.xpose.msra.mxu0 0.0
        %2574 = vmatpush.xpose.msra.mxu0 0.0
        %2575 = vmatpush.xpose.msra.mxu0 0.0
        %2576 = vmatpush.xpose.msra.mxu0 0.0
        %2577 = vmatpush.xpose.msra.mxu0 0.0
        %2578 = vmatpush.xpose.msra.mxu0 0.0
        %2579 = vmatpush.xpose.msra.mxu0 0.0
        %2580 = vmatpush.xpose.msra.mxu0 0.0
        %2581 = vmatpush.xpose.msra.mxu0 0.0
        %2582 = vmatpush.xpose.msra.mxu0 0.0
        %2583 = vmatpush.xpose.msra.mxu0 0.0
        %2584 = vmatpush.xpose.msra.mxu0 0.0
        %2585 = vmatpush.xpose.msra.mxu0 0.0
        %2586 = vmatpush.xpose.msra.mxu0 0.0
        %2587 = vmatpush.xpose.msra.mxu0 %v2570
        %2588 = vmatmul.f32.gmra.mxu0 %v2567
        %v2589 = vpop.f32.mrf.mxu0
        %v2590 = vadd.f32 0.0, %v2589
        %2591 = vdwg.mxu0
        %v2592 = vmul.f32 %v2590, 0.35355338
        %v2593 = vsel %vm2072, %v2592, -inf
        %2594 = vmax.xlane.f32.xlu0 %v2593
        %v2595 = vpop.xlane.xlu0 %2594
        %v2596 = vsub.f32 %v2592, %v2595
        %v2597 = vmul.f32 %v2596, 1.442695
        %v2598 = vpow.pop %v2597
        %v2599 = vsel %vm2072, %v2598, 0.0
        %2600 = vadd.xlane.f32.xlu0 %v2599
        %v2601 = vpop.xlane.xlu0 %2600
        %v2602 = vrcp.pop %v2601
        %v2603 = vmul.f32 %v2601, %v2602
        %v2604 = vsub.f32 2.0, %v2603
        %v2605 = vmul.f32 %v2602, %v2604
        %v2607 = vsel %vm2072, %v2598, 0
        %2609 = vmatpush.msra.mxu0 0.0
        %2610 = vmatpush.msra.mxu0 0.0
        %2611 = vmatpush.msra.mxu0 0.0
        %2612 = vmatpush.msra.mxu0 0.0
        %2613 = vmatpush.msra.mxu0 0.0
        %2614 = vmatpush.msra.mxu0 0.0
        %2615 = vmatpush.msra.mxu0 0.0
        %2616 = vmatpush.msra.mxu0 0.0
        %2617 = vmatpush.msra.mxu0 0.0
        %2618 = vmatpush.msra.mxu0 0.0
        %2619 = vmatpush.msra.mxu0 0.0
        %2620 = vmatpush.msra.mxu0 0.0
        %2621 = vmatpush.msra.mxu0 0.0
        %2622 = vmatpush.msra.mxu0 0.0
        %2623 = vmatpush.msra.mxu0 0.0
        %2624 = vmatpush.msra.mxu0 %v2564
        %2625 = vmatmul.f32.gmra.mxu0 %v2607
        %v2626 = vpop.f32.mrf.mxu0
        %v2627 = vadd.f32 0.0, %v2626
        %2628 = vdwg.mxu0
        %v2629 = vmul.f32 %v2627, %v2605
        %v2630 = vld [vmem:[#allocation19] sm:$0xff]
        %s2631 = scalar_lea.vmem [#allocation15], 16
        %v2632 = vld [vmem:[%s2631] sm:$0xff]
        %v2633 = vld [vmem:[%s2631 + $0x8] sm:$0xff]
        %s2634 = scalar_lea.vmem %s39, 1
        %v2635 = vld [vmem:[%s2634] sm:$0x1]
        %v2637 = vperm.slane %v2635, 0
        %2639 = vmatpush.msra.mxu0 0.0
        %2640 = vmatpush.msra.mxu0 0.0
        %2641 = vmatpush.msra.mxu0 0.0
        %2642 = vmatpush.msra.mxu0 0.0
        %2643 = vmatpush.msra.mxu0 0.0
        %2644 = vmatpush.msra.mxu0 0.0
        %2645 = vmatpush.msra.mxu0 0.0
        %2646 = vmatpush.msra.mxu0 0.0
        %2647 = vmatpush.msra.mxu0 0.0
        %2648 = vmatpush.msra.mxu0 0.0
        %2649 = vmatpush.msra.mxu0 0.0
        %2650 = vmatpush.msra.mxu0 0.0
        %2651 = vmatpush.msra.mxu0 0.0
        %2652 = vmatpush.msra.mxu0 0.0
        %2653 = vmatpush.msra.mxu0 %v2633
        %2654 = vmatpush.msra.mxu0 %v2632
        %2655 = vmatmul.f32.gmra.mxu0 %v2492
        %v2656 = vpop.f32.mrf.mxu0
        %v2657 = vadd.f32 %v2637, %v2656
        %2658 = vdwg.mxu0
        %s2659 = scalar_lea.vmem [#allocation16], 16
        %v2660 = vld [vmem:[%s2659] sm:$0xff]
        %v2661 = vld [vmem:[%s2659 + $0x8] sm:$0xff]
        %s2662 = scalar_lea.vmem %s41, 1
        %v2663 = vld [vmem:[%s2662] sm:$0x1]
        %v2665 = vperm.slane %v2663, 0
        %2667 = vmatpush.msra.mxu0 0.0
        %2668 = vmatpush.msra.mxu0 0.0
        %2669 = vmatpush.msra.mxu0 0.0
        %2670 = vmatpush.msra.mxu0 0.0
        %2671 = vmatpush.msra.mxu0 0.0
        %2672 = vmatpush.msra.mxu0 0.0
        %2673 = vmatpush.msra.mxu0 0.0
        %2674 = vmatpush.msra.mxu0 0.0
        %2675 = vmatpush.msra.mxu0 0.0
        %2676 = vmatpush.msra.mxu0 0.0
        %2677 = vmatpush.msra.mxu0 0.0
        %2678 = vmatpush.msra.mxu0 0.0
        %2679 = vmatpush.msra.mxu0 0.0
        %2680 = vmatpush.msra.mxu0 0.0
        %2681 = vmatpush.msra.mxu0 %v2661
        %2682 = vmatpush.msra.mxu0 %v2660
        %2683 = vmatmul.f32.gmra.mxu0 %v2492
        %v2684 = vpop.f32.mrf.mxu0
        %v2685 = vadd.f32 %v2665, %v2684
        %2686 = vdwg.mxu0
        %s2687 = scalar_lea.vmem [#allocation18], 16
        %v2688 = vld [vmem:[%s2687] sm:$0xff]
        %v2689 = vld [vmem:[%s2687 + $0x8] sm:$0xff]
        %s2690 = scalar_lea.vmem %s43, 1
        %v2691 = vld [vmem:[%s2690] sm:$0x1]
        %v2693 = vperm.slane %v2691, 0
        %2695 = vmatpush.msra.mxu0 0.0
        %2696 = vmatpush.msra.mxu0 0.0
        %2697 = vmatpush.msra.mxu0 0.0
        %2698 = vmatpush.msra.mxu0 0.0
        %2699 = vmatpush.msra.mxu0 0.0
        %2700 = vmatpush.msra.mxu0 0.0
        %2701 = vmatpush.msra.mxu0 0.0
        %2702 = vmatpush.msra.mxu0 0.0
        %2703 = vmatpush.msra.mxu0 0.0
        %2704 = vmatpush.msra.mxu0 0.0
        %2705 = vmatpush.msra.mxu0 0.0
        %2706 = vmatpush.msra.mxu0 0.0
        %2707 = vmatpush.msra.mxu0 0.0
        %2708 = vmatpush.msra.mxu0 0.0
        %2709 = vmatpush.msra.mxu0 %v2689
        %2710 = vmatpush.msra.mxu0 %v2688
        %2711 = vmatmul.f32.gmra.mxu0 %v2492
        %v2712 = vpop.f32.mrf.mxu0
        %v2713 = vadd.f32 %v2693, %v2712
        %2714 = vdwg.mxu0
        %v2716 = vsel %vm2072, %v2657, 0
        %v2719 = vsel %vm2072, %v2685, 0
        %2721 = vmatpush.xpose.msra.mxu0 0.0
        %2722 = vmatpush.xpose.msra.mxu0 0.0
        %2723 = vmatpush.xpose.msra.mxu0 0.0
        %2724 = vmatpush.xpose.msra.mxu0 0.0
        %2725 = vmatpush.xpose.msra.mxu0 0.0
        %2726 = vmatpush.xpose.msra.mxu0 0.0
        %2727 = vmatpush.xpose.msra.mxu0 0.0
        %2728 = vmatpush.xpose.msra.mxu0 0.0
        %2729 = vmatpush.xpose.msra.mxu0 0.0
        %2730 = vmatpush.xpose.msra.mxu0 0.0
        %2731 = vmatpush.xpose.msra.mxu0 0.0
        %2732 = vmatpush.xpose.msra.mxu0 0.0
        %2733 = vmatpush.xpose.msra.mxu0 0.0
        %2734 = vmatpush.xpose.msra.mxu0 0.0
        %2735 = vmatpush.xpose.msra.mxu0 0.0
        %2736 = vmatpush.xpose.msra.mxu0 %v2719
        %2737 = vmatmul.f32.gmra.mxu0 %v2716
        %v2738 = vpop.f32.mrf.mxu0
        %v2739 = vadd.f32 0.0, %v2738
        %2740 = vdwg.mxu0
        %v2741 = vmul.f32 %v2739, 0.35355338
        %v2742 = vsel %vm2072, %v2741, -inf
        %2743 = vmax.xlane.f32.xlu0 %v2742
        %v2744 = vpop.xlane.xlu0 %2743
        %v2745 = vsub.f32 %v2741, %v2744
        %v2746 = vmul.f32 %v2745, 1.442695
        %v2747 = vpow.pop %v2746
        %v2748 = vsel %vm2072, %v2747, 0.0
        %2749 = vadd.xlane.f32.xlu0 %v2748
        %v2750 = vpop.xlane.xlu0 %2749
        %v2751 = vrcp.pop %v2750
        %v2752 = vmul.f32 %v2750, %v2751
        %v2753 = vsub.f32 2.0, %v2752
        %v2754 = vmul.f32 %v2751, %v2753
        %v2756 = vsel %vm2072, %v2747, 0
        %2758 = vmatpush.msra.mxu0 0.0
        %2759 = vmatpush.msra.mxu0 0.0
        %2760 = vmatpush.msra.mxu0 0.0
        %2761 = vmatpush.msra.mxu0 0.0
        %2762 = vmatpush.msra.mxu0 0.0
        %2763 = vmatpush.msra.mxu0 0.0
        %2764 = vmatpush.msra.mxu0 0.0
        %2765 = vmatpush.msra.mxu0 0.0
        %2766 = vmatpush.msra.mxu0 0.0
        %2767 = vmatpush.msra.mxu0 0.0
        %2768 = vmatpush.msra.mxu0 0.0
        %2769 = vmatpush.msra.mxu0 0.0
        %2770 = vmatpush.msra.mxu0 0.0
        %2771 = vmatpush.msra.mxu0 0.0
        %2772 = vmatpush.msra.mxu0 0.0
        %2773 = vmatpush.msra.mxu0 %v2713
        %2774 = vmatmul.f32.gmra.mxu0 %v2756
        %v2775 = vpop.f32.mrf.mxu0
        %v2776 = vadd.f32 0.0, %v2775
        %2777 = vdwg.mxu0
        %v2778 = vmul.f32 %v2776, %v2754
        %s2779 = scalar_lea.vmem [#allocation19], 8
        %v2780 = vld [vmem:[%s2779] sm:$0xff]
        %v2782 = vsel %vm2072, %v2778, 0
        %2784 = vmatpush.msra.mxu0 0.0
        %2785 = vmatpush.msra.mxu0 0.0
        %2786 = vmatpush.msra.mxu0 0.0
        %2787 = vmatpush.msra.mxu0 0.0
        %2788 = vmatpush.msra.mxu0 0.0
        %2789 = vmatpush.msra.mxu0 0.0
        %2790 = vmatpush.msra.mxu0 0.0
        %2791 = vmatpush.msra.mxu0 0.0
        %2792 = vmatpush.msra.mxu0 0.0
        %2793 = vmatpush.msra.mxu0 0.0
        %2794 = vmatpush.msra.mxu0 0.0
        %2795 = vmatpush.msra.mxu0 0.0
        %2796 = vmatpush.msra.mxu0 0.0
        %2797 = vmatpush.msra.mxu0 0.0
        %2798 = vmatpush.msra.mxu0 0.0
        %2799 = vmatpush.msra.mxu0 %v2780
        %2800 = vmatmul.f32.gmra.mxu0 %v2782
        %v2801 = vpop.f32.mrf.mxu0
        %v2802 = vadd.f32 0.0, %v2801
        %2803 = vdwg.mxu0
        %v2805 = vsel %vm2072, %v2629, 0
        %2807 = vmatpush.msra.mxu0 0.0
        %2808 = vmatpush.msra.mxu0 0.0
        %2809 = vmatpush.msra.mxu0 0.0
        %2810 = vmatpush.msra.mxu0 0.0
        %2811 = vmatpush.msra.mxu0 0.0
        %2812 = vmatpush.msra.mxu0 0.0
        %2813 = vmatpush.msra.mxu0 0.0
        %2814 = vmatpush.msra.mxu0 0.0
        %2815 = vmatpush.msra.mxu0 0.0
        %2816 = vmatpush.msra.mxu0 0.0
        %2817 = vmatpush.msra.mxu0 0.0
        %2818 = vmatpush.msra.mxu0 0.0
        %2819 = vmatpush.msra.mxu0 0.0
        %2820 = vmatpush.msra.mxu0 0.0
        %2821 = vmatpush.msra.mxu0 0.0
        %2822 = vmatpush.msra.mxu0 %v2630
        %2823 = vmatmul.f32.gmra.mxu0 %v2805
        %v2824 = vpop.f32.mrf.mxu0
        %v2825 = vadd.f32 %v2802, %v2824
        %2826 = vdwg.mxu0
        %v2827 = vadd.f32 %v2462, %v2825
        %v2828 = vld [vmem:[%s47] sm:$0x1]
        %v2830 = vperm.slane %v2828, 0
        %v2832 = vadd.f32 %v2827, %v2830
        %v2833 = vsel %vm1961, %v2832, 0.0
        %2834 = vadd.xlane.f32.xlu0 %v2833
        %v2835 = vpop.xlane.xlu0 %2834
        %v2836 = vmul.f32 %v2835, %v1971
        %v2837 = vsub.f32 %v2832, %v2836
        %v2838 = vmul.f32 %v2837, %v2837
        %v2839 = vsel %vm1961, %v2838, 0.0
        %2840 = vadd.xlane.f32.xlu0 %v2839
        %v2841 = vpop.xlane.xlu0 %2840
        %v2842 = vmul.f32 %v2841, %v1971
        %v2843 = vadd.f32 %v2842, 1e-05
        %v2844 = vrsqrt.pop %v2843
        %v2845 = vmul.f32 %v2844, %v2843
        %v2846 = vmul.f32 %v2845, %v2844
        %v2847 = vmul.f32 0.5, %v2846
        %v2848 = vsub.f32 1.5, %v2847
        %v2849 = vmul.f32 %v2844, %v2848
        %vm2850 = vweird.f32 %v2843
        %vm2851 = vweird.f32 %v2844
        %vm2852 = vmor %vm2850, %vm2851
        %v2853 = vsel %vm2852, %v2844, %v2849
        %v2854 = vmul.f32 %v2837, %v2853
        %v2855 = vld [vmem:[#allocation21] sm:$0xff]
        %v2856 = vld [vmem:[#allocation21 + $0x8] sm:$0xff]
        %v2857 = vld [vmem:[%s51] sm:$0x1]
        %v2859 = vperm.slane %v2857, 0
        %v2862 = vsel %vm1961, %v2854, 0
        %2864 = vmatpush.msra.mxu0 0.0
        %2865 = vmatpush.msra.mxu0 0.0
        %2866 = vmatpush.msra.mxu0 0.0
        %2867 = vmatpush.msra.mxu0 0.0
        %2868 = vmatpush.msra.mxu0 0.0
        %2869 = vmatpush.msra.mxu0 0.0
        %2870 = vmatpush.msra.mxu0 0.0
        %2871 = vmatpush.msra.mxu0 0.0
        %2872 = vmatpush.msra.mxu0 0.0
        %2873 = vmatpush.msra.mxu0 0.0
        %2874 = vmatpush.msra.mxu0 0.0
        %2875 = vmatpush.msra.mxu0 0.0
        %2876 = vmatpush.msra.mxu0 0.0
        %2877 = vmatpush.msra.mxu0 0.0
        %2878 = vmatpush.msra.mxu0 %v2856
        %2879 = vmatpush.msra.mxu0 %v2855
        %2880 = vmatmul.f32.gmra.mxu0 %v2862
        %v2881 = vpop.f32.mrf.mxu0
        %v2882 = vadd.f32 %v2859, %v2881
        %2883 = vdwg.mxu0
        %v2884 = vmul.f32 %v2882, 0.5
        %v2885 = vmul.f32 %v2882, 0.70710677
        %v2886 = vand.u32 2147483647, %v2885
        %v2887 = vmul.f32 %v2886, 0.3275911
        %v2888 = vadd.f32 %v2887, 1.0
        %v2889 = vrcp.pop %v2888
        %v2890 = vmul.f32 %v2888, %v2889
        %v2891 = vsub.f32 1.0, %v2890
        %v2892 = vmul.f32 %v2889, %v2891
        %v2893 = vadd.f32 %v2889, %v2892
        %vm2894 = vweird.f32 %v2888
        %vm2895 = vweird.f32 %v2889
        %vm2896 = vmor %vm2894, %vm2895
        %v2897 = vsel %vm2896, %v2889, %v2893
        %v2898 = vand.u32 2147483647, %v2888
        %vm2899 = vcmp.eq.f32.partialorder %v2898, 8.507059e+37
        %v2900 = vand.u32 %v2888, 2147483648
        %v2901 = vor.u32 1.1754944e-38, %v2900
        %v2902 = vsel %vm2899, %v2901, %v2897
        %v2903 = vmul.f32 %v2902, 1.0614054
        %v2904 = vadd.f32 %v2903, -1.4531521
        %v2905 = vmul.f32 %v2904, %v2902
        %v2906 = vadd.f32 %v2905, 1.4214138
        %v2907 = vmul.f32 %v2906, %v2902
        %v2908 = vadd.f32 %v2907, -0.28449672
        %v2909 = vmul.f32 %v2908, %v2902
        %v2910 = vadd.f32 %v2909, 0.2548296
        %v2911 = vmul.f32 %v2910, %v2902
        %v2912 = vsub.f32 0.0, %v2886
        %v2913 = vmul.f32 %v2912, %v2886
        %v2914 = vmul.f32 %v2913, 1.442695
        %v2915 = vpow.pop %v2914
        %v2916 = vmul.f32 %v2911, %v2915
        %v2917 = vsub.f32 1.0, %v2916
        %vm2918 = vcmp.ge.f32.partialorder %v2885, 0.0
        %v2919 = vsub.f32 0.0, %v2917
        %v2920 = vsel %vm2918, %v2917, %v2919
        %v2921 = vadd.f32 %v2920, 1.0
        %v2922 = vmul.f32 %v2884, %v2921
        %v2923 = vld [vmem:[#allocation22] sm:$0xff]
        %v2924 = vld [vmem:[#allocation22 + $0x8] sm:$0xff]
        %v2925 = vld [vmem:[#allocation22 + $0x10] sm:$0xff]
        %v2926 = vld [vmem:[#allocation22 + $0x18] sm:$0xff]
        %v2927 = vld [vmem:[%s55] sm:$0x1]
        %v2929 = vperm.slane %v2927, 0
        %v2932 = vsel %vm2438, %v2922, 0
        %2934 = vmatpush.msra.mxu0 0.0
        %2935 = vmatpush.msra.mxu0 0.0
        %2936 = vmatpush.msra.mxu0 0.0
        %2937 = vmatpush.msra.mxu0 0.0
        %2938 = vmatpush.msra.mxu0 0.0
        %2939 = vmatpush.msra.mxu0 0.0
        %2940 = vmatpush.msra.mxu0 0.0
        %2941 = vmatpush.msra.mxu0 0.0
        %2942 = vmatpush.msra.mxu0 0.0
        %2943 = vmatpush.msra.mxu0 0.0
        %2944 = vmatpush.msra.mxu0 0.0
        %2945 = vmatpush.msra.mxu0 0.0
        %2946 = vmatpush.msra.mxu0 %v2926
        %2947 = vmatpush.msra.mxu0 %v2925
        %2948 = vmatpush.msra.mxu0 %v2924
        %2949 = vmatpush.msra.mxu0 %v2923
        %2950 = vmatmul.f32.gmra.mxu0 %v2932
        %v2951 = vpop.f32.mrf.mxu0
        %v2952 = vadd.f32 %v2929, %v2951
        %2953 = vdwg.mxu0
        %v2954 = vadd.f32 %v2832, %v2952
        %v2955 = vld [vmem:[#allocation4] sm:$0xff]
        %v2956 = vld [vmem:[%s7] sm:$0x1]
        %v2958 = vperm.slane %v2956, 0
        %2960 = vxpose.xlu0.b32.start [1/16] %v2954, 128
        %2961 = vxpose.xlu0.b32.cont [2/16] 0.0, 128
        %2962 = vxpose.xlu0.b32.cont [3/16] 0.0, 128
        %2963 = vxpose.xlu0.b32.cont [4/16] 0.0, 128
        %2964 = vxpose.xlu0.b32.cont [5/16] 0.0, 128
        %2965 = vxpose.xlu0.b32.cont [6/16] 0.0, 128
        %2966 = vxpose.xlu0.b32.cont [7/16] 0.0, 128
        %2967 = vxpose.xlu0.b32.cont [8/16] 0.0, 128
        %2968 = vxpose.xlu0.b32.cont [9/16] 0.0, 128
        %2969 = vxpose.xlu0.b32.cont [10/16] 0.0, 128
        %2970 = vxpose.xlu0.b32.cont [11/16] 0.0, 128
        %2971 = vxpose.xlu0.b32.cont [12/16] 0.0, 128
        %2972 = vxpose.xlu0.b32.cont [13/16] 0.0, 128
        %2973 = vxpose.xlu0.b32.cont [14/16] 0.0, 128
        %2974 = vxpose.xlu0.b32.cont [15/16] 0.0, 128
        %2975 = vxpose.xlu0.b32.end [16/16] 0.0, 128
        %v2976 = vpop.trf.xlu0
        %v2977 = vpop.trf.xlu0
        %v2978 = vpop.trf.xlu0
        %v2979 = vpop.trf.xlu0
        %v2980 = vpop.trf.xlu0
        %v2981 = vpop.trf.xlu0
        %v2982 = vpop.trf.xlu0
        %v2983 = vpop.trf.xlu0
        %v2984 = vpop.trf.xlu0
        %v2985 = vpop.trf.xlu0
        %v2986 = vpop.trf.xlu0
        %v2987 = vpop.trf.xlu0
        %v2988 = vpop.trf.xlu0
        %v2989 = vpop.trf.xlu0
        %v2990 = vpop.trf.xlu0
        %v2991 = vpop.trf.xlu0
        %v2993 = vsel %vm2072, %v2976, 0
        %v2996 = vsel %vm2072, %v2977, 0
        %2998 = vmatpush.msra.mxu0 0.0
        %2999 = vmatpush.msra.mxu0 0.0
        %3000 = vmatpush.msra.mxu0 0.0
        %3001 = vmatpush.msra.mxu0 0.0
        %3002 = vmatpush.msra.mxu0 0.0
        %3003 = vmatpush.msra.mxu0 0.0
        %3004 = vmatpush.msra.mxu0 0.0
        %3005 = vmatpush.msra.mxu0 0.0
        %3006 = vmatpush.msra.mxu0 0.0
        %3007 = vmatpush.msra.mxu0 0.0
        %3008 = vmatpush.msra.mxu0 0.0
        %3009 = vmatpush.msra.mxu0 0.0
        %3010 = vmatpush.msra.mxu0 0.0
        %3011 = vmatpush.msra.mxu0 0.0
        %3012 = vmatpush.msra.mxu0 0.0
        %3013 = vmatpush.msra.mxu0 %v2955
        %3014 = vmatmul.f32.gmra.mxu0 %v2993
        %v3015 = vpop.f32.mrf.mxu0
        %v3016 = vadd.f32 %v2958, %v3015
        %3017 = vmatmul.f32.gmra.mxu0 %v2996
        %v3018 = vpop.f32.mrf.mxu0
        %v3019 = vadd.f32 %v2958, %v3018
        %3020 = vdwg.mxu0
        %v3021 = vld [vmem:[%s3] sm:$0x1]
        %vm3024 = vcmask 1040384
        %v3025 = vrot.slane %v3016, 7
        %v3026 = vrot.slane %v3019, 7
        %v3027 = vsel %vm3024, %v3025, %v3026
        %v3031 = vsel %vm3024, %v3021, %v3025
        %v3032 = vsel %vm2438, %v3031, 0.0
        %3033 = vadd.xlane.f32.xlu0 %v3032
        %v3034 = vpop.xlane.xlu0 %3033
        %v3035 = vsel %vm2438, %v3027, 0.0
        %3036 = vadd.xlane.f32.xlu0 %v3035
        %v3037 = vpop.xlane.xlu0 %3036
        %vm3038 = vcmask 253952
        %v3039 = vsel %vm3038, %v3026, 0.0
        %3040 = vadd.xlane.f32.xlu0 %v3039
        %v3041 = vpop.xlane.xlu0 %3040
        %v3042 = vrcp.pop 32.0
        %v3043 = vmul.f32 32.0, %v3042
        %v3044 = vsub.f32 1.0, %v3043
        %v3045 = vmul.f32 %v3042, %v3044
        %v3046 = vadd.f32 %v3042, %v3045
        %vm3047 = vweird.f32 %v3042
        %v3048 = vsel %vm3047, %v3042, %v3046
        %v3049 = vmul.f32 %v3034, %v3048
        %v3050 = vmul.f32 %v3037, %v3048
        %v3051 = vmul.f32 %v3041, %v3048
        %v3052 = vsub.f32 %v3031, %v3049
        %v3053 = vsub.f32 %v3027, %v3050
        %v3054 = vsub.f32 %v3026, %v3051
        %v3055 = vmul.f32 %v3052, %v3052
        %v3056 = vmul.f32 %v3053, %v3053
        %v3057 = vmul.f32 %v3054, %v3054
        %v3058 = vsel %vm2438, %v3055, 0.0
        %3059 = vadd.xlane.f32.xlu0 %v3058
        %v3060 = vpop.xlane.xlu0 %3059
        %v3061 = vsel %vm2438, %v3056, 0.0
        %3062 = vadd.xlane.f32.xlu0 %v3061
        %v3063 = vpop.xlane.xlu0 %3062
        %v3064 = vsel %vm3038, %v3057, 0.0
        %3065 = vadd.xlane.f32.xlu0 %v3064
        %v3066 = vpop.xlane.xlu0 %3065
        %v3067 = vmul.f32 %v3060, %v3048
        %v3068 = vmul.f32 %v3063, %v3048
        %v3069 = vmul.f32 %v3066, %v3048
        %v3070 = vadd.f32 %v3067, 1e-05
        %v3071 = vadd.f32 %v3068, 1e-05
        %v3072 = vadd.f32 %v3069, 1e-05
        %v3073 = vrsqrt.pop %v3070
        %v3074 = vmul.f32 %v3073, %v3070
        %v3075 = vmul.f32 %v3074, %v3073
        %v3076 = vmul.f32 0.5, %v3075
        %v3077 = vsub.f32 1.5, %v3076
        %v3078 = vmul.f32 %v3073, %v3077
        %vm3079 = vweird.f32 %v3070
        %vm3080 = vweird.f32 %v3073
        %vm3081 = vmor %vm3079, %vm3080
        %v3082 = vsel %vm3081, %v3073, %v3078
        %v3083 = vrsqrt.pop %v3071
        %v3084 = vmul.f32 %v3083, %v3071
        %v3085 = vmul.f32 %v3084, %v3083
        %v3086 = vmul.f32 0.5, %v3085
        %v3087 = vsub.f32 1.5, %v3086
        %v3088 = vmul.f32 %v3083, %v3087
        %vm3089 = vweird.f32 %v3071
        %vm3090 = vweird.f32 %v3083
        %vm3091 = vmor %vm3089, %vm3090
        %v3092 = vsel %vm3091, %v3083, %v3088
        %v3093 = vrsqrt.pop %v3072
        %v3094 = vmul.f32 %v3093, %v3072
        %v3095 = vmul.f32 %v3094, %v3093
        %v3096 = vmul.f32 0.5, %v3095
        %v3097 = vsub.f32 1.5, %v3096
        %v3098 = vmul.f32 %v3093, %v3097
        %vm3099 = vweird.f32 %v3072
        %vm3100 = vweird.f32 %v3093
        %vm3101 = vmor %vm3099, %vm3100
        %v3102 = vsel %vm3101, %v3093, %v3098
        %v3103 = vmul.f32 %v3052, %v3082
        %v3104 = vmul.f32 %v3053, %v3092
        %v3105 = vmul.f32 %v3054, %v3102
        %v3106 = vld [vmem:[#allocation24] sm:$0xff]
        %v3107 = vld [vmem:[#allocation24 + $0x8] sm:$0xff]
        %v3108 = vld [vmem:[#allocation24 + $0x10] sm:$0xff]
        %v3109 = vld [vmem:[#allocation24 + $0x18] sm:$0xff]
        %v3110 = vld [vmem:[%s63] sm:$0x1]
        %v3112 = vperm.slane %v3110, 0
        %v3115 = vsel %vm2438, %v3103, 0
        %v3118 = vsel %vm2438, %v3104, 0
        %v3121 = vsel %vm2438, %v3105, 0
        %3123 = vmatpush.msra.mxu0 0.0
        %3124 = vmatpush.msra.mxu0 0.0
        %3125 = vmatpush.msra.mxu0 0.0
        %3126 = vmatpush.msra.mxu0 0.0
        %3127 = vmatpush.msra.mxu0 0.0
        %3128 = vmatpush.msra.mxu0 0.0
        %3129 = vmatpush.msra.mxu0 0.0
        %3130 = vmatpush.msra.mxu0 0.0
        %3131 = vmatpush.msra.mxu0 0.0
        %3132 = vmatpush.msra.mxu0 0.0
        %3133 = vmatpush.msra.mxu0 0.0
        %3134 = vmatpush.msra.mxu0 0.0
        %3135 = vmatpush.msra.mxu0 %v3109
        %3136 = vmatpush.msra.mxu0 %v3108
        %3137 = vmatpush.msra.mxu0 %v3107
        %3138 = vmatpush.msra.mxu0 %v3106
        %3139 = vmatmul.f32.gmra.mxu0 %v3115
        %v3140 = vpop.f32.mrf.mxu0
        %v3141 = vadd.f32 %v3112, %v3140
        %3142 = vmatmul.f32.gmra.mxu0 %v3118
        %v3143 = vpop.f32.mrf.mxu0
        %v3144 = vadd.f32 %v3112, %v3143
        %3145 = vmatmul.f32.gmra.mxu0 %v3121
        %v3146 = vpop.f32.mrf.mxu0
        %v3147 = vadd.f32 %v3112, %v3146
        %3148 = vdwg.mxu0
        %v3149 = vld [vmem:[#allocation25] sm:$0xff]
        %v3150 = vld [vmem:[#allocation25 + $0x8] sm:$0xff]
        %v3151 = vld [vmem:[#allocation25 + $0x10] sm:$0xff]
        %v3152 = vld [vmem:[#allocation25 + $0x18] sm:$0xff]
        %v3153 = vld [vmem:[%s65] sm:$0x1]
        %v3155 = vperm.slane %v3153, 0
        %3157 = vmatpush.msra.mxu0 0.0
        %3158 = vmatpush.msra.mxu0 0.0
        %3159 = vmatpush.msra.mxu0 0.0
        %3160 = vmatpush.msra.mxu0 0.0
        %3161 = vmatpush.msra.mxu0 0.0
        %3162 = vmatpush.msra.mxu0 0.0
        %3163 = vmatpush.msra.mxu0 0.0
        %3164 = vmatpush.msra.mxu0 0.0
        %3165 = vmatpush.msra.mxu0 0.0
        %3166 = vmatpush.msra.mxu0 0.0
        %3167 = vmatpush.msra.mxu0 0.0
        %3168 = vmatpush.msra.mxu0 0.0
        %3169 = vmatpush.msra.mxu0 %v3152
        %3170 = vmatpush.msra.mxu0 %v3151
        %3171 = vmatpush.msra.mxu0 %v3150
        %3172 = vmatpush.msra.mxu0 %v3149
        %3173 = vmatmul.f32.gmra.mxu0 %v3115
        %v3174 = vpop.f32.mrf.mxu0
        %v3175 = vadd.f32 %v3155, %v3174
        %3176 = vmatmul.f32.gmra.mxu0 %v3118
        %v3177 = vpop.f32.mrf.mxu0
        %v3178 = vadd.f32 %v3155, %v3177
        %3179 = vmatmul.f32.gmra.mxu0 %v3121
        %v3180 = vpop.f32.mrf.mxu0
        %v3181 = vadd.f32 %v3155, %v3180
        %3182 = vdwg.mxu0
        %v3183 = vld [vmem:[#allocation27] sm:$0xff]
        %v3184 = vld [vmem:[#allocation27 + $0x8] sm:$0xff]
        %v3185 = vld [vmem:[#allocation27 + $0x10] sm:$0xff]
        %v3186 = vld [vmem:[#allocation27 + $0x18] sm:$0xff]
        %v3187 = vld [vmem:[%s67] sm:$0x1]
        %v3189 = vperm.slane %v3187, 0
        %3191 = vmatpush.msra.mxu0 0.0
        %3192 = vmatpush.msra.mxu0 0.0
        %3193 = vmatpush.msra.mxu0 0.0
        %3194 = vmatpush.msra.mxu0 0.0
        %3195 = vmatpush.msra.mxu0 0.0
        %3196 = vmatpush.msra.mxu0 0.0
        %3197 = vmatpush.msra.mxu0 0.0
        %3198 = vmatpush.msra.mxu0 0.0
        %3199 = vmatpush.msra.mxu0 0.0
        %3200 = vmatpush.msra.mxu0 0.0
        %3201 = vmatpush.msra.mxu0 0.0
        %3202 = vmatpush.msra.mxu0 0.0
        %3203 = vmatpush.msra.mxu0 %v3186
        %3204 = vmatpush.msra.mxu0 %v3185
        %3205 = vmatpush.msra.mxu0 %v3184
        %3206 = vmatpush.msra.mxu0 %v3183
        %3207 = vmatmul.f32.gmra.mxu0 %v3115
        %v3208 = vpop.f32.mrf.mxu0
        %v3209 = vadd.f32 %v3189, %v3208
        %3210 = vmatmul.f32.gmra.mxu0 %v3118
        %v3211 = vpop.f32.mrf.mxu0
        %v3212 = vadd.f32 %v3189, %v3211
        %3213 = vmatmul.f32.gmra.mxu0 %v3121
        %v3214 = vpop.f32.mrf.mxu0
        %v3215 = vadd.f32 %v3189, %v3214
        %3216 = vdwg.mxu0
        %v3218 = vsel %vm1961, %v3141, 0
        %v3221 = vsel %vm1961, %v3144, 0
        %v3224 = vsel %vm1961, %v3147, 0
        %v3227 = vsel %vm1961, %v3175, 0
        %v3230 = vsel %vm1961, %v3178, 0
        %v3233 = vsel %vm1961, %v3181, 0
        %3235 = vmatpush.xpose.msra.mxu0 0.0
        %3236 = vmatpush.xpose.msra.mxu0 0.0
        %3237 = vmatpush.xpose.msra.mxu0 0.0
        %3238 = vmatpush.xpose.msra.mxu0 0.0
        %3239 = vmatpush.xpose.msra.mxu0 0.0
        %3240 = vmatpush.xpose.msra.mxu0 0.0
        %3241 = vmatpush.xpose.msra.mxu0 0.0
        %3242 = vmatpush.xpose.msra.mxu0 0.0
        %3243 = vmatpush.xpose.msra.mxu0 0.0
        %3244 = vmatpush.xpose.msra.mxu0 0.0
        %3245 = vmatpush.xpose.msra.mxu0 0.0
        %3246 = vmatpush.xpose.msra.mxu0 0.0
        %3247 = vmatpush.xpose.msra.mxu0 0.0
        %3248 = vmatpush.xpose.msra.mxu0 %v3233
        %3249 = vmatpush.xpose.msra.mxu0 %v3230
        %3250 = vmatpush.xpose.msra.mxu0 %v3227
        %3251 = vmatmul.f32.gmra.mxu0 %v3218
        %v3252 = vpop.f32.mrf.mxu0
        %v3253 = vadd.f32 0.0, %v3252
        %3254 = vmatmul.f32.gmra.mxu0 %v3221
        %v3255 = vpop.f32.mrf.mxu0
        %v3256 = vadd.f32 0.0, %v3255
        %3257 = vmatmul.f32.gmra.mxu0 %v3224
        %v3258 = vpop.f32.mrf.mxu0
        %v3259 = vadd.f32 0.0, %v3258
        %3260 = vdwg.mxu0
        %v3261 = vmul.f32 %v3253, 0.25
        %v3262 = vmul.f32 %v3256, 0.25
        %v3263 = vmul.f32 %v3259, 0.25
        %vm3264 = vcmask 138240
        %v3265 = vsel %vm3264, %v3261, -inf
        %3266 = vmax.xlane.f32.xlu0 %v3265
        %v3267 = vpop.xlane.xlu0 %3266
        %v3268 = vsel %vm3264, %v3262, -inf
        %3269 = vmax.xlane.f32.xlu0 %v3268
        %v3270 = vpop.xlane.xlu0 %3269
        %vm3271 = vcmask 131072
        %v3272 = vsel %vm3271, %v3263, -inf
        %3273 = vmax.xlane.f32.xlu0 %v3272
        %v3274 = vpop.xlane.xlu0 %3273
        %v3275 = vsub.f32 %v3261, %v3267
        %v3276 = vsub.f32 %v3262, %v3270
        %v3277 = vsub.f32 %v3263, %v3274
        %v3278 = vmul.f32 %v3275, 1.442695
        %v3279 = vpow.pop %v3278
        %v3280 = vmul.f32 %v3276, 1.442695
        %v3281 = vpow.pop %v3280
        %v3282 = vmul.f32 %v3277, 1.442695
        %v3283 = vpow.pop %v3282
        %v3284 = vsel %vm3264, %v3279, 0.0
        %3285 = vadd.xlane.f32.xlu0 %v3284
        %v3286 = vpop.xlane.xlu0 %3285
        %v3287 = vsel %vm3264, %v3281, 0.0
        %3288 = vadd.xlane.f32.xlu0 %v3287
        %v3289 = vpop.xlane.xlu0 %3288
        %v3290 = vsel %vm3271, %v3283, 0.0
        %3291 = vadd.xlane.f32.xlu0 %v3290
        %v3292 = vpop.xlane.xlu0 %3291
        %v3293 = vrcp.pop %v3286
        %v3294 = vrcp.pop %v3289
        %v3295 = vrcp.pop %v3292
        %v3296 = vmul.f32 %v3286, %v3293
        %v3297 = vmul.f32 %v3289, %v3294
        %v3298 = vmul.f32 %v3292, %v3295
        %v3299 = vsub.f32 2.0, %v3296
        %v3300 = vsub.f32 2.0, %v3297
        %v3301 = vsub.f32 2.0, %v3298
        %v3302 = vmul.f32 %v3293, %v3299
        %v3303 = vmul.f32 %v3294, %v3300
        %v3304 = vmul.f32 %v3295, %v3301
        %v3306 = vsel %vm3264, %v3279, 0
        %v3309 = vsel %vm3264, %v3281, 0
        %v3312 = vsel %vm3264, %v3283, 0
        %v3315 = vsel %vm3024, %v3215, 0
        %3317 = vmatpush.msra.mxu0 0.0
        %3318 = vmatpush.msra.mxu0 0.0
        %3319 = vmatpush.msra.mxu0 0.0
        %3320 = vmatpush.msra.mxu0 0.0
        %3321 = vmatpush.msra.mxu0 0.0
        %3322 = vmatpush.msra.mxu0 0.0
        %3323 = vmatpush.msra.mxu0 0.0
        %3324 = vmatpush.msra.mxu0 0.0
        %3325 = vmatpush.msra.mxu0 0.0
        %3326 = vmatpush.msra.mxu0 0.0
        %3327 = vmatpush.msra.mxu0 0.0
        %3328 = vmatpush.msra.mxu0 0.0
        %3329 = vmatpush.msra.mxu0 0.0
        %3330 = vmatpush.msra.mxu0 %v3315
        %3331 = vmatpush.msra.mxu0 %v3212
        %3332 = vmatpush.msra.mxu0 %v3209
        %3333 = vmatmul.f32.gmra.mxu0 %v3306
        %v3334 = vpop.f32.mrf.mxu0
        %v3335 = vadd.f32 0.0, %v3334
        %3336 = vmatmul.f32.gmra.mxu0 %v3309
        %v3337 = vpop.f32.mrf.mxu0
        %v3338 = vadd.f32 0.0, %v3337
        %3339 = vmatmul.f32.gmra.mxu0 %v3312
        %v3340 = vpop.f32.mrf.mxu0
        %v3341 = vadd.f32 0.0, %v3340
        %3342 = vdwg.mxu0
        %v3343 = vmul.f32 %v3335, %v3302
        %v3344 = vmul.f32 %v3338, %v3303
        %v3345 = vmul.f32 %v3341, %v3304
        %v3346 = vld [vmem:[#allocation28] sm:$0xff]
        %v3347 = vld [vmem:[#allocation28 + $0x8] sm:$0xff]
        %s3348 = scalar_lea.vmem [#allocation24], 32
        %v3349 = vld [vmem:[%s3348] sm:$0xff]
        %v3350 = vld [vmem:[%s3348 + $0x8] sm:$0xff]
        %v3351 = vld [vmem:[%s3348 + $0x10] sm:$0xff]
        %v3352 = vld [vmem:[%s3348 + $0x18] sm:$0xff]
        %s3353 = scalar_lea.vmem %s63, 1
        %v3354 = vld [vmem:[%s3353] sm:$0x1]
        %v3356 = vperm.slane %v3354, 0
        %3358 = vmatpush.msra.mxu0 0.0
        %3359 = vmatpush.msra.mxu0 0.0
        %3360 = vmatpush.msra.mxu0 0.0
        %3361 = vmatpush.msra.mxu0 0.0
        %3362 = vmatpush.msra.mxu0 0.0
        %3363 = vmatpush.msra.mxu0 0.0
        %3364 = vmatpush.msra.mxu0 0.0
        %3365 = vmatpush.msra.mxu0 0.0
        %3366 = vmatpush.msra.mxu0 0.0
        %3367 = vmatpush.msra.mxu0 0.0
        %3368 = vmatpush.msra.mxu0 0.0
        %3369 = vmatpush.msra.mxu0 0.0
        %3370 = vmatpush.msra.mxu0 %v3352
        %3371 = vmatpush.msra.mxu0 %v3351
        %3372 = vmatpush.msra.mxu0 %v3350
        %3373 = vmatpush.msra.mxu0 %v3349
        %3374 = vmatmul.f32.gmra.mxu0 %v3115
        %v3375 = vpop.f32.mrf.mxu0
        %v3376 = vadd.f32 %v3356, %v3375
        %3377 = vmatmul.f32.gmra.mxu0 %v3118
        %v3378 = vpop.f32.mrf.mxu0
        %v3379 = vadd.f32 %v3356, %v3378
        %3380 = vmatmul.f32.gmra.mxu0 %v3121
        %v3381 = vpop.f32.mrf.mxu0
        %v3382 = vadd.f32 %v3356, %v3381
        %3383 = vdwg.mxu0
        %s3384 = scalar_lea.vmem [#allocation25], 32
        %v3385 = vld [vmem:[%s3384] sm:$0xff]
        %v3386 = vld [vmem:[%s3384 + $0x8] sm:$0xff]
        %v3387 = vld [vmem:[%s3384 + $0x10] sm:$0xff]
        %v3388 = vld [vmem:[%s3384 + $0x18] sm:$0xff]
        %s3389 = scalar_lea.vmem %s65, 1
        %v3390 = vld [vmem:[%s3389] sm:$0x1]
        %v3392 = vperm.slane %v3390, 0
        %3394 = vmatpush.msra.mxu0 0.0
        %3395 = vmatpush.msra.mxu0 0.0
        %3396 = vmatpush.msra.mxu0 0.0
        %3397 = vmatpush.msra.mxu0 0.0
        %3398 = vmatpush.msra.mxu0 0.0
        %3399 = vmatpush.msra.mxu0 0.0
        %3400 = vmatpush.msra.mxu0 0.0
        %3401 = vmatpush.msra.mxu0 0.0
        %3402 = vmatpush.msra.mxu0 0.0
        %3403 = vmatpush.msra.mxu0 0.0
        %3404 = vmatpush.msra.mxu0 0.0
        %3405 = vmatpush.msra.mxu0 0.0
        %3406 = vmatpush.msra.mxu0 %v3388
        %3407 = vmatpush.msra.mxu0 %v3387
        %3408 = vmatpush.msra.mxu0 %v3386
        %3409 = vmatpush.msra.mxu0 %v3385
        %3410 = vmatmul.f32.gmra.mxu0 %v3115
        %v3411 = vpop.f32.mrf.mxu0
        %v3412 = vadd.f32 %v3392, %v3411
        %3413 = vmatmul.f32.gmra.mxu0 %v3118
        %v3414 = vpop.f32.mrf.mxu0
        %v3415 = vadd.f32 %v3392, %v3414
        %3416 = vmatmul.f32.gmra.mxu0 %v3121
        %v3417 = vpop.f32.mrf.mxu0
        %v3418 = vadd.f32 %v3392, %v3417
        %3419 = vdwg.mxu0
        %s3420 = scalar_lea.vmem [#allocation27], 32
        %v3421 = vld [vmem:[%s3420] sm:$0xff]
        %v3422 = vld [vmem:[%s3420 + $0x8] sm:$0xff]
        %v3423 = vld [vmem:[%s3420 + $0x10] sm:$0xff]
        %v3424 = vld [vmem:[%s3420 + $0x18] sm:$0xff]
        %s3425 = scalar_lea.vmem %s67, 1
        %v3426 = vld [vmem:[%s3425] sm:$0x1]
        %v3428 = vperm.slane %v3426, 0
        %3430 = vmatpush.msra.mxu0 0.0
        %3431 = vmatpush.msra.mxu0 0.0
        %3432 = vmatpush.msra.mxu0 0.0
        %3433 = vmatpush.msra.mxu0 0.0
        %3434 = vmatpush.msra.mxu0 0.0
        %3435 = vmatpush.msra.mxu0 0.0
        %3436 = vmatpush.msra.mxu0 0.0
        %3437 = vmatpush.msra.mxu0 0.0
        %3438 = vmatpush.msra.mxu0 0.0
        %3439 = vmatpush.msra.mxu0 0.0
        %3440 = vmatpush.msra.mxu0 0.0
        %3441 = vmatpush.msra.mxu0 0.0
        %3442 = vmatpush.msra.mxu0 %v3424
        %3443 = vmatpush.msra.mxu0 %v3423
        %3444 = vmatpush.msra.mxu0 %v3422
        %3445 = vmatpush.msra.mxu0 %v3421
        %3446 = vmatmul.f32.gmra.mxu0 %v3115
        %v3447 = vpop.f32.mrf.mxu0
        %v3448 = vadd.f32 %v3428, %v3447
        %3449 = vmatmul.f32.gmra.mxu0 %v3118
        %v3450 = vpop.f32.mrf.mxu0
        %v3451 = vadd.f32 %v3428, %v3450
        %3452 = vmatmul.f32.gmra.mxu0 %v3121
        %v3453 = vpop.f32.mrf.mxu0
        %v3454 = vadd.f32 %v3428, %v3453
        %3455 = vdwg.mxu0
        %v3457 = vsel %vm1961, %v3376, 0
        %v3460 = vsel %vm1961, %v3379, 0
        %v3463 = vsel %vm1961, %v3382, 0
        %v3466 = vsel %vm1961, %v3412, 0
        %v3469 = vsel %vm1961, %v3415, 0
        %v3472 = vsel %vm1961, %v3418, 0
        %3474 = vmatpush.xpose.msra.mxu0 0.0
        %3475 = vmatpush.xpose.msra.mxu0 0.0
        %3476 = vmatpush.xpose.msra.mxu0 0.0
        %3477 = vmatpush.xpose.msra.mxu0 0.0
        %3478 = vmatpush.xpose.msra.mxu0 0.0
        %3479 = vmatpush.xpose.msra.mxu0 0.0
        %3480 = vmatpush.xpose.msra.mxu0 0.0
        %3481 = vmatpush.xpose.msra.mxu0 0.0
        %3482 = vmatpush.xpose.msra.mxu0 0.0
        %3483 = vmatpush.xpose.msra.mxu0 0.0
        %3484 = vmatpush.xpose.msra.mxu0 0.0
        %3485 = vmatpush.xpose.msra.mxu0 0.0
        %3486 = vmatpush.xpose.msra.mxu0 0.0
        %3487 = vmatpush.xpose.msra.mxu0 %v3472
        %3488 = vmatpush.xpose.msra.mxu0 %v3469
        %3489 = vmatpush.xpose.msra.mxu0 %v3466
        %3490 = vmatmul.f32.gmra.mxu0 %v3457
        %v3491 = vpop.f32.mrf.mxu0
        %v3492 = vadd.f32 0.0, %v3491
        %3493 = vmatmul.f32.gmra.mxu0 %v3460
        %v3494 = vpop.f32.mrf.mxu0
        %v3495 = vadd.f32 0.0, %v3494
        %3496 = vmatmul.f32.gmra.mxu0 %v3463
        %v3497 = vpop.f32.mrf.mxu0
        %v3498 = vadd.f32 0.0, %v3497
        %3499 = vdwg.mxu0
        %v3500 = vmul.f32 %v3492, 0.25
        %v3501 = vmul.f32 %v3495, 0.25
        %v3502 = vmul.f32 %v3498, 0.25
        %v3503 = vsel %vm3264, %v3500, -inf
        %3504 = vmax.xlane.f32.xlu0 %v3503
        %v3505 = vpop.xlane.xlu0 %3504
        %v3506 = vsel %vm3264, %v3501, -inf
        %3507 = vmax.xlane.f32.xlu0 %v3506
        %v3508 = vpop.xlane.xlu0 %3507
        %v3509 = vsel %vm3271, %v3502, -inf
        %3510 = vmax.xlane.f32.xlu0 %v3509
        %v3511 = vpop.xlane.xlu0 %3510
        %v3512 = vsub.f32 %v3500, %v3505
        %v3513 = vsub.f32 %v3501, %v3508
        %v3514 = vsub.f32 %v3502, %v3511
        %v3515 = vmul.f32 %v3512, 1.442695
        %v3516 = vpow.pop %v3515
        %v3517 = vmul.f32 %v3513, 1.442695
        %v3518 = vpow.pop %v3517
        %v3519 = vmul.f32 %v3514, 1.442695
        %v3520 = vpow.pop %v3519
        %v3521 = vsel %vm3264, %v3516, 0.0
        %3522 = vadd.xlane.f32.xlu0 %v3521
        %v3523 = vpop.xlane.xlu0 %3522
        %v3524 = vsel %vm3264, %v3518, 0.0
        %3525 = vadd.xlane.f32.xlu0 %v3524
        %v3526 = vpop.xlane.xlu0 %3525
        %v3527 = vsel %vm3271, %v3520, 0.0
        %3528 = vadd.xlane.f32.xlu0 %v3527
        %v3529 = vpop.xlane.xlu0 %3528
        %v3530 = vrcp.pop %v3523
        %v3531 = vrcp.pop %v3526
        %v3532 = vrcp.pop %v3529
        %v3533 = vmul.f32 %v3523, %v3530
        %v3534 = vmul.f32 %v3526, %v3531
        %v3535 = vmul.f32 %v3529, %v3532
        %v3536 = vsub.f32 2.0, %v3533
        %v3537 = vsub.f32 2.0, %v3534
        %v3538 = vsub.f32 2.0, %v3535
        %v3539 = vmul.f32 %v3530, %v3536
        %v3540 = vmul.f32 %v3531, %v3537
        %v3541 = vmul.f32 %v3532, %v3538
        %v3543 = vsel %vm3264, %v3516, 0
        %v3546 = vsel %vm3264, %v3518, 0
        %v3549 = vsel %vm3264, %v3520, 0
        %v3552 = vsel %vm3024, %v3454, 0
        %3554 = vmatpush.msra.mxu0 0.0
        %3555 = vmatpush.msra.mxu0 0.0
        %3556 = vmatpush.msra.mxu0 0.0
        %3557 = vmatpush.msra.mxu0 0.0
        %3558 = vmatpush.msra.mxu0 0.0
        %3559 = vmatpush.msra.mxu0 0.0
        %3560 = vmatpush.msra.mxu0 0.0
        %3561 = vmatpush.msra.mxu0 0.0
        %3562 = vmatpush.msra.mxu0 0.0
        %3563 = vmatpush.msra.mxu0 0.0
        %3564 = vmatpush.msra.mxu0 0.0
        %3565 = vmatpush.msra.mxu0 0.0
        %3566 = vmatpush.msra.mxu0 0.0
        %3567 = vmatpush.msra.mxu0 %v3552
        %3568 = vmatpush.msra.mxu0 %v3451
        %3569 = vmatpush.msra.mxu0 %v3448
        %3570 = vmatmul.f32.gmra.mxu0 %v3543
        %v3571 = vpop.f32.mrf.mxu0
        %v3572 = vadd.f32 0.0, %v3571
        %3573 = vmatmul.f32.gmra.mxu0 %v3546
        %v3574 = vpop.f32.mrf.mxu0
        %v3575 = vadd.f32 0.0, %v3574
        %3576 = vmatmul.f32.gmra.mxu0 %v3549
        %v3577 = vpop.f32.mrf.mxu0
        %v3578 = vadd.f32 0.0, %v3577
        %3579 = vdwg.mxu0
        %v3580 = vmul.f32 %v3572, %v3539
        %v3581 = vmul.f32 %v3575, %v3540
        %v3582 = vmul.f32 %v3578, %v3541
        %s3583 = scalar_lea.vmem [#allocation28], 16
        %v3584 = vld [vmem:[%s3583] sm:$0xff]
        %v3585 = vld [vmem:[%s3583 + $0x8] sm:$0xff]
        %v3587 = vsel %vm1961, %v3580, 0
        %v3590 = vsel %vm1961, %v3581, 0
        %v3593 = vsel %vm1961, %v3582, 0
        %3595 = vmatpush.msra.mxu0 0.0
        %3596 = vmatpush.msra.mxu0 0.0
        %3597 = vmatpush.msra.mxu0 0.0
        %3598 = vmatpush.msra.mxu0 0.0
        %3599 = vmatpush.msra.mxu0 0.0
        %3600 = vmatpush.msra.mxu0 0.0
        %3601 = vmatpush.msra.mxu0 0.0
        %3602 = vmatpush.msra.mxu0 0.0
        %3603 = vmatpush.msra.mxu0 0.0
        %3604 = vmatpush.msra.mxu0 0.0
        %3605 = vmatpush.msra.mxu0 0.0
        %3606 = vmatpush.msra.mxu0 0.0
        %3607 = vmatpush.msra.mxu0 0.0
        %3608 = vmatpush.msra.mxu0 0.0
        %3609 = vmatpush.msra.mxu0 %v3585
        %3610 = vmatpush.msra.mxu0 %v3584
        %3611 = vmatmul.f32.gmra.mxu0 %v3587
        %v3612 = vpop.f32.mrf.mxu0
        %v3613 = vadd.f32 0.0, %v3612
        %3614 = vmatmul.f32.gmra.mxu0 %v3590
        %v3615 = vpop.f32.mrf.mxu0
        %v3616 = vadd.f32 0.0, %v3615
        %3617 = vmatmul.f32.gmra.mxu0 %v3593
        %v3618 = vpop.f32.mrf.mxu0
        %v3619 = vadd.f32 0.0, %v3618
        %3620 = vdwg.mxu0
        %v3622 = vsel %vm1961, %v3343, 0
        %v3625 = vsel %vm1961, %v3344, 0
        %v3628 = vsel %vm1961, %v3345, 0
        %3630 = vmatpush.msra.mxu0 0.0
        %3631 = vmatpush.msra.mxu0 0.0
        %3632 = vmatpush.msra.mxu0 0.0
        %3633 = vmatpush.msra.mxu0 0.0
        %3634 = vmatpush.msra.mxu0 0.0
        %3635 = vmatpush.msra.mxu0 0.0
        %3636 = vmatpush.msra.mxu0 0.0
        %3637 = vmatpush.msra.mxu0 0.0
        %3638 = vmatpush.msra.mxu0 0.0
        %3639 = vmatpush.msra.mxu0 0.0
        %3640 = vmatpush.msra.mxu0 0.0
        %3641 = vmatpush.msra.mxu0 0.0
        %3642 = vmatpush.msra.mxu0 0.0
        %3643 = vmatpush.msra.mxu0 0.0
        %3644 = vmatpush.msra.mxu0 %v3347
        %3645 = vmatpush.msra.mxu0 %v3346
        %3646 = vmatmul.f32.gmra.mxu0 %v3622
        %v3647 = vpop.f32.mrf.mxu0
        %v3648 = vadd.f32 %v3613, %v3647
        %3649 = vmatmul.f32.gmra.mxu0 %v3625
        %v3650 = vpop.f32.mrf.mxu0
        %v3651 = vadd.f32 %v3616, %v3650
        %3652 = vmatmul.f32.gmra.mxu0 %v3628
        %v3653 = vpop.f32.mrf.mxu0
        %v3654 = vadd.f32 %v3619, %v3653
        %3655 = vdwg.mxu0
        %v3656 = vadd.f32 %v3031, %v3648
        %v3657 = vadd.f32 %v3027, %v3651
        %v3658 = vadd.f32 %v3026, %v3654
        %v3659 = vld [vmem:[%s71] sm:$0x1]
        %v3661 = vperm.slane %v3659, 0
        %v3663 = vadd.f32 %v3656, %v3661
        %v3664 = vadd.f32 %v3657, %v3661
        %v3665 = vadd.f32 %v3658, %v3661
        %v3666 = vsel %vm2438, %v3663, 0.0
        %3667 = vadd.xlane.f32.xlu0 %v3666
        %v3668 = vpop.xlane.xlu0 %3667
        %v3669 = vsel %vm2438, %v3664, 0.0
        %3670 = vadd.xlane.f32.xlu0 %v3669
        %v3671 = vpop.xlane.xlu0 %3670
        %v3672 = vsel %vm3038, %v3665, 0.0
        %3673 = vadd.xlane.f32.xlu0 %v3672
        %v3674 = vpop.xlane.xlu0 %3673
        %v3675 = vmul.f32 %v3668, %v3048
        %v3676 = vmul.f32 %v3671, %v3048
        %v3677 = vmul.f32 %v3674, %v3048
        %v3678 = vsub.f32 %v3663, %v3675
        %v3679 = vsub.f32 %v3664, %v3676
        %v3680 = vsub.f32 %v3665, %v3677
        %v3681 = vmul.f32 %v3678, %v3678
        %v3682 = vmul.f32 %v3679, %v3679
        %v3683 = vmul.f32 %v3680, %v3680
        %v3684 = vsel %vm2438, %v3681, 0.0
        %3685 = vadd.xlane.f32.xlu0 %v3684
        %v3686 = vpop.xlane.xlu0 %3685
        %v3687 = vsel %vm2438, %v3682, 0.0
        %3688 = vadd.xlane.f32.xlu0 %v3687
        %v3689 = vpop.xlane.xlu0 %3688
        %v3690 = vsel %vm3038, %v3683, 0.0
        %3691 = vadd.xlane.f32.xlu0 %v3690
        %v3692 = vpop.xlane.xlu0 %3691
        %v3693 = vmul.f32 %v3686, %v3048
        %v3694 = vmul.f32 %v3689, %v3048
        %v3695 = vmul.f32 %v3692, %v3048
        %v3696 = vadd.f32 %v3693, 1e-05
        %v3697 = vadd.f32 %v3694, 1e-05
        %v3698 = vadd.f32 %v3695, 1e-05
        %v3699 = vrsqrt.pop %v3696
        %v3700 = vmul.f32 %v3699, %v3696
        %v3701 = vmul.f32 %v3700, %v3699
        %v3702 = vmul.f32 0.5, %v3701
        %v3703 = vsub.f32 1.5, %v3702
        %v3704 = vmul.f32 %v3699, %v3703
        %vm3705 = vweird.f32 %v3696
        %vm3706 = vweird.f32 %v3699
        %vm3707 = vmor %vm3705, %vm3706
        %v3708 = vsel %vm3707, %v3699, %v3704
        %v3709 = vrsqrt.pop %v3697
        %v3710 = vmul.f32 %v3709, %v3697
        %v3711 = vmul.f32 %v3710, %v3709
        %v3712 = vmul.f32 0.5, %v3711
        %v3713 = vsub.f32 1.5, %v3712
        %v3714 = vmul.f32 %v3709, %v3713
        %vm3715 = vweird.f32 %v3697
        %vm3716 = vweird.f32 %v3709
        %vm3717 = vmor %vm3715, %vm3716
        %v3718 = vsel %vm3717, %v3709, %v3714
        %v3719 = vrsqrt.pop %v3698
        %v3720 = vmul.f32 %v3719, %v3698
        %v3721 = vmul.f32 %v3720, %v3719
        %v3722 = vmul.f32 0.5, %v3721
        %v3723 = vsub.f32 1.5, %v3722
        %v3724 = vmul.f32 %v3719, %v3723
        %vm3725 = vweird.f32 %v3698
        %vm3726 = vweird.f32 %v3719
        %vm3727 = vmor %vm3725, %vm3726
        %v3728 = vsel %vm3727, %v3719, %v3724
        %v3729 = vmul.f32 %v3678, %v3708
        %v3730 = vmul.f32 %v3679, %v3718
        %v3731 = vmul.f32 %v3680, %v3728
        %v3732 = vld [vmem:[#allocation30] sm:$0xff]
        %v3733 = vld [vmem:[#allocation30 + $0x8] sm:$0xff]
        %v3734 = vld [vmem:[#allocation30 + $0x10] sm:$0xff]
        %v3735 = vld [vmem:[#allocation30 + $0x18] sm:$0xff]
        %v3736 = vld [vmem:[%s75] sm:$0x1]
        %v3738 = vperm.slane %v3736, 0
        %v3741 = vsel %vm2438, %v3729, 0
        %v3744 = vsel %vm2438, %v3730, 0
        %v3747 = vsel %vm2438, %v3731, 0
        %3749 = vmatpush.msra.mxu0 0.0
        %3750 = vmatpush.msra.mxu0 0.0
        %3751 = vmatpush.msra.mxu0 0.0
        %3752 = vmatpush.msra.mxu0 0.0
        %3753 = vmatpush.msra.mxu0 0.0
        %3754 = vmatpush.msra.mxu0 0.0
        %3755 = vmatpush.msra.mxu0 0.0
        %3756 = vmatpush.msra.mxu0 0.0
        %3757 = vmatpush.msra.mxu0 0.0
        %3758 = vmatpush.msra.mxu0 0.0
        %3759 = vmatpush.msra.mxu0 0.0
        %3760 = vmatpush.msra.mxu0 0.0
        %3761 = vmatpush.msra.mxu0 %v3735
        %3762 = vmatpush.msra.mxu0 %v3734
        %3763 = vmatpush.msra.mxu0 %v3733
        %3764 = vmatpush.msra.mxu0 %v3732
        %3765 = vmatmul.f32.gmra.mxu0 %v3741
        %v3766 = vpop.f32.mrf.mxu0
        %v3767 = vadd.f32 %v3738, %v3766
        %3768 = vmatmul.f32.gmra.mxu0 %v3744
        %v3769 = vpop.f32.mrf.mxu0
        %v3770 = vadd.f32 %v3738, %v3769
        %3771 = vmatmul.f32.gmra.mxu0 %v3747
        %v3772 = vpop.f32.mrf.mxu0
        %v3773 = vadd.f32 %v3738, %v3772
        %3774 = vdwg.mxu0
        %v3775 = vmul.f32 %v3767, 0.5
        %v3776 = vmul.f32 %v3770, 0.5
        %v3777 = vmul.f32 %v3773, 0.5
        %v3778 = vmul.f32 %v3767, 0.70710677
        %v3779 = vmul.f32 %v3770, 0.70710677
        %v3780 = vmul.f32 %v3773, 0.70710677
        %v3781 = vand.u32 2147483647, %v3778
        %v3782 = vand.u32 2147483647, %v3779
        %v3783 = vand.u32 2147483647, %v3780
        %v3784 = vmul.f32 %v3781, 0.3275911
        %v3785 = vmul.f32 %v3782, 0.3275911
        %v3786 = vmul.f32 %v3783, 0.3275911
        %v3787 = vadd.f32 %v3784, 1.0
        %v3788 = vadd.f32 %v3785, 1.0
        %v3789 = vadd.f32 %v3786, 1.0
        %v3790 = vrcp.pop %v3787
        %v3791 = vmul.f32 %v3787, %v3790
        %v3792 = vsub.f32 1.0, %v3791
        %v3793 = vmul.f32 %v3790, %v3792
        %v3794 = vadd.f32 %v3790, %v3793
        %vm3795 = vweird.f32 %v3787
        %vm3796 = vweird.f32 %v3790
        %vm3797 = vmor %vm3795, %vm3796
        %v3798 = vsel %vm3797, %v3790, %v3794
        %v3799 = vand.u32 2147483647, %v3787
        %vm3800 = vcmp.eq.f32.partialorder %v3799, 8.507059e+37
        %v3801 = vand.u32 %v3787, 2147483648
        %v3802 = vor.u32 1.1754944e-38, %v3801
        %v3803 = vsel %vm3800, %v3802, %v3798
        %v3804 = vrcp.pop %v3788
        %v3805 = vmul.f32 %v3788, %v3804
        %v3806 = vsub.f32 1.0, %v3805
        %v3807 = vmul.f32 %v3804, %v3806
        %v3808 = vadd.f32 %v3804, %v3807
        %vm3809 = vweird.f32 %v3788
        %vm3810 = vweird.f32 %v3804
        %vm3811 = vmor %vm3809, %vm3810
        %v3812 = vsel %vm3811, %v3804, %v3808
        %v3813 = vand.u32 2147483647, %v3788
        %vm3814 = vcmp.eq.f32.partialorder %v3813, 8.507059e+37
        %v3815 = vand.u32 %v3788, 2147483648
        %v3816 = vor.u32 1.1754944e-38, %v3815
        %v3817 = vsel %vm3814, %v3816, %v3812
        %v3818 = vrcp.pop %v3789
        %v3819 = vmul.f32 %v3789, %v3818
        %v3820 = vsub.f32 1.0, %v3819
        %v3821 = vmul.f32 %v3818, %v3820
        %v3822 = vadd.f32 %v3818, %v3821
        %vm3823 = vweird.f32 %v3789
        %vm3824 = vweird.f32 %v3818
        %vm3825 = vmor %vm3823, %vm3824
        %v3826 = vsel %vm3825, %v3818, %v3822
        %v3827 = vand.u32 2147483647, %v3789
        %vm3828 = vcmp.eq.f32.partialorder %v3827, 8.507059e+37
        %v3829 = vand.u32 %v3789, 2147483648
        %v3830 = vor.u32 1.1754944e-38, %v3829
        %v3831 = vsel %vm3828, %v3830, %v3826
        %v3832 = vmul.f32 %v3803, 1.0614054
        %v3833 = vmul.f32 %v3817, 1.0614054
        %v3834 = vmul.f32 %v3831, 1.0614054
        %v3835 = vadd.f32 %v3832, -1.4531521
        %v3836 = vadd.f32 %v3833, -1.4531521
        %v3837 = vadd.f32 %v3834, -1.4531521
        %v3838 = vmul.f32 %v3835, %v3803
        %v3839 = vmul.f32 %v3836, %v3817
        %v3840 = vmul.f32 %v3837, %v3831
        %v3841 = vadd.f32 %v3838, 1.4214138
        %v3842 = vadd.f32 %v3839, 1.4214138
        %v3843 = vadd.f32 %v3840, 1.4214138
        %v3844 = vmul.f32 %v3841, %v3803
        %v3845 = vmul.f32 %v3842, %v3817
        %v3846 = vmul.f32 %v3843, %v3831
        %v3847 = vadd.f32 %v3844, -0.28449672
        %v3848 = vadd.f32 %v3845, -0.28449672
        %v3849 = vadd.f32 %v3846, -0.28449672
        %v3850 = vmul.f32 %v3847, %v3803
        %v3851 = vmul.f32 %v3848, %v3817
        %v3852 = vmul.f32 %v3849, %v3831
        %v3853 = vadd.f32 %v3850, 0.2548296
        %v3854 = vadd.f32 %v3851, 0.2548296
        %v3855 = vadd.f32 %v3852, 0.2548296
        %v3856 = vmul.f32 %v3853, %v3803
        %v3857 = vmul.f32 %v3854, %v3817
        %v3858 = vmul.f32 %v3855, %v3831
        %v3859 = vsub.f32 0.0, %v3781
        %v3860 = vsub.f32 0.0, %v3782
        %v3861 = vsub.f32 0.0, %v3783
        %v3862 = vmul.f32 %v3859, %v3781
        %v3863 = vmul.f32 %v3860, %v3782
        %v3864 = vmul.f32 %v3861, %v3783
        %v3865 = vmul.f32 %v3862, 1.442695
        %v3866 = vpow.pop %v3865
        %v3867 = vmul.f32 %v3863, 1.442695
        %v3868 = vpow.pop %v3867
        %v3869 = vmul.f32 %v3864, 1.442695
        %v3870 = vpow.pop %v3869
        %v3871 = vmul.f32 %v3856, %v3866
        %v3872 = vmul.f32 %v3857, %v3868
        %v3873 = vmul.f32 %v3858, %v3870
        %v3874 = vsub.f32 1.0, %v3871
        %v3875 = vsub.f32 1.0, %v3872
        %v3876 = vsub.f32 1.0, %v3873
        %vm3877 = vcmp.ge.f32.partialorder %v3778, 0.0
        %vm3878 = vcmp.ge.f32.partialorder %v3779, 0.0
        %vm3879 = vcmp.ge.f32.partialorder %v3780, 0.0
        %v3880 = vsub.f32 0.0, %v3874
        %v3881 = vsub.f32 0.0, %v3875
        %v3882 = vsub.f32 0.0, %v3876
        %v3883 = vsel %vm3877, %v3874, %v3880
        %v3884 = vsel %vm3878, %v3875, %v3881
        %v3885 = vsel %vm3879, %v3876, %v3882
        %v3886 = vadd.f32 %v3883, 1.0
        %v3887 = vadd.f32 %v3884, 1.0
        %v3888 = vadd.f32 %v3885, 1.0
        %v3889 = vmul.f32 %v3775, %v3886
        %v3890 = vmul.f32 %v3776, %v3887
        %v3891 = vmul.f32 %v3777, %v3888
        %v3892 = vld [vmem:[#allocation31] sm:$0xff]
        %v3893 = vld [vmem:[#allocation31 + $0x8] sm:$0xff]
        %v3894 = vld [vmem:[#allocation31 + $0x10] sm:$0xff]
        %v3895 = vld [vmem:[#allocation31 + $0x18] sm:$0xff]
        %v3896 = vld [vmem:[%s79] sm:$0x1]
        %v3898 = vperm.slane %v3896, 0
        %v3901 = vsel %vm2438, %v3889, 0
        %v3904 = vsel %vm2438, %v3890, 0
        %v3907 = vsel %vm2438, %v3891, 0
        %3909 = vmatpush.msra.mxu0 0.0
        %3910 = vmatpush.msra.mxu0 0.0
        %3911 = vmatpush.msra.mxu0 0.0
        %3912 = vmatpush.msra.mxu0 0.0
        %3913 = vmatpush.msra.mxu0 0.0
        %3914 = vmatpush.msra.mxu0 0.0
        %3915 = vmatpush.msra.mxu0 0.0
        %3916 = vmatpush.msra.mxu0 0.0
        %3917 = vmatpush.msra.mxu0 0.0
        %3918 = vmatpush.msra.mxu0 0.0
        %3919 = vmatpush.msra.mxu0 0.0
        %3920 = vmatpush.msra.mxu0 0.0
        %3921 = vmatpush.msra.mxu0 %v3895
        %3922 = vmatpush.msra.mxu0 %v3894
        %3923 = vmatpush.msra.mxu0 %v3893
        %3924 = vmatpush.msra.mxu0 %v3892
        %3925 = vmatmul.f32.gmra.mxu0 %v3901
        %v3926 = vpop.f32.mrf.mxu0
        %v3927 = vadd.f32 %v3898, %v3926
        %3928 = vmatmul.f32.gmra.mxu0 %v3904
        %v3929 = vpop.f32.mrf.mxu0
        %v3930 = vadd.f32 %v3898, %v3929
        %3931 = vmatmul.f32.gmra.mxu0 %v3907
        %v3932 = vpop.f32.mrf.mxu0
        %v3933 = vadd.f32 %v3898, %v3932
        %3934 = vdwg.mxu0
        %v3935 = vadd.f32 %v3663, %v3927
        %v3936 = vadd.f32 %v3664, %v3930
        %v3937 = vadd.f32 %v3665, %v3933
        %v3938 = vsel %vm2438, %v3935, 0.0
        %3939 = vadd.xlane.f32.xlu0 %v3938
        %v3940 = vpop.xlane.xlu0 %3939
        %v3941 = vsel %vm2438, %v3936, 0.0
        %3942 = vadd.xlane.f32.xlu0 %v3941
        %v3943 = vpop.xlane.xlu0 %3942
        %v3944 = vsel %vm3038, %v3937, 0.0
        %3945 = vadd.xlane.f32.xlu0 %v3944
        %v3946 = vpop.xlane.xlu0 %3945
        %v3947 = vmul.f32 %v3940, %v3048
        %v3948 = vmul.f32 %v3943, %v3048
        %v3949 = vmul.f32 %v3946, %v3048
        %v3950 = vsub.f32 %v3935, %v3947
        %v3951 = vsub.f32 %v3936, %v3948
        %v3952 = vsub.f32 %v3937, %v3949
        %v3953 = vmul.f32 %v3950, %v3950
        %v3954 = vmul.f32 %v3951, %v3951
        %v3955 = vmul.f32 %v3952, %v3952
        %v3956 = vsel %vm2438, %v3953, 0.0
        %3957 = vadd.xlane.f32.xlu0 %v3956
        %v3958 = vpop.xlane.xlu0 %3957
        %v3959 = vsel %vm2438, %v3954, 0.0
        %3960 = vadd.xlane.f32.xlu0 %v3959
        %v3961 = vpop.xlane.xlu0 %3960
        %v3962 = vsel %vm3038, %v3955, 0.0
        %3963 = vadd.xlane.f32.xlu0 %v3962
        %v3964 = vpop.xlane.xlu0 %3963
        %v3965 = vmul.f32 %v3958, %v3048
        %v3966 = vmul.f32 %v3961, %v3048
        %v3967 = vmul.f32 %v3964, %v3048
        %v3968 = vadd.f32 %v3965, 1e-05
        %v3969 = vadd.f32 %v3966, 1e-05
        %v3970 = vadd.f32 %v3967, 1e-05
        %v3971 = vrsqrt.pop %v3968
        %v3972 = vmul.f32 %v3971, %v3968
        %v3973 = vmul.f32 %v3972, %v3971
        %v3974 = vmul.f32 0.5, %v3973
        %v3975 = vsub.f32 1.5, %v3974
        %v3976 = vmul.f32 %v3971, %v3975
        %vm3977 = vweird.f32 %v3968
        %vm3978 = vweird.f32 %v3971
        %vm3979 = vmor %vm3977, %vm3978
        %v3980 = vsel %vm3979, %v3971, %v3976
        %v3981 = vrsqrt.pop %v3969
        %v3982 = vmul.f32 %v3981, %v3969
        %v3983 = vmul.f32 %v3982, %v3981
        %v3984 = vmul.f32 0.5, %v3983
        %v3985 = vsub.f32 1.5, %v3984
        %v3986 = vmul.f32 %v3981, %v3985
        %vm3987 = vweird.f32 %v3969
        %vm3988 = vweird.f32 %v3981
        %vm3989 = vmor %vm3987, %vm3988
        %v3990 = vsel %vm3989, %v3981, %v3986
        %v3991 = vrsqrt.pop %v3970
        %v3992 = vmul.f32 %v3991, %v3970
        %v3993 = vmul.f32 %v3992, %v3991
        %v3994 = vmul.f32 0.5, %v3993
        %v3995 = vsub.f32 1.5, %v3994
        %v3996 = vmul.f32 %v3991, %v3995
        %vm3997 = vweird.f32 %v3970
        %vm3998 = vweird.f32 %v3991
        %vm3999 = vmor %vm3997, %vm3998
        %v4000 = vsel %vm3999, %v3991, %v3996
        %v4001 = vmul.f32 %v3950, %v3980
        %v4002 = vmul.f32 %v3951, %v3990
        %v4003 = vmul.f32 %v3952, %v4000
        %v4004 = vld [vmem:[#allocation33] sm:$0xff]
        %v4005 = vld [vmem:[#allocation33 + $0x8] sm:$0xff]
        %v4006 = vld [vmem:[#allocation33 + $0x10] sm:$0xff]
        %v4007 = vld [vmem:[#allocation33 + $0x18] sm:$0xff]
        %v4008 = vld [vmem:[%s87] sm:$0x1]
        %v4010 = vperm.slane %v4008, 0
        %v4013 = vsel %vm2438, %v4001, 0
        %v4016 = vsel %vm2438, %v4002, 0
        %v4019 = vsel %vm2438, %v4003, 0
        %4021 = vmatpush.msra.mxu0 0.0
        %4022 = vmatpush.msra.mxu0 0.0
        %4023 = vmatpush.msra.mxu0 0.0
        %4024 = vmatpush.msra.mxu0 0.0
        %4025 = vmatpush.msra.mxu0 0.0
        %4026 = vmatpush.msra.mxu0 0.0
        %4027 = vmatpush.msra.mxu0 0.0
        %4028 = vmatpush.msra.mxu0 0.0
        %4029 = vmatpush.msra.mxu0 0.0
        %4030 = vmatpush.msra.mxu0 0.0
        %4031 = vmatpush.msra.mxu0 0.0
        %4032 = vmatpush.msra.mxu0 0.0
        %4033 = vmatpush.msra.mxu0 %v4007
        %4034 = vmatpush.msra.mxu0 %v4006
        %4035 = vmatpush.msra.mxu0 %v4005
        %4036 = vmatpush.msra.mxu0 %v4004
        %4037 = vmatmul.f32.gmra.mxu0 %v4013
        %v4038 = vpop.f32.mrf.mxu0
        %v4039 = vadd.f32 %v4010, %v4038
        %4040 = vmatmul.f32.gmra.mxu0 %v4016
        %v4041 = vpop.f32.mrf.mxu0
        %v4042 = vadd.f32 %v4010, %v4041
        %4043 = vmatmul.f32.gmra.mxu0 %v4019
        %v4044 = vpop.f32.mrf.mxu0
        %v4045 = vadd.f32 %v4010, %v4044
        %4046 = vdwg.mxu0
        %v4047 = vld [vmem:[#allocation34] sm:$0xff]
        %v4048 = vld [vmem:[#allocation34 + $0x8] sm:$0xff]
        %v4049 = vld [vmem:[#allocation34 + $0x10] sm:$0xff]
        %v4050 = vld [vmem:[#allocation34 + $0x18] sm:$0xff]
        %v4051 = vld [vmem:[%s89] sm:$0x1]
        %v4053 = vperm.slane %v4051, 0
        %4055 = vmatpush.msra.mxu0 0.0
        %4056 = vmatpush.msra.mxu0 0.0
        %4057 = vmatpush.msra.mxu0 0.0
        %4058 = vmatpush.msra.mxu0 0.0
        %4059 = vmatpush.msra.mxu0 0.0
        %4060 = vmatpush.msra.mxu0 0.0
        %4061 = vmatpush.msra.mxu0 0.0
        %4062 = vmatpush.msra.mxu0 0.0
        %4063 = vmatpush.msra.mxu0 0.0
        %4064 = vmatpush.msra.mxu0 0.0
        %4065 = vmatpush.msra.mxu0 0.0
        %4066 = vmatpush.msra.mxu0 0.0
        %4067 = vmatpush.msra.mxu0 %v4050
        %4068 = vmatpush.msra.mxu0 %v4049
        %4069 = vmatpush.msra.mxu0 %v4048
        %4070 = vmatpush.msra.mxu0 %v4047
        %4071 = vmatmul.f32.gmra.mxu0 %v4013
        %v4072 = vpop.f32.mrf.mxu0
        %v4073 = vadd.f32 %v4053, %v4072
        %4074 = vmatmul.f32.gmra.mxu0 %v4016
        %v4075 = vpop.f32.mrf.mxu0
        %v4076 = vadd.f32 %v4053, %v4075
        %4077 = vmatmul.f32.gmra.mxu0 %v4019
        %v4078 = vpop.f32.mrf.mxu0
        %v4079 = vadd.f32 %v4053, %v4078
        %4080 = vdwg.mxu0
        %v4081 = vld [vmem:[#allocation36] sm:$0xff]
        %v4082 = vld [vmem:[#allocation36 + $0x8] sm:$0xff]
        %v4083 = vld [vmem:[#allocation36 + $0x10] sm:$0xff]
        %v4084 = vld [vmem:[#allocation36 + $0x18] sm:$0xff]
        %v4085 = vld [vmem:[%s91] sm:$0x1]
        %v4087 = vperm.slane %v4085, 0
        %4089 = vmatpush.msra.mxu0 0.0
        %4090 = vmatpush.msra.mxu0 0.0
        %4091 = vmatpush.msra.mxu0 0.0
        %4092 = vmatpush.msra.mxu0 0.0
        %4093 = vmatpush.msra.mxu0 0.0
        %4094 = vmatpush.msra.mxu0 0.0
        %4095 = vmatpush.msra.mxu0 0.0
        %4096 = vmatpush.msra.mxu0 0.0
        %4097 = vmatpush.msra.mxu0 0.0
        %4098 = vmatpush.msra.mxu0 0.0
        %4099 = vmatpush.msra.mxu0 0.0
        %4100 = vmatpush.msra.mxu0 0.0
        %4101 = vmatpush.msra.mxu0 %v4084
        %4102 = vmatpush.msra.mxu0 %v4083
        %4103 = vmatpush.msra.mxu0 %v4082
        %4104 = vmatpush.msra.mxu0 %v4081
        %4105 = vmatmul.f32.gmra.mxu0 %v4013
        %v4106 = vpop.f32.mrf.mxu0
        %v4107 = vadd.f32 %v4087, %v4106
        %4108 = vmatmul.f32.gmra.mxu0 %v4016
        %v4109 = vpop.f32.mrf.mxu0
        %v4110 = vadd.f32 %v4087, %v4109
        %4111 = vmatmul.f32.gmra.mxu0 %v4019
        %v4112 = vpop.f32.mrf.mxu0
        %v4113 = vadd.f32 %v4087, %v4112
        %4114 = vdwg.mxu0
        %v4116 = vsel %vm1961, %v4039, 0
        %v4119 = vsel %vm1961, %v4042, 0
        %v4122 = vsel %vm1961, %v4045, 0
        %v4125 = vsel %vm1961, %v4073, 0
        %v4128 = vsel %vm1961, %v4076, 0
        %v4131 = vsel %vm1961, %v4079, 0
        %4133 = vmatpush.xpose.msra.mxu0 0.0
        %4134 = vmatpush.xpose.msra.mxu0 0.0
        %4135 = vmatpush.xpose.msra.mxu0 0.0
        %4136 = vmatpush.xpose.msra.mxu0 0.0
        %4137 = vmatpush.xpose.msra.mxu0 0.0
        %4138 = vmatpush.xpose.msra.mxu0 0.0
        %4139 = vmatpush.xpose.msra.mxu0 0.0
        %4140 = vmatpush.xpose.msra.mxu0 0.0
        %4141 = vmatpush.xpose.msra.mxu0 0.0
        %4142 = vmatpush.xpose.msra.mxu0 0.0
        %4143 = vmatpush.xpose.msra.mxu0 0.0
        %4144 = vmatpush.xpose.msra.mxu0 0.0
        %4145 = vmatpush.xpose.msra.mxu0 0.0
        %4146 = vmatpush.xpose.msra.mxu0 %v4131
        %4147 = vmatpush.xpose.msra.mxu0 %v4128
        %4148 = vmatpush.xpose.msra.mxu0 %v4125
        %4149 = vmatmul.f32.gmra.mxu0 %v4116
        %v4150 = vpop.f32.mrf.mxu0
        %v4151 = vadd.f32 0.0, %v4150
        %4152 = vmatmul.f32.gmra.mxu0 %v4119
        %v4153 = vpop.f32.mrf.mxu0
        %v4154 = vadd.f32 0.0, %v4153
        %4155 = vmatmul.f32.gmra.mxu0 %v4122
        %v4156 = vpop.f32.mrf.mxu0
        %v4157 = vadd.f32 0.0, %v4156
        %4158 = vdwg.mxu0
        %v4159 = vmul.f32 %v4151, 0.25
        %v4160 = vmul.f32 %v4154, 0.25
        %v4161 = vmul.f32 %v4157, 0.25
        %v4162 = vsel %vm3264, %v4159, -inf
        %4163 = vmax.xlane.f32.xlu0 %v4162
        %v4164 = vpop.xlane.xlu0 %4163
        %v4165 = vsel %vm3264, %v4160, -inf
        %4166 = vmax.xlane.f32.xlu0 %v4165
        %v4167 = vpop.xlane.xlu0 %4166
        %v4168 = vsel %vm3271, %v4161, -inf
        %4169 = vmax.xlane.f32.xlu0 %v4168
        %v4170 = vpop.xlane.xlu0 %4169
        %v4171 = vsub.f32 %v4159, %v4164
        %v4172 = vsub.f32 %v4160, %v4167
        %v4173 = vsub.f32 %v4161, %v4170
        %v4174 = vmul.f32 %v4171, 1.442695
        %v4175 = vpow.pop %v4174
        %v4176 = vmul.f32 %v4172, 1.442695
        %v4177 = vpow.pop %v4176
        %v4178 = vmul.f32 %v4173, 1.442695
        %v4179 = vpow.pop %v4178
        %v4180 = vsel %vm3264, %v4175, 0.0
        %4181 = vadd.xlane.f32.xlu0 %v4180
        %v4182 = vpop.xlane.xlu0 %4181
        %v4183 = vsel %vm3264, %v4177, 0.0
        %4184 = vadd.xlane.f32.xlu0 %v4183
        %v4185 = vpop.xlane.xlu0 %4184
        %v4186 = vsel %vm3271, %v4179, 0.0
        %4187 = vadd.xlane.f32.xlu0 %v4186
        %v4188 = vpop.xlane.xlu0 %4187
        %v4189 = vrcp.pop %v4182
        %v4190 = vrcp.pop %v4185
        %v4191 = vrcp.pop %v4188
        %v4192 = vmul.f32 %v4182, %v4189
        %v4193 = vmul.f32 %v4185, %v4190
        %v4194 = vmul.f32 %v4188, %v4191
        %v4195 = vsub.f32 2.0, %v4192
        %v4196 = vsub.f32 2.0, %v4193
        %v4197 = vsub.f32 2.0, %v4194
        %v4198 = vmul.f32 %v4189, %v4195
        %v4199 = vmul.f32 %v4190, %v4196
        %v4200 = vmul.f32 %v4191, %v4197
        %v4202 = vsel %vm3264, %v4175, 0
        %v4205 = vsel %vm3264, %v4177, 0
        %v4208 = vsel %vm3264, %v4179, 0
        %v4211 = vsel %vm3024, %v4113, 0
        %4213 = vmatpush.msra.mxu0 0.0
        %4214 = vmatpush.msra.mxu0 0.0
        %4215 = vmatpush.msra.mxu0 0.0
        %4216 = vmatpush.msra.mxu0 0.0
        %4217 = vmatpush.msra.mxu0 0.0
        %4218 = vmatpush.msra.mxu0 0.0
        %4219 = vmatpush.msra.mxu0 0.0
        %4220 = vmatpush.msra.mxu0 0.0
        %4221 = vmatpush.msra.mxu0 0.0
        %4222 = vmatpush.msra.mxu0 0.0
        %4223 = vmatpush.msra.mxu0 0.0
        %4224 = vmatpush.msra.mxu0 0.0
        %4225 = vmatpush.msra.mxu0 0.0
        %4226 = vmatpush.msra.mxu0 %v4211
        %4227 = vmatpush.msra.mxu0 %v4110
        %4228 = vmatpush.msra.mxu0 %v4107
        %4229 = vmatmul.f32.gmra.mxu0 %v4202
        %v4230 = vpop.f32.mrf.mxu0
        %v4231 = vadd.f32 0.0, %v4230
        %4232 = vmatmul.f32.gmra.mxu0 %v4205
        %v4233 = vpop.f32.mrf.mxu0
        %v4234 = vadd.f32 0.0, %v4233
        %4235 = vmatmul.f32.gmra.mxu0 %v4208
        %v4236 = vpop.f32.mrf.mxu0
        %v4237 = vadd.f32 0.0, %v4236
        %4238 = vdwg.mxu0
        %v4239 = vmul.f32 %v4231, %v4198
        %v4240 = vmul.f32 %v4234, %v4199
        %v4241 = vmul.f32 %v4237, %v4200
        %v4242 = vld [vmem:[#allocation37] sm:$0xff]
        %v4243 = vld [vmem:[#allocation37 + $0x8] sm:$0xff]
        %s4244 = scalar_lea.vmem [#allocation33], 32
        %v4245 = vld [vmem:[%s4244] sm:$0xff]
        %v4246 = vld [vmem:[%s4244 + $0x8] sm:$0xff]
        %v4247 = vld [vmem:[%s4244 + $0x10] sm:$0xff]
        %v4248 = vld [vmem:[%s4244 + $0x18] sm:$0xff]
        %s4249 = scalar_lea.vmem %s87, 1
        %v4250 = vld [vmem:[%s4249] sm:$0x1]
        %v4252 = vperm.slane %v4250, 0
        %4254 = vmatpush.msra.mxu0 0.0
        %4255 = vmatpush.msra.mxu0 0.0
        %4256 = vmatpush.msra.mxu0 0.0
        %4257 = vmatpush.msra.mxu0 0.0
        %4258 = vmatpush.msra.mxu0 0.0
        %4259 = vmatpush.msra.mxu0 0.0
        %4260 = vmatpush.msra.mxu0 0.0
        %4261 = vmatpush.msra.mxu0 0.0
        %4262 = vmatpush.msra.mxu0 0.0
        %4263 = vmatpush.msra.mxu0 0.0
        %4264 = vmatpush.msra.mxu0 0.0
        %4265 = vmatpush.msra.mxu0 0.0
        %4266 = vmatpush.msra.mxu0 %v4248
        %4267 = vmatpush.msra.mxu0 %v4247
        %4268 = vmatpush.msra.mxu0 %v4246
        %4269 = vmatpush.msra.mxu0 %v4245
        %4270 = vmatmul.f32.gmra.mxu0 %v4013
        %v4271 = vpop.f32.mrf.mxu0
        %v4272 = vadd.f32 %v4252, %v4271
        %4273 = vmatmul.f32.gmra.mxu0 %v4016
        %v4274 = vpop.f32.mrf.mxu0
        %v4275 = vadd.f32 %v4252, %v4274
        %4276 = vmatmul.f32.gmra.mxu0 %v4019
        %v4277 = vpop.f32.mrf.mxu0
        %v4278 = vadd.f32 %v4252, %v4277
        %4279 = vdwg.mxu0
        %s4280 = scalar_lea.vmem [#allocation34], 32
        %v4281 = vld [vmem:[%s4280] sm:$0xff]
        %v4282 = vld [vmem:[%s4280 + $0x8] sm:$0xff]
        %v4283 = vld [vmem:[%s4280 + $0x10] sm:$0xff]
        %v4284 = vld [vmem:[%s4280 + $0x18] sm:$0xff]
        %s4285 = scalar_lea.vmem %s89, 1
        %v4286 = vld [vmem:[%s4285] sm:$0x1]
        %v4288 = vperm.slane %v4286, 0
        %4290 = vmatpush.msra.mxu0 0.0
        %4291 = vmatpush.msra.mxu0 0.0
        %4292 = vmatpush.msra.mxu0 0.0
        %4293 = vmatpush.msra.mxu0 0.0
        %4294 = vmatpush.msra.mxu0 0.0
        %4295 = vmatpush.msra.mxu0 0.0
        %4296 = vmatpush.msra.mxu0 0.0
        %4297 = vmatpush.msra.mxu0 0.0
        %4298 = vmatpush.msra.mxu0 0.0
        %4299 = vmatpush.msra.mxu0 0.0
        %4300 = vmatpush.msra.mxu0 0.0
        %4301 = vmatpush.msra.mxu0 0.0
        %4302 = vmatpush.msra.mxu0 %v4284
        %4303 = vmatpush.msra.mxu0 %v4283
        %4304 = vmatpush.msra.mxu0 %v4282
        %4305 = vmatpush.msra.mxu0 %v4281
        %4306 = vmatmul.f32.gmra.mxu0 %v4013
        %v4307 = vpop.f32.mrf.mxu0
        %v4308 = vadd.f32 %v4288, %v4307
        %4309 = vmatmul.f32.gmra.mxu0 %v4016
        %v4310 = vpop.f32.mrf.mxu0
        %v4311 = vadd.f32 %v4288, %v4310
        %4312 = vmatmul.f32.gmra.mxu0 %v4019
        %v4313 = vpop.f32.mrf.mxu0
        %v4314 = vadd.f32 %v4288, %v4313
        %4315 = vdwg.mxu0
        %s4316 = scalar_lea.vmem [#allocation36], 32
        %v4317 = vld [vmem:[%s4316] sm:$0xff]
        %v4318 = vld [vmem:[%s4316 + $0x8] sm:$0xff]
        %v4319 = vld [vmem:[%s4316 + $0x10] sm:$0xff]
        %v4320 = vld [vmem:[%s4316 + $0x18] sm:$0xff]
        %s4321 = scalar_lea.vmem %s91, 1
        %v4322 = vld [vmem:[%s4321] sm:$0x1]
        %v4324 = vperm.slane %v4322, 0
        %4326 = vmatpush.msra.mxu0 0.0
        %4327 = vmatpush.msra.mxu0 0.0
        %4328 = vmatpush.msra.mxu0 0.0
        %4329 = vmatpush.msra.mxu0 0.0
        %4330 = vmatpush.msra.mxu0 0.0
        %4331 = vmatpush.msra.mxu0 0.0
        %4332 = vmatpush.msra.mxu0 0.0
        %4333 = vmatpush.msra.mxu0 0.0
        %4334 = vmatpush.msra.mxu0 0.0
        %4335 = vmatpush.msra.mxu0 0.0
        %4336 = vmatpush.msra.mxu0 0.0
        %4337 = vmatpush.msra.mxu0 0.0
        %4338 = vmatpush.msra.mxu0 %v4320
        %4339 = vmatpush.msra.mxu0 %v4319
        %4340 = vmatpush.msra.mxu0 %v4318
        %4341 = vmatpush.msra.mxu0 %v4317
        %4342 = vmatmul.f32.gmra.mxu0 %v4013
        %v4343 = vpop.f32.mrf.mxu0
        %v4344 = vadd.f32 %v4324, %v4343
        %4345 = vmatmul.f32.gmra.mxu0 %v4016
        %v4346 = vpop.f32.mrf.mxu0
        %v4347 = vadd.f32 %v4324, %v4346
        %4348 = vmatmul.f32.gmra.mxu0 %v4019
        %v4349 = vpop.f32.mrf.mxu0
        %v4350 = vadd.f32 %v4324, %v4349
        %4351 = vdwg.mxu0
        %v4353 = vsel %vm1961, %v4272, 0
        %v4356 = vsel %vm1961, %v4275, 0
        %v4359 = vsel %vm1961, %v4278, 0
        %v4362 = vsel %vm1961, %v4308, 0
        %v4365 = vsel %vm1961, %v4311, 0
        %v4368 = vsel %vm1961, %v4314, 0
        %4370 = vmatpush.xpose.msra.mxu0 0.0
        %4371 = vmatpush.xpose.msra.mxu0 0.0
        %4372 = vmatpush.xpose.msra.mxu0 0.0
        %4373 = vmatpush.xpose.msra.mxu0 0.0
        %4374 = vmatpush.xpose.msra.mxu0 0.0
        %4375 = vmatpush.xpose.msra.mxu0 0.0
        %4376 = vmatpush.xpose.msra.mxu0 0.0
        %4377 = vmatpush.xpose.msra.mxu0 0.0
        %4378 = vmatpush.xpose.msra.mxu0 0.0
        %4379 = vmatpush.xpose.msra.mxu0 0.0
        %4380 = vmatpush.xpose.msra.mxu0 0.0
        %4381 = vmatpush.xpose.msra.mxu0 0.0
        %4382 = vmatpush.xpose.msra.mxu0 0.0
        %4383 = vmatpush.xpose.msra.mxu0 %v4368
        %4384 = vmatpush.xpose.msra.mxu0 %v4365
        %4385 = vmatpush.xpose.msra.mxu0 %v4362
        %4386 = vmatmul.f32.gmra.mxu0 %v4353
        %v4387 = vpop.f32.mrf.mxu0
        %v4388 = vadd.f32 0.0, %v4387
        %4389 = vmatmul.f32.gmra.mxu0 %v4356
        %v4390 = vpop.f32.mrf.mxu0
        %v4391 = vadd.f32 0.0, %v4390
        %4392 = vmatmul.f32.gmra.mxu0 %v4359
        %v4393 = vpop.f32.mrf.mxu0
        %v4394 = vadd.f32 0.0, %v4393
        %4395 = vdwg.mxu0
        %v4396 = vmul.f32 %v4388, 0.25
        %v4397 = vmul.f32 %v4391, 0.25
        %v4398 = vmul.f32 %v4394, 0.25
        %v4399 = vsel %vm3264, %v4396, -inf
        %4400 = vmax.xlane.f32.xlu0 %v4399
        %v4401 = vpop.xlane.xlu0 %4400
        %v4402 = vsel %vm3264, %v4397, -inf
        %4403 = vmax.xlane.f32.xlu0 %v4402
        %v4404 = vpop.xlane.xlu0 %4403
        %v4405 = vsel %vm3271, %v4398, -inf
        %4406 = vmax.xlane.f32.xlu0 %v4405
        %v4407 = vpop.xlane.xlu0 %4406
        %v4408 = vsub.f32 %v4396, %v4401
        %v4409 = vsub.f32 %v4397, %v4404
        %v4410 = vsub.f32 %v4398, %v4407
        %v4411 = vmul.f32 %v4408, 1.442695
        %v4412 = vpow.pop %v4411
        %v4413 = vmul.f32 %v4409, 1.442695
        %v4414 = vpow.pop %v4413
        %v4415 = vmul.f32 %v4410, 1.442695
        %v4416 = vpow.pop %v4415
        %v4417 = vsel %vm3264, %v4412, 0.0
        %4418 = vadd.xlane.f32.xlu0 %v4417
        %v4419 = vpop.xlane.xlu0 %4418
        %v4420 = vsel %vm3264, %v4414, 0.0
        %4421 = vadd.xlane.f32.xlu0 %v4420
        %v4422 = vpop.xlane.xlu0 %4421
        %v4423 = vsel %vm3271, %v4416, 0.0
        %4424 = vadd.xlane.f32.xlu0 %v4423
        %v4425 = vpop.xlane.xlu0 %4424
        %v4426 = vrcp.pop %v4419
        %v4427 = vrcp.pop %v4422
        %v4428 = vrcp.pop %v4425
        %v4429 = vmul.f32 %v4419, %v4426
        %v4430 = vmul.f32 %v4422, %v4427
        %v4431 = vmul.f32 %v4425, %v4428
        %v4432 = vsub.f32 2.0, %v4429
        %v4433 = vsub.f32 2.0, %v4430
        %v4434 = vsub.f32 2.0, %v4431
        %v4435 = vmul.f32 %v4426, %v4432
        %v4436 = vmul.f32 %v4427, %v4433
        %v4437 = vmul.f32 %v4428, %v4434
        %v4439 = vsel %vm3264, %v4412, 0
        %v4442 = vsel %vm3264, %v4414, 0
        %v4445 = vsel %vm3264, %v4416, 0
        %v4448 = vsel %vm3024, %v4350, 0
        %4450 = vmatpush.msra.mxu0 0.0
        %4451 = vmatpush.msra.mxu0 0.0
        %4452 = vmatpush.msra.mxu0 0.0
        %4453 = vmatpush.msra.mxu0 0.0
        %4454 = vmatpush.msra.mxu0 0.0
        %4455 = vmatpush.msra.mxu0 0.0
        %4456 = vmatpush.msra.mxu0 0.0
        %4457 = vmatpush.msra.mxu0 0.0
        %4458 = vmatpush.msra.mxu0 0.0
        %4459 = vmatpush.msra.mxu0 0.0
        %4460 = vmatpush.msra.mxu0 0.0
        %4461 = vmatpush.msra.mxu0 0.0
        %4462 = vmatpush.msra.mxu0 0.0
        %4463 = vmatpush.msra.mxu0 %v4448
        %4464 = vmatpush.msra.mxu0 %v4347
        %4465 = vmatpush.msra.mxu0 %v4344
        %4466 = vmatmul.f32.gmra.mxu0 %v4439
        %v4467 = vpop.f32.mrf.mxu0
        %v4468 = vadd.f32 0.0, %v4467
        %4469 = vmatmul.f32.gmra.mxu0 %v4442
        %v4470 = vpop.f32.mrf.mxu0
        %v4471 = vadd.f32 0.0, %v4470
        %4472 = vmatmul.f32.gmra.mxu0 %v4445
        %v4473 = vpop.f32.mrf.mxu0
        %v4474 = vadd.f32 0.0, %v4473
        %4475 = vdwg.mxu0
        %v4476 = vmul.f32 %v4468, %v4435
        %v4477 = vmul.f32 %v4471, %v4436
        %v4478 = vmul.f32 %v4474, %v4437
        %s4479 = scalar_lea.vmem [#allocation37], 16
        %v4480 = vld [vmem:[%s4479] sm:$0xff]
        %v4481 = vld [vmem:[%s4479 + $0x8] sm:$0xff]
        %v4483 = vsel %vm1961, %v4476, 0
        %v4486 = vsel %vm1961, %v4477, 0
        %v4489 = vsel %vm1961, %v4478, 0
        %4491 = vmatpush.msra.mxu0 0.0
        %4492 = vmatpush.msra.mxu0 0.0
        %4493 = vmatpush.msra.mxu0 0.0
        %4494 = vmatpush.msra.mxu0 0.0
        %4495 = vmatpush.msra.mxu0 0.0
        %4496 = vmatpush.msra.mxu0 0.0
        %4497 = vmatpush.msra.mxu0 0.0
        %4498 = vmatpush.msra.mxu0 0.0
        %4499 = vmatpush.msra.mxu0 0.0
        %4500 = vmatpush.msra.mxu0 0.0
        %4501 = vmatpush.msra.mxu0 0.0
        %4502 = vmatpush.msra.mxu0 0.0
        %4503 = vmatpush.msra.mxu0 0.0
        %4504 = vmatpush.msra.mxu0 0.0
        %4505 = vmatpush.msra.mxu0 %v4481
        %4506 = vmatpush.msra.mxu0 %v4480
        %4507 = vmatmul.f32.gmra.mxu0 %v4483
        %v4508 = vpop.f32.mrf.mxu0
        %v4509 = vadd.f32 0.0, %v4508
        %4510 = vmatmul.f32.gmra.mxu0 %v4486
        %v4511 = vpop.f32.mrf.mxu0
        %v4512 = vadd.f32 0.0, %v4511
        %4513 = vmatmul.f32.gmra.mxu0 %v4489
        %v4514 = vpop.f32.mrf.mxu0
        %v4515 = vadd.f32 0.0, %v4514
        %4516 = vdwg.mxu0
        %v4518 = vsel %vm1961, %v4239, 0
        %v4521 = vsel %vm1961, %v4240, 0
        %v4524 = vsel %vm1961, %v4241, 0
        %4526 = vmatpush.msra.mxu0 0.0
        %4527 = vmatpush.msra.mxu0 0.0
        %4528 = vmatpush.msra.mxu0 0.0
        %4529 = vmatpush.msra.mxu0 0.0
        %4530 = vmatpush.msra.mxu0 0.0
        %4531 = vmatpush.msra.mxu0 0.0
        %4532 = vmatpush.msra.mxu0 0.0
        %4533 = vmatpush.msra.mxu0 0.0
        %4534 = vmatpush.msra.mxu0 0.0
        %4535 = vmatpush.msra.mxu0 0.0
        %4536 = vmatpush.msra.mxu0 0.0
        %4537 = vmatpush.msra.mxu0 0.0
        %4538 = vmatpush.msra.mxu0 0.0
        %4539 = vmatpush.msra.mxu0 0.0
        %4540 = vmatpush.msra.mxu0 %v4243
        %4541 = vmatpush.msra.mxu0 %v4242
        %4542 = vmatmul.f32.gmra.mxu0 %v4518
        %v4543 = vpop.f32.mrf.mxu0
        %v4544 = vadd.f32 %v4509, %v4543
        %4545 = vmatmul.f32.gmra.mxu0 %v4521
        %v4546 = vpop.f32.mrf.mxu0
        %v4547 = vadd.f32 %v4512, %v4546
        %4548 = vmatmul.f32.gmra.mxu0 %v4524
        %v4549 = vpop.f32.mrf.mxu0
        %v4550 = vadd.f32 %v4515, %v4549
        %4551 = vdwg.mxu0
        %v4552 = vadd.f32 %v3935, %v4544
        %v4553 = vadd.f32 %v3936, %v4547
        %v4554 = vadd.f32 %v3937, %v4550
        %v4555 = vld [vmem:[%s95] sm:$0x1]
        %v4557 = vperm.slane %v4555, 0
        %v4559 = vadd.f32 %v4552, %v4557
        %v4560 = vadd.f32 %v4553, %v4557
        %v4561 = vadd.f32 %v4554, %v4557
        %v4562 = vsel %vm2438, %v4559, 0.0
        %4563 = vadd.xlane.f32.xlu0 %v4562
        %v4564 = vpop.xlane.xlu0 %4563
        %v4565 = vsel %vm2438, %v4560, 0.0
        %4566 = vadd.xlane.f32.xlu0 %v4565
        %v4567 = vpop.xlane.xlu0 %4566
        %v4568 = vsel %vm3038, %v4561, 0.0
        %4569 = vadd.xlane.f32.xlu0 %v4568
        %v4570 = vpop.xlane.xlu0 %4569
        %v4571 = vmul.f32 %v4564, %v3048
        %v4572 = vmul.f32 %v4567, %v3048
        %v4573 = vmul.f32 %v4570, %v3048
        %v4574 = vsub.f32 %v4559, %v4571
        %v4575 = vsub.f32 %v4560, %v4572
        %v4576 = vsub.f32 %v4561, %v4573
        %v4577 = vmul.f32 %v4574, %v4574
        %v4578 = vmul.f32 %v4575, %v4575
        %v4579 = vmul.f32 %v4576, %v4576
        %v4580 = vsel %vm2438, %v4577, 0.0
        %4581 = vadd.xlane.f32.xlu0 %v4580
        %v4582 = vpop.xlane.xlu0 %4581
        %v4583 = vsel %vm2438, %v4578, 0.0
        %4584 = vadd.xlane.f32.xlu0 %v4583
        %v4585 = vpop.xlane.xlu0 %4584
        %v4586 = vsel %vm3038, %v4579, 0.0
        %4587 = vadd.xlane.f32.xlu0 %v4586
        %v4588 = vpop.xlane.xlu0 %4587
        %v4589 = vmul.f32 %v4582, %v3048
        %v4590 = vmul.f32 %v4585, %v3048
        %v4591 = vmul.f32 %v4588, %v3048
        %v4592 = vadd.f32 %v4589, 1e-05
        %v4593 = vadd.f32 %v4590, 1e-05
        %v4594 = vadd.f32 %v4591, 1e-05
        %v4595 = vrsqrt.pop %v4592
        %v4596 = vmul.f32 %v4595, %v4592
        %v4597 = vmul.f32 %v4596, %v4595
        %v4598 = vmul.f32 0.5, %v4597
        %v4599 = vsub.f32 1.5, %v4598
        %v4600 = vmul.f32 %v4595, %v4599
        %vm4601 = vweird.f32 %v4592
        %vm4602 = vweird.f32 %v4595
        %vm4603 = vmor %vm4601, %vm4602
        %v4604 = vsel %vm4603, %v4595, %v4600
        %v4605 = vrsqrt.pop %v4593
        %v4606 = vmul.f32 %v4605, %v4593
        %v4607 = vmul.f32 %v4606, %v4605
        %v4608 = vmul.f32 0.5, %v4607
        %v4609 = vsub.f32 1.5, %v4608
        %v4610 = vmul.f32 %v4605, %v4609
        %vm4611 = vweird.f32 %v4593
        %vm4612 = vweird.f32 %v4605
        %vm4613 = vmor %vm4611, %vm4612
        %v4614 = vsel %vm4613, %v4605, %v4610
        %v4615 = vrsqrt.pop %v4594
        %v4616 = vmul.f32 %v4615, %v4594
        %v4617 = vmul.f32 %v4616, %v4615
        %v4618 = vmul.f32 0.5, %v4617
        %v4619 = vsub.f32 1.5, %v4618
        %v4620 = vmul.f32 %v4615, %v4619
        %vm4621 = vweird.f32 %v4594
        %vm4622 = vweird.f32 %v4615
        %vm4623 = vmor %vm4621, %vm4622
        %v4624 = vsel %vm4623, %v4615, %v4620
        %v4625 = vmul.f32 %v4574, %v4604
        %v4626 = vmul.f32 %v4575, %v4614
        %v4627 = vmul.f32 %v4576, %v4624
        %v4628 = vld [vmem:[#allocation39] sm:$0xff]
        %v4629 = vld [vmem:[#allocation39 + $0x8] sm:$0xff]
        %v4630 = vld [vmem:[#allocation39 + $0x10] sm:$0xff]
        %v4631 = vld [vmem:[#allocation39 + $0x18] sm:$0xff]
        %v4632 = vld [vmem:[%s99] sm:$0x1]
        %v4634 = vperm.slane %v4632, 0
        %v4637 = vsel %vm2438, %v4625, 0
        %v4640 = vsel %vm2438, %v4626, 0
        %v4643 = vsel %vm2438, %v4627, 0
        %4645 = vmatpush.msra.mxu0 0.0
        %4646 = vmatpush.msra.mxu0 0.0
        %4647 = vmatpush.msra.mxu0 0.0
        %4648 = vmatpush.msra.mxu0 0.0
        %4649 = vmatpush.msra.mxu0 0.0
        %4650 = vmatpush.msra.mxu0 0.0
        %4651 = vmatpush.msra.mxu0 0.0
        %4652 = vmatpush.msra.mxu0 0.0
        %4653 = vmatpush.msra.mxu0 0.0
        %4654 = vmatpush.msra.mxu0 0.0
        %4655 = vmatpush.msra.mxu0 0.0
        %4656 = vmatpush.msra.mxu0 0.0
        %4657 = vmatpush.msra.mxu0 %v4631
        %4658 = vmatpush.msra.mxu0 %v4630
        %4659 = vmatpush.msra.mxu0 %v4629
        %4660 = vmatpush.msra.mxu0 %v4628
        %4661 = vmatmul.f32.gmra.mxu0 %v4637
        %v4662 = vpop.f32.mrf.mxu0
        %v4663 = vadd.f32 %v4634, %v4662
        %4664 = vmatmul.f32.gmra.mxu0 %v4640
        %v4665 = vpop.f32.mrf.mxu0
        %v4666 = vadd.f32 %v4634, %v4665
        %4667 = vmatmul.f32.gmra.mxu0 %v4643
        %v4668 = vpop.f32.mrf.mxu0
        %v4669 = vadd.f32 %v4634, %v4668
        %4670 = vdwg.mxu0
        %v4671 = vmul.f32 %v4663, 0.5
        %v4672 = vmul.f32 %v4666, 0.5
        %v4673 = vmul.f32 %v4669, 0.5
        %v4674 = vmul.f32 %v4663, 0.70710677
        %v4675 = vmul.f32 %v4666, 0.70710677
        %v4676 = vmul.f32 %v4669, 0.70710677
        %v4677 = vand.u32 2147483647, %v4674
        %v4678 = vand.u32 2147483647, %v4675
        %v4679 = vand.u32 2147483647, %v4676
        %v4680 = vmul.f32 %v4677, 0.3275911
        %v4681 = vmul.f32 %v4678, 0.3275911
        %v4682 = vmul.f32 %v4679, 0.3275911
        %v4683 = vadd.f32 %v4680, 1.0
        %v4684 = vadd.f32 %v4681, 1.0
        %v4685 = vadd.f32 %v4682, 1.0
        %v4686 = vrcp.pop %v4683
        %v4687 = vmul.f32 %v4683, %v4686
        %v4688 = vsub.f32 1.0, %v4687
        %v4689 = vmul.f32 %v4686, %v4688
        %v4690 = vadd.f32 %v4686, %v4689
        %vm4691 = vweird.f32 %v4683
        %vm4692 = vweird.f32 %v4686
        %vm4693 = vmor %vm4691, %vm4692
        %v4694 = vsel %vm4693, %v4686, %v4690
        %v4695 = vand.u32 2147483647, %v4683
        %vm4696 = vcmp.eq.f32.partialorder %v4695, 8.507059e+37
        %v4697 = vand.u32 %v4683, 2147483648
        %v4698 = vor.u32 1.1754944e-38, %v4697
        %v4699 = vsel %vm4696, %v4698, %v4694
        %v4700 = vrcp.pop %v4684
        %v4701 = vmul.f32 %v4684, %v4700
        %v4702 = vsub.f32 1.0, %v4701
        %v4703 = vmul.f32 %v4700, %v4702
        %v4704 = vadd.f32 %v4700, %v4703
        %vm4705 = vweird.f32 %v4684
        %vm4706 = vweird.f32 %v4700
        %vm4707 = vmor %vm4705, %vm4706
        %v4708 = vsel %vm4707, %v4700, %v4704
        %v4709 = vand.u32 2147483647, %v4684
        %vm4710 = vcmp.eq.f32.partialorder %v4709, 8.507059e+37
        %v4711 = vand.u32 %v4684, 2147483648
        %v4712 = vor.u32 1.1754944e-38, %v4711
        %v4713 = vsel %vm4710, %v4712, %v4708
        %v4714 = vrcp.pop %v4685
        %v4715 = vmul.f32 %v4685, %v4714
        %v4716 = vsub.f32 1.0, %v4715
        %v4717 = vmul.f32 %v4714, %v4716
        %v4718 = vadd.f32 %v4714, %v4717
        %vm4719 = vweird.f32 %v4685
        %vm4720 = vweird.f32 %v4714
        %vm4721 = vmor %vm4719, %vm4720
        %v4722 = vsel %vm4721, %v4714, %v4718
        %v4723 = vand.u32 2147483647, %v4685
        %vm4724 = vcmp.eq.f32.partialorder %v4723, 8.507059e+37
        %v4725 = vand.u32 %v4685, 2147483648
        %v4726 = vor.u32 1.1754944e-38, %v4725
        %v4727 = vsel %vm4724, %v4726, %v4722
        %v4728 = vmul.f32 %v4699, 1.0614054
        %v4729 = vmul.f32 %v4713, 1.0614054
        %v4730 = vmul.f32 %v4727, 1.0614054
        %v4731 = vadd.f32 %v4728, -1.4531521
        %v4732 = vadd.f32 %v4729, -1.4531521
        %v4733 = vadd.f32 %v4730, -1.4531521
        %v4734 = vmul.f32 %v4731, %v4699
        %v4735 = vmul.f32 %v4732, %v4713
        %v4736 = vmul.f32 %v4733, %v4727
        %v4737 = vadd.f32 %v4734, 1.4214138
        %v4738 = vadd.f32 %v4735, 1.4214138
        %v4739 = vadd.f32 %v4736, 1.4214138
        %v4740 = vmul.f32 %v4737, %v4699
        %v4741 = vmul.f32 %v4738, %v4713
        %v4742 = vmul.f32 %v4739, %v4727
        %v4743 = vadd.f32 %v4740, -0.28449672
        %v4744 = vadd.f32 %v4741, -0.28449672
        %v4745 = vadd.f32 %v4742, -0.28449672
        %v4746 = vmul.f32 %v4743, %v4699
        %v4747 = vmul.f32 %v4744, %v4713
        %v4748 = vmul.f32 %v4745, %v4727
        %v4749 = vadd.f32 %v4746, 0.2548296
        %v4750 = vadd.f32 %v4747, 0.2548296
        %v4751 = vadd.f32 %v4748, 0.2548296
        %v4752 = vmul.f32 %v4749, %v4699
        %v4753 = vmul.f32 %v4750, %v4713
        %v4754 = vmul.f32 %v4751, %v4727
        %v4755 = vsub.f32 0.0, %v4677
        %v4756 = vsub.f32 0.0, %v4678
        %v4757 = vsub.f32 0.0, %v4679
        %v4758 = vmul.f32 %v4755, %v4677
        %v4759 = vmul.f32 %v4756, %v4678
        %v4760 = vmul.f32 %v4757, %v4679
        %v4761 = vmul.f32 %v4758, 1.442695
        %v4762 = vpow.pop %v4761
        %v4763 = vmul.f32 %v4759, 1.442695
        %v4764 = vpow.pop %v4763
        %v4765 = vmul.f32 %v4760, 1.442695
        %v4766 = vpow.pop %v4765
        %v4767 = vmul.f32 %v4752, %v4762
        %v4768 = vmul.f32 %v4753, %v4764
        %v4769 = vmul.f32 %v4754, %v4766
        %v4770 = vsub.f32 1.0, %v4767
        %v4771 = vsub.f32 1.0, %v4768
        %v4772 = vsub.f32 1.0, %v4769
        %vm4773 = vcmp.ge.f32.partialorder %v4674, 0.0
        %vm4774 = vcmp.ge.f32.partialorder %v4675, 0.0
        %vm4775 = vcmp.ge.f32.partialorder %v4676, 0.0
        %v4776 = vsub.f32 0.0, %v4770
        %v4777 = vsub.f32 0.0, %v4771
        %v4778 = vsub.f32 0.0, %v4772
        %v4779 = vsel %vm4773, %v4770, %v4776
        %v4780 = vsel %vm4774, %v4771, %v4777
        %v4781 = vsel %vm4775, %v4772, %v4778
        %v4782 = vadd.f32 %v4779, 1.0
        %v4783 = vadd.f32 %v4780, 1.0
        %v4784 = vadd.f32 %v4781, 1.0
        %v4785 = vmul.f32 %v4671, %v4782
        %v4786 = vmul.f32 %v4672, %v4783
        %v4787 = vmul.f32 %v4673, %v4784
        %v4788 = vld [vmem:[%s101] sm:$0xff]
        %v4789 = vld [vmem:[%s101 + $0x8] sm:$0xff]
        %v4790 = vld [vmem:[%s101 + $0x10] sm:$0xff]
        %v4791 = vld [vmem:[%s101 + $0x18] sm:$0xff]
        %v4792 = vld [vmem:[%s103] sm:$0x1]
        %v4794 = vperm.slane %v4792, 0
        %v4797 = vsel %vm2438, %v4785, 0
        %v4800 = vsel %vm2438, %v4786, 0
        %v4803 = vsel %vm2438, %v4787, 0
        %4805 = vmatpush.msra.mxu0 0.0
        %4806 = vmatpush.msra.mxu0 0.0
        %4807 = vmatpush.msra.mxu0 0.0
        %4808 = vmatpush.msra.mxu0 0.0
        %4809 = vmatpush.msra.mxu0 0.0
        %4810 = vmatpush.msra.mxu0 0.0
        %4811 = vmatpush.msra.mxu0 0.0
        %4812 = vmatpush.msra.mxu0 0.0
        %4813 = vmatpush.msra.mxu0 0.0
        %4814 = vmatpush.msra.mxu0 0.0
        %4815 = vmatpush.msra.mxu0 0.0
        %4816 = vmatpush.msra.mxu0 0.0
        %4817 = vmatpush.msra.mxu0 %v4791
        %4818 = vmatpush.msra.mxu0 %v4790
        %4819 = vmatpush.msra.mxu0 %v4789
        %4820 = vmatpush.msra.mxu0 %v4788
        %4821 = vmatmul.f32.gmra.mxu0 %v4797
        %v4822 = vpop.f32.mrf.mxu0
        %v4823 = vadd.f32 %v4794, %v4822
        %4824 = vmatmul.f32.gmra.mxu0 %v4800
        %v4825 = vpop.f32.mrf.mxu0
        %v4826 = vadd.f32 %v4794, %v4825
        %4827 = vmatmul.f32.gmra.mxu0 %v4803
        %v4828 = vpop.f32.mrf.mxu0
        %v4829 = vadd.f32 %v4794, %v4828
        %4830 = vdwg.mxu0
        %v4831 = vadd.f32 %v4559, %v4823
        %v4832 = vadd.f32 %v4560, %v4826
        %v4833 = vadd.f32 %v4561, %v4829
        %4834 = vst.msk [vmem:[%s1959] sm:$0xff] %vm2438, %v4831
        %4835 = vst.msk [vmem:[%s1959 + $0x8] sm:$0xff] %vm2438, %v4832
        %4836 = vst.msk [vmem:[%s1959 + $0x10] sm:$0x1] %vm3038, %v4833
        %p4837 = scmp.lt.s32.totalorder %s131, 1
        %s4838 = scalar_select %p4837, %s131, 1
        %s4839 = smul.addr %s4838, 3
        %s4840 = smul.addr %s4839, 8
        %s4841 = scalar_lea.vmem %s105, %s4840
        // Predicated region
        $region329: #{_lambda_.1} parent=227 // pred_check
          %p4842 = pneg %p1246
        $region330: #{_lambda_.1} parent=227 // pred_check_branch
          %4844 = sbr.rel (%p4842) target = $region332
        $region331: #{_lambda_.1} parent=227 // pred_region
          _
        $region332: #{_lambda_.1} parent=227 // pred_fallthru
          _
      $region228: #{_lambda_.1} parent=5 // pred_fallthru
        _
      %p4845 = scmp.le.s32.totalorder 2, %s126
      // Predicated region
      $region333: #{_lambda_.1} parent=5 // pred_check
        %p4846 = pneg %p4845
      $region334: #{_lambda_.1} parent=5 // pred_check_branch
        %4848 = sbr.rel (%p4846) target = $region336
      $region335: #{_lambda_.1} parent=5 // pred_region
        %s4849 = ssub.s32 %s126, 2
        // Predicated region
        $region337: #{_lambda_.1} parent=335 // pred_check
          %p4850 = pneg %p1252
        $region338: #{_lambda_.1} parent=335 // pred_check_branch
          %4852 = sbr.rel (%p4850) target = $region340
        $region339: #{_lambda_.1} parent=335 // pred_region
          %p4853 = scmp.lt.s32.totalorder %s132, 1
          %s4854 = scalar_select %p4853, %s132, 1
          %s4855 = smul.addr %s4854, 3
          %s4856 = smul.addr %s4855, 8
          %s4857 = scalar_lea.vmem %s105, %s4856
        $region340: #{_lambda_.1} parent=335 // pred_fallthru
          _
      $region336: #{_lambda_.1} parent=5 // pred_fallthru
        _
    $region6: #{_lambda_.1} parent=1 // loop_footer
      %s130 = sadd.s32 1, %s126
    $region7: #{_lambda_.1} parent=1 // loop_footer_branch
      %125 = sbr.rel target = $region3
    $region8: #{_lambda_.1} parent=1 // loop_exit
      _
    %4858 = vsyncpa [#allocation3], 1
    %s4859 = scalar_lea.sflag [#allocation3], 1
    %4860 = vsyncpa %s4859, 1
    %4861 = vsyncpa [#allocation5], 1
    %4862 = vsyncpa [#allocation8], 1
    %4863 = vsyncpa [#allocation11], 1
    %4864 = vsyncpa [#allocation14], 1
    %4865 = vsyncpa [#allocation17], 1
    %4866 = vsyncpa [#allocation20], 1
    %4867 = vsyncpa [#allocation23], 1
    %4868 = vsyncpa [#allocation26], 1
    %4869 = vsyncpa [#allocation29], 1
    %4870 = vsyncpa [#allocation32], 1
    %4871 = vsyncpa [#allocation35], 1
    %4872 = vsyncpa [#allocation38], 1

</llo_original>
